<compile_context>
chip_gen: v7x
topology: tpu7x:2x2x1
jax: 0.10.0
libtpu: 0.0.40
codegen_flags: <defaults>
</compile_context>

<pallas_src>
import functools

import jax
import jax.numpy as jnp
from jax.experimental import pallas as pl
from jax.experimental.pallas import tpu as pltpu


_LN_EPS = 1e-5
_INV_SQRT2 = 0.7071067811865476
_DEFAULT_TM = 512                 # token tile upper bound (rows per grid step)
_DEFAULT_TKV = 512                # KV tile upper bound for the attention kernel


def _round_up(n, m):
    return (n + m - 1) // m * m


@functools.lru_cache(maxsize=None)
def _vmem_limit_bytes():
    # Generation-aware scoped-VMEM cap: ~3/4 of physical, capped at 100 MiB
    # (v5e/v6e: 128 MiB -> 96 MiB; v7x: 64 MiB -> 48 MiB).  Conservative
    # fallback (48 MiB) if the query is unavailable.
    cap = 64 * 1024 * 1024
    try:
        cap = int(pltpu.get_tpu_info().vmem_capacity_bytes)
    except Exception:
        pass
    return min((cap * 3) // 4, 100 * 1024 * 1024)


def _compiler_params(sem):
    return pltpu.CompilerParams(dimension_semantics=sem,
                                vmem_limit_bytes=_vmem_limit_bytes())


def _gelu_exact(x):
    # torch.nn.GELU() / F.gelu default: exact erf form.
    return 0.5 * x * (1.0 + jax.lax.erf(x * _INV_SQRT2))


def _layernorm_f32(x_f32, g_ref, b_ref):
    mu = jnp.mean(x_f32, axis=-1, keepdims=True)
    xc = x_f32 - mu
    var = jnp.mean(xc * xc, axis=-1, keepdims=True)
    xn = xc * jax.lax.rsqrt(var + _LN_EPS)
    return xn * g_ref[...].astype(jnp.float32) + b_ref[...].astype(jnp.float32)


# ---------------------------------------------------------------- kernels ----

def _ln_qkv_kernel(x_ref, g_ref, b_ref, wq_ref, wk_ref, wv_ref, q_ref, k_ref, v_ref):
    # q, k, v = LayerNorm(x) @ {Wq, Wk, Wv}   (to_q / to_k / to_v are bias-free)
    h = _layernorm_f32(x_ref[...].astype(jnp.float32), g_ref, b_ref)
    h = h.astype(wq_ref.dtype)
    q_ref[...] = jnp.dot(h, wq_ref[...], preferred_element_type=jnp.float32).astype(q_ref.dtype)
    k_ref[...] = jnp.dot(h, wk_ref[...], preferred_element_type=jnp.float32).astype(k_ref.dtype)
    v_ref[...] = jnp.dot(h, wv_ref[...], preferred_element_type=jnp.float32).astype(v_ref.dtype)


def _ln_q_kernel(x_ref, g_ref, b_ref, wq_ref, q_ref):
    h = _layernorm_f32(x_ref[...].astype(jnp.float32), g_ref, b_ref)
    q_ref[...] = jnp.dot(h.astype(wq_ref.dtype), wq_ref[...],
                         preferred_element_type=jnp.float32).astype(q_ref.dtype)


def _kv_kernel(c_ref, wk_ref, wv_ref, k_ref, v_ref):
    c = c_ref[...].astype(wk_ref.dtype)
    k_ref[...] = jnp.dot(c, wk_ref[...], preferred_element_type=jnp.float32).astype(k_ref.dtype)
    v_ref[...] = jnp.dot(c, wv_ref[...], preferred_element_type=jnp.float32).astype(v_ref.dtype)


def _out_proj_res_kernel(a_ref, r_ref, w_ref, b_ref, o_ref):
    # o = a @ Wo + bo + residual        (Dropout(p=0.0) -> identity)
    o = jnp.dot(a_ref[...].astype(w_ref.dtype), w_ref[...],
                preferred_element_type=jnp.float32)
    o = o + b_ref[...].astype(jnp.float32) + r_ref[...].astype(jnp.float32)
    o_ref[...] = o.astype(o_ref.dtype)


def _ln_geglu_ffn_kernel(x_ref, g_ref, b_ref, w1_ref, b1_ref, w2_ref, b2_ref, o_ref):
    # o = Linear2( GEGLU( Linear1( LayerNorm(x) ) ) ) + x
    # TODO(synk): for very large dims on v7x, add a hidden-dim grid axis (with a
    # VMEM f32 accumulator for the second matmul) so ff_w1/ff_w2 + the hidden
    # activation stay inside the 64 MiB VMEM budget.
    x = x_ref[...].astype(jnp.float32)
    h = _layernorm_f32(x, g_ref, b_ref)
    h = jnp.dot(h.astype(w1_ref.dtype), w1_ref[...], preferred_element_type=jnp.float32)
    h = h + b1_ref[...].astype(jnp.float32)
    inner = w2_ref.shape[0]
    val, gate = h[:, :inner], h[:, inner:]
    a = (val * _gelu_exact(gate)).astype(w2_ref.dtype)
    o = jnp.dot(a, w2_ref[...], preferred_element_type=jnp.float32)
    o = o + b2_ref[...].astype(jnp.float32) + x
    o_ref[...] = o.astype(o_ref.dtype)


def _flash_attn_kernel(q_ref, k_ref, v_ref, o_ref, m_sc, l_sc, acc_sc, *, hg, d):
    # One (batch, head-group) slab; grid axis 2 walks KV tiles (online softmax).
    kt = pl.program_id(2)

    @pl.when(kt == 0)
    def _():
        m_sc[...] = jnp.full(m_sc.shape, -jnp.inf, dtype=m_sc.dtype)
        l_sc[...] = jnp.zeros(l_sc.shape, dtype=l_sc.dtype)
        acc_sc[...] = jnp.zeros(acc_sc.shape, dtype=acc_sc.dtype)

    scale = float(d) ** -0.5
    for h in range(hg):                               # static unroll over heads in group
        q = q_ref[0, :, h * d:(h + 1) * d]            # (S, d)
        k = k_ref[0, :, h * d:(h + 1) * d]            # (tkv, d)
        v = v_ref[0, :, h * d:(h + 1) * d]            # (tkv, d)
        s = jax.lax.dot_general(q, k, (((1,), (1,)), ((), ())),
                                preferred_element_type=jnp.float32) * scale
        m_prev = m_sc[h]                              # (S, 1)
        m_new = jnp.maximum(m_prev, jnp.max(s, axis=-1, keepdims=True))
        alpha = jnp.exp(m_prev - m_new)
        p = jnp.exp(s - m_new)                        # unnormalized probabilities
        l_sc[h] = alpha * l_sc[h] + jnp.sum(p, axis=-1, keepdims=True)
        acc_sc[h] = alpha * acc_sc[h] + jnp.dot(p.astype(v.dtype), v,
                                                preferred_element_type=jnp.float32)
        m_sc[h] = m_new

    # TODO(synk): optional attention-mask path not implemented (mask is never
    # passed by BasicTransformerBlock.forward).
    @pl.when(kt == pl.num_programs(2) - 1)
    def _():
        outs = [acc_sc[h] * pl.reciprocal(l_sc[h], approx=True) for h in range(hg)]
        o_ref[0] = jnp.concatenate(outs, axis=-1).astype(o_ref.dtype)   # lane-dense store


# ------------------------------------------------------------- pallas glue ----

def _pick_row_tiles(M, tm_max):
    g = pl.cdiv(M, tm_max)
    if g == 1 and M >= 16:
        g = 2                      # give both v7x TensorCores a row tile
    tm = _round_up(pl.cdiv(M, g), 8)
    return g, tm, g * tm


def _run_rowtiled(kernel, row_args, resident_args, out_cols, *, tm_max, out_dtype):
    """Run `kernel` tiled over rows (tokens), multi-output capable.

    row_args:      [M, C_i] arrays, tiled (tm, C_i) along the single grid axis.
    resident_args: 2-D arrays kept fully resident in VMEM (weights / biases / LN params).
    out_cols:      list of output column counts -> tuple of [M, c] outputs.
    """
    M = row_args[0].shape[0]
    g, tm, M_pad = _pick_row_tiles(M, tm_max)
    if M_pad != M:
        row_args = [jnp.pad(a, ((0, M_pad - M), (0, 0))) for a in row_args]

    in_specs = [pl.BlockSpec((tm, a.shape[1]), lambda i: (i, 0)) for a in row_args]
    # Constant-index resident specs: the same block is re-used every grid step,
    # so the weight DMA happens once and stays in VMEM.
    # TODO(synk): mark these pipeline_mode=pl.Buffered(1) (single-buffered) on jax
    # versions that support it to halve resident-weight VMEM on v7x.
    in_specs += [pl.BlockSpec(a.shape, lambda i: (0, 0)) for a in resident_args]

    outs = pl.pallas_call(
        kernel,
        out_shape=tuple(jax.ShapeDtypeStruct((M_pad, c), out_dtype) for c in out_cols),
        grid_spec=pltpu.PrefetchScalarGridSpec(
            num_scalar_prefetch=0,
            grid=(g,),
            in_specs=in_specs,
            out_specs=tuple(pl.BlockSpec((tm, c), lambda i: (i, 0)) for c in out_cols),
        ),
        compiler_params=_compiler_params(("parallel",)),
    )(*row_args, *resident_args)
    if not isinstance(outs, (tuple, list)):
        outs = (outs,)
    if M_pad != M:
        outs = tuple(o[:M] for o in outs)
    return outs if len(out_cols) > 1 else outs[0]


def _pick_head_group(H, d):
    # Smallest divisor hg of H such that hg*d is a lane-dense multiple of 128;
    # fall back to all heads in one group (block last dim == full array dim).
    for hg in range(1, H + 1):
        if H % hg == 0 and (hg * d) % 128 == 0:
            return hg
    return H


def _pick_kv_tile(Sc, tkv_max):
    if Sc <= tkv_max:
        return Sc
    for t in range(min(tkv_max, Sc), 7, -1):
        if Sc % t == 0 and t % 8 == 0:
            return t
    return Sc


def _run_attention(q, k, v, *, n_heads, d_head, tkv_max):
    """q: [B, S, H*d]; k, v: [B, Sc, H*d] -> [B, S, H*d].

    Heads are indexed directly in the BlockSpecs (no split/transpose in XLA),
    >=2 heads per grid step when d_head < 128, KV dimension tiled flash-style.
    """
    B, S, _ = q.shape
    Sc = k.shape[1]
    H, d = n_heads, d_head
    hg = _pick_head_group(H, d)
    G = H // hg
    tkv = _pick_kv_tile(Sc, tkv_max)
    KT = Sc // tkv

    kernel = functools.partial(_flash_attn_kernel, hg=hg, d=d)
    return pl.pallas_call(
        kernel,
        out_shape=jax.ShapeDtypeStruct((B, S, H * d), q.dtype),
        grid_spec=pltpu.PrefetchScalarGridSpec(
            num_scalar_prefetch=0,
            grid=(B, G, KT),
            in_specs=[
                pl.BlockSpec((1, S, hg * d), lambda b, g, kt: (b, 0, g)),
                pl.BlockSpec((1, tkv, hg * d), lambda b, g, kt: (b, kt, g)),
                pl.BlockSpec((1, tkv, hg * d), lambda b, g, kt: (b, kt, g)),
            ],
            out_specs=pl.BlockSpec((1, S, hg * d), lambda b, g, kt: (b, 0, g)),
            scratch_shapes=[
                pltpu.VMEM((hg, S, 1), jnp.float32),    # running max m
                pltpu.VMEM((hg, S, 1), jnp.float32),    # running sum l
                pltpu.VMEM((hg, S, d), jnp.float32),    # output accumulator
            ],
        ),
        compiler_params=_compiler_params(("parallel", "parallel", "arbitrary")),
    )(q, k, v)


@functools.partial(jax.jit, static_argnames=("n_heads", "d_head", "tm_max", "tkv_max"))
def basic_transformer_block(x, context, params, *, n_heads, d_head,
                            tm_max=_DEFAULT_TM, tkv_max=_DEFAULT_TKV):
    """x: [B, S, dim]; context: [B, Sc, dim_ctx] or None; weights stored [in, out]."""
    B, S, dim = x.shape
    H, d = n_heads, d_head
    inner = H * d
    M = B * S
    p = params
    x2 = x.reshape(M, dim)

    # ---- attn1: self-attention on norm1(x), + residual ---------------------
    q, k, v = _run_rowtiled(
        _ln_qkv_kernel, [x2],
        [p["ln1_g"], p["ln1_b"], p["attn1_wq"], p["attn1_wk"], p["attn1_wv"]],
        [inner, inner, inner], tm_max=tm_max, out_dtype=x.dtype)
    a = _run_attention(q.reshape(B, S, inner), k.reshape(B, S, inner),
                       v.reshape(B, S, inner),
                       n_heads=H, d_head=d, tkv_max=tkv_max)
    x2 = _run_rowtiled(_out_proj_res_kernel, [a.reshape(M, inner), x2],
                       [p["attn1_wo"], p["attn1_bo"]], [dim],
                       tm_max=tm_max, out_dtype=x.dtype)

    # ---- attn2: cross-attention on norm2(x) vs context, + residual ---------
    if context is None:
        # CrossAttention defaults context to its *own* (already normalized) input.
        q, k, v = _run_rowtiled(
            _ln_qkv_kernel, [x2],
            [p["ln2_g"], p["ln2_b"], p["attn2_wq"], p["attn2_wk"], p["attn2_wv"]],
            [inner, inner, inner], tm_max=tm_max, out_dtype=x.dtype)
        Bc, Sc = B, S
    else:
        Bc, Sc, cdim = context.shape
        q = _run_rowtiled(_ln_q_kernel, [x2],
                          [p["ln2_g"], p["ln2_b"], p["attn2_wq"]],
                          [inner], tm_max=tm_max, out_dtype=x.dtype)
        k, v = _run_rowtiled(_kv_kernel, [context.reshape(Bc * Sc, cdim)],
                             [p["attn2_wk"], p["attn2_wv"]],
                             [inner, inner], tm_max=tm_max, out_dtype=x.dtype)
    a = _run_attention(q.reshape(B, S, inner), k.reshape(Bc, Sc, inner),
                       v.reshape(Bc, Sc, inner),
                       n_heads=H, d_head=d, tkv_max=tkv_max)
    x2 = _run_rowtiled(_out_proj_res_kernel, [a.reshape(M, inner), x2],
                       [p["attn2_wo"], p["attn2_bo"]], [dim],
                       tm_max=tm_max, out_dtype=x.dtype)

    # ---- ff: GEGLU feed-forward on norm3(x), + residual (fully fused) -------
    x2 = _run_rowtiled(_ln_geglu_ffn_kernel, [x2],
                       [p["ln3_g"], p["ln3_b"],
                        p["ff_w1"], p["ff_b1"], p["ff_w2"], p["ff_b2"]],
                       [dim], tm_max=min(tm_max, 256), out_dtype=x.dtype)

    return x2.reshape(B, S, dim)


# ------------------------------------------------------------- reference ----

_HI = jax.lax.Precision.HIGHEST


def _block_reference(x, context, p, n_heads, d_head):
    H, d = n_heads, d_head

    def ln(t, g, b):
        mu = jnp.mean(t, axis=-1, keepdims=True)
        var = jnp.mean((t - mu) ** 2, axis=-1, keepdims=True)
        return (t - mu) / jnp.sqrt(var + _LN_EPS) * g + b

    def mm(a, b):
        return jnp.dot(a, b, precision=_HI)

    def attention(xq, xkv, wq, wk, wv, wo, bo):
        B, S, _ = xq.shape
        Sc = xkv.shape[1]
        q = mm(xq, wq).reshape(B, S, H, d).transpose(0, 2, 1, 3)
        k = mm(xkv, wk).reshape(B, Sc, H, d).transpose(0, 2, 1, 3)
        v = mm(xkv, wv).reshape(B, Sc, H, d).transpose(0, 2, 1, 3)
        sim = jnp.einsum("bhid,bhjd->bhij", q, k, precision=_HI) * (float(d) ** -0.5)
        attn = jax.nn.softmax(sim, axis=-1)
        o = jnp.einsum("bhij,bhjd->bhid", attn, v, precision=_HI)
        o = o.transpose(0, 2, 1, 3).reshape(B, S, H * d)
        return mm(o, wo) + bo

    h = ln(x, p["ln1_g"], p["ln1_b"])
    x = attention(h, h, p["attn1_wq"], p["attn1_wk"], p["attn1_wv"],
                  p["attn1_wo"], p["attn1_bo"]) + x
    h = ln(x, p["ln2_g"], p["ln2_b"])
    ctx = h if context is None else context
    x = attention(h, ctx, p["attn2_wq"], p["attn2_wk"], p["attn2_wv"],
                  p["attn2_wo"], p["attn2_bo"]) + x
    h = ln(x, p["ln3_g"], p["ln3_b"])
    hp = mm(h, p["ff_w1"]) + p["ff_b1"]
    val, gate = jnp.split(hp, 2, axis=-1)
    x = mm(val * _gelu_exact(gate), p["ff_w2"]) + p["ff_b2"] + x
    return x


# ------------------------------------------------------------------ demo ----

if __name__ == "__main__":
    # BasicTransformerBlock(dim=128, n_heads=2, d_head=64, gated_ff=True)
    B, S, Sc = 2, 8, 16
    n_heads, d_head = 2, 64
    dim = n_heads * d_head          # 128 (lane-dense feature dims throughout)
    mult = 4
    inner_ff = dim * mult           # 512
    inner = n_heads * d_head        # 128

    key = jax.random.PRNGKey(0)
    kx, kc, kp = jax.random.split(key, 3)
    dt = jnp.float32
    x = jax.random.normal(kx, (B, S, dim), dtype=dt)
    context = jax.random.normal(kc, (B, Sc, dim), dtype=dt)

    ks = jax.random.split(kp, 20)

    def lin(k, din, dout):
        return jax.random.normal(k, (din, dout), dt) * (float(din) ** -0.5)

    params = {
        "ln1_g": 1.0 + 0.1 * jax.random.normal(ks[0], (1, dim), dt),
        "ln1_b": 0.05 * jax.random.normal(ks[1], (1, dim), dt),
        "attn1_wq": lin(ks[2], dim, inner),
        "attn1_wk": lin(ks[3], dim, inner),
        "attn1_wv": lin(ks[4], dim, inner),
        "attn1_wo": lin(ks[5], inner, dim),
        "attn1_bo": 0.02 * jax.random.normal(ks[6], (1, dim), dt),
        "ln2_g": 1.0 + 0.1 * jax.random.normal(ks[7], (1, dim), dt),
        "ln2_b": 0.05 * jax.random.normal(ks[8], (1, dim), dt),
        "attn2_wq": lin(ks[9], dim, inner),
        "attn2_wk": lin(ks[10], dim, inner),
        "attn2_wv": lin(ks[11], dim, inner),
        "attn2_wo": lin(ks[12], inner, dim),
        "attn2_bo": 0.02 * jax.random.normal(ks[13], (1, dim), dt),
        "ln3_g": 1.0 + 0.1 * jax.random.normal(ks[14], (1, dim), dt),
        "ln3_b": 0.05 * jax.random.normal(ks[15], (1, dim), dt),
        "ff_w1": lin(ks[16], dim, 2 * inner_ff),
        "ff_b1": 0.02 * jax.random.normal(ks[17], (1, 2 * inner_ff), dt),
        "ff_w2": lin(ks[18], inner_ff, dim),
        "ff_b2": 0.02 * jax.random.normal(ks[19], (1, dim), dt),
    }

    # tkv_max=8 exercises the multi-step flash KV path (Sc=16 -> 2 KV tiles).
    run = functools.partial(basic_transformer_block,
                            n_heads=n_heads, d_head=d_head, tkv_max=8)

    # ---- f32 path: tight check against a HIGHEST-precision reference --------
    y32 = jax.block_until_ready(run(x, context, params))
    y_ref = jax.block_until_ready(_block_reference(x, context, params, n_heads, d_head))
    assert y32.shape == (B, S, dim)
    err32 = float(jnp.max(jnp.abs(y32 - y_ref)))
    assert jnp.allclose(y32, y_ref, atol=2e-2, rtol=2e-2), \
        f"f32 mismatch vs reference (max abs err {err32})"

    # ---- bf16 fast path: bf16 weights/activations on the MXU, f32 accum -----
    to_bf16 = lambda t: jax.tree_util.tree_map(lambda a: a.astype(jnp.bfloat16), t)
    to_f32 = lambda t: jax.tree_util.tree_map(lambda a: a.astype(jnp.float32), t)
    params16 = to_bf16(params)
    x16, c16 = x.astype(jnp.bfloat16), context.astype(jnp.bfloat16)
    y16 = jax.block_until_ready(run(x16, c16, params16))
    ref16 = jax.block_until_ready(
        _block_reference(to_f32(x16), to_f32(c16), to_f32(params16), n_heads, d_head))
    err16 = float(jnp.max(jnp.abs(y16.astype(jnp.float32) - ref16)))
    assert jnp.allclose(y16.astype(jnp.float32), ref16, atol=1e-1, rtol=1e-1), \
        f"bf16 mismatch vs reference (max abs err {err16})"

    print("KERNEL_OK")
</pallas_src>

<mosaic_0001>
module attributes {stable_mosaic.version = 11 : i64} {
  func.func @_ln_q_kernel(%arg0: i32, %arg1: memref<8x128xf32, #tpu.memory_space<vmem>>, %arg2: memref<1x128xf32, #tpu.memory_space<vmem>>, %arg3: memref<1x128xf32, #tpu.memory_space<vmem>>, %arg4: memref<128x128xf32, #tpu.memory_space<vmem>>, %arg5: memref<8x128xf32, #tpu.memory_space<vmem>>) attributes {dimension_semantics = [#tpu.dimension_semantics<parallel>], iteration_bounds = array<i64: 2>, scalar_prefetch = 0 : i64, scratch_operands = 0 : i64, tpu.core_type = #tpu.core_type<tc>, window_params = [{transform_indices = @transform_0, window_bounds = array<i64: 8, 128>}, {pipeline_mode = #tpu.pipeline_mode<synchronous>, transform_indices = @transform_1, window_bounds = array<i64: 1, 128>}, {pipeline_mode = #tpu.pipeline_mode<synchronous>, transform_indices = @transform_2, window_bounds = array<i64: 1, 128>}, {pipeline_mode = #tpu.pipeline_mode<synchronous>, transform_indices = @transform_3, window_bounds = array<i64: 128, 128>}, {transform_indices = @transform_4, window_bounds = array<i64: 8, 128>}]} {
    %c0 = arith.constant 0 : index
    %c0_0 = arith.constant 0 : index
    %0 = vector.load %arg1[%c0, %c0_0] : memref<8x128xf32, #tpu.memory_space<vmem>>, vector<8x128xf32>
    %cst = arith.constant dense<0.000000e+00> : vector<8xf32>
    %1 = vector.multi_reduction <add>, %0, %cst [1] : vector<8x128xf32> to vector<8xf32>
    %2 = vector.shape_cast %1 : vector<8xf32> to vector<8x1xf32>
    %cst_1 = arith.constant 1.280000e+02 : f32
    %3 = vector.broadcast %cst_1 : f32 to vector<8x1xf32>
    %4 = arith.divf %2, %3 : vector<8x1xf32>
    %5 = vector.broadcast %4 : vector<8x1xf32> to vector<8x128xf32>
    %6 = arith.subf %0, %5 : vector<8x128xf32>
    %7 = arith.mulf %6, %6 : vector<8x128xf32>
    %cst_2 = arith.constant dense<0.000000e+00> : vector<8xf32>
    %8 = vector.multi_reduction <add>, %7, %cst_2 [1] : vector<8x128xf32> to vector<8xf32>
    %9 = vector.shape_cast %8 : vector<8xf32> to vector<8x1xf32>
    %cst_3 = arith.constant 1.280000e+02 : f32
    %10 = vector.broadcast %cst_3 : f32 to vector<8x1xf32>
    %11 = arith.divf %9, %10 : vector<8x1xf32>
    %cst_4 = arith.constant 9.99999974E-6 : f32
    %12 = vector.broadcast %cst_4 : f32 to vector<8x1xf32>
    %13 = arith.addf %11, %12 : vector<8x1xf32>
    %14 = math.rsqrt %13 : vector<8x1xf32>
    %15 = vector.broadcast %14 : vector<8x1xf32> to vector<8x128xf32>
    %16 = arith.mulf %6, %15 : vector<8x128xf32>
    %c0_5 = arith.constant 0 : index
    %c0_6 = arith.constant 0 : index
    %17 = vector.load %arg2[%c0_5, %c0_6] : memref<1x128xf32, #tpu.memory_space<vmem>>, vector<1x128xf32>
    %18 = vector.broadcast %17 : vector<1x128xf32> to vector<8x128xf32>
    %19 = arith.mulf %16, %18 : vector<8x128xf32>
    %c0_7 = arith.constant 0 : index
    %c0_8 = arith.constant 0 : index
    %20 = vector.load %arg3[%c0_7, %c0_8] : memref<1x128xf32, #tpu.memory_space<vmem>>, vector<1x128xf32>
    %21 = vector.broadcast %20 : vector<1x128xf32> to vector<8x128xf32>
    %22 = arith.addf %19, %21 : vector<8x128xf32>
    %c0_9 = arith.constant 0 : index
    %c0_10 = arith.constant 0 : index
    %23 = vector.load %arg4[%c0_9, %c0_10] : memref<128x128xf32, #tpu.memory_space<vmem>>, vector<128x128xf32>
    %cst_11 = arith.constant dense<0.000000e+00> : vector<8x128xf32>
    %24 = tpu.matmul %22, %23, %cst_11 {dimension_numbers = #tpu.dot_dimension_numbers<[1], [0], [0], [1], [0, 0, 1, 1], [], []>} : vector<8x128xf32>, vector<128x128xf32>, vector<8x128xf32> -> vector<8x128xf32>
    %c0_12 = arith.constant 0 : index
    %c0_13 = arith.constant 0 : index
    %25 = vector.load %arg5[%c0_12, %c0_13] : memref<8x128xf32, #tpu.memory_space<vmem>>, vector<8x128xf32>
    tpu.vector_store %arg5[%c0_12, %c0_13], %24 {strides = array<i32>} : memref<8x128xf32, #tpu.memory_space<vmem>>, vector<8x128xf32>,
    return
  }
  func.func @transform_0(%arg0: i32) -> (i32, i32) {
    %c0_i32 = arith.constant 0 : i32
    %c0_i32_0 = arith.constant 0 : i32
    return %arg0, %c0_i32 : i32, i32
  }
  func.func @transform_1(%arg0: i32) -> (i32, i32) {
    %c0_i32 = arith.constant 0 : i32
    %c0_i32_0 = arith.constant 0 : i32
    %c0_i32_1 = arith.constant 0 : i32
    return %c0_i32, %c0_i32_0 : i32, i32
  }
  func.func @transform_2(%arg0: i32) -> (i32, i32) {
    %c0_i32 = arith.constant 0 : i32
    %c0_i32_0 = arith.constant 0 : i32
    %c0_i32_1 = arith.constant 0 : i32
    return %c0_i32, %c0_i32_0 : i32, i32
  }
  func.func @transform_3(%arg0: i32) -> (i32, i32) {
    %c0_i32 = arith.constant 0 : i32
    %c0_i32_0 = arith.constant 0 : i32
    %c0_i32_1 = arith.constant 0 : i32
    return %c0_i32, %c0_i32_0 : i32, i32
  }
  func.func @transform_4(%arg0: i32) -> (i32, i32) {
    %c0_i32 = arith.constant 0 : i32
    %c0_i32_0 = arith.constant 0 : i32
    return %arg0, %c0_i32 : i32, i32
  }
}

module attributes {stable_mosaic.version = 11 : i64} {
  func.func @_flash_attn_kernel(%arg0: i32, %arg1: i32, %arg2: i32, %arg3: memref<1x8x128xf32, #tpu.memory_space<vmem>>, %arg4: memref<1x8x128xf32, #tpu.memory_space<vmem>>, %arg5: memref<1x8x128xf32, #tpu.memory_space<vmem>>, %arg6: memref<1x8x128xf32, #tpu.memory_space<vmem>>, %arg7: memref<2x8x1xf32, #tpu.memory_space<vmem>>, %arg8: memref<2x8x1xf32, #tpu.memory_space<vmem>>, %arg9: memref<2x8x64xf32, #tpu.memory_space<vmem>>) attributes {dimension_semantics = [#tpu.dimension_semantics<parallel>, #tpu.dimension_semantics<parallel>, #tpu.dimension_semantics<arbitrary>], iteration_bounds = array<i64: 2, 1, 1>, scalar_prefetch = 0 : i64, scratch_operands = 3 : i64, tpu.core_type = #tpu.core_type<tc>, window_params = [{transform_indices = @transform_0, window_bounds = array<i64: 1, 8, 128>}, {transform_indices = @transform_1, window_bounds = array<i64: 1, 8, 128>}, {transform_indices = @transform_2, window_bounds = array<i64: 1, 8, 128>}, {transform_indices = @transform_3, window_bounds = array<i64: 1, 8, 128>}]} {
    %c0_i32 = arith.constant 0 : i32
    %0 = arith.cmpi eq, %arg2, %c0_i32 : i32
    %1 = arith.extui %0 : i1 to i32
    %c0_i32_0 = arith.constant 0 : i32
    %2 = arith.cmpi ne, %1, %c0_i32_0 : i32
    scf.if %2 {
      %cst_63 = arith.constant 0xFF800000 : f32
      %86 = vector.broadcast %cst_63 : f32 to vector<2x8x1xf32>
      %c0_64 = arith.constant 0 : index
      %c0_65 = arith.constant 0 : index
      %c0_66 = arith.constant 0 : index
      %87 = vector.load %arg7[%c0_64, %c0_65, %c0_66] : memref<2x8x1xf32, #tpu.memory_space<vmem>>, vector<2x8x1xf32>
      tpu.vector_store %arg7[%c0_64, %c0_65, %c0_66], %86 {strides = array<i32>} : memref<2x8x1xf32, #tpu.memory_space<vmem>>, vector<2x8x1xf32>,
      %cst_67 = arith.constant 0.000000e+00 : f32
      %88 = vector.broadcast %cst_67 : f32 to vector<2x8x1xf32>
      %c0_68 = arith.constant 0 : index
      %c0_69 = arith.constant 0 : index
      %c0_70 = arith.constant 0 : index
      %89 = vector.load %arg8[%c0_68, %c0_69, %c0_70] : memref<2x8x1xf32, #tpu.memory_space<vmem>>, vector<2x8x1xf32>
      tpu.vector_store %arg8[%c0_68, %c0_69, %c0_70], %88 {strides = array<i32>} : memref<2x8x1xf32, #tpu.memory_space<vmem>>, vector<2x8x1xf32>,
      %cst_71 = arith.constant 0.000000e+00 : f32
      %90 = vector.broadcast %cst_71 : f32 to vector<2x8x64xf32>
      %c0_72 = arith.constant 0 : index
      %c0_73 = arith.constant 0 : index
      %c0_74 = arith.constant 0 : index
      %91 = vector.load %arg9[%c0_72, %c0_73, %c0_74] : memref<2x8x64xf32, #tpu.memory_space<vmem>>, vector<2x8x64xf32>
      tpu.vector_store %arg9[%c0_72, %c0_73, %c0_74], %90 {strides = array<i32>} : memref<2x8x64xf32, #tpu.memory_space<vmem>>, vector<2x8x64xf32>,
    } else {
    }
    %c0 = arith.constant 0 : index
    %c0_1 = arith.constant 0 : index
    %c0_2 = arith.constant 0 : index
    %3 = vector.load %arg3[%c0, %c0_1, %c0_2] : memref<1x8x128xf32, #tpu.memory_space<vmem>>, vector<1x8x64xf32>
    %4 = vector.shape_cast %3 : vector<1x8x64xf32> to vector<8x64xf32>
    %c0_3 = arith.constant 0 : index
    %c0_4 = arith.constant 0 : index
    %c0_5 = arith.constant 0 : index
    %5 = vector.load %arg4[%c0_3, %c0_4, %c0_5] : memref<1x8x128xf32, #tpu.memory_space<vmem>>, vector<1x8x64xf32>
    %6 = vector.shape_cast %5 : vector<1x8x64xf32> to vector<8x64xf32>
    %c0_6 = arith.constant 0 : index
    %c0_7 = arith.constant 0 : index
    %c0_8 = arith.constant 0 : index
    %7 = vector.load %arg5[%c0_6, %c0_7, %c0_8] : memref<1x8x128xf32, #tpu.memory_space<vmem>>, vector<1x8x64xf32>
    %8 = vector.shape_cast %7 : vector<1x8x64xf32> to vector<8x64xf32>
    %cst = arith.constant dense<0.000000e+00> : vector<8x8xf32>
    %9 = tpu.matmul %4, %6, %cst {dimension_numbers = #tpu.dot_dimension_numbers<[1], [1], [0], [0], [0, 0, 1, 0], [], []>} : vector<8x64xf32>, vector<8x64xf32>, vector<8x8xf32> -> vector<8x8xf32>
    %cst_9 = arith.constant 1.250000e-01 : f32
    %10 = vector.broadcast %cst_9 : f32 to vector<8x8xf32>
    %11 = arith.mulf %9, %10 : vector<8x8xf32>
    %c0_10 = arith.constant 0 : index
    %c0_11 = arith.constant 0 : index
    %c0_12 = arith.constant 0 : index
    %12 = vector.load %arg7[%c0_10, %c0_11, %c0_12] : memref<2x8x1xf32, #tpu.memory_space<vmem>>, vector<1x8x1xf32>
    %13 = vector.shape_cast %12 : vector<1x8x1xf32> to vector<8x1xf32>
    %cst_13 = arith.constant dense<0xFF800000> : vector<8xf32>
    %14 = vector.multi_reduction <maximumf>, %11, %cst_13 [1] : vector<8x8xf32> to vector<8xf32>
    %15 = vector.shape_cast %14 : vector<8xf32> to vector<8x1xf32>
    %16 = arith.maximumf %13, %15 : vector<8x1xf32>
    %17 = arith.subf %13, %16 : vector<8x1xf32>
    %18 = math.exp %17 : vector<8x1xf32>
    %19 = vector.broadcast %16 : vector<8x1xf32> to vector<8x8xf32>
    %20 = arith.subf %11, %19 : vector<8x8xf32>
    %21 = math.exp %20 : vector<8x8xf32>
    %c0_14 = arith.constant 0 : index
    %c0_15 = arith.constant 0 : index
    %c0_16 = arith.constant 0 : index
    %22 = vector.load %arg8[%c0_14, %c0_15, %c0_16] : memref<2x8x1xf32, #tpu.memory_space<vmem>>, vector<1x8x1xf32>
    %23 = vector.shape_cast %22 : vector<1x8x1xf32> to vector<8x1xf32>
    %24 = arith.mulf %18, %23 : vector<8x1xf32>
    %cst_17 = arith.constant dense<0.000000e+00> : vector<8xf32>
    %25 = vector.multi_reduction <add>, %21, %cst_17 [1] : vector<8x8xf32> to vector<8xf32>
    %26 = vector.shape_cast %25 : vector<8xf32> to vector<8x1xf32>
    %27 = arith.addf %24, %26 : vector<8x1xf32>
    %c0_18 = arith.constant 0 : index
    %c0_19 = arith.constant 0 : index
    %c0_20 = arith.constant 0 : index
    %28 = vector.load %arg8[%c0_18, %c0_19, %c0_20] : memref<2x8x1xf32, #tpu.memory_space<vmem>>, vector<1x8x1xf32>
    %29 = vector.shape_cast %28 : vector<1x8x1xf32> to vector<8x1xf32>
    %30 = vector.shape_cast %27 : vector<8x1xf32> to vector<1x8x1xf32>
    tpu.vector_store %arg8[%c0_18, %c0_19, %c0_20], %30 {strides = array<i32>} : memref<2x8x1xf32, #tpu.memory_space<vmem>>, vector<1x8x1xf32>,
    %c0_21 = arith.constant 0 : index
    %c0_22 = arith.constant 0 : index
    %c0_23 = arith.constant 0 : index
    %31 = vector.load %arg9[%c0_21, %c0_22, %c0_23] : memref<2x8x64xf32, #tpu.memory_space<vmem>>, vector<1x8x64xf32>
    %32 = vector.shape_cast %31 : vector<1x8x64xf32> to vector<8x64xf32>
    %33 = vector.broadcast %18 : vector<8x1xf32> to vector<8x64xf32>
    %34 = arith.mulf %33, %32 : vector<8x64xf32>
    %cst_24 = arith.constant dense<0.000000e+00> : vector<8x64xf32>
    %35 = tpu.matmul %21, %8, %cst_24 {dimension_numbers = #tpu.dot_dimension_numbers<[1], [0], [0], [1], [0, 0, 1, 1], [], []>} : vector<8x8xf32>, vector<8x64xf32>, vector<8x64xf32> -> vector<8x64xf32>
    %36 = arith.addf %34, %35 : vector<8x64xf32>
    %c0_25 = arith.constant 0 : index
    %c0_26 = arith.constant 0 : index
    %c0_27 = arith.constant 0 : index
    %37 = vector.load %arg9[%c0_25, %c0_26, %c0_27] : memref<2x8x64xf32, #tpu.memory_space<vmem>>, vector<1x8x64xf32>
    %38 = vector.shape_cast %37 : vector<1x8x64xf32> to vector<8x64xf32>
    %39 = vector.shape_cast %36 : vector<8x64xf32> to vector<1x8x64xf32>
    tpu.vector_store %arg9[%c0_25, %c0_26, %c0_27], %39 {strides = array<i32>} : memref<2x8x64xf32, #tpu.memory_space<vmem>>, vector<1x8x64xf32>,
    %c0_28 = arith.constant 0 : index
    %c0_29 = arith.constant 0 : index
    %c0_30 = arith.constant 0 : index
    %40 = vector.load %arg7[%c0_28, %c0_29, %c0_30] : memref<2x8x1xf32, #tpu.memory_space<vmem>>, vector<1x8x1xf32>
    %41 = vector.shape_cast %40 : vector<1x8x1xf32> to vector<8x1xf32>
    %42 = vector.shape_cast %16 : vector<8x1xf32> to vector<1x8x1xf32>
    tpu.vector_store %arg7[%c0_28, %c0_29, %c0_30], %42 {strides = array<i32>} : memref<2x8x1xf32, #tpu.memory_space<vmem>>, vector<1x8x1xf32>,
    %c0_31 = arith.constant 0 : index
    %c0_32 = arith.constant 0 : index
    %c64 = arith.constant 64 : index
    %43 = vector.load %arg3[%c0_31, %c0_32, %c64] : memref<1x8x128xf32, #tpu.memory_space<vmem>>, vector<1x8x64xf32>
    %44 = vector.shape_cast %43 : vector<1x8x64xf32> to vector<8x64xf32>
    %c0_33 = arith.constant 0 : index
    %c0_34 = arith.constant 0 : index
    %c64_35 = arith.constant 64 : index
    %45 = vector.load %arg4[%c0_33, %c0_34, %c64_35] : memref<1x8x128xf32, #tpu.memory_space<vmem>>, vector<1x8x64xf32>
    %46 = vector.shape_cast %45 : vector<1x8x64xf32> to vector<8x64xf32>
    %c0_36 = arith.constant 0 : index
    %c0_37 = arith.constant 0 : index
    %c64_38 = arith.constant 64 : index
    %47 = vector.load %arg5[%c0_36, %c0_37, %c64_38] : memref<1x8x128xf32, #tpu.memory_space<vmem>>, vector<1x8x64xf32>
    %48 = vector.shape_cast %47 : vector<1x8x64xf32> to vector<8x64xf32>
    %cst_39 = arith.constant dense<0.000000e+00> : vector<8x8xf32>
    %49 = tpu.matmul %44, %46, %cst_39 {dimension_numbers = #tpu.dot_dimension_numbers<[1], [1], [0], [0], [0, 0, 1, 0], [], []>} : vector<8x64xf32>, vector<8x64xf32>, vector<8x8xf32> -> vector<8x8xf32>
    %cst_40 = arith.constant 1.250000e-01 : f32
    %50 = vector.broadcast %cst_40 : f32 to vector<8x8xf32>
    %51 = arith.mulf %49, %50 : vector<8x8xf32>
    %c1 = arith.constant 1 : index
    %c0_41 = arith.constant 0 : index
    %c0_42 = arith.constant 0 : index
    %52 = vector.load %arg7[%c1, %c0_41, %c0_42] : memref<2x8x1xf32, #tpu.memory_space<vmem>>, vector<1x8x1xf32>
    %53 = vector.shape_cast %52 : vector<1x8x1xf32> to vector<8x1xf32>
    %cst_43 = arith.constant dense<0xFF800000> : vector<8xf32>
    %54 = vector.multi_reduction <maximumf>, %51, %cst_43 [1] : vector<8x8xf32> to vector<8xf32>
    %55 = vector.shape_cast %54 : vector<8xf32> to vector<8x1xf32>
    %56 = arith.maximumf %53, %55 : vector<8x1xf32>
    %57 = arith.subf %53, %56 : vector<8x1xf32>
    %58 = math.exp %57 : vector<8x1xf32>
    %59 = vector.broadcast %56 : vector<8x1xf32> to vector<8x8xf32>
    %60 = arith.subf %51, %59 : vector<8x8xf32>
    %61 = math.exp %60 : vector<8x8xf32>
    %c1_44 = arith.constant 1 : index
    %c0_45 = arith.constant 0 : index
    %c0_46 = arith.constant 0 : index
    %62 = vector.load %arg8[%c1_44, %c0_45, %c0_46] : memref<2x8x1xf32, #tpu.memory_space<vmem>>, vector<1x8x1xf32>
    %63 = vector.shape_cast %62 : vector<1x8x1xf32> to vector<8x1xf32>
    %64 = arith.mulf %58, %63 : vector<8x1xf32>
    %cst_47 = arith.constant dense<0.000000e+00> : vector<8xf32>
    %65 = vector.multi_reduction <add>, %61, %cst_47 [1] : vector<8x8xf32> to vector<8xf32>
    %66 = vector.shape_cast %65 : vector<8xf32> to vector<8x1xf32>
    %67 = arith.addf %64, %66 : vector<8x1xf32>
    %c1_48 = arith.constant 1 : index
    %c0_49 = arith.constant 0 : index
    %c0_50 = arith.constant 0 : index
    %68 = vector.load %arg8[%c1_48, %c0_49, %c0_50] : memref<2x8x1xf32, #tpu.memory_space<vmem>>, vector<1x8x1xf32>
    %69 = vector.shape_cast %68 : vector<1x8x1xf32> to vector<8x1xf32>
    %70 = vector.shape_cast %67 : vector<8x1xf32> to vector<1x8x1xf32>
    tpu.vector_store %arg8[%c1_48, %c0_49, %c0_50], %70 {strides = array<i32>} : memref<2x8x1xf32, #tpu.memory_space<vmem>>, vector<1x8x1xf32>,
    %c1_51 = arith.constant 1 : index
    %c0_52 = arith.constant 0 : index
    %c0_53 = arith.constant 0 : index
    %71 = vector.load %arg9[%c1_51, %c0_52, %c0_53] : memref<2x8x64xf32, #tpu.memory_space<vmem>>, vector<1x8x64xf32>
    %72 = vector.shape_cast %71 : vector<1x8x64xf32> to vector<8x64xf32>
    %73 = vector.broadcast %58 : vector<8x1xf32> to vector<8x64xf32>
    %74 = arith.mulf %73, %72 : vector<8x64xf32>
    %cst_54 = arith.constant dense<0.000000e+00> : vector<8x64xf32>
    %75 = tpu.matmul %61, %48, %cst_54 {dimension_numbers = #tpu.dot_dimension_numbers<[1], [0], [0], [1], [0, 0, 1, 1], [], []>} : vector<8x8xf32>, vector<8x64xf32>, vector<8x64xf32> -> vector<8x64xf32>
    %76 = arith.addf %74, %75 : vector<8x64xf32>
    %c1_55 = arith.constant 1 : index
    %c0_56 = arith.constant 0 : index
    %c0_57 = arith.constant 0 : index
    %77 = vector.load %arg9[%c1_55, %c0_56, %c0_57] : memref<2x8x64xf32, #tpu.memory_space<vmem>>, vector<1x8x64xf32>
    %78 = vector.shape_cast %77 : vector<1x8x64xf32> to vector<8x64xf32>
    %79 = vector.shape_cast %76 : vector<8x64xf32> to vector<1x8x64xf32>
    tpu.vector_store %arg9[%c1_55, %c0_56, %c0_57], %79 {strides = array<i32>} : memref<2x8x64xf32, #tpu.memory_space<vmem>>, vector<1x8x64xf32>,
    %c1_58 = arith.constant 1 : index
    %c0_59 = arith.constant 0 : index
    %c0_60 = arith.constant 0 : index
    %80 = vector.load %arg7[%c1_58, %c0_59, %c0_60] : memref<2x8x1xf32, #tpu.memory_space<vmem>>, vector<1x8x1xf32>
    %81 = vector.shape_cast %80 : vector<1x8x1xf32> to vector<8x1xf32>
    %82 = vector.shape_cast %56 : vector<8x1xf32> to vector<1x8x1xf32>
    tpu.vector_store %arg7[%c1_58, %c0_59, %c0_60], %82 {strides = array<i32>} : memref<2x8x1xf32, #tpu.memory_space<vmem>>, vector<1x8x1xf32>,
    %c0_i32_61 = arith.constant 0 : i32
    %83 = arith.cmpi eq, %arg2, %c0_i32_61 : i32
    %84 = arith.extui %83 : i1 to i32
    %c0_i32_62 = arith.constant 0 : i32
    %85 = arith.cmpi ne, %84, %c0_i32_62 : i32
    scf.if %85 {
      %c0_63 = arith.constant 0 : index
      %c0_64 = arith.constant 0 : index
      %c0_65 = arith.constant 0 : index
      %86 = vector.load %arg9[%c0_63, %c0_64, %c0_65] : memref<2x8x64xf32, #tpu.memory_space<vmem>>, vector<1x8x64xf32>
      %87 = vector.shape_cast %86 : vector<1x8x64xf32> to vector<8x64xf32>
      %c0_66 = arith.constant 0 : index
      %c0_67 = arith.constant 0 : index
      %c0_68 = arith.constant 0 : index
      %88 = vector.load %arg8[%c0_66, %c0_67, %c0_68] : memref<2x8x1xf32, #tpu.memory_space<vmem>>, vector<1x8x1xf32>
      %89 = vector.shape_cast %88 : vector<1x8x1xf32> to vector<8x1xf32>
      %90 = tpu.reciprocal %89 {approx = true} : vector<8x1xf32> -> vector<8x1xf32>
      %91 = vector.broadcast %90 : vector<8x1xf32> to vector<8x64xf32>
      %92 = arith.mulf %87, %91 : vector<8x64xf32>
      %c1_69 = arith.constant 1 : index
      %c0_70 = arith.constant 0 : index
      %c0_71 = arith.constant 0 : index
      %93 = vector.load %arg9[%c1_69, %c0_70, %c0_71] : memref<2x8x64xf32, #tpu.memory_space<vmem>>, vector<1x8x64xf32>
      %94 = vector.shape_cast %93 : vector<1x8x64xf32> to vector<8x64xf32>
      %c1_72 = arith.constant 1 : index
      %c0_73 = arith.constant 0 : index
      %c0_74 = arith.constant 0 : index
      %95 = vector.load %arg8[%c1_72, %c0_73, %c0_74] : memref<2x8x1xf32, #tpu.memory_space<vmem>>, vector<1x8x1xf32>
      %96 = vector.shape_cast %95 : vector<1x8x1xf32> to vector<8x1xf32>
      %97 = tpu.reciprocal %96 {approx = true} : vector<8x1xf32> -> vector<8x1xf32>
      %98 = vector.broadcast %97 : vector<8x1xf32> to vector<8x64xf32>
      %99 = arith.mulf %94, %98 : vector<8x64xf32>
      %100 = tpu.concatenate %92, %99 in 1 : vector<8x64xf32>, vector<8x64xf32> -> vector<8x128xf32>
      %c0_75 = arith.constant 0 : index
      %c0_76 = arith.constant 0 : index
      %c0_77 = arith.constant 0 : index
      %101 = vector.load %arg6[%c0_75, %c0_76, %c0_77] : memref<1x8x128xf32, #tpu.memory_space<vmem>>, vector<1x8x128xf32>
      %102 = vector.shape_cast %101 : vector<1x8x128xf32> to vector<8x128xf32>
      %103 = vector.shape_cast %100 : vector<8x128xf32> to vector<1x8x128xf32>
      tpu.vector_store %arg6[%c0_75, %c0_76, %c0_77], %103 {strides = array<i32>} : memref<1x8x128xf32, #tpu.memory_space<vmem>>, vector<1x8x128xf32>,
    } else {
    }
    return
  }
  func.func @transform_0(%arg0: i32, %arg1: i32, %arg2: i32) -> (i32, i32, i32) {
    %c0_i32 = arith.constant 0 : i32
    %c0_i32_0 = arith.constant 0 : i32
    return %arg0, %c0_i32, %arg1 : i32, i32, i32
  }
  func.func @transform_1(%arg0: i32, %arg1: i32, %arg2: i32) -> (i32, i32, i32) {
    %c0_i32 = arith.constant 0 : i32
    return %arg0, %arg2, %arg1 : i32, i32, i32
  }
  func.func @transform_2(%arg0: i32, %arg1: i32, %arg2: i32) -> (i32, i32, i32) {
    %c0_i32 = arith.constant 0 : i32
    return %arg0, %arg2, %arg1 : i32, i32, i32
  }
  func.func @transform_3(%arg0: i32, %arg1: i32, %arg2: i32) -> (i32, i32, i32) {
    %c0_i32 = arith.constant 0 : i32
    %c0_i32_0 = arith.constant 0 : i32
    return %arg0, %c0_i32, %arg1 : i32, i32, i32
  }
}

module attributes {stable_mosaic.version = 11 : i64} {
  func.func @_ln_qkv_kernel(%arg0: i32, %arg1: memref<8x128xf32, #tpu.memory_space<vmem>>, %arg2: memref<1x128xf32, #tpu.memory_space<vmem>>, %arg3: memref<1x128xf32, #tpu.memory_space<vmem>>, %arg4: memref<128x128xf32, #tpu.memory_space<vmem>>, %arg5: memref<128x128xf32, #tpu.memory_space<vmem>>, %arg6: memref<128x128xf32, #tpu.memory_space<vmem>>, %arg7: memref<8x128xf32, #tpu.memory_space<vmem>>, %arg8: memref<8x128xf32, #tpu.memory_space<vmem>>, %arg9: memref<8x128xf32, #tpu.memory_space<vmem>>) attributes {dimension_semantics = [#tpu.dimension_semantics<parallel>], iteration_bounds = array<i64: 2>, scalar_prefetch = 0 : i64, scratch_operands = 0 : i64, tpu.core_type = #tpu.core_type<tc>, window_params = [{transform_indices = @transform_0, window_bounds = array<i64: 8, 128>}, {pipeline_mode = #tpu.pipeline_mode<synchronous>, transform_indices = @transform_1, window_bounds = array<i64: 1, 128>}, {pipeline_mode = #tpu.pipeline_mode<synchronous>, transform_indices = @transform_2, window_bounds = array<i64: 1, 128>}, {pipeline_mode = #tpu.pipeline_mode<synchronous>, transform_indices = @transform_3, window_bounds = array<i64: 128, 128>}, {pipeline_mode = #tpu.pipeline_mode<synchronous>, transform_indices = @transform_4, window_bounds = array<i64: 128, 128>}, {pipeline_mode = #tpu.pipeline_mode<synchronous>, transform_indices = @transform_5, window_bounds = array<i64: 128, 128>}, {transform_indices = @transform_6, window_bounds = array<i64: 8, 128>}, {transform_indices = @transform_7, window_bounds = array<i64: 8, 128>}, {transform_indices = @transform_8, window_bounds = array<i64: 8, 128>}]} {
    %c0 = arith.constant 0 : index
    %c0_0 = arith.constant 0 : index
    %0 = vector.load %arg1[%c0, %c0_0] : memref<8x128xf32, #tpu.memory_space<vmem>>, vector<8x128xf32>
    %cst = arith.constant dense<0.000000e+00> : vector<8xf32>
    %1 = vector.multi_reduction <add>, %0, %cst [1] : vector<8x128xf32> to vector<8xf32>
    %2 = vector.shape_cast %1 : vector<8xf32> to vector<8x1xf32>
    %cst_1 = arith.constant 1.280000e+02 : f32
    %3 = vector.broadcast %cst_1 : f32 to vector<8x1xf32>
    %4 = arith.divf %2, %3 : vector<8x1xf32>
    %5 = vector.broadcast %4 : vector<8x1xf32> to vector<8x128xf32>
    %6 = arith.subf %0, %5 : vector<8x128xf32>
    %7 = arith.mulf %6, %6 : vector<8x128xf32>
    %cst_2 = arith.constant dense<0.000000e+00> : vector<8xf32>
    %8 = vector.multi_reduction <add>, %7, %cst_2 [1] : vector<8x128xf32> to vector<8xf32>
    %9 = vector.shape_cast %8 : vector<8xf32> to vector<8x1xf32>
    %cst_3 = arith.constant 1.280000e+02 : f32
    %10 = vector.broadcast %cst_3 : f32 to vector<8x1xf32>
    %11 = arith.divf %9, %10 : vector<8x1xf32>
    %cst_4 = arith.constant 9.99999974E-6 : f32
    %12 = vector.broadcast %cst_4 : f32 to vector<8x1xf32>
    %13 = arith.addf %11, %12 : vector<8x1xf32>
    %14 = math.rsqrt %13 : vector<8x1xf32>
    %15 = vector.broadcast %14 : vector<8x1xf32> to vector<8x128xf32>
    %16 = arith.mulf %6, %15 : vector<8x128xf32>
    %c0_5 = arith.constant 0 : index
    %c0_6 = arith.constant 0 : index
    %17 = vector.load %arg2[%c0_5, %c0_6] : memref<1x128xf32, #tpu.memory_space<vmem>>, vector<1x128xf32>
    %18 = vector.broadcast %17 : vector<1x128xf32> to vector<8x128xf32>
    %19 = arith.mulf %16, %18 : vector<8x128xf32>
    %c0_7 = arith.constant 0 : index
    %c0_8 = arith.constant 0 : index
    %20 = vector.load %arg3[%c0_7, %c0_8] : memref<1x128xf32, #tpu.memory_space<vmem>>, vector<1x128xf32>
    %21 = vector.broadcast %20 : vector<1x128xf32> to vector<8x128xf32>
    %22 = arith.addf %19, %21 : vector<8x128xf32>
    %c0_9 = arith.constant 0 : index
    %c0_10 = arith.constant 0 : index
    %23 = vector.load %arg4[%c0_9, %c0_10] : memref<128x128xf32, #tpu.memory_space<vmem>>, vector<128x128xf32>
    %cst_11 = arith.constant dense<0.000000e+00> : vector<8x128xf32>
    %24 = tpu.matmul %22, %23, %cst_11 {dimension_numbers = #tpu.dot_dimension_numbers<[1], [0], [0], [1], [0, 0, 1, 1], [], []>} : vector<8x128xf32>, vector<128x128xf32>, vector<8x128xf32> -> vector<8x128xf32>
    %c0_12 = arith.constant 0 : index
    %c0_13 = arith.constant 0 : index
    %25 = vector.load %arg7[%c0_12, %c0_13] : memref<8x128xf32, #tpu.memory_space<vmem>>, vector<8x128xf32>
    tpu.vector_store %arg7[%c0_12, %c0_13], %24 {strides = array<i32>} : memref<8x128xf32, #tpu.memory_space<vmem>>, vector<8x128xf32>,
    %c0_14 = arith.constant 0 : index
    %c0_15 = arith.constant 0 : index
    %26 = vector.load %arg5[%c0_14, %c0_15] : memref<128x128xf32, #tpu.memory_space<vmem>>, vector<128x128xf32>
    %cst_16 = arith.constant dense<0.000000e+00> : vector<8x128xf32>
    %27 = tpu.matmul %22, %26, %cst_16 {dimension_numbers = #tpu.dot_dimension_numbers<[1], [0], [0], [1], [0, 0, 1, 1], [], []>} : vector<8x128xf32>, vector<128x128xf32>, vector<8x128xf32> -> vector<8x128xf32>
    %c0_17 = arith.constant 0 : index
    %c0_18 = arith.constant 0 : index
    %28 = vector.load %arg8[%c0_17, %c0_18] : memref<8x128xf32, #tpu.memory_space<vmem>>, vector<8x128xf32>
    tpu.vector_store %arg8[%c0_17, %c0_18], %27 {strides = array<i32>} : memref<8x128xf32, #tpu.memory_space<vmem>>, vector<8x128xf32>,
    %c0_19 = arith.constant 0 : index
    %c0_20 = arith.constant 0 : index
    %29 = vector.load %arg6[%c0_19, %c0_20] : memref<128x128xf32, #tpu.memory_space<vmem>>, vector<128x128xf32>
    %cst_21 = arith.constant dense<0.000000e+00> : vector<8x128xf32>
    %30 = tpu.matmul %22, %29, %cst_21 {dimension_numbers = #tpu.dot_dimension_numbers<[1], [0], [0], [1], [0, 0, 1, 1], [], []>} : vector<8x128xf32>, vector<128x128xf32>, vector<8x128xf32> -> vector<8x128xf32>
    %c0_22 = arith.constant 0 : index
    %c0_23 = arith.constant 0 : index
    %31 = vector.load %arg9[%c0_22, %c0_23] : memref<8x128xf32, #tpu.memory_space<vmem>>, vector<8x128xf32>
    tpu.vector_store %arg9[%c0_22, %c0_23], %30 {strides = array<i32>} : memref<8x128xf32, #tpu.memory_space<vmem>>, vector<8x128xf32>,
    return
  }
  func.func @transform_0(%arg0: i32) -> (i32, i32) {
    %c0_i32 = arith.constant 0 : i32
    %c0_i32_0 = arith.constant 0 : i32
    return %arg0, %c0_i32 : i32, i32
  }
  func.func @transform_1(%arg0: i32) -> (i32, i32) {
    %c0_i32 = arith.constant 0 : i32
    %c0_i32_0 = arith.constant 0 : i32
    %c0_i32_1 = arith.constant 0 : i32
    return %c0_i32, %c0_i32_0 : i32, i32
  }
  func.func @transform_2(%arg0: i32) -> (i32, i32) {
    %c0_i32 = arith.constant 0 : i32
    %c0_i32_0 = arith.constant 0 : i32
    %c0_i32_1 = arith.constant 0 : i32
    return %c0_i32, %c0_i32_0 : i32, i32
  }
  func.func @transform_3(%arg0: i32) -> (i32, i32) {
    %c0_i32 = arith.constant 0 : i32
    %c0_i32_0 = arith.constant 0 : i32
    %c0_i32_1 = arith.constant 0 : i32
    return %c0_i32, %c0_i32_0 : i32, i32
  }
  func.func @transform_4(%arg0: i32) -> (i32, i32) {
    %c0_i32 = arith.constant 0 : i32
    %c0_i32_0 = arith.constant 0 : i32
    %c0_i32_1 = arith.constant 0 : i32
    return %c0_i32, %c0_i32_0 : i32, i32
  }
  func.func @transform_5(%arg0: i32) -> (i32, i32) {
    %c0_i32 = arith.constant 0 : i32
    %c0_i32_0 = arith.constant 0 : i32
    %c0_i32_1 = arith.constant 0 : i32
    return %c0_i32, %c0_i32_0 : i32, i32
  }
  func.func @transform_6(%arg0: i32) -> (i32, i32) {
    %c0_i32 = arith.constant 0 : i32
    %c0_i32_0 = arith.constant 0 : i32
    return %arg0, %c0_i32 : i32, i32
  }
  func.func @transform_7(%arg0: i32) -> (i32, i32) {
    %c0_i32 = arith.constant 0 : i32
    %c0_i32_0 = arith.constant 0 : i32
    return %arg0, %c0_i32 : i32, i32
  }
  func.func @transform_8(%arg0: i32) -> (i32, i32) {
    %c0_i32 = arith.constant 0 : i32
    %c0_i32_0 = arith.constant 0 : i32
    return %arg0, %c0_i32 : i32, i32
  }
}

module attributes {stable_mosaic.version = 11 : i64} {
  func.func @_out_proj_res_kernel(%arg0: i32, %arg1: memref<8x128xf32, #tpu.memory_space<vmem>>, %arg2: memref<8x128xf32, #tpu.memory_space<vmem>>, %arg3: memref<128x128xf32, #tpu.memory_space<vmem>>, %arg4: memref<1x128xf32, #tpu.memory_space<vmem>>, %arg5: memref<8x128xf32, #tpu.memory_space<vmem>>) attributes {dimension_semantics = [#tpu.dimension_semantics<parallel>], iteration_bounds = array<i64: 2>, scalar_prefetch = 0 : i64, scratch_operands = 0 : i64, tpu.core_type = #tpu.core_type<tc>, window_params = [{transform_indices = @transform_0, window_bounds = array<i64: 8, 128>}, {transform_indices = @transform_1, window_bounds = array<i64: 8, 128>}, {pipeline_mode = #tpu.pipeline_mode<synchronous>, transform_indices = @transform_2, window_bounds = array<i64: 128, 128>}, {pipeline_mode = #tpu.pipeline_mode<synchronous>, transform_indices = @transform_3, window_bounds = array<i64: 1, 128>}, {transform_indices = @transform_4, window_bounds = array<i64: 8, 128>}]} {
    %c0 = arith.constant 0 : index
    %c0_0 = arith.constant 0 : index
    %0 = vector.load %arg1[%c0, %c0_0] : memref<8x128xf32, #tpu.memory_space<vmem>>, vector<8x128xf32>
    %c0_1 = arith.constant 0 : index
    %c0_2 = arith.constant 0 : index
    %1 = vector.load %arg3[%c0_1, %c0_2] : memref<128x128xf32, #tpu.memory_space<vmem>>, vector<128x128xf32>
    %cst = arith.constant dense<0.000000e+00> : vector<8x128xf32>
    %2 = tpu.matmul %0, %1, %cst {dimension_numbers = #tpu.dot_dimension_numbers<[1], [0], [0], [1], [0, 0, 1, 1], [], []>} : vector<8x128xf32>, vector<128x128xf32>, vector<8x128xf32> -> vector<8x128xf32>
    %c0_3 = arith.constant 0 : index
    %c0_4 = arith.constant 0 : index
    %3 = vector.load %arg4[%c0_3, %c0_4] : memref<1x128xf32, #tpu.memory_space<vmem>>, vector<1x128xf32>
    %4 = vector.broadcast %3 : vector<1x128xf32> to vector<8x128xf32>
    %5 = arith.addf %2, %4 : vector<8x128xf32>
    %c0_5 = arith.constant 0 : index
    %c0_6 = arith.constant 0 : index
    %6 = vector.load %arg2[%c0_5, %c0_6] : memref<8x128xf32, #tpu.memory_space<vmem>>, vector<8x128xf32>
    %7 = arith.addf %5, %6 : vector<8x128xf32>
    %c0_7 = arith.constant 0 : index
    %c0_8 = arith.constant 0 : index
    %8 = vector.load %arg5[%c0_7, %c0_8] : memref<8x128xf32, #tpu.memory_space<vmem>>, vector<8x128xf32>
    tpu.vector_store %arg5[%c0_7, %c0_8], %7 {strides = array<i32>} : memref<8x128xf32, #tpu.memory_space<vmem>>, vector<8x128xf32>,
    return
  }
  func.func @transform_0(%arg0: i32) -> (i32, i32) {
    %c0_i32 = arith.constant 0 : i32
    %c0_i32_0 = arith.constant 0 : i32
    return %arg0, %c0_i32 : i32, i32
  }
  func.func @transform_1(%arg0: i32) -> (i32, i32) {
    %c0_i32 = arith.constant 0 : i32
    %c0_i32_0 = arith.constant 0 : i32
    return %arg0, %c0_i32 : i32, i32
  }
  func.func @transform_2(%arg0: i32) -> (i32, i32) {
    %c0_i32 = arith.constant 0 : i32
    %c0_i32_0 = arith.constant 0 : i32
    %c0_i32_1 = arith.constant 0 : i32
    return %c0_i32, %c0_i32_0 : i32, i32
  }
  func.func @transform_3(%arg0: i32) -> (i32, i32) {
    %c0_i32 = arith.constant 0 : i32
    %c0_i32_0 = arith.constant 0 : i32
    %c0_i32_1 = arith.constant 0 : i32
    return %c0_i32, %c0_i32_0 : i32, i32
  }
  func.func @transform_4(%arg0: i32) -> (i32, i32) {
    %c0_i32 = arith.constant 0 : i32
    %c0_i32_0 = arith.constant 0 : i32
    return %arg0, %c0_i32 : i32, i32
  }
}

module attributes {stable_mosaic.version = 11 : i64} {
  func.func @_out_proj_res_kernel(%arg0: i32, %arg1: memref<8x128xf32, #tpu.memory_space<vmem>>, %arg2: memref<8x128xf32, #tpu.memory_space<vmem>>, %arg3: memref<128x128xf32, #tpu.memory_space<vmem>>, %arg4: memref<1x128xf32, #tpu.memory_space<vmem>>, %arg5: memref<8x128xf32, #tpu.memory_space<vmem>>) attributes {dimension_semantics = [#tpu.dimension_semantics<parallel>], iteration_bounds = array<i64: 2>, scalar_prefetch = 0 : i64, scratch_operands = 0 : i64, tpu.core_type = #tpu.core_type<tc>, window_params = [{transform_indices = @transform_0, window_bounds = array<i64: 8, 128>}, {transform_indices = @transform_1, window_bounds = array<i64: 8, 128>}, {pipeline_mode = #tpu.pipeline_mode<synchronous>, transform_indices = @transform_2, window_bounds = array<i64: 128, 128>}, {pipeline_mode = #tpu.pipeline_mode<synchronous>, transform_indices = @transform_3, window_bounds = array<i64: 1, 128>}, {transform_indices = @transform_4, window_bounds = array<i64: 8, 128>}]} {
    %c0 = arith.constant 0 : index
    %c0_0 = arith.constant 0 : index
    %0 = vector.load %arg1[%c0, %c0_0] : memref<8x128xf32, #tpu.memory_space<vmem>>, vector<8x128xf32>
    %c0_1 = arith.constant 0 : index
    %c0_2 = arith.constant 0 : index
    %1 = vector.load %arg3[%c0_1, %c0_2] : memref<128x128xf32, #tpu.memory_space<vmem>>, vector<128x128xf32>
    %cst = arith.constant dense<0.000000e+00> : vector<8x128xf32>
    %2 = tpu.matmul %0, %1, %cst {dimension_numbers = #tpu.dot_dimension_numbers<[1], [0], [0], [1], [0, 0, 1, 1], [], []>} : vector<8x128xf32>, vector<128x128xf32>, vector<8x128xf32> -> vector<8x128xf32>
    %c0_3 = arith.constant 0 : index
    %c0_4 = arith.constant 0 : index
    %3 = vector.load %arg4[%c0_3, %c0_4] : memref<1x128xf32, #tpu.memory_space<vmem>>, vector<1x128xf32>
    %4 = vector.broadcast %3 : vector<1x128xf32> to vector<8x128xf32>
    %5 = arith.addf %2, %4 : vector<8x128xf32>
    %c0_5 = arith.constant 0 : index
    %c0_6 = arith.constant 0 : index
    %6 = vector.load %arg2[%c0_5, %c0_6] : memref<8x128xf32, #tpu.memory_space<vmem>>, vector<8x128xf32>
    %7 = arith.addf %5, %6 : vector<8x128xf32>
    %c0_7 = arith.constant 0 : index
    %c0_8 = arith.constant 0 : index
    %8 = vector.load %arg5[%c0_7, %c0_8] : memref<8x128xf32, #tpu.memory_space<vmem>>, vector<8x128xf32>
    tpu.vector_store %arg5[%c0_7, %c0_8], %7 {strides = array<i32>} : memref<8x128xf32, #tpu.memory_space<vmem>>, vector<8x128xf32>,
    return
  }
  func.func @transform_0(%arg0: i32) -> (i32, i32) {
    %c0_i32 = arith.constant 0 : i32
    %c0_i32_0 = arith.constant 0 : i32
    return %arg0, %c0_i32 : i32, i32
  }
  func.func @transform_1(%arg0: i32) -> (i32, i32) {
    %c0_i32 = arith.constant 0 : i32
    %c0_i32_0 = arith.constant 0 : i32
    return %arg0, %c0_i32 : i32, i32
  }
  func.func @transform_2(%arg0: i32) -> (i32, i32) {
    %c0_i32 = arith.constant 0 : i32
    %c0_i32_0 = arith.constant 0 : i32
    %c0_i32_1 = arith.constant 0 : i32
    return %c0_i32, %c0_i32_0 : i32, i32
  }
  func.func @transform_3(%arg0: i32) -> (i32, i32) {
    %c0_i32 = arith.constant 0 : i32
    %c0_i32_0 = arith.constant 0 : i32
    %c0_i32_1 = arith.constant 0 : i32
    return %c0_i32, %c0_i32_0 : i32, i32
  }
  func.func @transform_4(%arg0: i32) -> (i32, i32) {
    %c0_i32 = arith.constant 0 : i32
    %c0_i32_0 = arith.constant 0 : i32
    return %arg0, %c0_i32 : i32, i32
  }
}

module attributes {stable_mosaic.version = 11 : i64} {
  func.func @_kv_kernel(%arg0: i32, %arg1: memref<16x128xf32, #tpu.memory_space<vmem>>, %arg2: memref<128x128xf32, #tpu.memory_space<vmem>>, %arg3: memref<128x128xf32, #tpu.memory_space<vmem>>, %arg4: memref<16x128xf32, #tpu.memory_space<vmem>>, %arg5: memref<16x128xf32, #tpu.memory_space<vmem>>) attributes {dimension_semantics = [#tpu.dimension_semantics<parallel>], iteration_bounds = array<i64: 2>, scalar_prefetch = 0 : i64, scratch_operands = 0 : i64, tpu.core_type = #tpu.core_type<tc>, window_params = [{transform_indices = @transform_0, window_bounds = array<i64: 16, 128>}, {pipeline_mode = #tpu.pipeline_mode<synchronous>, transform_indices = @transform_1, window_bounds = array<i64: 128, 128>}, {pipeline_mode = #tpu.pipeline_mode<synchronous>, transform_indices = @transform_2, window_bounds = array<i64: 128, 128>}, {transform_indices = @transform_3, window_bounds = array<i64: 16, 128>}, {transform_indices = @transform_4, window_bounds = array<i64: 16, 128>}]} {
    %c0 = arith.constant 0 : index
    %c0_0 = arith.constant 0 : index
    %0 = vector.load %arg1[%c0, %c0_0] : memref<16x128xf32, #tpu.memory_space<vmem>>, vector<16x128xf32>
    %c0_1 = arith.constant 0 : index
    %c0_2 = arith.constant 0 : index
    %1 = vector.load %arg2[%c0_1, %c0_2] : memref<128x128xf32, #tpu.memory_space<vmem>>, vector<128x128xf32>
    %cst = arith.constant dense<0.000000e+00> : vector<16x128xf32>
    %2 = tpu.matmul %0, %1, %cst {dimension_numbers = #tpu.dot_dimension_numbers<[1], [0], [0], [1], [0, 0, 1, 1], [], []>} : vector<16x128xf32>, vector<128x128xf32>, vector<16x128xf32> -> vector<16x128xf32>
    %c0_3 = arith.constant 0 : index
    %c0_4 = arith.constant 0 : index
    %3 = vector.load %arg4[%c0_3, %c0_4] : memref<16x128xf32, #tpu.memory_space<vmem>>, vector<16x128xf32>
    tpu.vector_store %arg4[%c0_3, %c0_4], %2 {strides = array<i32>} : memref<16x128xf32, #tpu.memory_space<vmem>>, vector<16x128xf32>,
    %c0_5 = arith.constant 0 : index
    %c0_6 = arith.constant 0 : index
    %4 = vector.load %arg3[%c0_5, %c0_6] : memref<128x128xf32, #tpu.memory_space<vmem>>, vector<128x128xf32>
    %cst_7 = arith.constant dense<0.000000e+00> : vector<16x128xf32>
    %5 = tpu.matmul %0, %4, %cst_7 {dimension_numbers = #tpu.dot_dimension_numbers<[1], [0], [0], [1], [0, 0, 1, 1], [], []>} : vector<16x128xf32>, vector<128x128xf32>, vector<16x128xf32> -> vector<16x128xf32>
    %c0_8 = arith.constant 0 : index
    %c0_9 = arith.constant 0 : index
    %6 = vector.load %arg5[%c0_8, %c0_9] : memref<16x128xf32, #tpu.memory_space<vmem>>, vector<16x128xf32>
    tpu.vector_store %arg5[%c0_8, %c0_9], %5 {strides = array<i32>} : memref<16x128xf32, #tpu.memory_space<vmem>>, vector<16x128xf32>,
    return
  }
  func.func @transform_0(%arg0: i32) -> (i32, i32) {
    %c0_i32 = arith.constant 0 : i32
    %c0_i32_0 = arith.constant 0 : i32
    return %arg0, %c0_i32 : i32, i32
  }
  func.func @transform_1(%arg0: i32) -> (i32, i32) {
    %c0_i32 = arith.constant 0 : i32
    %c0_i32_0 = arith.constant 0 : i32
    %c0_i32_1 = arith.constant 0 : i32
    return %c0_i32, %c0_i32_0 : i32, i32
  }
  func.func @transform_2(%arg0: i32) -> (i32, i32) {
    %c0_i32 = arith.constant 0 : i32
    %c0_i32_0 = arith.constant 0 : i32
    %c0_i32_1 = arith.constant 0 : i32
    return %c0_i32, %c0_i32_0 : i32, i32
  }
  func.func @transform_3(%arg0: i32) -> (i32, i32) {
    %c0_i32 = arith.constant 0 : i32
    %c0_i32_0 = arith.constant 0 : i32
    return %arg0, %c0_i32 : i32, i32
  }
  func.func @transform_4(%arg0: i32) -> (i32, i32) {
    %c0_i32 = arith.constant 0 : i32
    %c0_i32_0 = arith.constant 0 : i32
    return %arg0, %c0_i32 : i32, i32
  }
}

module attributes {stable_mosaic.version = 11 : i64} {
  func.func @_ln_geglu_ffn_kernel(%arg0: i32, %arg1: memref<8x128xf32, #tpu.memory_space<vmem>>, %arg2: memref<1x128xf32, #tpu.memory_space<vmem>>, %arg3: memref<1x128xf32, #tpu.memory_space<vmem>>, %arg4: memref<128x1024xf32, #tpu.memory_space<vmem>>, %arg5: memref<1x1024xf32, #tpu.memory_space<vmem>>, %arg6: memref<512x128xf32, #tpu.memory_space<vmem>>, %arg7: memref<1x128xf32, #tpu.memory_space<vmem>>, %arg8: memref<8x128xf32, #tpu.memory_space<vmem>>) attributes {dimension_semantics = [#tpu.dimension_semantics<parallel>], iteration_bounds = array<i64: 2>, scalar_prefetch = 0 : i64, scratch_operands = 0 : i64, tpu.core_type = #tpu.core_type<tc>, window_params = [{transform_indices = @transform_0, window_bounds = array<i64: 8, 128>}, {pipeline_mode = #tpu.pipeline_mode<synchronous>, transform_indices = @transform_1, window_bounds = array<i64: 1, 128>}, {pipeline_mode = #tpu.pipeline_mode<synchronous>, transform_indices = @transform_2, window_bounds = array<i64: 1, 128>}, {pipeline_mode = #tpu.pipeline_mode<synchronous>, transform_indices = @transform_3, window_bounds = array<i64: 128, 1024>}, {pipeline_mode = #tpu.pipeline_mode<synchronous>, transform_indices = @transform_4, window_bounds = array<i64: 1, 1024>}, {pipeline_mode = #tpu.pipeline_mode<synchronous>, transform_indices = @transform_5, window_bounds = array<i64: 512, 128>}, {pipeline_mode = #tpu.pipeline_mode<synchronous>, transform_indices = @transform_6, window_bounds = array<i64: 1, 128>}, {transform_indices = @transform_7, window_bounds = array<i64: 8, 128>}]} {
    %c0 = arith.constant 0 : index
    %c0_0 = arith.constant 0 : index
    %0 = vector.load %arg1[%c0, %c0_0] : memref<8x128xf32, #tpu.memory_space<vmem>>, vector<8x128xf32>
    %cst = arith.constant dense<0.000000e+00> : vector<8xf32>
    %1 = vector.multi_reduction <add>, %0, %cst [1] : vector<8x128xf32> to vector<8xf32>
    %2 = vector.shape_cast %1 : vector<8xf32> to vector<8x1xf32>
    %cst_1 = arith.constant 1.280000e+02 : f32
    %3 = vector.broadcast %cst_1 : f32 to vector<8x1xf32>
    %4 = arith.divf %2, %3 : vector<8x1xf32>
    %5 = vector.broadcast %4 : vector<8x1xf32> to vector<8x128xf32>
    %6 = arith.subf %0, %5 : vector<8x128xf32>
    %7 = arith.mulf %6, %6 : vector<8x128xf32>
    %cst_2 = arith.constant dense<0.000000e+00> : vector<8xf32>
    %8 = vector.multi_reduction <add>, %7, %cst_2 [1] : vector<8x128xf32> to vector<8xf32>
    %9 = vector.shape_cast %8 : vector<8xf32> to vector<8x1xf32>
    %cst_3 = arith.constant 1.280000e+02 : f32
    %10 = vector.broadcast %cst_3 : f32 to vector<8x1xf32>
    %11 = arith.divf %9, %10 : vector<8x1xf32>
    %cst_4 = arith.constant 9.99999974E-6 : f32
    %12 = vector.broadcast %cst_4 : f32 to vector<8x1xf32>
    %13 = arith.addf %11, %12 : vector<8x1xf32>
    %14 = math.rsqrt %13 : vector<8x1xf32>
    %15 = vector.broadcast %14 : vector<8x1xf32> to vector<8x128xf32>
    %16 = arith.mulf %6, %15 : vector<8x128xf32>
    %c0_5 = arith.constant 0 : index
    %c0_6 = arith.constant 0 : index
    %17 = vector.load %arg2[%c0_5, %c0_6] : memref<1x128xf32, #tpu.memory_space<vmem>>, vector<1x128xf32>
    %18 = vector.broadcast %17 : vector<1x128xf32> to vector<8x128xf32>
    %19 = arith.mulf %16, %18 : vector<8x128xf32>
    %c0_7 = arith.constant 0 : index
    %c0_8 = arith.constant 0 : index
    %20 = vector.load %arg3[%c0_7, %c0_8] : memref<1x128xf32, #tpu.memory_space<vmem>>, vector<1x128xf32>
    %21 = vector.broadcast %20 : vector<1x128xf32> to vector<8x128xf32>
    %22 = arith.addf %19, %21 : vector<8x128xf32>
    %c0_9 = arith.constant 0 : index
    %c0_10 = arith.constant 0 : index
    %23 = vector.load %arg4[%c0_9, %c0_10] : memref<128x1024xf32, #tpu.memory_space<vmem>>, vector<128x1024xf32>
    %cst_11 = arith.constant dense<0.000000e+00> : vector<8x1024xf32>
    %24 = tpu.matmul %22, %23, %cst_11 {dimension_numbers = #tpu.dot_dimension_numbers<[1], [0], [0], [1], [0, 0, 1, 1], [], []>} : vector<8x128xf32>, vector<128x1024xf32>, vector<8x1024xf32> -> vector<8x1024xf32>
    %c0_12 = arith.constant 0 : index
    %c0_13 = arith.constant 0 : index
    %25 = vector.load %arg5[%c0_12, %c0_13] : memref<1x1024xf32, #tpu.memory_space<vmem>>, vector<1x1024xf32>
    %26 = vector.broadcast %25 : vector<1x1024xf32> to vector<8x1024xf32>
    %27 = arith.addf %24, %26 : vector<8x1024xf32>
    %28 = vector.extract_strided_slice %27 {offsets = [0, 0], sizes = [8, 512], strides = [1, 1]} : vector<8x1024xf32> to vector<8x512xf32>
    %29 = vector.extract_strided_slice %27 {offsets = [0, 512], sizes = [8, 512], strides = [1, 1]} : vector<8x1024xf32> to vector<8x512xf32>
    %cst_14 = arith.constant 5.000000e-01 : f32
    %30 = vector.broadcast %cst_14 : f32 to vector<8x512xf32>
    %31 = arith.mulf %30, %29 : vector<8x512xf32>
    %cst_15 = arith.constant 0.707106769 : f32
    %32 = vector.broadcast %cst_15 : f32 to vector<8x512xf32>
    %33 = arith.mulf %29, %32 : vector<8x512xf32>
    %34 = math.erf %33 : vector<8x512xf32>
    %cst_16 = arith.constant 1.000000e+00 : f32
    %35 = vector.broadcast %cst_16 : f32 to vector<8x512xf32>
    %36 = arith.addf %35, %34 : vector<8x512xf32>
    %37 = arith.mulf %31, %36 : vector<8x512xf32>
    %38 = arith.mulf %28, %37 : vector<8x512xf32>
    %c0_17 = arith.constant 0 : index
    %c0_18 = arith.constant 0 : index
    %39 = vector.load %arg6[%c0_17, %c0_18] : memref<512x128xf32, #tpu.memory_space<vmem>>, vector<512x128xf32>
    %cst_19 = arith.constant dense<0.000000e+00> : vector<8x128xf32>
    %40 = tpu.matmul %38, %39, %cst_19 {dimension_numbers = #tpu.dot_dimension_numbers<[1], [0], [0], [1], [0, 0, 1, 1], [], []>} : vector<8x512xf32>, vector<512x128xf32>, vector<8x128xf32> -> vector<8x128xf32>
    %c0_20 = arith.constant 0 : index
    %c0_21 = arith.constant 0 : index
    %41 = vector.load %arg7[%c0_20, %c0_21] : memref<1x128xf32, #tpu.memory_space<vmem>>, vector<1x128xf32>
    %42 = vector.broadcast %41 : vector<1x128xf32> to vector<8x128xf32>
    %43 = arith.addf %40, %42 : vector<8x128xf32>
    %44 = arith.addf %43, %0 : vector<8x128xf32>
    %c0_22 = arith.constant 0 : index
    %c0_23 = arith.constant 0 : index
    %45 = vector.load %arg8[%c0_22, %c0_23] : memref<8x128xf32, #tpu.memory_space<vmem>>, vector<8x128xf32>
    tpu.vector_store %arg8[%c0_22, %c0_23], %44 {strides = array<i32>} : memref<8x128xf32, #tpu.memory_space<vmem>>, vector<8x128xf32>,
    return
  }
  func.func @transform_0(%arg0: i32) -> (i32, i32) {
    %c0_i32 = arith.constant 0 : i32
    %c0_i32_0 = arith.constant 0 : i32
    return %arg0, %c0_i32 : i32, i32
  }
  func.func @transform_1(%arg0: i32) -> (i32, i32) {
    %c0_i32 = arith.constant 0 : i32
    %c0_i32_0 = arith.constant 0 : i32
    %c0_i32_1 = arith.constant 0 : i32
    return %c0_i32, %c0_i32_0 : i32, i32
  }
  func.func @transform_2(%arg0: i32) -> (i32, i32) {
    %c0_i32 = arith.constant 0 : i32
    %c0_i32_0 = arith.constant 0 : i32
    %c0_i32_1 = arith.constant 0 : i32
    return %c0_i32, %c0_i32_0 : i32, i32
  }
  func.func @transform_3(%arg0: i32) -> (i32, i32) {
    %c0_i32 = arith.constant 0 : i32
    %c0_i32_0 = arith.constant 0 : i32
    %c0_i32_1 = arith.constant 0 : i32
    return %c0_i32, %c0_i32_0 : i32, i32
  }
  func.func @transform_4(%arg0: i32) -> (i32, i32) {
    %c0_i32 = arith.constant 0 : i32
    %c0_i32_0 = arith.constant 0 : i32
    %c0_i32_1 = arith.constant 0 : i32
    return %c0_i32, %c0_i32_0 : i32, i32
  }
  func.func @transform_5(%arg0: i32) -> (i32, i32) {
    %c0_i32 = arith.constant 0 : i32
    %c0_i32_0 = arith.constant 0 : i32
    %c0_i32_1 = arith.constant 0 : i32
    return %c0_i32, %c0_i32_0 : i32, i32
  }
  func.func @transform_6(%arg0: i32) -> (i32, i32) {
    %c0_i32 = arith.constant 0 : i32
    %c0_i32_0 = arith.constant 0 : i32
    %c0_i32_1 = arith.constant 0 : i32
    return %c0_i32, %c0_i32_0 : i32, i32
  }
  func.func @transform_7(%arg0: i32) -> (i32, i32) {
    %c0_i32 = arith.constant 0 : i32
    %c0_i32_0 = arith.constant 0 : i32
    return %arg0, %c0_i32 : i32, i32
  }
}

module attributes {stable_mosaic.version = 11 : i64} {
  func.func @_flash_attn_kernel(%arg0: i32, %arg1: i32, %arg2: i32, %arg3: memref<1x8x128xf32, #tpu.memory_space<vmem>>, %arg4: memref<1x8x128xf32, #tpu.memory_space<vmem>>, %arg5: memref<1x8x128xf32, #tpu.memory_space<vmem>>, %arg6: memref<1x8x128xf32, #tpu.memory_space<vmem>>, %arg7: memref<2x8x1xf32, #tpu.memory_space<vmem>>, %arg8: memref<2x8x1xf32, #tpu.memory_space<vmem>>, %arg9: memref<2x8x64xf32, #tpu.memory_space<vmem>>) attributes {dimension_semantics = [#tpu.dimension_semantics<parallel>, #tpu.dimension_semantics<parallel>, #tpu.dimension_semantics<arbitrary>], iteration_bounds = array<i64: 2, 1, 2>, scalar_prefetch = 0 : i64, scratch_operands = 3 : i64, tpu.core_type = #tpu.core_type<tc>, window_params = [{transform_indices = @transform_0, window_bounds = array<i64: 1, 8, 128>}, {transform_indices = @transform_1, window_bounds = array<i64: 1, 8, 128>}, {transform_indices = @transform_2, window_bounds = array<i64: 1, 8, 128>}, {transform_indices = @transform_3, window_bounds = array<i64: 1, 8, 128>}]} {
    %c0_i32 = arith.constant 0 : i32
    %0 = arith.cmpi eq, %arg2, %c0_i32 : i32
    %1 = arith.extui %0 : i1 to i32
    %c0_i32_0 = arith.constant 0 : i32
    %2 = arith.cmpi ne, %1, %c0_i32_0 : i32
    scf.if %2 {
      %cst_62 = arith.constant 0xFF800000 : f32
      %86 = vector.broadcast %cst_62 : f32 to vector<2x8x1xf32>
      %c0_63 = arith.constant 0 : index
      %c0_64 = arith.constant 0 : index
      %c0_65 = arith.constant 0 : index
      %87 = vector.load %arg7[%c0_63, %c0_64, %c0_65] : memref<2x8x1xf32, #tpu.memory_space<vmem>>, vector<2x8x1xf32>
      tpu.vector_store %arg7[%c0_63, %c0_64, %c0_65], %86 {strides = array<i32>} : memref<2x8x1xf32, #tpu.memory_space<vmem>>, vector<2x8x1xf32>,
      %cst_66 = arith.constant 0.000000e+00 : f32
      %88 = vector.broadcast %cst_66 : f32 to vector<2x8x1xf32>
      %c0_67 = arith.constant 0 : index
      %c0_68 = arith.constant 0 : index
      %c0_69 = arith.constant 0 : index
      %89 = vector.load %arg8[%c0_67, %c0_68, %c0_69] : memref<2x8x1xf32, #tpu.memory_space<vmem>>, vector<2x8x1xf32>
      tpu.vector_store %arg8[%c0_67, %c0_68, %c0_69], %88 {strides = array<i32>} : memref<2x8x1xf32, #tpu.memory_space<vmem>>, vector<2x8x1xf32>,
      %cst_70 = arith.constant 0.000000e+00 : f32
      %90 = vector.broadcast %cst_70 : f32 to vector<2x8x64xf32>
      %c0_71 = arith.constant 0 : index
      %c0_72 = arith.constant 0 : index
      %c0_73 = arith.constant 0 : index
      %91 = vector.load %arg9[%c0_71, %c0_72, %c0_73] : memref<2x8x64xf32, #tpu.memory_space<vmem>>, vector<2x8x64xf32>
      tpu.vector_store %arg9[%c0_71, %c0_72, %c0_73], %90 {strides = array<i32>} : memref<2x8x64xf32, #tpu.memory_space<vmem>>, vector<2x8x64xf32>,
    } else {
    }
    %c0 = arith.constant 0 : index
    %c0_1 = arith.constant 0 : index
    %c0_2 = arith.constant 0 : index
    %3 = vector.load %arg3[%c0, %c0_1, %c0_2] : memref<1x8x128xf32, #tpu.memory_space<vmem>>, vector<1x8x64xf32>
    %4 = vector.shape_cast %3 : vector<1x8x64xf32> to vector<8x64xf32>
    %c0_3 = arith.constant 0 : index
    %c0_4 = arith.constant 0 : index
    %c0_5 = arith.constant 0 : index
    %5 = vector.load %arg4[%c0_3, %c0_4, %c0_5] : memref<1x8x128xf32, #tpu.memory_space<vmem>>, vector<1x8x64xf32>
    %6 = vector.shape_cast %5 : vector<1x8x64xf32> to vector<8x64xf32>
    %c0_6 = arith.constant 0 : index
    %c0_7 = arith.constant 0 : index
    %c0_8 = arith.constant 0 : index
    %7 = vector.load %arg5[%c0_6, %c0_7, %c0_8] : memref<1x8x128xf32, #tpu.memory_space<vmem>>, vector<1x8x64xf32>
    %8 = vector.shape_cast %7 : vector<1x8x64xf32> to vector<8x64xf32>
    %cst = arith.constant dense<0.000000e+00> : vector<8x8xf32>
    %9 = tpu.matmul %4, %6, %cst {dimension_numbers = #tpu.dot_dimension_numbers<[1], [1], [0], [0], [0, 0, 1, 0], [], []>} : vector<8x64xf32>, vector<8x64xf32>, vector<8x8xf32> -> vector<8x8xf32>
    %cst_9 = arith.constant 1.250000e-01 : f32
    %10 = vector.broadcast %cst_9 : f32 to vector<8x8xf32>
    %11 = arith.mulf %9, %10 : vector<8x8xf32>
    %c0_10 = arith.constant 0 : index
    %c0_11 = arith.constant 0 : index
    %c0_12 = arith.constant 0 : index
    %12 = vector.load %arg7[%c0_10, %c0_11, %c0_12] : memref<2x8x1xf32, #tpu.memory_space<vmem>>, vector<1x8x1xf32>
    %13 = vector.shape_cast %12 : vector<1x8x1xf32> to vector<8x1xf32>
    %cst_13 = arith.constant dense<0xFF800000> : vector<8xf32>
    %14 = vector.multi_reduction <maximumf>, %11, %cst_13 [1] : vector<8x8xf32> to vector<8xf32>
    %15 = vector.shape_cast %14 : vector<8xf32> to vector<8x1xf32>
    %16 = arith.maximumf %13, %15 : vector<8x1xf32>
    %17 = arith.subf %13, %16 : vector<8x1xf32>
    %18 = math.exp %17 : vector<8x1xf32>
    %19 = vector.broadcast %16 : vector<8x1xf32> to vector<8x8xf32>
    %20 = arith.subf %11, %19 : vector<8x8xf32>
    %21 = math.exp %20 : vector<8x8xf32>
    %c0_14 = arith.constant 0 : index
    %c0_15 = arith.constant 0 : index
    %c0_16 = arith.constant 0 : index
    %22 = vector.load %arg8[%c0_14, %c0_15, %c0_16] : memref<2x8x1xf32, #tpu.memory_space<vmem>>, vector<1x8x1xf32>
    %23 = vector.shape_cast %22 : vector<1x8x1xf32> to vector<8x1xf32>
    %24 = arith.mulf %18, %23 : vector<8x1xf32>
    %cst_17 = arith.constant dense<0.000000e+00> : vector<8xf32>
    %25 = vector.multi_reduction <add>, %21, %cst_17 [1] : vector<8x8xf32> to vector<8xf32>
    %26 = vector.shape_cast %25 : vector<8xf32> to vector<8x1xf32>
    %27 = arith.addf %24, %26 : vector<8x1xf32>
    %c0_18 = arith.constant 0 : index
    %c0_19 = arith.constant 0 : index
    %c0_20 = arith.constant 0 : index
    %28 = vector.load %arg8[%c0_18, %c0_19, %c0_20] : memref<2x8x1xf32, #tpu.memory_space<vmem>>, vector<1x8x1xf32>
    %29 = vector.shape_cast %28 : vector<1x8x1xf32> to vector<8x1xf32>
    %30 = vector.shape_cast %27 : vector<8x1xf32> to vector<1x8x1xf32>
    tpu.vector_store %arg8[%c0_18, %c0_19, %c0_20], %30 {strides = array<i32>} : memref<2x8x1xf32, #tpu.memory_space<vmem>>, vector<1x8x1xf32>,
    %c0_21 = arith.constant 0 : index
    %c0_22 = arith.constant 0 : index
    %c0_23 = arith.constant 0 : index
    %31 = vector.load %arg9[%c0_21, %c0_22, %c0_23] : memref<2x8x64xf32, #tpu.memory_space<vmem>>, vector<1x8x64xf32>
    %32 = vector.shape_cast %31 : vector<1x8x64xf32> to vector<8x64xf32>
    %33 = vector.broadcast %18 : vector<8x1xf32> to vector<8x64xf32>
    %34 = arith.mulf %33, %32 : vector<8x64xf32>
    %cst_24 = arith.constant dense<0.000000e+00> : vector<8x64xf32>
    %35 = tpu.matmul %21, %8, %cst_24 {dimension_numbers = #tpu.dot_dimension_numbers<[1], [0], [0], [1], [0, 0, 1, 1], [], []>} : vector<8x8xf32>, vector<8x64xf32>, vector<8x64xf32> -> vector<8x64xf32>
    %36 = arith.addf %34, %35 : vector<8x64xf32>
    %c0_25 = arith.constant 0 : index
    %c0_26 = arith.constant 0 : index
    %c0_27 = arith.constant 0 : index
    %37 = vector.load %arg9[%c0_25, %c0_26, %c0_27] : memref<2x8x64xf32, #tpu.memory_space<vmem>>, vector<1x8x64xf32>
    %38 = vector.shape_cast %37 : vector<1x8x64xf32> to vector<8x64xf32>
    %39 = vector.shape_cast %36 : vector<8x64xf32> to vector<1x8x64xf32>
    tpu.vector_store %arg9[%c0_25, %c0_26, %c0_27], %39 {strides = array<i32>} : memref<2x8x64xf32, #tpu.memory_space<vmem>>, vector<1x8x64xf32>,
    %c0_28 = arith.constant 0 : index
    %c0_29 = arith.constant 0 : index
    %c0_30 = arith.constant 0 : index
    %40 = vector.load %arg7[%c0_28, %c0_29, %c0_30] : memref<2x8x1xf32, #tpu.memory_space<vmem>>, vector<1x8x1xf32>
    %41 = vector.shape_cast %40 : vector<1x8x1xf32> to vector<8x1xf32>
    %42 = vector.shape_cast %16 : vector<8x1xf32> to vector<1x8x1xf32>
    tpu.vector_store %arg7[%c0_28, %c0_29, %c0_30], %42 {strides = array<i32>} : memref<2x8x1xf32, #tpu.memory_space<vmem>>, vector<1x8x1xf32>,
    %c0_31 = arith.constant 0 : index
    %c0_32 = arith.constant 0 : index
    %c64 = arith.constant 64 : index
    %43 = vector.load %arg3[%c0_31, %c0_32, %c64] : memref<1x8x128xf32, #tpu.memory_space<vmem>>, vector<1x8x64xf32>
    %44 = vector.shape_cast %43 : vector<1x8x64xf32> to vector<8x64xf32>
    %c0_33 = arith.constant 0 : index
    %c0_34 = arith.constant 0 : index
    %c64_35 = arith.constant 64 : index
    %45 = vector.load %arg4[%c0_33, %c0_34, %c64_35] : memref<1x8x128xf32, #tpu.memory_space<vmem>>, vector<1x8x64xf32>
    %46 = vector.shape_cast %45 : vector<1x8x64xf32> to vector<8x64xf32>
    %c0_36 = arith.constant 0 : index
    %c0_37 = arith.constant 0 : index
    %c64_38 = arith.constant 64 : index
    %47 = vector.load %arg5[%c0_36, %c0_37, %c64_38] : memref<1x8x128xf32, #tpu.memory_space<vmem>>, vector<1x8x64xf32>
    %48 = vector.shape_cast %47 : vector<1x8x64xf32> to vector<8x64xf32>
    %cst_39 = arith.constant dense<0.000000e+00> : vector<8x8xf32>
    %49 = tpu.matmul %44, %46, %cst_39 {dimension_numbers = #tpu.dot_dimension_numbers<[1], [1], [0], [0], [0, 0, 1, 0], [], []>} : vector<8x64xf32>, vector<8x64xf32>, vector<8x8xf32> -> vector<8x8xf32>
    %cst_40 = arith.constant 1.250000e-01 : f32
    %50 = vector.broadcast %cst_40 : f32 to vector<8x8xf32>
    %51 = arith.mulf %49, %50 : vector<8x8xf32>
    %c1 = arith.constant 1 : index
    %c0_41 = arith.constant 0 : index
    %c0_42 = arith.constant 0 : index
    %52 = vector.load %arg7[%c1, %c0_41, %c0_42] : memref<2x8x1xf32, #tpu.memory_space<vmem>>, vector<1x8x1xf32>
    %53 = vector.shape_cast %52 : vector<1x8x1xf32> to vector<8x1xf32>
    %cst_43 = arith.constant dense<0xFF800000> : vector<8xf32>
    %54 = vector.multi_reduction <maximumf>, %51, %cst_43 [1] : vector<8x8xf32> to vector<8xf32>
    %55 = vector.shape_cast %54 : vector<8xf32> to vector<8x1xf32>
    %56 = arith.maximumf %53, %55 : vector<8x1xf32>
    %57 = arith.subf %53, %56 : vector<8x1xf32>
    %58 = math.exp %57 : vector<8x1xf32>
    %59 = vector.broadcast %56 : vector<8x1xf32> to vector<8x8xf32>
    %60 = arith.subf %51, %59 : vector<8x8xf32>
    %61 = math.exp %60 : vector<8x8xf32>
    %c1_44 = arith.constant 1 : index
    %c0_45 = arith.constant 0 : index
    %c0_46 = arith.constant 0 : index
    %62 = vector.load %arg8[%c1_44, %c0_45, %c0_46] : memref<2x8x1xf32, #tpu.memory_space<vmem>>, vector<1x8x1xf32>
    %63 = vector.shape_cast %62 : vector<1x8x1xf32> to vector<8x1xf32>
    %64 = arith.mulf %58, %63 : vector<8x1xf32>
    %cst_47 = arith.constant dense<0.000000e+00> : vector<8xf32>
    %65 = vector.multi_reduction <add>, %61, %cst_47 [1] : vector<8x8xf32> to vector<8xf32>
    %66 = vector.shape_cast %65 : vector<8xf32> to vector<8x1xf32>
    %67 = arith.addf %64, %66 : vector<8x1xf32>
    %c1_48 = arith.constant 1 : index
    %c0_49 = arith.constant 0 : index
    %c0_50 = arith.constant 0 : index
    %68 = vector.load %arg8[%c1_48, %c0_49, %c0_50] : memref<2x8x1xf32, #tpu.memory_space<vmem>>, vector<1x8x1xf32>
    %69 = vector.shape_cast %68 : vector<1x8x1xf32> to vector<8x1xf32>
    %70 = vector.shape_cast %67 : vector<8x1xf32> to vector<1x8x1xf32>
    tpu.vector_store %arg8[%c1_48, %c0_49, %c0_50], %70 {strides = array<i32>} : memref<2x8x1xf32, #tpu.memory_space<vmem>>, vector<1x8x1xf32>,
    %c1_51 = arith.constant 1 : index
    %c0_52 = arith.constant 0 : index
    %c0_53 = arith.constant 0 : index
    %71 = vector.load %arg9[%c1_51, %c0_52, %c0_53] : memref<2x8x64xf32, #tpu.memory_space<vmem>>, vector<1x8x64xf32>
    %72 = vector.shape_cast %71 : vector<1x8x64xf32> to vector<8x64xf32>
    %73 = vector.broadcast %58 : vector<8x1xf32> to vector<8x64xf32>
    %74 = arith.mulf %73, %72 : vector<8x64xf32>
    %cst_54 = arith.constant dense<0.000000e+00> : vector<8x64xf32>
    %75 = tpu.matmul %61, %48, %cst_54 {dimension_numbers = #tpu.dot_dimension_numbers<[1], [0], [0], [1], [0, 0, 1, 1], [], []>} : vector<8x8xf32>, vector<8x64xf32>, vector<8x64xf32> -> vector<8x64xf32>
    %76 = arith.addf %74, %75 : vector<8x64xf32>
    %c1_55 = arith.constant 1 : index
    %c0_56 = arith.constant 0 : index
    %c0_57 = arith.constant 0 : index
    %77 = vector.load %arg9[%c1_55, %c0_56, %c0_57] : memref<2x8x64xf32, #tpu.memory_space<vmem>>, vector<1x8x64xf32>
    %78 = vector.shape_cast %77 : vector<1x8x64xf32> to vector<8x64xf32>
    %79 = vector.shape_cast %76 : vector<8x64xf32> to vector<1x8x64xf32>
    tpu.vector_store %arg9[%c1_55, %c0_56, %c0_57], %79 {strides = array<i32>} : memref<2x8x64xf32, #tpu.memory_space<vmem>>, vector<1x8x64xf32>,
    %c1_58 = arith.constant 1 : index
    %c0_59 = arith.constant 0 : index
    %c0_60 = arith.constant 0 : index
    %80 = vector.load %arg7[%c1_58, %c0_59, %c0_60] : memref<2x8x1xf32, #tpu.memory_space<vmem>>, vector<1x8x1xf32>
    %81 = vector.shape_cast %80 : vector<1x8x1xf32> to vector<8x1xf32>
    %82 = vector.shape_cast %56 : vector<8x1xf32> to vector<1x8x1xf32>
    tpu.vector_store %arg7[%c1_58, %c0_59, %c0_60], %82 {strides = array<i32>} : memref<2x8x1xf32, #tpu.memory_space<vmem>>, vector<1x8x1xf32>,
    %c1_i32 = arith.constant 1 : i32
    %83 = arith.cmpi eq, %arg2, %c1_i32 : i32
    %84 = arith.extui %83 : i1 to i32
    %c0_i32_61 = arith.constant 0 : i32
    %85 = arith.cmpi ne, %84, %c0_i32_61 : i32
    scf.if %85 {
      %c0_62 = arith.constant 0 : index
      %c0_63 = arith.constant 0 : index
      %c0_64 = arith.constant 0 : index
      %86 = vector.load %arg9[%c0_62, %c0_63, %c0_64] : memref<2x8x64xf32, #tpu.memory_space<vmem>>, vector<1x8x64xf32>
      %87 = vector.shape_cast %86 : vector<1x8x64xf32> to vector<8x64xf32>
      %c0_65 = arith.constant 0 : index
      %c0_66 = arith.constant 0 : index
      %c0_67 = arith.constant 0 : index
      %88 = vector.load %arg8[%c0_65, %c0_66, %c0_67] : memref<2x8x1xf32, #tpu.memory_space<vmem>>, vector<1x8x1xf32>
      %89 = vector.shape_cast %88 : vector<1x8x1xf32> to vector<8x1xf32>
      %90 = tpu.reciprocal %89 {approx = true} : vector<8x1xf32> -> vector<8x1xf32>
      %91 = vector.broadcast %90 : vector<8x1xf32> to vector<8x64xf32>
      %92 = arith.mulf %87, %91 : vector<8x64xf32>
      %c1_68 = arith.constant 1 : index
      %c0_69 = arith.constant 0 : index
      %c0_70 = arith.constant 0 : index
      %93 = vector.load %arg9[%c1_68, %c0_69, %c0_70] : memref<2x8x64xf32, #tpu.memory_space<vmem>>, vector<1x8x64xf32>
      %94 = vector.shape_cast %93 : vector<1x8x64xf32> to vector<8x64xf32>
      %c1_71 = arith.constant 1 : index
      %c0_72 = arith.constant 0 : index
      %c0_73 = arith.constant 0 : index
      %95 = vector.load %arg8[%c1_71, %c0_72, %c0_73] : memref<2x8x1xf32, #tpu.memory_space<vmem>>, vector<1x8x1xf32>
      %96 = vector.shape_cast %95 : vector<1x8x1xf32> to vector<8x1xf32>
      %97 = tpu.reciprocal %96 {approx = true} : vector<8x1xf32> -> vector<8x1xf32>
      %98 = vector.broadcast %97 : vector<8x1xf32> to vector<8x64xf32>
      %99 = arith.mulf %94, %98 : vector<8x64xf32>
      %100 = tpu.concatenate %92, %99 in 1 : vector<8x64xf32>, vector<8x64xf32> -> vector<8x128xf32>
      %c0_74 = arith.constant 0 : index
      %c0_75 = arith.constant 0 : index
      %c0_76 = arith.constant 0 : index
      %101 = vector.load %arg6[%c0_74, %c0_75, %c0_76] : memref<1x8x128xf32, #tpu.memory_space<vmem>>, vector<1x8x128xf32>
      %102 = vector.shape_cast %101 : vector<1x8x128xf32> to vector<8x128xf32>
      %103 = vector.shape_cast %100 : vector<8x128xf32> to vector<1x8x128xf32>
      tpu.vector_store %arg6[%c0_74, %c0_75, %c0_76], %103 {strides = array<i32>} : memref<1x8x128xf32, #tpu.memory_space<vmem>>, vector<1x8x128xf32>,
    } else {
    }
    return
  }
  func.func @transform_0(%arg0: i32, %arg1: i32, %arg2: i32) -> (i32, i32, i32) {
    %c0_i32 = arith.constant 0 : i32
    %c0_i32_0 = arith.constant 0 : i32
    return %arg0, %c0_i32, %arg1 : i32, i32, i32
  }
  func.func @transform_1(%arg0: i32, %arg1: i32, %arg2: i32) -> (i32, i32, i32) {
    %c0_i32 = arith.constant 0 : i32
    return %arg0, %arg2, %arg1 : i32, i32, i32
  }
  func.func @transform_2(%arg0: i32, %arg1: i32, %arg2: i32) -> (i32, i32, i32) {
    %c0_i32 = arith.constant 0 : i32
    return %arg0, %arg2, %arg1 : i32, i32, i32
  }
  func.func @transform_3(%arg0: i32, %arg1: i32, %arg2: i32) -> (i32, i32, i32) {
    %c0_i32 = arith.constant 0 : i32
    %c0_i32_0 = arith.constant 0 : i32
    return %arg0, %c0_i32, %arg1 : i32, i32, i32
  }
}

</mosaic_0001>

<llo_original>
// kernel: basic_transformer_block.10
$region0: #{basic_transformer_block.10}
  #allocation0 [shape = 'u32[]', space=smem, size = 0x4, offset = 0x4, fixed_abs, tag = 'smem constant byte address 0x4 - core index']
  #allocation1 [shape = 'u32[144,128]{1,0:T(1,128)}', space=vmem, size = 0x12000, scoped, tag = 'internal scratch']
  %s0 = inlined_call_operand.vmem [shape: f32[16,128], index: 0, kind: input, shape index: {}]
  %s1 = inlined_call_operand.hbm [shape: f32[16,128], index: 1, kind: input, shape index: {}]
  %s2 = inlined_call_operand.hbm [shape: f32[128,128], index: 2, kind: input, shape index: {}]
  %s3 = inlined_call_operand.hbm [shape: f32[1,128], index: 3, kind: input, shape index: {}]
  %s4 = inlined_call_operand.vmem [shape: f32[16,128], index: 4, kind: output, shape index: {}]
  %s5 = sld [smem:[#allocation0]]
  $region61: #{basic_transformer_block.10} parent=0
    _
  %s7 = ssub.s32 1, %s5
  %s8 = scalar_select 0, %s7, %s5
  $region1: #{basic_transformer_block.10} parent=0
    #allocation2 [shape = 'u8[8192]{0}', space=vmem, size = 0x2000, scoped, tag = 'input window, operand 1']
    #allocation3 [shape = 's32[2]{0}', space=sflag, size = 0x8, scoped, tag = 'scoped memory for basic_transformer_block.10']
    #allocation4 [shape = 'u8[65536]{0}', space=vmem, size = 0x10000, scoped, tag = 'input window, operand 2, single buffered']
    #allocation5 [shape = 's32[1]{0}', space=sflag, size = 0x4, scoped, tag = 'scoped memory for basic_transformer_block.10']
    #allocation6 [shape = 'u8[512]{0}', space=vmem, size = 0x400, scoped, tag = 'input window, operand 3, single buffered']
    %9 = vsyncpa [#allocation3], 0
    %s10 = scalar_lea.sflag [#allocation3], 1
    %11 = vsyncpa %s10, 0
    %12 = vsyncpa [#allocation5], 0
    loop: start=0, step=1, limit=4
    $region2: #{basic_transformer_block.10} parent=1 // loop_pre_header
      _
    $region3: #{basic_transformer_block.10} parent=1 // loop_header
      %s14 = sphi 0, %s18
      %p15 = scmp.ge.s32.totalorder %s14, 4
      %s24 = sphi 0, %s26
      %s27 = sphi 0, %s24
      %s28 = sphi 0, %s27
      %s44 = sphi 0, %s28
      %s50 = sphi 0, %s52
      %s53 = sphi 0, %s50
      %s54 = sphi 0, %s53
      %s70 = sphi 0, %s54
      %s74 = sphi 0, %s74
      %s76 = sphi 0, %s74
      %s77 = sphi 0, %s76
      %s91 = sphi 0, %s77
      %s95 = sphi 0, %s95
      %s97 = sphi 0, %s95
      %s98 = sphi 0, %s97
      %s112 = sphi 0, %s98
      %s118 = sphi 0, %s120
      %s121 = sphi 0, %s118
      %s122 = sphi 0, %s121
      %s138 = sphi 0, %s122
    $region4: #{basic_transformer_block.10} parent=1 // loop_header_branch
      %17 = sbr.rel (%p15) target = $region8
    $region5: #{basic_transformer_block.10} parent=1 // loop_body
      %s19 = ssub.s32 %s14, 1
      %s20 = ssub.s32 %s14, 2
      %s21 = sadd.s32 %s14, 1
      %s22 = ssub.s32 %s14, %s21
      %p23 = scmp.eq.s32.totalorder %s22, 0
      %s25 = sadd.s32 %s24, 1
      %s26 = scalar_select %p23, %s24, %s25
      %p29 = pneg %p23
      %p30 = scmp.eq.s32.totalorder %s14, 1
      %p31 = por %p29, %p30
      %p32 = scmp.ne.s32.totalorder %s24, %s27
      %p33 = scmp.eq.s32.totalorder %s14, 0
      %p34 = por %p32, %p33
      %p35 = scmp.ne.s32.totalorder %s24, %s27
      %p36 = scmp.eq.s32.totalorder %s19, 1
      %p37 = por %p35, %p36
      %p38 = scmp.ne.s32.totalorder %s27, %s28
      %p39 = scmp.eq.s32.totalorder %s19, 0
      %p40 = por %p38, %p39
      %p41 = scmp.ne.s32.totalorder %s27, %s28
      %p42 = scmp.eq.s32.totalorder %s20, 1
      %p43 = por %p41, %p42
      %p45 = scmp.ne.s32.totalorder %s28, %s44
      %p46 = scmp.eq.s32.totalorder %s20, 0
      %p47 = por %p45, %p46
      %s48 = ssub.s32 %s14, %s21
      %p49 = scmp.eq.s32.totalorder %s48, 0
      %s51 = sadd.s32 %s50, 1
      %s52 = scalar_select %p49, %s50, %s51
      %p55 = pneg %p49
      %p56 = scmp.eq.s32.totalorder %s14, 1
      %p57 = por %p55, %p56
      %p58 = scmp.ne.s32.totalorder %s50, %s53
      %p59 = scmp.eq.s32.totalorder %s14, 0
      %p60 = por %p58, %p59
      %p61 = scmp.ne.s32.totalorder %s50, %s53
      %p62 = scmp.eq.s32.totalorder %s19, 1
      %p63 = por %p61, %p62
      %p64 = scmp.ne.s32.totalorder %s53, %s54
      %p65 = scmp.eq.s32.totalorder %s19, 0
      %p66 = por %p64, %p65
      %p67 = scmp.ne.s32.totalorder %s53, %s54
      %p68 = scmp.eq.s32.totalorder %s20, 1
      %p69 = por %p67, %p68
      %p71 = scmp.ne.s32.totalorder %s54, %s70
      %p72 = scmp.eq.s32.totalorder %s20, 0
      %p73 = por %p71, %p72
      %s75 = sadd.s32 %s74, 1
      %p78 = scmp.eq.s32.totalorder %s14, 1
      %p79 = scmp.ne.s32.totalorder %s74, %s76
      %p80 = scmp.eq.s32.totalorder %s14, 0
      %p81 = por %p79, %p80
      %p82 = scmp.ne.s32.totalorder %s74, %s76
      %p83 = scmp.eq.s32.totalorder %s19, 1
      %p84 = por %p82, %p83
      %p85 = scmp.ne.s32.totalorder %s76, %s77
      %p86 = scmp.eq.s32.totalorder %s19, 0
      %p87 = por %p85, %p86
      %p88 = scmp.ne.s32.totalorder %s76, %s77
      %p89 = scmp.eq.s32.totalorder %s20, 1
      %p90 = por %p88, %p89
      %p92 = scmp.ne.s32.totalorder %s77, %s91
      %p93 = scmp.eq.s32.totalorder %s20, 0
      %p94 = por %p92, %p93
      %s96 = sadd.s32 %s95, 1
      %p99 = scmp.eq.s32.totalorder %s14, 1
      %p100 = scmp.ne.s32.totalorder %s95, %s97
      %p101 = scmp.eq.s32.totalorder %s14, 0
      %p102 = por %p100, %p101
      %p103 = scmp.ne.s32.totalorder %s95, %s97
      %p104 = scmp.eq.s32.totalorder %s19, 1
      %p105 = por %p103, %p104
      %p106 = scmp.ne.s32.totalorder %s97, %s98
      %p107 = scmp.eq.s32.totalorder %s19, 0
      %p108 = por %p106, %p107
      %p109 = scmp.ne.s32.totalorder %s97, %s98
      %p110 = scmp.eq.s32.totalorder %s20, 1
      %p111 = por %p109, %p110
      %p113 = scmp.ne.s32.totalorder %s98, %s112
      %p114 = scmp.eq.s32.totalorder %s20, 0
      %p115 = por %p113, %p114
      %s116 = ssub.s32 %s14, %s21
      %p117 = scmp.eq.s32.totalorder %s116, 0
      %s119 = sadd.s32 %s118, 1
      %s120 = scalar_select %p117, %s118, %s119
      %p123 = pneg %p117
      %p124 = scmp.eq.s32.totalorder %s14, 1
      %p125 = por %p123, %p124
      %p126 = scmp.ne.s32.totalorder %s118, %s121
      %p127 = scmp.eq.s32.totalorder %s14, 0
      %p128 = por %p126, %p127
      %p129 = scmp.ne.s32.totalorder %s118, %s121
      %p130 = scmp.eq.s32.totalorder %s19, 1
      %p131 = por %p129, %p130
      %p132 = scmp.ne.s32.totalorder %s121, %s122
      %p133 = scmp.eq.s32.totalorder %s19, 0
      %p134 = por %p132, %p133
      %p135 = scmp.ne.s32.totalorder %s121, %s122
      %p136 = scmp.eq.s32.totalorder %s20, 1
      %p137 = por %p135, %p136
      %p139 = scmp.ne.s32.totalorder %s122, %s138
      %p140 = scmp.eq.s32.totalorder %s20, 0
      %p141 = por %p139, %p140
      %p142 = scmp.le.s32.totalorder 1, %s14
      %p143 = scmp.lt.s32.totalorder %s14, 3
      %p144 = pnand %p142, %p143
      %p145 = pneg %p144
      // Predicated region
      $region9: #{basic_transformer_block.10} parent=5 // pred_check
        _
      $region10: #{basic_transformer_block.10} parent=5 // pred_check_branch
        %147 = sbr.rel (%p144) target = $region12
      $region11: #{basic_transformer_block.10} parent=5 // pred_region
        %s148 = ssub.s32 %s14, 1
        // Predicated region
        $region13: #{basic_transformer_block.10} parent=11 // pred_check
          %p149 = pneg %p87
        $region14: #{basic_transformer_block.10} parent=11 // pred_check_branch
          %151 = sbr.rel (%p149) target = $region16
        $region15: #{basic_transformer_block.10} parent=11 // pred_region
          %s153 = ssub.s32 2048, 2048
          %154 = vsyncadd [#allocation5], %s153
          %s155 = sshll.u32 [#allocation4], 4
          %s156 = int_to_ptr.vmem [resolvable:$true] %s155
          %161 = dma.hbm_to_vmem [thread:$0]  %s2, 2048, %s156, [#allocation5], 128, 128, 8
        $region16: #{basic_transformer_block.10} parent=11 // pred_fallthru
          _
        // Predicated region
        $region17: #{basic_transformer_block.10} parent=11 // pred_check
          %p162 = pneg %p108
        $region18: #{basic_transformer_block.10} parent=11 // pred_check_branch
          %164 = sbr.rel (%p162) target = $region20
        $region19: #{basic_transformer_block.10} parent=11 // pred_region
          %s166 = ssub.s32 16, 16
          %167 = vsyncadd [#allocation5], %s166
          %s169 = sshll.u32 [#allocation6], 4
          %s170 = int_to_ptr.vmem [resolvable:$true] %s169
          %172 = dma.hbm_to_vmem [thread:$0]  %s3, 16, %s170, [#allocation5]
        $region20: #{basic_transformer_block.10} parent=11 // pred_fallthru
          _
      $region12: #{basic_transformer_block.10} parent=5 // pred_fallthru
        _
      %p173 = scmp.lt.s32.totalorder %s14, 2
      // Predicated region
      $region21: #{basic_transformer_block.10} parent=5 // pred_check
        %p174 = pneg %p173
      $region22: #{basic_transformer_block.10} parent=5 // pred_check_branch
        %176 = sbr.rel (%p174) target = $region24
      $region23: #{basic_transformer_block.10} parent=5 // pred_region
        // Predicated region
        $region25: #{basic_transformer_block.10} parent=23 // pred_check
          %p177 = pneg %p34
        $region26: #{basic_transformer_block.10} parent=23 // pred_check_branch
          %179 = sbr.rel (%p177) target = $region28
        $region27: #{basic_transformer_block.10} parent=23 // pred_region
          %p180 = scmp.lt.s32.totalorder %s14, 1
          %s181 = scalar_select %p180, %s14, 1
          %s182 = smul.addr %s181, 8
          %s183 = scalar_lea.vmem %s0, %s182
        $region28: #{basic_transformer_block.10} parent=23 // pred_fallthru
          _
        // Predicated region
        $region29: #{basic_transformer_block.10} parent=23 // pred_check
          %p184 = pneg %p60
        $region30: #{basic_transformer_block.10} parent=23 // pred_check_branch
          %186 = sbr.rel (%p184) target = $region32
        $region31: #{basic_transformer_block.10} parent=23 // pred_region
          %s187 = sand.u32 %s50, 1
          %s188 = scalar_lea.sflag [#allocation3], %s187
          %s189 = sand.u32 %s50, 1
          %s190 = smul.addr %s189, 8
          %s191 = scalar_lea.vmem [#allocation2], %s190
          %s193 = ssub.s32 128, 128
          %194 = vsyncadd %s188, %s193
          %s195 = smul.addr %s14, 128
          %s196 = scalar_lea.hbm %s1, %s195
          %s198 = sshll.u32 %s191, 4
          %s199 = int_to_ptr.vmem [resolvable:$true] %s198
          %201 = dma.hbm_to_vmem [thread:$0]  %s196, 128, %s199, %s188
        $region32: #{basic_transformer_block.10} parent=23 // pred_fallthru
          _
      $region24: #{basic_transformer_block.10} parent=5 // pred_fallthru
        _
      %p202 = scmp.le.s32.totalorder 1, %s14
      %p203 = scmp.lt.s32.totalorder %s14, 3
      %p204 = pnand %p202, %p203
      %p205 = pneg %p204
      // Predicated region
      $region33: #{basic_transformer_block.10} parent=5 // pred_check
        _
      $region34: #{basic_transformer_block.10} parent=5 // pred_check_branch
        %207 = sbr.rel (%p204) target = $region36
      $region35: #{basic_transformer_block.10} parent=5 // pred_region
        %s208 = ssub.s32 %s14, 1
        %s209 = sand.u32 %s53, 1
        %s210 = scalar_lea.sflag [#allocation3], %s209
        %s211 = sand.u32 %s53, 1
        %s212 = smul.addr %s211, 8
        %s213 = scalar_lea.vmem [#allocation2], %s212
        // Predicated region
        $region37: #{basic_transformer_block.10} parent=35 // pred_check
          %p214 = pneg %p66
        $region38: #{basic_transformer_block.10} parent=35 // pred_check_branch
          %216 = sbr.rel (%p214) target = $region40
        $region39: #{basic_transformer_block.10} parent=35 // pred_region
          %217 = dma.done %s210, 128
        $region40: #{basic_transformer_block.10} parent=35 // pred_fallthru
          _
        // Predicated region
        $region41: #{basic_transformer_block.10} parent=35 // pred_check
          %p218 = pneg %p87
        $region42: #{basic_transformer_block.10} parent=35 // pred_check_branch
          %220 = sbr.rel (%p218) target = $region44
        $region43: #{basic_transformer_block.10} parent=35 // pred_region
          %221 = dma.done [#allocation5], 2048
        $region44: #{basic_transformer_block.10} parent=35 // pred_fallthru
          _
        // Predicated region
        $region45: #{basic_transformer_block.10} parent=35 // pred_check
          %p222 = pneg %p108
        $region46: #{basic_transformer_block.10} parent=35 // pred_check_branch
          %224 = sbr.rel (%p222) target = $region48
        $region47: #{basic_transformer_block.10} parent=35 // pred_region
          %225 = dma.done [#allocation5], 16
        $region48: #{basic_transformer_block.10} parent=35 // pred_fallthru
          _
        %p226 = scmp.lt.s32.totalorder %s19, 1
        %s227 = scalar_select %p226, %s19, 1
        %s228 = smul.addr %s227, 8
        %s229 = scalar_lea.vmem %s0, %s228
        %p230 = pneg %p40
        %p231 = pneg %p37
        %s232 = sand.u32 %s53, 1
        %s233 = scalar_lea.sflag [#allocation3], %s232
        %s234 = sand.u32 %s53, 1
        %s235 = smul.addr %s234, 8
        %s236 = scalar_lea.vmem [#allocation2], %s235
        %p237 = pneg %p66
        %p238 = pneg %p63
        %p239 = pneg %p87
        %p240 = pneg %p84
        %p241 = pneg %p108
        %p242 = pneg %p105
        %p243 = pneg %p134
        %p244 = pneg %p131
        %p245 = scmp.lt.s32.totalorder %s19, 1
        %s246 = scalar_select %p245, %s19, 1
        %s247 = smul.addr %s246, 8
        %s248 = scalar_lea.vmem %s4, %s247
        %p249 = scmp.lt.s32.totalorder %s19, 1
        %s250 = scalar_select %p249, %s19, 1
        %s251 = smul.addr %s250, 8
        %s252 = scalar_lea.vmem %s0, %s251
        %p253 = scmp.lt.s32.totalorder %s19, 1
        %s254 = scalar_select %p253, %s19, 1
        %s255 = smul.addr %s254, 8
        %s256 = scalar_lea.vmem %s4, %s255
        %v257 = vld [vmem:[%s252] sm:$0xff]
        %v258 = vld [vmem:[#allocation4] sm:$0xff]
        %v259 = vld [vmem:[#allocation4 + $0x8] sm:$0xff]
        %v260 = vld [vmem:[#allocation4 + $0x10] sm:$0xff]
        %v261 = vld [vmem:[#allocation4 + $0x18] sm:$0xff]
        %v262 = vld [vmem:[#allocation4 + $0x20] sm:$0xff]
        %v263 = vld [vmem:[#allocation4 + $0x28] sm:$0xff]
        %v264 = vld [vmem:[#allocation4 + $0x30] sm:$0xff]
        %v265 = vld [vmem:[#allocation4 + $0x38] sm:$0xff]
        %v266 = vld [vmem:[#allocation4 + $0x40] sm:$0xff]
        %v267 = vld [vmem:[#allocation4 + $0x48] sm:$0xff]
        %v268 = vld [vmem:[#allocation4 + $0x50] sm:$0xff]
        %v269 = vld [vmem:[#allocation4 + $0x58] sm:$0xff]
        %v270 = vld [vmem:[#allocation4 + $0x60] sm:$0xff]
        %v271 = vld [vmem:[#allocation4 + $0x68] sm:$0xff]
        %v272 = vld [vmem:[#allocation4 + $0x70] sm:$0xff]
        %v273 = vld [vmem:[#allocation4 + $0x78] sm:$0xff]
        %v274 = vld [vmem:[#allocation6] sm:$0x1]
        %v276 = vlaneseq
        %v277 = vshrl.u32 %v276, 7
        %v278 = vsub.s32 0, %v277
        %v279 = vrot.slane %v274, %v278
        %281 = vmatprep.subr.mxu0 0.0
        %282 = vmatpush1.msra.mxu0 %v258
        %283 = vmatprep.subr.mxu0 0.0
        %284 = vmatpush1.msra.mxu0 %v259
        %285 = vmatprep.subr.mxu0 0.0
        %286 = vmatpush1.msra.mxu0 %v260
        %287 = vmatprep.subr.mxu0 0.0
        %288 = vmatpush1.msra.mxu0 %v261
        %289 = vmatprep.subr.mxu0 0.0
        %290 = vmatpush1.msra.mxu0 %v262
        %291 = vmatprep.subr.mxu0 0.0
        %292 = vmatpush1.msra.mxu0 %v263
        %293 = vmatprep.subr.mxu0 0.0
        %294 = vmatpush1.msra.mxu0 %v264
        %295 = vmatprep.subr.mxu0 0.0
        %296 = vmatpush1.msra.mxu0 %v265
        %297 = vmatprep.subr.mxu0 0.0
        %298 = vmatpush1.msra.mxu0 %v266
        %299 = vmatprep.subr.mxu0 0.0
        %300 = vmatpush1.msra.mxu0 %v267
        %301 = vmatprep.subr.mxu0 0.0
        %302 = vmatpush1.msra.mxu0 %v268
        %303 = vmatprep.subr.mxu0 0.0
        %304 = vmatpush1.msra.mxu0 %v269
        %305 = vmatprep.subr.mxu0 0.0
        %306 = vmatpush1.msra.mxu0 %v270
        %307 = vmatprep.subr.mxu0 0.0
        %308 = vmatpush1.msra.mxu0 %v271
        %309 = vmatprep.subr.mxu0 0.0
        %310 = vmatpush1.msra.mxu0 %v272
        %311 = vmatprep.subr.mxu0 0.0
        %312 = vmatpush1.msra.mxu0 %v273
        %313 = vmatprep.subr.mxu0 0.0
        %314 = vmatpush1.msra.mxu0 0.0
        %315 = vmatprep.subr.mxu0 0.0
        %316 = vmatpush1.msra.mxu0 0.0
        %317 = vmatprep.subr.mxu0 0.0
        %318 = vmatpush1.msra.mxu0 0.0
        %319 = vmatprep.subr.mxu0 0.0
        %320 = vmatpush1.msra.mxu0 0.0
        %321 = vmatprep.subr.mxu0 0.0
        %322 = vmatpush1.msra.mxu0 0.0
        %323 = vmatprep.subr.mxu0 0.0
        %324 = vmatpush1.msra.mxu0 0.0
        %325 = vmatprep.subr.mxu0 0.0
        %326 = vmatpush1.msra.mxu0 0.0
        %327 = vmatprep.subr.mxu0 0.0
        %328 = vmatpush1.msra.mxu0 0.0
        %329 = vmatprep.subr.mxu0 0.0
        %330 = vmatpush1.msra.mxu0 0.0
        %331 = vmatprep.subr.mxu0 0.0
        %332 = vmatpush1.msra.mxu0 0.0
        %333 = vmatprep.subr.mxu0 0.0
        %334 = vmatpush1.msra.mxu0 0.0
        %335 = vmatprep.subr.mxu0 0.0
        %336 = vmatpush1.msra.mxu0 0.0
        %337 = vmatprep.subr.mxu0 0.0
        %338 = vmatpush1.msra.mxu0 0.0
        %339 = vmatprep.subr.mxu0 0.0
        %340 = vmatpush1.msra.mxu0 0.0
        %341 = vmatprep.subr.mxu0 0.0
        %342 = vmatpush1.msra.mxu0 0.0
        %343 = vmatprep.subr.mxu0 0.0
        %344 = vmatpush1.msra.mxu0 0.0
        %345 = vmatprep.mubr.f32.mxu0 0.0
        %346 = vmatmul.mubr.f32.gmra.mrb[0].mxu0 %v257
        %v347 = vpop.f32.mrb[0].mxu0
        %v348 = vadd.f32 %v279, %v347
        %v349 = vpop.f32.mrb[0].mxu0
        %350 = vdwg.mxu0
        %v351 = vld [vmem:[%s213] sm:$0xff]
        %v352 = vadd.f32 %v348, %v351
        %353 = vst [vmem:[%s256] sm:$0xff] %v352
        %p354 = scmp.lt.s32.totalorder %s19, 1
        %s355 = scalar_select %p354, %s19, 1
        %s356 = smul.addr %s355, 8
        %s357 = scalar_lea.vmem %s4, %s356
        // Predicated region
        $region49: #{basic_transformer_block.10} parent=35 // pred_check
          %p358 = pneg %p131
        $region50: #{basic_transformer_block.10} parent=35 // pred_check_branch
          %360 = sbr.rel (%p358) target = $region52
        $region51: #{basic_transformer_block.10} parent=35 // pred_region
          _
        $region52: #{basic_transformer_block.10} parent=35 // pred_fallthru
          _
      $region36: #{basic_transformer_block.10} parent=5 // pred_fallthru
        _
      %p361 = scmp.le.s32.totalorder 2, %s14
      // Predicated region
      $region53: #{basic_transformer_block.10} parent=5 // pred_check
        %p362 = pneg %p361
      $region54: #{basic_transformer_block.10} parent=5 // pred_check_branch
        %364 = sbr.rel (%p362) target = $region56
      $region55: #{basic_transformer_block.10} parent=5 // pred_region
        %s365 = ssub.s32 %s14, 2
        // Predicated region
        $region57: #{basic_transformer_block.10} parent=55 // pred_check
          %p366 = pneg %p137
        $region58: #{basic_transformer_block.10} parent=55 // pred_check_branch
          %368 = sbr.rel (%p366) target = $region60
        $region59: #{basic_transformer_block.10} parent=55 // pred_region
          %p369 = scmp.lt.s32.totalorder %s20, 1
          %s370 = scalar_select %p369, %s20, 1
          %s371 = smul.addr %s370, 8
          %s372 = scalar_lea.vmem %s4, %s371
        $region60: #{basic_transformer_block.10} parent=55 // pred_fallthru
          _
      $region56: #{basic_transformer_block.10} parent=5 // pred_fallthru
        _
    $region6: #{basic_transformer_block.10} parent=1 // loop_footer
      %s18 = sadd.s32 1, %s14
    $region7: #{basic_transformer_block.10} parent=1 // loop_footer_branch
      %13 = sbr.rel target = $region3
    $region8: #{basic_transformer_block.10} parent=1 // loop_exit
      _
    %373 = vsyncpa [#allocation3], 1
    %s374 = scalar_lea.sflag [#allocation3], 1
    %375 = vsyncpa %s374, 1
    %376 = vsyncpa [#allocation5], 1

// kernel: basic_transformer_block.11
$region0: #{basic_transformer_block.11}
  #allocation0 [shape = 'u32[]', space=smem, size = 0x4, offset = 0x4, fixed_abs, tag = 'smem constant byte address 0x4 - core index']
  #allocation1 [shape = 'u32[144,128]{1,0:T(1,128)}', space=vmem, size = 0x12000, scoped, tag = 'internal scratch']
  %s0 = inlined_call_operand.vmem [shape: f32[16,128], index: 0, kind: input, shape index: {}]
  %s1 = inlined_call_operand.vmem [shape: f32[1,128], index: 1, kind: input, shape index: {}]
  %s2 = inlined_call_operand.vmem [shape: f32[1,128], index: 2, kind: input, shape index: {}]
  %s3 = inlined_call_operand.hbm [shape: f32[128,128], index: 3, kind: input, shape index: {}]
  %s4 = inlined_call_operand.vmem [shape: f32[16,128], index: 4, kind: output, shape index: {}]
  %s5 = sld [smem:[#allocation0]]
  $region53: #{basic_transformer_block.11} parent=0
    _
  %s7 = ssub.s32 1, %s5
  %s8 = scalar_select 0, %s7, %s5
  $region1: #{basic_transformer_block.11} parent=0
    #allocation2 [shape = 'u8[65536]{0}', space=vmem, size = 0x10000, scoped, tag = 'input window, operand 3, single buffered']
    #allocation3 [shape = 's32[2]{0}', space=sflag, size = 0x8, scoped, tag = 'scoped memory for basic_transformer_block.11']
    %9 = vsyncpa [#allocation3], 0
    loop: start=0, step=1, limit=4
    $region2: #{basic_transformer_block.11} parent=1 // loop_pre_header
      _
    $region3: #{basic_transformer_block.11} parent=1 // loop_header
      %s11 = sphi 0, %s15
      %p12 = scmp.ge.s32.totalorder %s11, 4
      %s21 = sphi 0, %s23
      %s24 = sphi 0, %s21
      %s25 = sphi 0, %s24
      %s41 = sphi 0, %s25
      %s45 = sphi 0, %s45
      %s47 = sphi 0, %s45
      %s48 = sphi 0, %s47
      %s62 = sphi 0, %s48
      %s66 = sphi 0, %s66
      %s68 = sphi 0, %s66
      %s69 = sphi 0, %s68
      %s83 = sphi 0, %s69
      %s87 = sphi 0, %s87
      %s89 = sphi 0, %s87
      %s90 = sphi 0, %s89
      %s104 = sphi 0, %s90
      %s110 = sphi 0, %s112
      %s113 = sphi 0, %s110
      %s114 = sphi 0, %s113
      %s130 = sphi 0, %s114
    $region4: #{basic_transformer_block.11} parent=1 // loop_header_branch
      %14 = sbr.rel (%p12) target = $region8
    $region5: #{basic_transformer_block.11} parent=1 // loop_body
      %s16 = ssub.s32 %s11, 1
      %s17 = ssub.s32 %s11, 2
      %s18 = sadd.s32 %s11, 1
      %s19 = ssub.s32 %s11, %s18
      %p20 = scmp.eq.s32.totalorder %s19, 0
      %s22 = sadd.s32 %s21, 1
      %s23 = scalar_select %p20, %s21, %s22
      %p26 = pneg %p20
      %p27 = scmp.eq.s32.totalorder %s11, 1
      %p28 = por %p26, %p27
      %p29 = scmp.ne.s32.totalorder %s21, %s24
      %p30 = scmp.eq.s32.totalorder %s11, 0
      %p31 = por %p29, %p30
      %p32 = scmp.ne.s32.totalorder %s21, %s24
      %p33 = scmp.eq.s32.totalorder %s16, 1
      %p34 = por %p32, %p33
      %p35 = scmp.ne.s32.totalorder %s24, %s25
      %p36 = scmp.eq.s32.totalorder %s16, 0
      %p37 = por %p35, %p36
      %p38 = scmp.ne.s32.totalorder %s24, %s25
      %p39 = scmp.eq.s32.totalorder %s17, 1
      %p40 = por %p38, %p39
      %p42 = scmp.ne.s32.totalorder %s25, %s41
      %p43 = scmp.eq.s32.totalorder %s17, 0
      %p44 = por %p42, %p43
      %s46 = sadd.s32 %s45, 1
      %p49 = scmp.eq.s32.totalorder %s11, 1
      %p50 = scmp.ne.s32.totalorder %s45, %s47
      %p51 = scmp.eq.s32.totalorder %s11, 0
      %p52 = por %p50, %p51
      %p53 = scmp.ne.s32.totalorder %s45, %s47
      %p54 = scmp.eq.s32.totalorder %s16, 1
      %p55 = por %p53, %p54
      %p56 = scmp.ne.s32.totalorder %s47, %s48
      %p57 = scmp.eq.s32.totalorder %s16, 0
      %p58 = por %p56, %p57
      %p59 = scmp.ne.s32.totalorder %s47, %s48
      %p60 = scmp.eq.s32.totalorder %s17, 1
      %p61 = por %p59, %p60
      %p63 = scmp.ne.s32.totalorder %s48, %s62
      %p64 = scmp.eq.s32.totalorder %s17, 0
      %p65 = por %p63, %p64
      %s67 = sadd.s32 %s66, 1
      %p70 = scmp.eq.s32.totalorder %s11, 1
      %p71 = scmp.ne.s32.totalorder %s66, %s68
      %p72 = scmp.eq.s32.totalorder %s11, 0
      %p73 = por %p71, %p72
      %p74 = scmp.ne.s32.totalorder %s66, %s68
      %p75 = scmp.eq.s32.totalorder %s16, 1
      %p76 = por %p74, %p75
      %p77 = scmp.ne.s32.totalorder %s68, %s69
      %p78 = scmp.eq.s32.totalorder %s16, 0
      %p79 = por %p77, %p78
      %p80 = scmp.ne.s32.totalorder %s68, %s69
      %p81 = scmp.eq.s32.totalorder %s17, 1
      %p82 = por %p80, %p81
      %p84 = scmp.ne.s32.totalorder %s69, %s83
      %p85 = scmp.eq.s32.totalorder %s17, 0
      %p86 = por %p84, %p85
      %s88 = sadd.s32 %s87, 1
      %p91 = scmp.eq.s32.totalorder %s11, 1
      %p92 = scmp.ne.s32.totalorder %s87, %s89
      %p93 = scmp.eq.s32.totalorder %s11, 0
      %p94 = por %p92, %p93
      %p95 = scmp.ne.s32.totalorder %s87, %s89
      %p96 = scmp.eq.s32.totalorder %s16, 1
      %p97 = por %p95, %p96
      %p98 = scmp.ne.s32.totalorder %s89, %s90
      %p99 = scmp.eq.s32.totalorder %s16, 0
      %p100 = por %p98, %p99
      %p101 = scmp.ne.s32.totalorder %s89, %s90
      %p102 = scmp.eq.s32.totalorder %s17, 1
      %p103 = por %p101, %p102
      %p105 = scmp.ne.s32.totalorder %s90, %s104
      %p106 = scmp.eq.s32.totalorder %s17, 0
      %p107 = por %p105, %p106
      %s108 = ssub.s32 %s11, %s18
      %p109 = scmp.eq.s32.totalorder %s108, 0
      %s111 = sadd.s32 %s110, 1
      %s112 = scalar_select %p109, %s110, %s111
      %p115 = pneg %p109
      %p116 = scmp.eq.s32.totalorder %s11, 1
      %p117 = por %p115, %p116
      %p118 = scmp.ne.s32.totalorder %s110, %s113
      %p119 = scmp.eq.s32.totalorder %s11, 0
      %p120 = por %p118, %p119
      %p121 = scmp.ne.s32.totalorder %s110, %s113
      %p122 = scmp.eq.s32.totalorder %s16, 1
      %p123 = por %p121, %p122
      %p124 = scmp.ne.s32.totalorder %s113, %s114
      %p125 = scmp.eq.s32.totalorder %s16, 0
      %p126 = por %p124, %p125
      %p127 = scmp.ne.s32.totalorder %s113, %s114
      %p128 = scmp.eq.s32.totalorder %s17, 1
      %p129 = por %p127, %p128
      %p131 = scmp.ne.s32.totalorder %s114, %s130
      %p132 = scmp.eq.s32.totalorder %s17, 0
      %p133 = por %p131, %p132
      %p134 = scmp.le.s32.totalorder 1, %s11
      %p135 = scmp.lt.s32.totalorder %s11, 3
      %p136 = pnand %p134, %p135
      %p137 = pneg %p136
      // Predicated region
      $region9: #{basic_transformer_block.11} parent=5 // pred_check
        _
      $region10: #{basic_transformer_block.11} parent=5 // pred_check_branch
        %139 = sbr.rel (%p136) target = $region12
      $region11: #{basic_transformer_block.11} parent=5 // pred_region
        %s140 = ssub.s32 %s11, 1
        // Predicated region
        $region13: #{basic_transformer_block.11} parent=11 // pred_check
          %p141 = pneg %p58
        $region14: #{basic_transformer_block.11} parent=11 // pred_check_branch
          %143 = sbr.rel (%p141) target = $region16
        $region15: #{basic_transformer_block.11} parent=11 // pred_region
          _
        $region16: #{basic_transformer_block.11} parent=11 // pred_fallthru
          _
        // Predicated region
        $region17: #{basic_transformer_block.11} parent=11 // pred_check
          %p144 = pneg %p79
        $region18: #{basic_transformer_block.11} parent=11 // pred_check_branch
          %146 = sbr.rel (%p144) target = $region20
        $region19: #{basic_transformer_block.11} parent=11 // pred_region
          _
        $region20: #{basic_transformer_block.11} parent=11 // pred_fallthru
          _
        // Predicated region
        $region21: #{basic_transformer_block.11} parent=11 // pred_check
          %p147 = pneg %p100
        $region22: #{basic_transformer_block.11} parent=11 // pred_check_branch
          %149 = sbr.rel (%p147) target = $region24
        $region23: #{basic_transformer_block.11} parent=11 // pred_region
          %s151 = ssub.s32 2048, 2048
          %152 = vsyncadd [#allocation3], %s151
          %s153 = sshll.u32 [#allocation2], 4
          %s154 = int_to_ptr.vmem [resolvable:$true] %s153
          %159 = dma.hbm_to_vmem [thread:$0]  %s3, 2048, %s154, [#allocation3], 128, 128, 8
        $region24: #{basic_transformer_block.11} parent=11 // pred_fallthru
          _
      $region12: #{basic_transformer_block.11} parent=5 // pred_fallthru
        _
      %p160 = scmp.lt.s32.totalorder %s11, 2
      // Predicated region
      $region25: #{basic_transformer_block.11} parent=5 // pred_check
        %p161 = pneg %p160
      $region26: #{basic_transformer_block.11} parent=5 // pred_check_branch
        %163 = sbr.rel (%p161) target = $region28
      $region27: #{basic_transformer_block.11} parent=5 // pred_region
        // Predicated region
        $region29: #{basic_transformer_block.11} parent=27 // pred_check
          %p164 = pneg %p31
        $region30: #{basic_transformer_block.11} parent=27 // pred_check_branch
          %166 = sbr.rel (%p164) target = $region32
        $region31: #{basic_transformer_block.11} parent=27 // pred_region
          %p167 = scmp.lt.s32.totalorder %s11, 1
          %s168 = scalar_select %p167, %s11, 1
          %s169 = smul.addr %s168, 8
          %s170 = scalar_lea.vmem %s0, %s169
        $region32: #{basic_transformer_block.11} parent=27 // pred_fallthru
          _
      $region28: #{basic_transformer_block.11} parent=5 // pred_fallthru
        _
      %p171 = scmp.le.s32.totalorder 1, %s11
      %p172 = scmp.lt.s32.totalorder %s11, 3
      %p173 = pnand %p171, %p172
      %p174 = pneg %p173
      // Predicated region
      $region33: #{basic_transformer_block.11} parent=5 // pred_check
        _
      $region34: #{basic_transformer_block.11} parent=5 // pred_check_branch
        %176 = sbr.rel (%p173) target = $region36
      $region35: #{basic_transformer_block.11} parent=5 // pred_region
        %s177 = ssub.s32 %s11, 1
        // Predicated region
        $region37: #{basic_transformer_block.11} parent=35 // pred_check
          %p178 = pneg %p100
        $region38: #{basic_transformer_block.11} parent=35 // pred_check_branch
          %180 = sbr.rel (%p178) target = $region40
        $region39: #{basic_transformer_block.11} parent=35 // pred_region
          %181 = dma.done [#allocation3], 2048
        $region40: #{basic_transformer_block.11} parent=35 // pred_fallthru
          _
        %p182 = scmp.lt.s32.totalorder %s16, 1
        %s183 = scalar_select %p182, %s16, 1
        %s184 = smul.addr %s183, 8
        %s185 = scalar_lea.vmem %s0, %s184
        %p186 = pneg %p37
        %p187 = pneg %p34
        %p188 = pneg %p58
        %p189 = pneg %p55
        %p190 = pneg %p79
        %p191 = pneg %p76
        %p192 = pneg %p100
        %p193 = pneg %p97
        %p194 = pneg %p126
        %p195 = pneg %p123
        %p196 = scmp.lt.s32.totalorder %s16, 1
        %s197 = scalar_select %p196, %s16, 1
        %s198 = smul.addr %s197, 8
        %s199 = scalar_lea.vmem %s4, %s198
        %p200 = scmp.lt.s32.totalorder %s16, 1
        %s201 = scalar_select %p200, %s16, 1
        %s202 = smul.addr %s201, 8
        %s203 = scalar_lea.vmem %s0, %s202
        %p204 = scmp.lt.s32.totalorder %s16, 1
        %s205 = scalar_select %p204, %s16, 1
        %s206 = smul.addr %s205, 8
        %s207 = scalar_lea.vmem %s4, %s206
        %v208 = vld [vmem:[%s203] sm:$0xff]
        %209 = vadd.xlane.f32.xlu0 %v208
        %v210 = vpop.xlane.xlu0 %209
        %v211 = vrcp.pop 128.0
        %v212 = vmul.f32 %v210, %v211
        %v213 = vsub.f32 %v208, %v212
        %v214 = vmul.f32 %v213, %v213
        %215 = vadd.xlane.f32.xlu0 %v214
        %v216 = vpop.xlane.xlu0 %215
        %v217 = vmul.f32 %v216, %v211
        %v218 = vadd.f32 %v217, 1e-05
        %v219 = vrsqrt.pop %v218
        %v220 = vmul.f32 %v213, %v219
        %v221 = vld [vmem:[%s1] sm:$0x1]
        %v223 = vlaneseq
        %v224 = vshrl.u32 %v223, 7
        %v225 = vsub.s32 0, %v224
        %v226 = vrot.slane %v221, %v225
        %v228 = vmul.f32 %v220, %v226
        %v229 = vld [vmem:[%s2] sm:$0x1]
        %v231 = vlaneseq
        %v232 = vshrl.u32 %v231, 7
        %v233 = vsub.s32 0, %v232
        %v234 = vrot.slane %v229, %v233
        %v236 = vadd.f32 %v228, %v234
        %v237 = vld [vmem:[#allocation2] sm:$0xff]
        %v238 = vld [vmem:[#allocation2 + $0x8] sm:$0xff]
        %v239 = vld [vmem:[#allocation2 + $0x10] sm:$0xff]
        %v240 = vld [vmem:[#allocation2 + $0x18] sm:$0xff]
        %v241 = vld [vmem:[#allocation2 + $0x20] sm:$0xff]
        %v242 = vld [vmem:[#allocation2 + $0x28] sm:$0xff]
        %v243 = vld [vmem:[#allocation2 + $0x30] sm:$0xff]
        %v244 = vld [vmem:[#allocation2 + $0x38] sm:$0xff]
        %v245 = vld [vmem:[#allocation2 + $0x40] sm:$0xff]
        %v246 = vld [vmem:[#allocation2 + $0x48] sm:$0xff]
        %v247 = vld [vmem:[#allocation2 + $0x50] sm:$0xff]
        %v248 = vld [vmem:[#allocation2 + $0x58] sm:$0xff]
        %v249 = vld [vmem:[#allocation2 + $0x60] sm:$0xff]
        %v250 = vld [vmem:[#allocation2 + $0x68] sm:$0xff]
        %v251 = vld [vmem:[#allocation2 + $0x70] sm:$0xff]
        %v252 = vld [vmem:[#allocation2 + $0x78] sm:$0xff]
        %253 = vmatprep.subr.mxu0 0.0
        %254 = vmatpush1.msra.mxu0 %v237
        %255 = vmatprep.subr.mxu0 0.0
        %256 = vmatpush1.msra.mxu0 %v238
        %257 = vmatprep.subr.mxu0 0.0
        %258 = vmatpush1.msra.mxu0 %v239
        %259 = vmatprep.subr.mxu0 0.0
        %260 = vmatpush1.msra.mxu0 %v240
        %261 = vmatprep.subr.mxu0 0.0
        %262 = vmatpush1.msra.mxu0 %v241
        %263 = vmatprep.subr.mxu0 0.0
        %264 = vmatpush1.msra.mxu0 %v242
        %265 = vmatprep.subr.mxu0 0.0
        %266 = vmatpush1.msra.mxu0 %v243
        %267 = vmatprep.subr.mxu0 0.0
        %268 = vmatpush1.msra.mxu0 %v244
        %269 = vmatprep.subr.mxu0 0.0
        %270 = vmatpush1.msra.mxu0 %v245
        %271 = vmatprep.subr.mxu0 0.0
        %272 = vmatpush1.msra.mxu0 %v246
        %273 = vmatprep.subr.mxu0 0.0
        %274 = vmatpush1.msra.mxu0 %v247
        %275 = vmatprep.subr.mxu0 0.0
        %276 = vmatpush1.msra.mxu0 %v248
        %277 = vmatprep.subr.mxu0 0.0
        %278 = vmatpush1.msra.mxu0 %v249
        %279 = vmatprep.subr.mxu0 0.0
        %280 = vmatpush1.msra.mxu0 %v250
        %281 = vmatprep.subr.mxu0 0.0
        %282 = vmatpush1.msra.mxu0 %v251
        %283 = vmatprep.subr.mxu0 0.0
        %284 = vmatpush1.msra.mxu0 %v252
        %285 = vmatprep.subr.mxu0 0.0
        %286 = vmatpush1.msra.mxu0 0.0
        %287 = vmatprep.subr.mxu0 0.0
        %288 = vmatpush1.msra.mxu0 0.0
        %289 = vmatprep.subr.mxu0 0.0
        %290 = vmatpush1.msra.mxu0 0.0
        %291 = vmatprep.subr.mxu0 0.0
        %292 = vmatpush1.msra.mxu0 0.0
        %293 = vmatprep.subr.mxu0 0.0
        %294 = vmatpush1.msra.mxu0 0.0
        %295 = vmatprep.subr.mxu0 0.0
        %296 = vmatpush1.msra.mxu0 0.0
        %297 = vmatprep.subr.mxu0 0.0
        %298 = vmatpush1.msra.mxu0 0.0
        %299 = vmatprep.subr.mxu0 0.0
        %300 = vmatpush1.msra.mxu0 0.0
        %301 = vmatprep.subr.mxu0 0.0
        %302 = vmatpush1.msra.mxu0 0.0
        %303 = vmatprep.subr.mxu0 0.0
        %304 = vmatpush1.msra.mxu0 0.0
        %305 = vmatprep.subr.mxu0 0.0
        %306 = vmatpush1.msra.mxu0 0.0
        %307 = vmatprep.subr.mxu0 0.0
        %308 = vmatpush1.msra.mxu0 0.0
        %309 = vmatprep.subr.mxu0 0.0
        %310 = vmatpush1.msra.mxu0 0.0
        %311 = vmatprep.subr.mxu0 0.0
        %312 = vmatpush1.msra.mxu0 0.0
        %313 = vmatprep.subr.mxu0 0.0
        %314 = vmatpush1.msra.mxu0 0.0
        %315 = vmatprep.subr.mxu0 0.0
        %316 = vmatpush1.msra.mxu0 0.0
        %317 = vmatprep.mubr.f32.mxu0 0.0
        %318 = vmatmul.mubr.f32.gmra.mrb[0].mxu0 %v236
        %v319 = vpop.f32.mrb[0].mxu0
        %v320 = vadd.f32 0.0, %v319
        %v321 = vpop.f32.mrb[0].mxu0
        %322 = vdwg.mxu0
        %323 = vst [vmem:[%s207] sm:$0xff] %v320
        %p324 = scmp.lt.s32.totalorder %s16, 1
        %s325 = scalar_select %p324, %s16, 1
        %s326 = smul.addr %s325, 8
        %s327 = scalar_lea.vmem %s4, %s326
        // Predicated region
        $region41: #{basic_transformer_block.11} parent=35 // pred_check
          %p328 = pneg %p123
        $region42: #{basic_transformer_block.11} parent=35 // pred_check_branch
          %330 = sbr.rel (%p328) target = $region44
        $region43: #{basic_transformer_block.11} parent=35 // pred_region
          _
        $region44: #{basic_transformer_block.11} parent=35 // pred_fallthru
          _
      $region36: #{basic_transformer_block.11} parent=5 // pred_fallthru
        _
      %p331 = scmp.le.s32.totalorder 2, %s11
      // Predicated region
      $region45: #{basic_transformer_block.11} parent=5 // pred_check
        %p332 = pneg %p331
      $region46: #{basic_transformer_block.11} parent=5 // pred_check_branch
        %334 = sbr.rel (%p332) target = $region48
      $region47: #{basic_transformer_block.11} parent=5 // pred_region
        %s335 = ssub.s32 %s11, 2
        // Predicated region
        $region49: #{basic_transformer_block.11} parent=47 // pred_check
          %p336 = pneg %p129
        $region50: #{basic_transformer_block.11} parent=47 // pred_check_branch
          %338 = sbr.rel (%p336) target = $region52
        $region51: #{basic_transformer_block.11} parent=47 // pred_region
          %p339 = scmp.lt.s32.totalorder %s17, 1
          %s340 = scalar_select %p339, %s17, 1
          %s341 = smul.addr %s340, 8
          %s342 = scalar_lea.vmem %s4, %s341
        $region52: #{basic_transformer_block.11} parent=47 // pred_fallthru
          _
      $region48: #{basic_transformer_block.11} parent=5 // pred_fallthru
        _
    $region6: #{basic_transformer_block.11} parent=1 // loop_footer
      %s15 = sadd.s32 1, %s11
    $region7: #{basic_transformer_block.11} parent=1 // loop_footer_branch
      %10 = sbr.rel target = $region3
    $region8: #{basic_transformer_block.11} parent=1 // loop_exit
      _
    %343 = vsyncpa [#allocation3], 1
    %s344 = scalar_lea.sflag [#allocation3], 1
    %345 = vsyncpa %s344, 1

// kernel: basic_transformer_block.8
$region0: #{basic_transformer_block.8}
  #allocation0 [shape = 'u32[]', space=smem, size = 0x4, offset = 0x4, fixed_abs, tag = 'smem constant byte address 0x4 - core index']
  #allocation1 [shape = 'u32[144,128]{1,0:T(1,128)}', space=vmem, size = 0x12000, scoped, tag = 'internal scratch']
  %s0 = inlined_call_operand.hbm [shape: f32[16,128], index: 0, kind: input, shape index: {}]
  %s1 = inlined_call_operand.vmem [shape: f32[1,128], index: 1, kind: input, shape index: {}]
  %s2 = inlined_call_operand.vmem [shape: f32[1,128], index: 2, kind: input, shape index: {}]
  %s3 = inlined_call_operand.hbm [shape: f32[128,128], index: 3, kind: input, shape index: {}]
  %s4 = inlined_call_operand.hbm [shape: f32[128,128], index: 4, kind: input, shape index: {}]
  %s5 = inlined_call_operand.hbm [shape: f32[128,128], index: 5, kind: input, shape index: {}]
  %s6 = inlined_call_operand.vmem [shape: f32[16,128], index: 6, kind: output, shape index: {0}]
  %s7 = inlined_call_operand.vmem [shape: f32[16,128], index: 7, kind: output, shape index: {1}]
  %s8 = inlined_call_operand.vmem [shape: f32[16,128], index: 8, kind: output, shape index: {2}]
  %9 = xla_tuple %s6, %s7, %s8
  %s10 = sld [smem:[#allocation0]]
  $region89: #{basic_transformer_block.8} parent=0
    _
  %s12 = ssub.s32 1, %s10
  %s13 = scalar_select 0, %s12, %s10
  $region1: #{basic_transformer_block.8} parent=0
    #allocation2 [shape = 'u8[8192]{0}', space=vmem, size = 0x2000, scoped, tag = 'input window, operand 0']
    #allocation3 [shape = 's32[2]{0}', space=sflag, size = 0x8, scoped, tag = 'scoped memory for basic_transformer_block.8']
    #allocation4 [shape = 'u8[65536]{0}', space=vmem, size = 0x10000, scoped, tag = 'input window, operand 3, single buffered']
    #allocation5 [shape = 's32[1]{0}', space=sflag, size = 0x4, scoped, tag = 'scoped memory for basic_transformer_block.8']
    #allocation6 [shape = 'u8[65536]{0}', space=vmem, size = 0x10000, scoped, tag = 'input window, operand 4, single buffered']
    #allocation7 [shape = 'u8[65536]{0}', space=vmem, size = 0x10000, scoped, tag = 'input window, operand 5, single buffered']
    #allocation8 [shape = 's32[1]{0}', space=sflag, size = 0x4, scoped, tag = 'scoped memory for basic_transformer_block.8']
    %14 = vsyncpa [#allocation3], 0
    %s15 = scalar_lea.sflag [#allocation3], 1
    %16 = vsyncpa %s15, 0
    %17 = vsyncpa [#allocation5], 0
    %18 = vsyncpa [#allocation8], 0
    loop: start=0, step=1, limit=4
    $region2: #{basic_transformer_block.8} parent=1 // loop_pre_header
      _
    $region3: #{basic_transformer_block.8} parent=1 // loop_header
      %s20 = sphi 0, %s24
      %p21 = scmp.ge.s32.totalorder %s20, 4
      %s30 = sphi 0, %s32
      %s33 = sphi 0, %s30
      %s34 = sphi 0, %s33
      %s50 = sphi 0, %s34
      %s54 = sphi 0, %s54
      %s56 = sphi 0, %s54
      %s57 = sphi 0, %s56
      %s71 = sphi 0, %s57
      %s75 = sphi 0, %s75
      %s77 = sphi 0, %s75
      %s78 = sphi 0, %s77
      %s92 = sphi 0, %s78
      %s96 = sphi 0, %s96
      %s98 = sphi 0, %s96
      %s99 = sphi 0, %s98
      %s113 = sphi 0, %s99
      %s117 = sphi 0, %s117
      %s119 = sphi 0, %s117
      %s120 = sphi 0, %s119
      %s134 = sphi 0, %s120
      %s138 = sphi 0, %s138
      %s140 = sphi 0, %s138
      %s141 = sphi 0, %s140
      %s155 = sphi 0, %s141
      %s161 = sphi 0, %s163
      %s164 = sphi 0, %s161
      %s165 = sphi 0, %s164
      %s181 = sphi 0, %s165
      %s187 = sphi 0, %s189
      %s190 = sphi 0, %s187
      %s191 = sphi 0, %s190
      %s207 = sphi 0, %s191
      %s213 = sphi 0, %s215
      %s216 = sphi 0, %s213
      %s217 = sphi 0, %s216
      %s233 = sphi 0, %s217
    $region4: #{basic_transformer_block.8} parent=1 // loop_header_branch
      %23 = sbr.rel (%p21) target = $region8
    $region5: #{basic_transformer_block.8} parent=1 // loop_body
      %s25 = ssub.s32 %s20, 1
      %s26 = ssub.s32 %s20, 2
      %s27 = sadd.s32 %s20, 1
      %s28 = ssub.s32 %s20, %s27
      %p29 = scmp.eq.s32.totalorder %s28, 0
      %s31 = sadd.s32 %s30, 1
      %s32 = scalar_select %p29, %s30, %s31
      %p35 = pneg %p29
      %p36 = scmp.eq.s32.totalorder %s20, 1
      %p37 = por %p35, %p36
      %p38 = scmp.ne.s32.totalorder %s30, %s33
      %p39 = scmp.eq.s32.totalorder %s20, 0
      %p40 = por %p38, %p39
      %p41 = scmp.ne.s32.totalorder %s30, %s33
      %p42 = scmp.eq.s32.totalorder %s25, 1
      %p43 = por %p41, %p42
      %p44 = scmp.ne.s32.totalorder %s33, %s34
      %p45 = scmp.eq.s32.totalorder %s25, 0
      %p46 = por %p44, %p45
      %p47 = scmp.ne.s32.totalorder %s33, %s34
      %p48 = scmp.eq.s32.totalorder %s26, 1
      %p49 = por %p47, %p48
      %p51 = scmp.ne.s32.totalorder %s34, %s50
      %p52 = scmp.eq.s32.totalorder %s26, 0
      %p53 = por %p51, %p52
      %s55 = sadd.s32 %s54, 1
      %p58 = scmp.eq.s32.totalorder %s20, 1
      %p59 = scmp.ne.s32.totalorder %s54, %s56
      %p60 = scmp.eq.s32.totalorder %s20, 0
      %p61 = por %p59, %p60
      %p62 = scmp.ne.s32.totalorder %s54, %s56
      %p63 = scmp.eq.s32.totalorder %s25, 1
      %p64 = por %p62, %p63
      %p65 = scmp.ne.s32.totalorder %s56, %s57
      %p66 = scmp.eq.s32.totalorder %s25, 0
      %p67 = por %p65, %p66
      %p68 = scmp.ne.s32.totalorder %s56, %s57
      %p69 = scmp.eq.s32.totalorder %s26, 1
      %p70 = por %p68, %p69
      %p72 = scmp.ne.s32.totalorder %s57, %s71
      %p73 = scmp.eq.s32.totalorder %s26, 0
      %p74 = por %p72, %p73
      %s76 = sadd.s32 %s75, 1
      %p79 = scmp.eq.s32.totalorder %s20, 1
      %p80 = scmp.ne.s32.totalorder %s75, %s77
      %p81 = scmp.eq.s32.totalorder %s20, 0
      %p82 = por %p80, %p81
      %p83 = scmp.ne.s32.totalorder %s75, %s77
      %p84 = scmp.eq.s32.totalorder %s25, 1
      %p85 = por %p83, %p84
      %p86 = scmp.ne.s32.totalorder %s77, %s78
      %p87 = scmp.eq.s32.totalorder %s25, 0
      %p88 = por %p86, %p87
      %p89 = scmp.ne.s32.totalorder %s77, %s78
      %p90 = scmp.eq.s32.totalorder %s26, 1
      %p91 = por %p89, %p90
      %p93 = scmp.ne.s32.totalorder %s78, %s92
      %p94 = scmp.eq.s32.totalorder %s26, 0
      %p95 = por %p93, %p94
      %s97 = sadd.s32 %s96, 1
      %p100 = scmp.eq.s32.totalorder %s20, 1
      %p101 = scmp.ne.s32.totalorder %s96, %s98
      %p102 = scmp.eq.s32.totalorder %s20, 0
      %p103 = por %p101, %p102
      %p104 = scmp.ne.s32.totalorder %s96, %s98
      %p105 = scmp.eq.s32.totalorder %s25, 1
      %p106 = por %p104, %p105
      %p107 = scmp.ne.s32.totalorder %s98, %s99
      %p108 = scmp.eq.s32.totalorder %s25, 0
      %p109 = por %p107, %p108
      %p110 = scmp.ne.s32.totalorder %s98, %s99
      %p111 = scmp.eq.s32.totalorder %s26, 1
      %p112 = por %p110, %p111
      %p114 = scmp.ne.s32.totalorder %s99, %s113
      %p115 = scmp.eq.s32.totalorder %s26, 0
      %p116 = por %p114, %p115
      %s118 = sadd.s32 %s117, 1
      %p121 = scmp.eq.s32.totalorder %s20, 1
      %p122 = scmp.ne.s32.totalorder %s117, %s119
      %p123 = scmp.eq.s32.totalorder %s20, 0
      %p124 = por %p122, %p123
      %p125 = scmp.ne.s32.totalorder %s117, %s119
      %p126 = scmp.eq.s32.totalorder %s25, 1
      %p127 = por %p125, %p126
      %p128 = scmp.ne.s32.totalorder %s119, %s120
      %p129 = scmp.eq.s32.totalorder %s25, 0
      %p130 = por %p128, %p129
      %p131 = scmp.ne.s32.totalorder %s119, %s120
      %p132 = scmp.eq.s32.totalorder %s26, 1
      %p133 = por %p131, %p132
      %p135 = scmp.ne.s32.totalorder %s120, %s134
      %p136 = scmp.eq.s32.totalorder %s26, 0
      %p137 = por %p135, %p136
      %s139 = sadd.s32 %s138, 1
      %p142 = scmp.eq.s32.totalorder %s20, 1
      %p143 = scmp.ne.s32.totalorder %s138, %s140
      %p144 = scmp.eq.s32.totalorder %s20, 0
      %p145 = por %p143, %p144
      %p146 = scmp.ne.s32.totalorder %s138, %s140
      %p147 = scmp.eq.s32.totalorder %s25, 1
      %p148 = por %p146, %p147
      %p149 = scmp.ne.s32.totalorder %s140, %s141
      %p150 = scmp.eq.s32.totalorder %s25, 0
      %p151 = por %p149, %p150
      %p152 = scmp.ne.s32.totalorder %s140, %s141
      %p153 = scmp.eq.s32.totalorder %s26, 1
      %p154 = por %p152, %p153
      %p156 = scmp.ne.s32.totalorder %s141, %s155
      %p157 = scmp.eq.s32.totalorder %s26, 0
      %p158 = por %p156, %p157
      %s159 = ssub.s32 %s20, %s27
      %p160 = scmp.eq.s32.totalorder %s159, 0
      %s162 = sadd.s32 %s161, 1
      %s163 = scalar_select %p160, %s161, %s162
      %p166 = pneg %p160
      %p167 = scmp.eq.s32.totalorder %s20, 1
      %p168 = por %p166, %p167
      %p169 = scmp.ne.s32.totalorder %s161, %s164
      %p170 = scmp.eq.s32.totalorder %s20, 0
      %p171 = por %p169, %p170
      %p172 = scmp.ne.s32.totalorder %s161, %s164
      %p173 = scmp.eq.s32.totalorder %s25, 1
      %p174 = por %p172, %p173
      %p175 = scmp.ne.s32.totalorder %s164, %s165
      %p176 = scmp.eq.s32.totalorder %s25, 0
      %p177 = por %p175, %p176
      %p178 = scmp.ne.s32.totalorder %s164, %s165
      %p179 = scmp.eq.s32.totalorder %s26, 1
      %p180 = por %p178, %p179
      %p182 = scmp.ne.s32.totalorder %s165, %s181
      %p183 = scmp.eq.s32.totalorder %s26, 0
      %p184 = por %p182, %p183
      %s185 = ssub.s32 %s20, %s27
      %p186 = scmp.eq.s32.totalorder %s185, 0
      %s188 = sadd.s32 %s187, 1
      %s189 = scalar_select %p186, %s187, %s188
      %p192 = pneg %p186
      %p193 = scmp.eq.s32.totalorder %s20, 1
      %p194 = por %p192, %p193
      %p195 = scmp.ne.s32.totalorder %s187, %s190
      %p196 = scmp.eq.s32.totalorder %s20, 0
      %p197 = por %p195, %p196
      %p198 = scmp.ne.s32.totalorder %s187, %s190
      %p199 = scmp.eq.s32.totalorder %s25, 1
      %p200 = por %p198, %p199
      %p201 = scmp.ne.s32.totalorder %s190, %s191
      %p202 = scmp.eq.s32.totalorder %s25, 0
      %p203 = por %p201, %p202
      %p204 = scmp.ne.s32.totalorder %s190, %s191
      %p205 = scmp.eq.s32.totalorder %s26, 1
      %p206 = por %p204, %p205
      %p208 = scmp.ne.s32.totalorder %s191, %s207
      %p209 = scmp.eq.s32.totalorder %s26, 0
      %p210 = por %p208, %p209
      %s211 = ssub.s32 %s20, %s27
      %p212 = scmp.eq.s32.totalorder %s211, 0
      %s214 = sadd.s32 %s213, 1
      %s215 = scalar_select %p212, %s213, %s214
      %p218 = pneg %p212
      %p219 = scmp.eq.s32.totalorder %s20, 1
      %p220 = por %p218, %p219
      %p221 = scmp.ne.s32.totalorder %s213, %s216
      %p222 = scmp.eq.s32.totalorder %s20, 0
      %p223 = por %p221, %p222
      %p224 = scmp.ne.s32.totalorder %s213, %s216
      %p225 = scmp.eq.s32.totalorder %s25, 1
      %p226 = por %p224, %p225
      %p227 = scmp.ne.s32.totalorder %s216, %s217
      %p228 = scmp.eq.s32.totalorder %s25, 0
      %p229 = por %p227, %p228
      %p230 = scmp.ne.s32.totalorder %s216, %s217
      %p231 = scmp.eq.s32.totalorder %s26, 1
      %p232 = por %p230, %p231
      %p234 = scmp.ne.s32.totalorder %s217, %s233
      %p235 = scmp.eq.s32.totalorder %s26, 0
      %p236 = por %p234, %p235
      %p237 = scmp.le.s32.totalorder 1, %s20
      %p238 = scmp.lt.s32.totalorder %s20, 3
      %p239 = pnand %p237, %p238
      %p240 = pneg %p239
      // Predicated region
      $region9: #{basic_transformer_block.8} parent=5 // pred_check
        _
      $region10: #{basic_transformer_block.8} parent=5 // pred_check_branch
        %242 = sbr.rel (%p239) target = $region12
      $region11: #{basic_transformer_block.8} parent=5 // pred_region
        %s243 = ssub.s32 %s20, 1
        // Predicated region
        $region13: #{basic_transformer_block.8} parent=11 // pred_check
          %p244 = pneg %p67
        $region14: #{basic_transformer_block.8} parent=11 // pred_check_branch
          %246 = sbr.rel (%p244) target = $region16
        $region15: #{basic_transformer_block.8} parent=11 // pred_region
          _
        $region16: #{basic_transformer_block.8} parent=11 // pred_fallthru
          _
        // Predicated region
        $region17: #{basic_transformer_block.8} parent=11 // pred_check
          %p247 = pneg %p88
        $region18: #{basic_transformer_block.8} parent=11 // pred_check_branch
          %249 = sbr.rel (%p247) target = $region20
        $region19: #{basic_transformer_block.8} parent=11 // pred_region
          _
        $region20: #{basic_transformer_block.8} parent=11 // pred_fallthru
          _
        // Predicated region
        $region21: #{basic_transformer_block.8} parent=11 // pred_check
          %p250 = pneg %p109
        $region22: #{basic_transformer_block.8} parent=11 // pred_check_branch
          %252 = sbr.rel (%p250) target = $region24
        $region23: #{basic_transformer_block.8} parent=11 // pred_region
          %s254 = ssub.s32 2048, 2048
          %255 = vsyncadd [#allocation5], %s254
          %s256 = sshll.u32 [#allocation4], 4
          %s257 = int_to_ptr.vmem [resolvable:$true] %s256
          %262 = dma.hbm_to_vmem [thread:$0]  %s3, 2048, %s257, [#allocation5], 128, 128, 8
        $region24: #{basic_transformer_block.8} parent=11 // pred_fallthru
          _
        // Predicated region
        $region25: #{basic_transformer_block.8} parent=11 // pred_check
          %p263 = pneg %p130
        $region26: #{basic_transformer_block.8} parent=11 // pred_check_branch
          %265 = sbr.rel (%p263) target = $region28
        $region27: #{basic_transformer_block.8} parent=11 // pred_region
          %s267 = ssub.s32 2048, 2048
          %268 = vsyncadd [#allocation5], %s267
          %s269 = sshll.u32 [#allocation6], 4
          %s270 = int_to_ptr.vmem [resolvable:$true] %s269
          %275 = dma.hbm_to_vmem [thread:$0]  %s4, 2048, %s270, [#allocation5], 128, 128, 8
        $region28: #{basic_transformer_block.8} parent=11 // pred_fallthru
          _
        // Predicated region
        $region29: #{basic_transformer_block.8} parent=11 // pred_check
          %p276 = pneg %p151
        $region30: #{basic_transformer_block.8} parent=11 // pred_check_branch
          %278 = sbr.rel (%p276) target = $region32
        $region31: #{basic_transformer_block.8} parent=11 // pred_region
          %s280 = ssub.s32 2048, 2048
          %281 = vsyncadd [#allocation8], %s280
          %s282 = sshll.u32 [#allocation7], 4
          %s283 = int_to_ptr.vmem [resolvable:$true] %s282
          %288 = dma.hbm_to_vmem [thread:$0]  %s5, 2048, %s283, [#allocation8], 128, 128, 8
        $region32: #{basic_transformer_block.8} parent=11 // pred_fallthru
          _
      $region12: #{basic_transformer_block.8} parent=5 // pred_fallthru
        _
      %p289 = scmp.lt.s32.totalorder %s20, 2
      // Predicated region
      $region33: #{basic_transformer_block.8} parent=5 // pred_check
        %p290 = pneg %p289
      $region34: #{basic_transformer_block.8} parent=5 // pred_check_branch
        %292 = sbr.rel (%p290) target = $region36
      $region35: #{basic_transformer_block.8} parent=5 // pred_region
        // Predicated region
        $region37: #{basic_transformer_block.8} parent=35 // pred_check
          %p293 = pneg %p40
        $region38: #{basic_transformer_block.8} parent=35 // pred_check_branch
          %295 = sbr.rel (%p293) target = $region40
        $region39: #{basic_transformer_block.8} parent=35 // pred_region
          %s296 = sand.u32 %s30, 1
          %s297 = scalar_lea.sflag [#allocation3], %s296
          %s298 = sand.u32 %s30, 1
          %s299 = smul.addr %s298, 8
          %s300 = scalar_lea.vmem [#allocation2], %s299
          %s302 = ssub.s32 128, 128
          %303 = vsyncadd %s297, %s302
          %s304 = smul.addr %s20, 128
          %s305 = scalar_lea.hbm %s0, %s304
          %s307 = sshll.u32 %s300, 4
          %s308 = int_to_ptr.vmem [resolvable:$true] %s307
          %310 = dma.hbm_to_vmem [thread:$0]  %s305, 128, %s308, %s297
        $region40: #{basic_transformer_block.8} parent=35 // pred_fallthru
          _
      $region36: #{basic_transformer_block.8} parent=5 // pred_fallthru
        _
      %p311 = scmp.le.s32.totalorder 1, %s20
      %p312 = scmp.lt.s32.totalorder %s20, 3
      %p313 = pnand %p311, %p312
      %p314 = pneg %p313
      // Predicated region
      $region41: #{basic_transformer_block.8} parent=5 // pred_check
        _
      $region42: #{basic_transformer_block.8} parent=5 // pred_check_branch
        %316 = sbr.rel (%p313) target = $region44
      $region43: #{basic_transformer_block.8} parent=5 // pred_region
        %s317 = ssub.s32 %s20, 1
        %s318 = sand.u32 %s33, 1
        %s319 = scalar_lea.sflag [#allocation3], %s318
        %s320 = sand.u32 %s33, 1
        %s321 = smul.addr %s320, 8
        %s322 = scalar_lea.vmem [#allocation2], %s321
        // Predicated region
        $region45: #{basic_transformer_block.8} parent=43 // pred_check
          %p323 = pneg %p46
        $region46: #{basic_transformer_block.8} parent=43 // pred_check_branch
          %325 = sbr.rel (%p323) target = $region48
        $region47: #{basic_transformer_block.8} parent=43 // pred_region
          %326 = dma.done %s319, 128
        $region48: #{basic_transformer_block.8} parent=43 // pred_fallthru
          _
        // Predicated region
        $region49: #{basic_transformer_block.8} parent=43 // pred_check
          %p327 = pneg %p109
        $region50: #{basic_transformer_block.8} parent=43 // pred_check_branch
          %329 = sbr.rel (%p327) target = $region52
        $region51: #{basic_transformer_block.8} parent=43 // pred_region
          %330 = dma.done [#allocation5], 2048
        $region52: #{basic_transformer_block.8} parent=43 // pred_fallthru
          _
        // Predicated region
        $region53: #{basic_transformer_block.8} parent=43 // pred_check
          %p331 = pneg %p130
        $region54: #{basic_transformer_block.8} parent=43 // pred_check_branch
          %333 = sbr.rel (%p331) target = $region56
        $region55: #{basic_transformer_block.8} parent=43 // pred_region
          %334 = dma.done [#allocation5], 2048
        $region56: #{basic_transformer_block.8} parent=43 // pred_fallthru
          _
        // Predicated region
        $region57: #{basic_transformer_block.8} parent=43 // pred_check
          %p335 = pneg %p151
        $region58: #{basic_transformer_block.8} parent=43 // pred_check_branch
          %337 = sbr.rel (%p335) target = $region60
        $region59: #{basic_transformer_block.8} parent=43 // pred_region
          %338 = dma.done [#allocation8], 2048
        $region60: #{basic_transformer_block.8} parent=43 // pred_fallthru
          _
        %s339 = sand.u32 %s33, 1
        %s340 = scalar_lea.sflag [#allocation3], %s339
        %s341 = sand.u32 %s33, 1
        %s342 = smul.addr %s341, 8
        %s343 = scalar_lea.vmem [#allocation2], %s342
        %p344 = pneg %p46
        %p345 = pneg %p43
        %p346 = pneg %p67
        %p347 = pneg %p64
        %p348 = pneg %p88
        %p349 = pneg %p85
        %p350 = pneg %p109
        %p351 = pneg %p106
        %p352 = pneg %p130
        %p353 = pneg %p127
        %p354 = pneg %p151
        %p355 = pneg %p148
        %p356 = pneg %p177
        %p357 = pneg %p174
        %p358 = scmp.lt.s32.totalorder %s25, 1
        %s359 = scalar_select %p358, %s25, 1
        %s360 = smul.addr %s359, 8
        %s361 = scalar_lea.vmem %s6, %s360
        %p362 = pneg %p203
        %p363 = pneg %p200
        %p364 = scmp.lt.s32.totalorder %s25, 1
        %s365 = scalar_select %p364, %s25, 1
        %s366 = smul.addr %s365, 8
        %s367 = scalar_lea.vmem %s7, %s366
        %p368 = pneg %p229
        %p369 = pneg %p226
        %p370 = scmp.lt.s32.totalorder %s25, 1
        %s371 = scalar_select %p370, %s25, 1
        %s372 = smul.addr %s371, 8
        %s373 = scalar_lea.vmem %s8, %s372
        %p374 = scmp.lt.s32.totalorder %s25, 1
        %s375 = scalar_select %p374, %s25, 1
        %s376 = smul.addr %s375, 8
        %s377 = scalar_lea.vmem %s6, %s376
        %p378 = scmp.lt.s32.totalorder %s25, 1
        %s379 = scalar_select %p378, %s25, 1
        %s380 = smul.addr %s379, 8
        %s381 = scalar_lea.vmem %s7, %s380
        %p382 = scmp.lt.s32.totalorder %s25, 1
        %s383 = scalar_select %p382, %s25, 1
        %s384 = smul.addr %s383, 8
        %s385 = scalar_lea.vmem %s8, %s384
        %v386 = vld [vmem:[%s322] sm:$0xff]
        %387 = vadd.xlane.f32.xlu0 %v386
        %v388 = vpop.xlane.xlu0 %387
        %v389 = vrcp.pop 128.0
        %v390 = vmul.f32 %v388, %v389
        %v391 = vsub.f32 %v386, %v390
        %v392 = vmul.f32 %v391, %v391
        %393 = vadd.xlane.f32.xlu0 %v392
        %v394 = vpop.xlane.xlu0 %393
        %v395 = vmul.f32 %v394, %v389
        %v396 = vadd.f32 %v395, 1e-05
        %v397 = vrsqrt.pop %v396
        %v398 = vmul.f32 %v391, %v397
        %v399 = vld [vmem:[%s1] sm:$0x1]
        %v401 = vlaneseq
        %v402 = vshrl.u32 %v401, 7
        %v403 = vsub.s32 0, %v402
        %v404 = vrot.slane %v399, %v403
        %v406 = vmul.f32 %v398, %v404
        %v407 = vld [vmem:[%s2] sm:$0x1]
        %v409 = vlaneseq
        %v410 = vshrl.u32 %v409, 7
        %v411 = vsub.s32 0, %v410
        %v412 = vrot.slane %v407, %v411
        %v414 = vadd.f32 %v406, %v412
        %v415 = vld [vmem:[#allocation4] sm:$0xff]
        %v416 = vld [vmem:[#allocation4 + $0x8] sm:$0xff]
        %v417 = vld [vmem:[#allocation4 + $0x10] sm:$0xff]
        %v418 = vld [vmem:[#allocation4 + $0x18] sm:$0xff]
        %v419 = vld [vmem:[#allocation4 + $0x20] sm:$0xff]
        %v420 = vld [vmem:[#allocation4 + $0x28] sm:$0xff]
        %v421 = vld [vmem:[#allocation4 + $0x30] sm:$0xff]
        %v422 = vld [vmem:[#allocation4 + $0x38] sm:$0xff]
        %v423 = vld [vmem:[#allocation4 + $0x40] sm:$0xff]
        %v424 = vld [vmem:[#allocation4 + $0x48] sm:$0xff]
        %v425 = vld [vmem:[#allocation4 + $0x50] sm:$0xff]
        %v426 = vld [vmem:[#allocation4 + $0x58] sm:$0xff]
        %v427 = vld [vmem:[#allocation4 + $0x60] sm:$0xff]
        %v428 = vld [vmem:[#allocation4 + $0x68] sm:$0xff]
        %v429 = vld [vmem:[#allocation4 + $0x70] sm:$0xff]
        %v430 = vld [vmem:[#allocation4 + $0x78] sm:$0xff]
        %431 = vmatprep.subr.mxu0 0.0
        %432 = vmatpush1.msra.mxu0 %v415
        %433 = vmatprep.subr.mxu0 0.0
        %434 = vmatpush1.msra.mxu0 %v416
        %435 = vmatprep.subr.mxu0 0.0
        %436 = vmatpush1.msra.mxu0 %v417
        %437 = vmatprep.subr.mxu0 0.0
        %438 = vmatpush1.msra.mxu0 %v418
        %439 = vmatprep.subr.mxu0 0.0
        %440 = vmatpush1.msra.mxu0 %v419
        %441 = vmatprep.subr.mxu0 0.0
        %442 = vmatpush1.msra.mxu0 %v420
        %443 = vmatprep.subr.mxu0 0.0
        %444 = vmatpush1.msra.mxu0 %v421
        %445 = vmatprep.subr.mxu0 0.0
        %446 = vmatpush1.msra.mxu0 %v422
        %447 = vmatprep.subr.mxu0 0.0
        %448 = vmatpush1.msra.mxu0 %v423
        %449 = vmatprep.subr.mxu0 0.0
        %450 = vmatpush1.msra.mxu0 %v424
        %451 = vmatprep.subr.mxu0 0.0
        %452 = vmatpush1.msra.mxu0 %v425
        %453 = vmatprep.subr.mxu0 0.0
        %454 = vmatpush1.msra.mxu0 %v426
        %455 = vmatprep.subr.mxu0 0.0
        %456 = vmatpush1.msra.mxu0 %v427
        %457 = vmatprep.subr.mxu0 0.0
        %458 = vmatpush1.msra.mxu0 %v428
        %459 = vmatprep.subr.mxu0 0.0
        %460 = vmatpush1.msra.mxu0 %v429
        %461 = vmatprep.subr.mxu0 0.0
        %462 = vmatpush1.msra.mxu0 %v430
        %463 = vmatprep.subr.mxu0 0.0
        %464 = vmatpush1.msra.mxu0 0.0
        %465 = vmatprep.subr.mxu0 0.0
        %466 = vmatpush1.msra.mxu0 0.0
        %467 = vmatprep.subr.mxu0 0.0
        %468 = vmatpush1.msra.mxu0 0.0
        %469 = vmatprep.subr.mxu0 0.0
        %470 = vmatpush1.msra.mxu0 0.0
        %471 = vmatprep.subr.mxu0 0.0
        %472 = vmatpush1.msra.mxu0 0.0
        %473 = vmatprep.subr.mxu0 0.0
        %474 = vmatpush1.msra.mxu0 0.0
        %475 = vmatprep.subr.mxu0 0.0
        %476 = vmatpush1.msra.mxu0 0.0
        %477 = vmatprep.subr.mxu0 0.0
        %478 = vmatpush1.msra.mxu0 0.0
        %479 = vmatprep.subr.mxu0 0.0
        %480 = vmatpush1.msra.mxu0 0.0
        %481 = vmatprep.subr.mxu0 0.0
        %482 = vmatpush1.msra.mxu0 0.0
        %483 = vmatprep.subr.mxu0 0.0
        %484 = vmatpush1.msra.mxu0 0.0
        %485 = vmatprep.subr.mxu0 0.0
        %486 = vmatpush1.msra.mxu0 0.0
        %487 = vmatprep.subr.mxu0 0.0
        %488 = vmatpush1.msra.mxu0 0.0
        %489 = vmatprep.subr.mxu0 0.0
        %490 = vmatpush1.msra.mxu0 0.0
        %491 = vmatprep.subr.mxu0 0.0
        %492 = vmatpush1.msra.mxu0 0.0
        %493 = vmatprep.subr.mxu0 0.0
        %494 = vmatpush1.msra.mxu0 0.0
        %495 = vmatprep.mubr.f32.mxu0 0.0
        %496 = vmatmul.mubr.f32.gmra.mrb[0].mxu0 %v414
        %v497 = vpop.f32.mrb[0].mxu0
        %v498 = vadd.f32 0.0, %v497
        %v499 = vpop.f32.mrb[0].mxu0
        %500 = vdwg.mxu0
        %501 = vst [vmem:[%s377] sm:$0xff] %v498
        %v502 = vld [vmem:[#allocation6] sm:$0xff]
        %v503 = vld [vmem:[#allocation6 + $0x8] sm:$0xff]
        %v504 = vld [vmem:[#allocation6 + $0x10] sm:$0xff]
        %v505 = vld [vmem:[#allocation6 + $0x18] sm:$0xff]
        %v506 = vld [vmem:[#allocation6 + $0x20] sm:$0xff]
        %v507 = vld [vmem:[#allocation6 + $0x28] sm:$0xff]
        %v508 = vld [vmem:[#allocation6 + $0x30] sm:$0xff]
        %v509 = vld [vmem:[#allocation6 + $0x38] sm:$0xff]
        %v510 = vld [vmem:[#allocation6 + $0x40] sm:$0xff]
        %v511 = vld [vmem:[#allocation6 + $0x48] sm:$0xff]
        %v512 = vld [vmem:[#allocation6 + $0x50] sm:$0xff]
        %v513 = vld [vmem:[#allocation6 + $0x58] sm:$0xff]
        %v514 = vld [vmem:[#allocation6 + $0x60] sm:$0xff]
        %v515 = vld [vmem:[#allocation6 + $0x68] sm:$0xff]
        %v516 = vld [vmem:[#allocation6 + $0x70] sm:$0xff]
        %v517 = vld [vmem:[#allocation6 + $0x78] sm:$0xff]
        %518 = vmatprep.subr.mxu0 0.0
        %519 = vmatpush1.msra.mxu0 %v502
        %520 = vmatprep.subr.mxu0 0.0
        %521 = vmatpush1.msra.mxu0 %v503
        %522 = vmatprep.subr.mxu0 0.0
        %523 = vmatpush1.msra.mxu0 %v504
        %524 = vmatprep.subr.mxu0 0.0
        %525 = vmatpush1.msra.mxu0 %v505
        %526 = vmatprep.subr.mxu0 0.0
        %527 = vmatpush1.msra.mxu0 %v506
        %528 = vmatprep.subr.mxu0 0.0
        %529 = vmatpush1.msra.mxu0 %v507
        %530 = vmatprep.subr.mxu0 0.0
        %531 = vmatpush1.msra.mxu0 %v508
        %532 = vmatprep.subr.mxu0 0.0
        %533 = vmatpush1.msra.mxu0 %v509
        %534 = vmatprep.subr.mxu0 0.0
        %535 = vmatpush1.msra.mxu0 %v510
        %536 = vmatprep.subr.mxu0 0.0
        %537 = vmatpush1.msra.mxu0 %v511
        %538 = vmatprep.subr.mxu0 0.0
        %539 = vmatpush1.msra.mxu0 %v512
        %540 = vmatprep.subr.mxu0 0.0
        %541 = vmatpush1.msra.mxu0 %v513
        %542 = vmatprep.subr.mxu0 0.0
        %543 = vmatpush1.msra.mxu0 %v514
        %544 = vmatprep.subr.mxu0 0.0
        %545 = vmatpush1.msra.mxu0 %v515
        %546 = vmatprep.subr.mxu0 0.0
        %547 = vmatpush1.msra.mxu0 %v516
        %548 = vmatprep.subr.mxu0 0.0
        %549 = vmatpush1.msra.mxu0 %v517
        %550 = vmatprep.subr.mxu0 0.0
        %551 = vmatpush1.msra.mxu0 0.0
        %552 = vmatprep.subr.mxu0 0.0
        %553 = vmatpush1.msra.mxu0 0.0
        %554 = vmatprep.subr.mxu0 0.0
        %555 = vmatpush1.msra.mxu0 0.0
        %556 = vmatprep.subr.mxu0 0.0
        %557 = vmatpush1.msra.mxu0 0.0
        %558 = vmatprep.subr.mxu0 0.0
        %559 = vmatpush1.msra.mxu0 0.0
        %560 = vmatprep.subr.mxu0 0.0
        %561 = vmatpush1.msra.mxu0 0.0
        %562 = vmatprep.subr.mxu0 0.0
        %563 = vmatpush1.msra.mxu0 0.0
        %564 = vmatprep.subr.mxu0 0.0
        %565 = vmatpush1.msra.mxu0 0.0
        %566 = vmatprep.subr.mxu0 0.0
        %567 = vmatpush1.msra.mxu0 0.0
        %568 = vmatprep.subr.mxu0 0.0
        %569 = vmatpush1.msra.mxu0 0.0
        %570 = vmatprep.subr.mxu0 0.0
        %571 = vmatpush1.msra.mxu0 0.0
        %572 = vmatprep.subr.mxu0 0.0
        %573 = vmatpush1.msra.mxu0 0.0
        %574 = vmatprep.subr.mxu0 0.0
        %575 = vmatpush1.msra.mxu0 0.0
        %576 = vmatprep.subr.mxu0 0.0
        %577 = vmatpush1.msra.mxu0 0.0
        %578 = vmatprep.subr.mxu0 0.0
        %579 = vmatpush1.msra.mxu0 0.0
        %580 = vmatprep.subr.mxu0 0.0
        %581 = vmatpush1.msra.mxu0 0.0
        %582 = vmatprep.mubr.f32.mxu0 0.0
        %583 = vmatmul.mubr.f32.gmra.mrb[0].mxu0 %v414
        %v584 = vpop.f32.mrb[0].mxu0
        %v585 = vadd.f32 0.0, %v584
        %v586 = vpop.f32.mrb[0].mxu0
        %587 = vdwg.mxu0
        %588 = vst [vmem:[%s381] sm:$0xff] %v585
        %v589 = vld [vmem:[#allocation7] sm:$0xff]
        %v590 = vld [vmem:[#allocation7 + $0x8] sm:$0xff]
        %v591 = vld [vmem:[#allocation7 + $0x10] sm:$0xff]
        %v592 = vld [vmem:[#allocation7 + $0x18] sm:$0xff]
        %v593 = vld [vmem:[#allocation7 + $0x20] sm:$0xff]
        %v594 = vld [vmem:[#allocation7 + $0x28] sm:$0xff]
        %v595 = vld [vmem:[#allocation7 + $0x30] sm:$0xff]
        %v596 = vld [vmem:[#allocation7 + $0x38] sm:$0xff]
        %v597 = vld [vmem:[#allocation7 + $0x40] sm:$0xff]
        %v598 = vld [vmem:[#allocation7 + $0x48] sm:$0xff]
        %v599 = vld [vmem:[#allocation7 + $0x50] sm:$0xff]
        %v600 = vld [vmem:[#allocation7 + $0x58] sm:$0xff]
        %v601 = vld [vmem:[#allocation7 + $0x60] sm:$0xff]
        %v602 = vld [vmem:[#allocation7 + $0x68] sm:$0xff]
        %v603 = vld [vmem:[#allocation7 + $0x70] sm:$0xff]
        %v604 = vld [vmem:[#allocation7 + $0x78] sm:$0xff]
        %605 = vmatprep.subr.mxu0 0.0
        %606 = vmatpush1.msra.mxu0 %v589
        %607 = vmatprep.subr.mxu0 0.0
        %608 = vmatpush1.msra.mxu0 %v590
        %609 = vmatprep.subr.mxu0 0.0
        %610 = vmatpush1.msra.mxu0 %v591
        %611 = vmatprep.subr.mxu0 0.0
        %612 = vmatpush1.msra.mxu0 %v592
        %613 = vmatprep.subr.mxu0 0.0
        %614 = vmatpush1.msra.mxu0 %v593
        %615 = vmatprep.subr.mxu0 0.0
        %616 = vmatpush1.msra.mxu0 %v594
        %617 = vmatprep.subr.mxu0 0.0
        %618 = vmatpush1.msra.mxu0 %v595
        %619 = vmatprep.subr.mxu0 0.0
        %620 = vmatpush1.msra.mxu0 %v596
        %621 = vmatprep.subr.mxu0 0.0
        %622 = vmatpush1.msra.mxu0 %v597
        %623 = vmatprep.subr.mxu0 0.0
        %624 = vmatpush1.msra.mxu0 %v598
        %625 = vmatprep.subr.mxu0 0.0
        %626 = vmatpush1.msra.mxu0 %v599
        %627 = vmatprep.subr.mxu0 0.0
        %628 = vmatpush1.msra.mxu0 %v600
        %629 = vmatprep.subr.mxu0 0.0
        %630 = vmatpush1.msra.mxu0 %v601
        %631 = vmatprep.subr.mxu0 0.0
        %632 = vmatpush1.msra.mxu0 %v602
        %633 = vmatprep.subr.mxu0 0.0
        %634 = vmatpush1.msra.mxu0 %v603
        %635 = vmatprep.subr.mxu0 0.0
        %636 = vmatpush1.msra.mxu0 %v604
        %637 = vmatprep.subr.mxu0 0.0
        %638 = vmatpush1.msra.mxu0 0.0
        %639 = vmatprep.subr.mxu0 0.0
        %640 = vmatpush1.msra.mxu0 0.0
        %641 = vmatprep.subr.mxu0 0.0
        %642 = vmatpush1.msra.mxu0 0.0
        %643 = vmatprep.subr.mxu0 0.0
        %644 = vmatpush1.msra.mxu0 0.0
        %645 = vmatprep.subr.mxu0 0.0
        %646 = vmatpush1.msra.mxu0 0.0
        %647 = vmatprep.subr.mxu0 0.0
        %648 = vmatpush1.msra.mxu0 0.0
        %649 = vmatprep.subr.mxu0 0.0
        %650 = vmatpush1.msra.mxu0 0.0
        %651 = vmatprep.subr.mxu0 0.0
        %652 = vmatpush1.msra.mxu0 0.0
        %653 = vmatprep.subr.mxu0 0.0
        %654 = vmatpush1.msra.mxu0 0.0
        %655 = vmatprep.subr.mxu0 0.0
        %656 = vmatpush1.msra.mxu0 0.0
        %657 = vmatprep.subr.mxu0 0.0
        %658 = vmatpush1.msra.mxu0 0.0
        %659 = vmatprep.subr.mxu0 0.0
        %660 = vmatpush1.msra.mxu0 0.0
        %661 = vmatprep.subr.mxu0 0.0
        %662 = vmatpush1.msra.mxu0 0.0
        %663 = vmatprep.subr.mxu0 0.0
        %664 = vmatpush1.msra.mxu0 0.0
        %665 = vmatprep.subr.mxu0 0.0
        %666 = vmatpush1.msra.mxu0 0.0
        %667 = vmatprep.subr.mxu0 0.0
        %668 = vmatpush1.msra.mxu0 0.0
        %669 = vmatprep.mubr.f32.mxu0 0.0
        %670 = vmatmul.mubr.f32.gmra.mrb[0].mxu0 %v414
        %v671 = vpop.f32.mrb[0].mxu0
        %v672 = vadd.f32 0.0, %v671
        %v673 = vpop.f32.mrb[0].mxu0
        %674 = vdwg.mxu0
        %675 = vst [vmem:[%s385] sm:$0xff] %v672
        %p676 = scmp.lt.s32.totalorder %s25, 1
        %s677 = scalar_select %p676, %s25, 1
        %s678 = smul.addr %s677, 8
        %s679 = scalar_lea.vmem %s6, %s678
        %p680 = scmp.lt.s32.totalorder %s25, 1
        %s681 = scalar_select %p680, %s25, 1
        %s682 = smul.addr %s681, 8
        %s683 = scalar_lea.vmem %s7, %s682
        %p684 = scmp.lt.s32.totalorder %s25, 1
        %s685 = scalar_select %p684, %s25, 1
        %s686 = smul.addr %s685, 8
        %s687 = scalar_lea.vmem %s8, %s686
        // Predicated region
        $region61: #{basic_transformer_block.8} parent=43 // pred_check
          %p688 = pneg %p174
        $region62: #{basic_transformer_block.8} parent=43 // pred_check_branch
          %690 = sbr.rel (%p688) target = $region64
        $region63: #{basic_transformer_block.8} parent=43 // pred_region
          _
        $region64: #{basic_transformer_block.8} parent=43 // pred_fallthru
          _
        // Predicated region
        $region65: #{basic_transformer_block.8} parent=43 // pred_check
          %p691 = pneg %p200
        $region66: #{basic_transformer_block.8} parent=43 // pred_check_branch
          %693 = sbr.rel (%p691) target = $region68
        $region67: #{basic_transformer_block.8} parent=43 // pred_region
          _
        $region68: #{basic_transformer_block.8} parent=43 // pred_fallthru
          _
        // Predicated region
        $region69: #{basic_transformer_block.8} parent=43 // pred_check
          %p694 = pneg %p226
        $region70: #{basic_transformer_block.8} parent=43 // pred_check_branch
          %696 = sbr.rel (%p694) target = $region72
        $region71: #{basic_transformer_block.8} parent=43 // pred_region
          _
        $region72: #{basic_transformer_block.8} parent=43 // pred_fallthru
          _
      $region44: #{basic_transformer_block.8} parent=5 // pred_fallthru
        _
      %p697 = scmp.le.s32.totalorder 2, %s20
      // Predicated region
      $region73: #{basic_transformer_block.8} parent=5 // pred_check
        %p698 = pneg %p697
      $region74: #{basic_transformer_block.8} parent=5 // pred_check_branch
        %700 = sbr.rel (%p698) target = $region76
      $region75: #{basic_transformer_block.8} parent=5 // pred_region
        %s701 = ssub.s32 %s20, 2
        // Predicated region
        $region77: #{basic_transformer_block.8} parent=75 // pred_check
          %p702 = pneg %p180
        $region78: #{basic_transformer_block.8} parent=75 // pred_check_branch
          %704 = sbr.rel (%p702) target = $region80
        $region79: #{basic_transformer_block.8} parent=75 // pred_region
          %p705 = scmp.lt.s32.totalorder %s26, 1
          %s706 = scalar_select %p705, %s26, 1
          %s707 = smul.addr %s706, 8
          %s708 = scalar_lea.vmem %s6, %s707
        $region80: #{basic_transformer_block.8} parent=75 // pred_fallthru
          _
        // Predicated region
        $region81: #{basic_transformer_block.8} parent=75 // pred_check
          %p709 = pneg %p206
        $region82: #{basic_transformer_block.8} parent=75 // pred_check_branch
          %711 = sbr.rel (%p709) target = $region84
        $region83: #{basic_transformer_block.8} parent=75 // pred_region
          %p712 = scmp.lt.s32.totalorder %s26, 1
          %s713 = scalar_select %p712, %s26, 1
          %s714 = smul.addr %s713, 8
          %s715 = scalar_lea.vmem %s7, %s714
        $region84: #{basic_transformer_block.8} parent=75 // pred_fallthru
          _
        // Predicated region
        $region85: #{basic_transformer_block.8} parent=75 // pred_check
          %p716 = pneg %p232
        $region86: #{basic_transformer_block.8} parent=75 // pred_check_branch
          %718 = sbr.rel (%p716) target = $region88
        $region87: #{basic_transformer_block.8} parent=75 // pred_region
          %p719 = scmp.lt.s32.totalorder %s26, 1
          %s720 = scalar_select %p719, %s26, 1
          %s721 = smul.addr %s720, 8
          %s722 = scalar_lea.vmem %s8, %s721
        $region88: #{basic_transformer_block.8} parent=75 // pred_fallthru
          _
      $region76: #{basic_transformer_block.8} parent=5 // pred_fallthru
        _
    $region6: #{basic_transformer_block.8} parent=1 // loop_footer
      %s24 = sadd.s32 1, %s20
    $region7: #{basic_transformer_block.8} parent=1 // loop_footer_branch
      %19 = sbr.rel target = $region3
    $region8: #{basic_transformer_block.8} parent=1 // loop_exit
      _
    %723 = vsyncpa [#allocation3], 1
    %s724 = scalar_lea.sflag [#allocation3], 1
    %725 = vsyncpa %s724, 1
    %726 = vsyncpa [#allocation5], 1
    %727 = vsyncpa [#allocation8], 1

// kernel: basic_transformer_block.9
$region0: #{basic_transformer_block.9}
  #allocation0 [shape = 'u32[]', space=smem, size = 0x4, offset = 0x4, fixed_abs, tag = 'smem constant byte address 0x4 - core index']
  #allocation1 [shape = 'u32[144,128]{1,0:T(1,128)}', space=vmem, size = 0x12000, scoped, tag = 'internal scratch']
  #allocation2 [shape = 'f32[2,8,1]{2,1,0:T(8,128)}', space=vmem, size = 0x2000, scoped, tag = 'scratch operand']
  #allocation3 [shape = 'f32[2,8,1]{2,1,0:T(8,128)}', space=vmem, size = 0x2000, scoped, tag = 'scratch operand']
  #allocation4 [shape = 'f32[2,8,64]{2,1,0:T(8,128)}', space=vmem, size = 0x2000, scoped, tag = 'scratch operand']
  %s0 = inlined_call_operand.vmem [shape: f32[2,8,128], index: 0, kind: input, shape index: {}]
  %s1 = inlined_call_operand.vmem [shape: f32[2,8,128], index: 1, kind: input, shape index: {}]
  %s2 = inlined_call_operand.vmem [shape: f32[2,8,128], index: 2, kind: input, shape index: {}]
  %s3 = inlined_call_operand.vmem [shape: f32[2,8,128], index: 3, kind: output, shape index: {}]
  %s4 = sld [smem:[#allocation0]]
  $region53: #{basic_transformer_block.9} parent=0
    _
  %s6 = ssub.s32 1, %s4
  %s7 = scalar_select 0, %s6, %s4
  loop: start=0, step=1, limit=4
  $region2: #{basic_transformer_block.9} parent=0 // loop_pre_header
    _
  $region3: #{basic_transformer_block.9} parent=0 // loop_header
    %s9 = sphi 0, %s13
    %p10 = scmp.ge.s32.totalorder %s9, 4
    %s16 = sphi 0, %s35
    %s17 = sphi 0, %s31
    %s18 = sphi 0, %s27
    %s19 = sphi 0, %s16
    %s20 = sphi 0, %s17
    %s21 = sphi 0, %s18
    %s22 = sphi 0, %s19
    %s23 = sphi 0, %s20
    %s24 = sphi 0, %s21
    %s40 = sphi 0, %s42
    %s43 = sphi 0, %s40
    %s44 = sphi 0, %s43
    %s60 = sphi 0, %s44
    %s70 = sphi 0, %s72
    %s73 = sphi 0, %s70
    %s74 = sphi 0, %s73
    %s90 = sphi 0, %s74
    %s100 = sphi 0, %s102
    %s103 = sphi 0, %s100
    %s104 = sphi 0, %s103
    %s120 = sphi 0, %s104
    %s128 = sphi 0, %s130
    %s131 = sphi 0, %s128
    %s132 = sphi 0, %s131
    %s148 = sphi 0, %s132
  $region4: #{basic_transformer_block.9} parent=0 // loop_header_branch
    %12 = sbr.rel (%p10) target = $region8
  $region5: #{basic_transformer_block.9} parent=0 // loop_body
    %s14 = ssub.s32 %s9, 1
    %s15 = ssub.s32 %s9, 2
    %s25 = sadd.s32 1, %s18
    %p26 = scmp.ge.s32.totalorder %s25, 1
    %s27 = scalar_select %p26, 0, %s25
    %s28 = sadd.s32 1, %s17
    %s29 = scalar_select %p26, %s28, %s17
    %p30 = scmp.ge.s32.totalorder %s29, 1
    %s31 = scalar_select %p30, 0, %s29
    %s32 = sadd.s32 1, %s16
    %s33 = scalar_select %p30, %s32, %s16
    %p34 = scmp.ge.s32.totalorder %s33, 2
    %s35 = scalar_select %p34, 0, %s33
    %s36 = ssub.s32 %s16, %s35
    %s37 = ssub.s32 %s17, %s31
    %s38 = sor.u32 %s36, %s37
    %p39 = scmp.eq.s32.totalorder %s38, 0
    %s41 = sadd.s32 %s40, 1
    %s42 = scalar_select %p39, %s40, %s41
    %p45 = pneg %p39
    %p46 = scmp.eq.s32.totalorder %s9, 1
    %p47 = por %p45, %p46
    %p48 = scmp.ne.s32.totalorder %s40, %s43
    %p49 = scmp.eq.s32.totalorder %s9, 0
    %p50 = por %p48, %p49
    %p51 = scmp.ne.s32.totalorder %s40, %s43
    %p52 = scmp.eq.s32.totalorder %s14, 1
    %p53 = por %p51, %p52
    %p54 = scmp.ne.s32.totalorder %s43, %s44
    %p55 = scmp.eq.s32.totalorder %s14, 0
    %p56 = por %p54, %p55
    %p57 = scmp.ne.s32.totalorder %s43, %s44
    %p58 = scmp.eq.s32.totalorder %s15, 1
    %p59 = por %p57, %p58
    %p61 = scmp.ne.s32.totalorder %s44, %s60
    %p62 = scmp.eq.s32.totalorder %s15, 0
    %p63 = por %p61, %p62
    %s64 = ssub.s32 %s16, %s35
    %s65 = ssub.s32 %s18, %s27
    %s66 = sor.u32 %s64, %s65
    %s67 = ssub.s32 %s17, %s31
    %s68 = sor.u32 %s66, %s67
    %p69 = scmp.eq.s32.totalorder %s68, 0
    %s71 = sadd.s32 %s70, 1
    %s72 = scalar_select %p69, %s70, %s71
    %p75 = pneg %p69
    %p76 = scmp.eq.s32.totalorder %s9, 1
    %p77 = por %p75, %p76
    %p78 = scmp.ne.s32.totalorder %s70, %s73
    %p79 = scmp.eq.s32.totalorder %s9, 0
    %p80 = por %p78, %p79
    %p81 = scmp.ne.s32.totalorder %s70, %s73
    %p82 = scmp.eq.s32.totalorder %s14, 1
    %p83 = por %p81, %p82
    %p84 = scmp.ne.s32.totalorder %s73, %s74
    %p85 = scmp.eq.s32.totalorder %s14, 0
    %p86 = por %p84, %p85
    %p87 = scmp.ne.s32.totalorder %s73, %s74
    %p88 = scmp.eq.s32.totalorder %s15, 1
    %p89 = por %p87, %p88
    %p91 = scmp.ne.s32.totalorder %s74, %s90
    %p92 = scmp.eq.s32.totalorder %s15, 0
    %p93 = por %p91, %p92
    %s94 = ssub.s32 %s16, %s35
    %s95 = ssub.s32 %s18, %s27
    %s96 = sor.u32 %s94, %s95
    %s97 = ssub.s32 %s17, %s31
    %s98 = sor.u32 %s96, %s97
    %p99 = scmp.eq.s32.totalorder %s98, 0
    %s101 = sadd.s32 %s100, 1
    %s102 = scalar_select %p99, %s100, %s101
    %p105 = pneg %p99
    %p106 = scmp.eq.s32.totalorder %s9, 1
    %p107 = por %p105, %p106
    %p108 = scmp.ne.s32.totalorder %s100, %s103
    %p109 = scmp.eq.s32.totalorder %s9, 0
    %p110 = por %p108, %p109
    %p111 = scmp.ne.s32.totalorder %s100, %s103
    %p112 = scmp.eq.s32.totalorder %s14, 1
    %p113 = por %p111, %p112
    %p114 = scmp.ne.s32.totalorder %s103, %s104
    %p115 = scmp.eq.s32.totalorder %s14, 0
    %p116 = por %p114, %p115
    %p117 = scmp.ne.s32.totalorder %s103, %s104
    %p118 = scmp.eq.s32.totalorder %s15, 1
    %p119 = por %p117, %p118
    %p121 = scmp.ne.s32.totalorder %s104, %s120
    %p122 = scmp.eq.s32.totalorder %s15, 0
    %p123 = por %p121, %p122
    %s124 = ssub.s32 %s16, %s35
    %s125 = ssub.s32 %s17, %s31
    %s126 = sor.u32 %s124, %s125
    %p127 = scmp.eq.s32.totalorder %s126, 0
    %s129 = sadd.s32 %s128, 1
    %s130 = scalar_select %p127, %s128, %s129
    %p133 = pneg %p127
    %p134 = scmp.eq.s32.totalorder %s9, 1
    %p135 = por %p133, %p134
    %p136 = scmp.ne.s32.totalorder %s128, %s131
    %p137 = scmp.eq.s32.totalorder %s9, 0
    %p138 = por %p136, %p137
    %p139 = scmp.ne.s32.totalorder %s128, %s131
    %p140 = scmp.eq.s32.totalorder %s14, 1
    %p141 = por %p139, %p140
    %p142 = scmp.ne.s32.totalorder %s131, %s132
    %p143 = scmp.eq.s32.totalorder %s14, 0
    %p144 = por %p142, %p143
    %p145 = scmp.ne.s32.totalorder %s131, %s132
    %p146 = scmp.eq.s32.totalorder %s15, 1
    %p147 = por %p145, %p146
    %p149 = scmp.ne.s32.totalorder %s132, %s148
    %p150 = scmp.eq.s32.totalorder %s15, 0
    %p151 = por %p149, %p150
    %p152 = scmp.le.s32.totalorder 1, %s9
    %p153 = scmp.lt.s32.totalorder %s9, 3
    %p154 = pnand %p152, %p153
    %p155 = pneg %p154
    // Predicated region
    $region9: #{basic_transformer_block.9} parent=5 // pred_check
      _
    $region10: #{basic_transformer_block.9} parent=5 // pred_check_branch
      %157 = sbr.rel (%p154) target = $region12
    $region11: #{basic_transformer_block.9} parent=5 // pred_region
      %s158 = ssub.s32 %s9, 1
    $region12: #{basic_transformer_block.9} parent=5 // pred_fallthru
      _
    %p159 = scmp.lt.s32.totalorder %s9, 2
    // Predicated region
    $region13: #{basic_transformer_block.9} parent=5 // pred_check
      %p160 = pneg %p159
    $region14: #{basic_transformer_block.9} parent=5 // pred_check_branch
      %162 = sbr.rel (%p160) target = $region16
    $region15: #{basic_transformer_block.9} parent=5 // pred_region
      // Predicated region
      $region17: #{basic_transformer_block.9} parent=15 // pred_check
        %p163 = pneg %p50
      $region18: #{basic_transformer_block.9} parent=15 // pred_check_branch
        %165 = sbr.rel (%p163) target = $region20
      $region19: #{basic_transformer_block.9} parent=15 // pred_region
        %p166 = scmp.lt.s32.totalorder %s16, 1
        %s167 = scalar_select %p166, %s16, 1
        %p168 = scmp.lt.s32.totalorder %s17, 0
        %s169 = scalar_select %p168, %s17, 0
        %s170 = sadd.s32 %s169, %s167
        %s171 = smul.addr %s170, 8
        %s172 = scalar_lea.vmem %s0, %s171
      $region20: #{basic_transformer_block.9} parent=15 // pred_fallthru
        _
      // Predicated region
      $region21: #{basic_transformer_block.9} parent=15 // pred_check
        %p173 = pneg %p80
      $region22: #{basic_transformer_block.9} parent=15 // pred_check_branch
        %175 = sbr.rel (%p173) target = $region24
      $region23: #{basic_transformer_block.9} parent=15 // pred_region
        %p176 = scmp.lt.s32.totalorder %s16, 1
        %s177 = scalar_select %p176, %s16, 1
        %p178 = scmp.lt.s32.totalorder %s18, 0
        %s179 = scalar_select %p178, %s18, 0
        %p180 = scmp.lt.s32.totalorder %s17, 0
        %s181 = scalar_select %p180, %s17, 0
        %s182 = sadd.s32 %s181, %s179
        %s183 = sadd.s32 %s182, %s177
        %s184 = smul.addr %s183, 8
        %s185 = scalar_lea.vmem %s1, %s184
      $region24: #{basic_transformer_block.9} parent=15 // pred_fallthru
        _
      // Predicated region
      $region25: #{basic_transformer_block.9} parent=15 // pred_check
        %p186 = pneg %p110
      $region26: #{basic_transformer_block.9} parent=15 // pred_check_branch
        %188 = sbr.rel (%p186) target = $region28
      $region27: #{basic_transformer_block.9} parent=15 // pred_region
        %p189 = scmp.lt.s32.totalorder %s16, 1
        %s190 = scalar_select %p189, %s16, 1
        %p191 = scmp.lt.s32.totalorder %s18, 0
        %s192 = scalar_select %p191, %s18, 0
        %p193 = scmp.lt.s32.totalorder %s17, 0
        %s194 = scalar_select %p193, %s17, 0
        %s195 = sadd.s32 %s194, %s192
        %s196 = sadd.s32 %s195, %s190
        %s197 = smul.addr %s196, 8
        %s198 = scalar_lea.vmem %s2, %s197
      $region28: #{basic_transformer_block.9} parent=15 // pred_fallthru
        _
    $region16: #{basic_transformer_block.9} parent=5 // pred_fallthru
      _
    %p199 = scmp.le.s32.totalorder 1, %s9
    %p200 = scmp.lt.s32.totalorder %s9, 3
    %p201 = pnand %p199, %p200
    %p202 = pneg %p201
    // Predicated region
    $region29: #{basic_transformer_block.9} parent=5 // pred_check
      _
    $region30: #{basic_transformer_block.9} parent=5 // pred_check_branch
      %204 = sbr.rel (%p201) target = $region32
    $region31: #{basic_transformer_block.9} parent=5 // pred_region
      %s205 = ssub.s32 %s9, 1
      %p206 = scmp.lt.s32.totalorder %s19, 1
      %s207 = scalar_select %p206, %s19, 1
      %p208 = scmp.lt.s32.totalorder %s20, 0
      %s209 = scalar_select %p208, %s20, 0
      %s210 = sadd.s32 %s209, %s207
      %s211 = smul.addr %s210, 8
      %s212 = scalar_lea.vmem %s0, %s211
      %p213 = pneg %p56
      %p214 = pneg %p53
      %p215 = scmp.lt.s32.totalorder %s19, 1
      %s216 = scalar_select %p215, %s19, 1
      %p217 = scmp.lt.s32.totalorder %s21, 0
      %s218 = scalar_select %p217, %s21, 0
      %p219 = scmp.lt.s32.totalorder %s20, 0
      %s220 = scalar_select %p219, %s20, 0
      %s221 = sadd.s32 %s220, %s218
      %s222 = sadd.s32 %s221, %s216
      %s223 = smul.addr %s222, 8
      %s224 = scalar_lea.vmem %s1, %s223
      %p225 = pneg %p86
      %p226 = pneg %p83
      %p227 = scmp.lt.s32.totalorder %s19, 1
      %s228 = scalar_select %p227, %s19, 1
      %p229 = scmp.lt.s32.totalorder %s21, 0
      %s230 = scalar_select %p229, %s21, 0
      %p231 = scmp.lt.s32.totalorder %s20, 0
      %s232 = scalar_select %p231, %s20, 0
      %s233 = sadd.s32 %s232, %s230
      %s234 = sadd.s32 %s233, %s228
      %s235 = smul.addr %s234, 8
      %s236 = scalar_lea.vmem %s2, %s235
      %p237 = pneg %p116
      %p238 = pneg %p113
      %p239 = pneg %p144
      %p240 = pneg %p141
      %p241 = scmp.lt.s32.totalorder %s19, 1
      %s242 = scalar_select %p241, %s19, 1
      %p243 = scmp.lt.s32.totalorder %s20, 0
      %s244 = scalar_select %p243, %s20, 0
      %s245 = sadd.s32 %s244, %s242
      %s246 = smul.addr %s245, 8
      %s247 = scalar_lea.vmem %s3, %s246
      %p248 = scmp.lt.s32.totalorder %s19, 1
      %s249 = scalar_select %p248, %s19, 1
      %p250 = scmp.lt.s32.totalorder %s20, 0
      %s251 = scalar_select %p250, %s20, 0
      %s252 = sadd.s32 %s251, %s249
      %s253 = smul.addr %s252, 8
      %s254 = scalar_lea.vmem %s0, %s253
      %p255 = scmp.lt.s32.totalorder %s19, 1
      %s256 = scalar_select %p255, %s19, 1
      %p257 = scmp.lt.s32.totalorder %s21, 0
      %s258 = scalar_select %p257, %s21, 0
      %p259 = scmp.lt.s32.totalorder %s20, 0
      %s260 = scalar_select %p259, %s20, 0
      %s261 = sadd.s32 %s260, %s258
      %s262 = sadd.s32 %s261, %s256
      %s263 = smul.addr %s262, 8
      %s264 = scalar_lea.vmem %s1, %s263
      %p265 = scmp.lt.s32.totalorder %s19, 1
      %s266 = scalar_select %p265, %s19, 1
      %p267 = scmp.lt.s32.totalorder %s21, 0
      %s268 = scalar_select %p267, %s21, 0
      %p269 = scmp.lt.s32.totalorder %s20, 0
      %s270 = scalar_select %p269, %s20, 0
      %s271 = sadd.s32 %s270, %s268
      %s272 = sadd.s32 %s271, %s266
      %s273 = smul.addr %s272, 8
      %s274 = scalar_lea.vmem %s2, %s273
      %p275 = scmp.lt.s32.totalorder %s19, 1
      %s276 = scalar_select %p275, %s19, 1
      %p277 = scmp.lt.s32.totalorder %s20, 0
      %s278 = scalar_select %p277, %s20, 0
      %s279 = sadd.s32 %s278, %s276
      %s280 = smul.addr %s279, 8
      %s281 = scalar_lea.vmem %s3, %s280
      %p282 = scmp.eq.s32.totalorder %s21, 0
      // Predicated region
      $region33: #{basic_transformer_block.9} parent=31 // pred_check
        %p283 = pneg %p282
      $region34: #{basic_transformer_block.9} parent=31 // pred_check_branch
        %285 = sbr.rel (%p283) target = $region36
      $region35: #{basic_transformer_block.9} parent=31 // pred_region
        %vm286 = vcmask 7168
        %287 = vst.msk [vmem:[#allocation2] sm:$0xff] %vm286, -inf
        %288 = vst.msk [vmem:[#allocation2 + $0x8] sm:$0xff] %vm286, -inf
        %289 = vst.msk [vmem:[#allocation3] sm:$0xff] %vm286, 0.0
        %290 = vst.msk [vmem:[#allocation3 + $0x8] sm:$0xff] %vm286, 0.0
        %vm291 = vcmask 523264
        %292 = vst.msk [vmem:[#allocation4] sm:$0xff] %vm291, 0.0
        %293 = vst.msk [vmem:[#allocation4 + $0x8] sm:$0xff] %vm291, 0.0
      $region36: #{basic_transformer_block.9} parent=31 // pred_fallthru
        _
      %v294 = vld [vmem:[%s254] sm:$0xff]
      %v295 = vld [vmem:[%s264] sm:$0xff]
      %v296 = vld [vmem:[%s274] sm:$0xff]
      %vm297 = vcmask 523264
      %v299 = vsel %vm297, %v294, 0
      %v302 = vsel %vm297, %v295, 0
      %304 = vmatprep.subr.mxu0 0.0
      %305 = vmatpush1.xpose.msra.mxu0 %v302
      %306 = vmatprep.subr.mxu0 0.0
      %307 = vmatpush1.xpose.msra.mxu0 0.0
      %308 = vmatprep.subr.mxu0 0.0
      %309 = vmatpush1.xpose.msra.mxu0 0.0
      %310 = vmatprep.subr.mxu0 0.0
      %311 = vmatpush1.xpose.msra.mxu0 0.0
      %312 = vmatprep.subr.mxu0 0.0
      %313 = vmatpush1.xpose.msra.mxu0 0.0
      %314 = vmatprep.subr.mxu0 0.0
      %315 = vmatpush1.xpose.msra.mxu0 0.0
      %316 = vmatprep.subr.mxu0 0.0
      %317 = vmatpush1.xpose.msra.mxu0 0.0
      %318 = vmatprep.subr.mxu0 0.0
      %319 = vmatpush1.xpose.msra.mxu0 0.0
      %320 = vmatprep.subr.mxu0 0.0
      %321 = vmatpush1.xpose.msra.mxu0 0.0
      %322 = vmatprep.subr.mxu0 0.0
      %323 = vmatpush1.xpose.msra.mxu0 0.0
      %324 = vmatprep.subr.mxu0 0.0
      %325 = vmatpush1.xpose.msra.mxu0 0.0
      %326 = vmatprep.subr.mxu0 0.0
      %327 = vmatpush1.xpose.msra.mxu0 0.0
      %328 = vmatprep.subr.mxu0 0.0
      %329 = vmatpush1.xpose.msra.mxu0 0.0
      %330 = vmatprep.subr.mxu0 0.0
      %331 = vmatpush1.xpose.msra.mxu0 0.0
      %332 = vmatprep.subr.mxu0 0.0
      %333 = vmatpush1.xpose.msra.mxu0 0.0
      %334 = vmatprep.subr.mxu0 0.0
      %335 = vmatpush1.xpose.msra.mxu0 0.0
      %336 = vmatprep.subr.mxu0 0.0
      %337 = vmatpush1.xpose.msra.mxu0 0.0
      %338 = vmatprep.subr.mxu0 0.0
      %339 = vmatpush1.xpose.msra.mxu0 0.0
      %340 = vmatprep.subr.mxu0 0.0
      %341 = vmatpush1.xpose.msra.mxu0 0.0
      %342 = vmatprep.subr.mxu0 0.0
      %343 = vmatpush1.xpose.msra.mxu0 0.0
      %344 = vmatprep.subr.mxu0 0.0
      %345 = vmatpush1.xpose.msra.mxu0 0.0
      %346 = vmatprep.subr.mxu0 0.0
      %347 = vmatpush1.xpose.msra.mxu0 0.0
      %348 = vmatprep.subr.mxu0 0.0
      %349 = vmatpush1.xpose.msra.mxu0 0.0
      %350 = vmatprep.subr.mxu0 0.0
      %351 = vmatpush1.xpose.msra.mxu0 0.0
      %352 = vmatprep.subr.mxu0 0.0
      %353 = vmatpush1.xpose.msra.mxu0 0.0
      %354 = vmatprep.subr.mxu0 0.0
      %355 = vmatpush1.xpose.msra.mxu0 0.0
      %356 = vmatprep.subr.mxu0 0.0
      %357 = vmatpush1.xpose.msra.mxu0 0.0
      %358 = vmatprep.subr.mxu0 0.0
      %359 = vmatpush1.xpose.msra.mxu0 0.0
      %360 = vmatprep.subr.mxu0 0.0
      %361 = vmatpush1.xpose.msra.mxu0 0.0
      %362 = vmatprep.subr.mxu0 0.0
      %363 = vmatpush1.xpose.msra.mxu0 0.0
      %364 = vmatprep.subr.mxu0 0.0
      %365 = vmatpush1.xpose.msra.mxu0 0.0
      %366 = vmatprep.subr.mxu0 0.0
      %367 = vmatpush1.xpose.msra.mxu0 0.0
      %368 = vmatprep.mubr.f32.mxu0 0.0
      %369 = vmatmul.mubr.f32.gmra.mrb[0].mxu0 %v299
      %v370 = vpop.f32.mrb[0].mxu0
      %v371 = vadd.f32 0.0, %v370
      %v372 = vpop.f32.mrb[0].mxu0
      %373 = vdwg.mxu0
      %v374 = vmul.f32 %v371, 0.125
      %v375 = vld [vmem:[#allocation2] sm:$0xff]
      %vm376 = vcmask 64512
      %v377 = vsel %vm376, %v374, -inf
      %378 = vmax.xlane.f32.xlu0 %v377
      %v379 = vpop.xlane.xlu0 %378
      %v380 = vmax.f32 %v375, %v379
      %v381 = vsub.f32 %v375, %v380
      %v382 = vmul.f32 %v381, 1.442695
      %v383 = vpow.pop %v382
      %385 = vset.pattern.permute.xlu0 0
      %386 = vperm.xlu0 %385, %v380
      %v387 = vpop.permute.xlu0 %386
      %v389 = vsub.f32 %v374, %v387
      %v390 = vmul.f32 %v389, 1.442695
      %v391 = vpow.pop %v390
      %v392 = vld [vmem:[#allocation3] sm:$0xff]
      %v393 = vmul.f32 %v383, %v392
      %v394 = vsel %vm376, %v391, 0.0
      %395 = vadd.xlane.f32.xlu0 %v394
      %v396 = vpop.xlane.xlu0 %395
      %v397 = vadd.f32 %v393, %v396
      %vm398 = vcmask 7168
      %399 = vst.msk [vmem:[#allocation3] sm:$0xff] %vm398, %v397
      %v400 = vld [vmem:[#allocation4] sm:$0xff]
      %402 = vset.pattern.permute.xlu0 0
      %403 = vperm.xlu0 %402, %v383
      %v404 = vpop.permute.xlu0 %403
      %v406 = vmul.f32 %v404, %v400
      %v408 = vsel %vm376, %v391, 0
      %410 = vmatprep.subr.mxu0 0.0
      %411 = vmatpush1.msra.mxu0 %v296
      %412 = vmatprep.subr.mxu0 0.0
      %413 = vmatpush1.msra.mxu0 0.0
      %414 = vmatprep.subr.mxu0 0.0
      %415 = vmatpush1.msra.mxu0 0.0
      %416 = vmatprep.subr.mxu0 0.0
      %417 = vmatpush1.msra.mxu0 0.0
      %418 = vmatprep.subr.mxu0 0.0
      %419 = vmatpush1.msra.mxu0 0.0
      %420 = vmatprep.subr.mxu0 0.0
      %421 = vmatpush1.msra.mxu0 0.0
      %422 = vmatprep.subr.mxu0 0.0
      %423 = vmatpush1.msra.mxu0 0.0
      %424 = vmatprep.subr.mxu0 0.0
      %425 = vmatpush1.msra.mxu0 0.0
      %426 = vmatprep.subr.mxu0 0.0
      %427 = vmatpush1.msra.mxu0 0.0
      %428 = vmatprep.subr.mxu0 0.0
      %429 = vmatpush1.msra.mxu0 0.0
      %430 = vmatprep.subr.mxu0 0.0
      %431 = vmatpush1.msra.mxu0 0.0
      %432 = vmatprep.subr.mxu0 0.0
      %433 = vmatpush1.msra.mxu0 0.0
      %434 = vmatprep.subr.mxu0 0.0
      %435 = vmatpush1.msra.mxu0 0.0
      %436 = vmatprep.subr.mxu0 0.0
      %437 = vmatpush1.msra.mxu0 0.0
      %438 = vmatprep.subr.mxu0 0.0
      %439 = vmatpush1.msra.mxu0 0.0
      %440 = vmatprep.subr.mxu0 0.0
      %441 = vmatpush1.msra.mxu0 0.0
      %442 = vmatprep.subr.mxu0 0.0
      %443 = vmatpush1.msra.mxu0 0.0
      %444 = vmatprep.subr.mxu0 0.0
      %445 = vmatpush1.msra.mxu0 0.0
      %446 = vmatprep.subr.mxu0 0.0
      %447 = vmatpush1.msra.mxu0 0.0
      %448 = vmatprep.subr.mxu0 0.0
      %449 = vmatpush1.msra.mxu0 0.0
      %450 = vmatprep.subr.mxu0 0.0
      %451 = vmatpush1.msra.mxu0 0.0
      %452 = vmatprep.subr.mxu0 0.0
      %453 = vmatpush1.msra.mxu0 0.0
      %454 = vmatprep.subr.mxu0 0.0
      %455 = vmatpush1.msra.mxu0 0.0
      %456 = vmatprep.subr.mxu0 0.0
      %457 = vmatpush1.msra.mxu0 0.0
      %458 = vmatprep.subr.mxu0 0.0
      %459 = vmatpush1.msra.mxu0 0.0
      %460 = vmatprep.subr.mxu0 0.0
      %461 = vmatpush1.msra.mxu0 0.0
      %462 = vmatprep.subr.mxu0 0.0
      %463 = vmatpush1.msra.mxu0 0.0
      %464 = vmatprep.subr.mxu0 0.0
      %465 = vmatpush1.msra.mxu0 0.0
      %466 = vmatprep.subr.mxu0 0.0
      %467 = vmatpush1.msra.mxu0 0.0
      %468 = vmatprep.subr.mxu0 0.0
      %469 = vmatpush1.msra.mxu0 0.0
      %470 = vmatprep.subr.mxu0 0.0
      %471 = vmatpush1.msra.mxu0 0.0
      %472 = vmatprep.subr.mxu0 0.0
      %473 = vmatpush1.msra.mxu0 0.0
      %474 = vmatprep.mubr.f32.mxu0 0.0
      %475 = vmatmul.mubr.f32.gmra.mrb[0].mxu0 %v408
      %v476 = vpop.f32.mrb[0].mxu0
      %v477 = vadd.f32 0.0, %v476
      %v478 = vpop.f32.mrb[0].mxu0
      %479 = vdwg.mxu0
      %v480 = vadd.f32 %v406, %v477
      %481 = vst.msk [vmem:[#allocation4] sm:$0xff] %vm297, %v480
      %482 = vst.msk [vmem:[#allocation2] sm:$0xff] %vm398, %v380
      %v483 = vld [vmem:[%s254] sm:$0xff]
      %v484 = vld [vmem:[%s264] sm:$0xff]
      %v485 = vld [vmem:[%s274] sm:$0xff]
      %487 = vrot.lane.b32.xlu0 %v483, 64
      %v488 = vpop.permute.xlu0 %487
      %490 = vrot.lane.b32.xlu0 %v484, 64
      %v491 = vpop.permute.xlu0 %490
      %v492 = vsel %vm297, %v488, 0
      %v494 = vsel %vm297, %v491, 0
      %496 = vmatprep.subr.mxu0 0.0
      %497 = vmatpush1.xpose.msra.mxu0 %v494
      %498 = vmatprep.subr.mxu0 0.0
      %499 = vmatpush1.xpose.msra.mxu0 0.0
      %500 = vmatprep.subr.mxu0 0.0
      %501 = vmatpush1.xpose.msra.mxu0 0.0
      %502 = vmatprep.subr.mxu0 0.0
      %503 = vmatpush1.xpose.msra.mxu0 0.0
      %504 = vmatprep.subr.mxu0 0.0
      %505 = vmatpush1.xpose.msra.mxu0 0.0
      %506 = vmatprep.subr.mxu0 0.0
      %507 = vmatpush1.xpose.msra.mxu0 0.0
      %508 = vmatprep.subr.mxu0 0.0
      %509 = vmatpush1.xpose.msra.mxu0 0.0
      %510 = vmatprep.subr.mxu0 0.0
      %511 = vmatpush1.xpose.msra.mxu0 0.0
      %512 = vmatprep.subr.mxu0 0.0
      %513 = vmatpush1.xpose.msra.mxu0 0.0
      %514 = vmatprep.subr.mxu0 0.0
      %515 = vmatpush1.xpose.msra.mxu0 0.0
      %516 = vmatprep.subr.mxu0 0.0
      %517 = vmatpush1.xpose.msra.mxu0 0.0
      %518 = vmatprep.subr.mxu0 0.0
      %519 = vmatpush1.xpose.msra.mxu0 0.0
      %520 = vmatprep.subr.mxu0 0.0
      %521 = vmatpush1.xpose.msra.mxu0 0.0
      %522 = vmatprep.subr.mxu0 0.0
      %523 = vmatpush1.xpose.msra.mxu0 0.0
      %524 = vmatprep.subr.mxu0 0.0
      %525 = vmatpush1.xpose.msra.mxu0 0.0
      %526 = vmatprep.subr.mxu0 0.0
      %527 = vmatpush1.xpose.msra.mxu0 0.0
      %528 = vmatprep.subr.mxu0 0.0
      %529 = vmatpush1.xpose.msra.mxu0 0.0
      %530 = vmatprep.subr.mxu0 0.0
      %531 = vmatpush1.xpose.msra.mxu0 0.0
      %532 = vmatprep.subr.mxu0 0.0
      %533 = vmatpush1.xpose.msra.mxu0 0.0
      %534 = vmatprep.subr.mxu0 0.0
      %535 = vmatpush1.xpose.msra.mxu0 0.0
      %536 = vmatprep.subr.mxu0 0.0
      %537 = vmatpush1.xpose.msra.mxu0 0.0
      %538 = vmatprep.subr.mxu0 0.0
      %539 = vmatpush1.xpose.msra.mxu0 0.0
      %540 = vmatprep.subr.mxu0 0.0
      %541 = vmatpush1.xpose.msra.mxu0 0.0
      %542 = vmatprep.subr.mxu0 0.0
      %543 = vmatpush1.xpose.msra.mxu0 0.0
      %544 = vmatprep.subr.mxu0 0.0
      %545 = vmatpush1.xpose.msra.mxu0 0.0
      %546 = vmatprep.subr.mxu0 0.0
      %547 = vmatpush1.xpose.msra.mxu0 0.0
      %548 = vmatprep.subr.mxu0 0.0
      %549 = vmatpush1.xpose.msra.mxu0 0.0
      %550 = vmatprep.subr.mxu0 0.0
      %551 = vmatpush1.xpose.msra.mxu0 0.0
      %552 = vmatprep.subr.mxu0 0.0
      %553 = vmatpush1.xpose.msra.mxu0 0.0
      %554 = vmatprep.subr.mxu0 0.0
      %555 = vmatpush1.xpose.msra.mxu0 0.0
      %556 = vmatprep.subr.mxu0 0.0
      %557 = vmatpush1.xpose.msra.mxu0 0.0
      %558 = vmatprep.subr.mxu0 0.0
      %559 = vmatpush1.xpose.msra.mxu0 0.0
      %560 = vmatprep.mubr.f32.mxu0 0.0
      %561 = vmatmul.mubr.f32.gmra.mrb[0].mxu0 %v492
      %v562 = vpop.f32.mrb[0].mxu0
      %v563 = vadd.f32 0.0, %v562
      %v564 = vpop.f32.mrb[0].mxu0
      %565 = vdwg.mxu0
      %v566 = vmul.f32 %v563, 0.125
      %s567 = scalar_lea.vmem [#allocation2], 8
      %v568 = vld [vmem:[%s567] sm:$0xff]
      %v569 = vsel %vm376, %v566, -inf
      %570 = vmax.xlane.f32.xlu0 %v569
      %v571 = vpop.xlane.xlu0 %570
      %v572 = vmax.f32 %v568, %v571
      %v573 = vsub.f32 %v568, %v572
      %v574 = vmul.f32 %v573, 1.442695
      %v575 = vpow.pop %v574
      %577 = vset.pattern.permute.xlu0 0
      %578 = vperm.xlu0 %577, %v572
      %v579 = vpop.permute.xlu0 %578
      %v581 = vsub.f32 %v566, %v579
      %v582 = vmul.f32 %v581, 1.442695
      %v583 = vpow.pop %v582
      %s584 = scalar_lea.vmem [#allocation3], 8
      %v585 = vld [vmem:[%s584] sm:$0xff]
      %v586 = vmul.f32 %v575, %v585
      %v587 = vsel %vm376, %v583, 0.0
      %588 = vadd.xlane.f32.xlu0 %v587
      %v589 = vpop.xlane.xlu0 %588
      %v590 = vadd.f32 %v586, %v589
      %591 = vst.msk [vmem:[%s584] sm:$0xff] %vm398, %v590
      %s592 = scalar_lea.vmem [#allocation4], 8
      %v593 = vld [vmem:[%s592] sm:$0xff]
      %595 = vset.pattern.permute.xlu0 0
      %596 = vperm.xlu0 %595, %v575
      %v597 = vpop.permute.xlu0 %596
      %v599 = vmul.f32 %v597, %v593
      %601 = vrot.lane.b32.xlu0 %v485, 64
      %v602 = vpop.permute.xlu0 %601
      %v605 = vsel %vm376, %v583, 0
      %607 = vmatprep.subr.mxu0 0.0
      %608 = vmatpush1.msra.mxu0 %v602
      %609 = vmatprep.subr.mxu0 0.0
      %610 = vmatpush1.msra.mxu0 0.0
      %611 = vmatprep.subr.mxu0 0.0
      %612 = vmatpush1.msra.mxu0 0.0
      %613 = vmatprep.subr.mxu0 0.0
      %614 = vmatpush1.msra.mxu0 0.0
      %615 = vmatprep.subr.mxu0 0.0
      %616 = vmatpush1.msra.mxu0 0.0
      %617 = vmatprep.subr.mxu0 0.0
      %618 = vmatpush1.msra.mxu0 0.0
      %619 = vmatprep.subr.mxu0 0.0
      %620 = vmatpush1.msra.mxu0 0.0
      %621 = vmatprep.subr.mxu0 0.0
      %622 = vmatpush1.msra.mxu0 0.0
      %623 = vmatprep.subr.mxu0 0.0
      %624 = vmatpush1.msra.mxu0 0.0
      %625 = vmatprep.subr.mxu0 0.0
      %626 = vmatpush1.msra.mxu0 0.0
      %627 = vmatprep.subr.mxu0 0.0
      %628 = vmatpush1.msra.mxu0 0.0
      %629 = vmatprep.subr.mxu0 0.0
      %630 = vmatpush1.msra.mxu0 0.0
      %631 = vmatprep.subr.mxu0 0.0
      %632 = vmatpush1.msra.mxu0 0.0
      %633 = vmatprep.subr.mxu0 0.0
      %634 = vmatpush1.msra.mxu0 0.0
      %635 = vmatprep.subr.mxu0 0.0
      %636 = vmatpush1.msra.mxu0 0.0
      %637 = vmatprep.subr.mxu0 0.0
      %638 = vmatpush1.msra.mxu0 0.0
      %639 = vmatprep.subr.mxu0 0.0
      %640 = vmatpush1.msra.mxu0 0.0
      %641 = vmatprep.subr.mxu0 0.0
      %642 = vmatpush1.msra.mxu0 0.0
      %643 = vmatprep.subr.mxu0 0.0
      %644 = vmatpush1.msra.mxu0 0.0
      %645 = vmatprep.subr.mxu0 0.0
      %646 = vmatpush1.msra.mxu0 0.0
      %647 = vmatprep.subr.mxu0 0.0
      %648 = vmatpush1.msra.mxu0 0.0
      %649 = vmatprep.subr.mxu0 0.0
      %650 = vmatpush1.msra.mxu0 0.0
      %651 = vmatprep.subr.mxu0 0.0
      %652 = vmatpush1.msra.mxu0 0.0
      %653 = vmatprep.subr.mxu0 0.0
      %654 = vmatpush1.msra.mxu0 0.0
      %655 = vmatprep.subr.mxu0 0.0
      %656 = vmatpush1.msra.mxu0 0.0
      %657 = vmatprep.subr.mxu0 0.0
      %658 = vmatpush1.msra.mxu0 0.0
      %659 = vmatprep.subr.mxu0 0.0
      %660 = vmatpush1.msra.mxu0 0.0
      %661 = vmatprep.subr.mxu0 0.0
      %662 = vmatpush1.msra.mxu0 0.0
      %663 = vmatprep.subr.mxu0 0.0
      %664 = vmatpush1.msra.mxu0 0.0
      %665 = vmatprep.subr.mxu0 0.0
      %666 = vmatpush1.msra.mxu0 0.0
      %667 = vmatprep.subr.mxu0 0.0
      %668 = vmatpush1.msra.mxu0 0.0
      %669 = vmatprep.subr.mxu0 0.0
      %670 = vmatpush1.msra.mxu0 0.0
      %671 = vmatprep.mubr.f32.mxu0 0.0
      %672 = vmatmul.mubr.f32.gmra.mrb[0].mxu0 %v605
      %v673 = vpop.f32.mrb[0].mxu0
      %v674 = vadd.f32 0.0, %v673
      %v675 = vpop.f32.mrb[0].mxu0
      %676 = vdwg.mxu0
      %v677 = vadd.f32 %v599, %v674
      %678 = vst.msk [vmem:[%s592] sm:$0xff] %vm297, %v677
      %679 = vst.msk [vmem:[%s567] sm:$0xff] %vm398, %v572
      // Predicated region
      $region37: #{basic_transformer_block.9} parent=31 // pred_check
        %p680 = pneg %p282
      $region38: #{basic_transformer_block.9} parent=31 // pred_check_branch
        %682 = sbr.rel (%p680) target = $region40
      $region39: #{basic_transformer_block.9} parent=31 // pred_region
        %v683 = vld [vmem:[#allocation4] sm:$0xff]
        %v684 = vld [vmem:[#allocation3] sm:$0xff]
        %v685 = vrcp.pop %v684
        %687 = vset.pattern.permute.xlu0 0
        %688 = vperm.xlu0 %687, %v685
        %v689 = vpop.permute.xlu0 %688
        %v691 = vmul.f32 %v683, %v689
        %v692 = vld [vmem:[%s592] sm:$0xff]
        %v693 = vld [vmem:[%s584] sm:$0xff]
        %v694 = vrcp.pop %v693
        %696 = vset.pattern.permute.xlu0 0
        %697 = vperm.xlu0 %696, %v694
        %v698 = vpop.permute.xlu0 %697
        %v700 = vmul.f32 %v692, %v698
        %702 = vrot.lane.b32.xlu0 %v700, 64
        %v703 = vpop.permute.xlu0 %702
        %v705 = vsel %vm297, %v691, %v703
        %706 = vst [vmem:[%s281] sm:$0xff] %v705
      $region40: #{basic_transformer_block.9} parent=31 // pred_fallthru
        _
      %p707 = scmp.lt.s32.totalorder %s19, 1
      %s708 = scalar_select %p707, %s19, 1
      %p709 = scmp.lt.s32.totalorder %s20, 0
      %s710 = scalar_select %p709, %s20, 0
      %s711 = sadd.s32 %s710, %s708
      %s712 = smul.addr %s711, 8
      %s713 = scalar_lea.vmem %s3, %s712
      // Predicated region
      $region41: #{basic_transformer_block.9} parent=31 // pred_check
        %p714 = pneg %p141
      $region42: #{basic_transformer_block.9} parent=31 // pred_check_branch
        %716 = sbr.rel (%p714) target = $region44
      $region43: #{basic_transformer_block.9} parent=31 // pred_region
        _
      $region44: #{basic_transformer_block.9} parent=31 // pred_fallthru
        _
    $region32: #{basic_transformer_block.9} parent=5 // pred_fallthru
      _
    %p717 = scmp.le.s32.totalorder 2, %s9
    // Predicated region
    $region45: #{basic_transformer_block.9} parent=5 // pred_check
      %p718 = pneg %p717
    $region46: #{basic_transformer_block.9} parent=5 // pred_check_branch
      %720 = sbr.rel (%p718) target = $region48
    $region47: #{basic_transformer_block.9} parent=5 // pred_region
      %s721 = ssub.s32 %s9, 2
      // Predicated region
      $region49: #{basic_transformer_block.9} parent=47 // pred_check
        %p722 = pneg %p147
      $region50: #{basic_transformer_block.9} parent=47 // pred_check_branch
        %724 = sbr.rel (%p722) target = $region52
      $region51: #{basic_transformer_block.9} parent=47 // pred_region
        %p725 = scmp.lt.s32.totalorder %s22, 1
        %s726 = scalar_select %p725, %s22, 1
        %p727 = scmp.lt.s32.totalorder %s23, 0
        %s728 = scalar_select %p727, %s23, 0
        %s729 = sadd.s32 %s728, %s726
        %s730 = smul.addr %s729, 8
        %s731 = scalar_lea.vmem %s3, %s730
      $region52: #{basic_transformer_block.9} parent=47 // pred_fallthru
        _
    $region48: #{basic_transformer_block.9} parent=5 // pred_fallthru
      _
  $region6: #{basic_transformer_block.9} parent=0 // loop_footer
    %s13 = sadd.s32 1, %s9
  $region7: #{basic_transformer_block.9} parent=0 // loop_footer_branch
    %8 = sbr.rel target = $region3
  $region8: #{basic_transformer_block.9} parent=0 // loop_exit
    _

// kernel: basic_transformer_block.14
$region0: #{basic_transformer_block.14}
  #allocation0 [shape = 'u32[]', space=smem, size = 0x4, offset = 0x4, fixed_abs, tag = 'smem constant byte address 0x4 - core index']
  #allocation1 [shape = 'u32[144,128]{1,0:T(1,128)}', space=vmem, size = 0x12000, scoped, tag = 'internal scratch']
  %s0 = inlined_call_operand.vmem [shape: f32[16,128], index: 0, kind: input, shape index: {}]
  %s1 = inlined_call_operand.vmem [shape: f32[16,128], index: 1, kind: input, shape index: {}]
  %s2 = inlined_call_operand.vmem [shape: f32[128,128], index: 2, kind: input, shape index: {}]
  %s3 = inlined_call_operand.vmem [shape: f32[1,128], index: 3, kind: input, shape index: {}]
  %s4 = inlined_call_operand.vmem [shape: f32[16,128], index: 4, kind: output, shape index: {}]
  %s5 = sld [smem:[#allocation0]]
  $region49: #{basic_transformer_block.14} parent=0
    _
  %s7 = ssub.s32 1, %s5
  %s8 = scalar_select 0, %s7, %s5
  loop: start=0, step=1, limit=4
  $region2: #{basic_transformer_block.14} parent=0 // loop_pre_header
    _
  $region3: #{basic_transformer_block.14} parent=0 // loop_header
    %s10 = sphi 0, %s14
    %p11 = scmp.ge.s32.totalorder %s10, 4
    %s20 = sphi 0, %s22
    %s23 = sphi 0, %s20
    %s24 = sphi 0, %s23
    %s40 = sphi 0, %s24
    %s46 = sphi 0, %s48
    %s49 = sphi 0, %s46
    %s50 = sphi 0, %s49
    %s66 = sphi 0, %s50
    %s70 = sphi 0, %s70
    %s72 = sphi 0, %s70
    %s73 = sphi 0, %s72
    %s87 = sphi 0, %s73
    %s91 = sphi 0, %s91
    %s93 = sphi 0, %s91
    %s94 = sphi 0, %s93
    %s108 = sphi 0, %s94
    %s114 = sphi 0, %s116
    %s117 = sphi 0, %s114
    %s118 = sphi 0, %s117
    %s134 = sphi 0, %s118
  $region4: #{basic_transformer_block.14} parent=0 // loop_header_branch
    %13 = sbr.rel (%p11) target = $region8
  $region5: #{basic_transformer_block.14} parent=0 // loop_body
    %s15 = ssub.s32 %s10, 1
    %s16 = ssub.s32 %s10, 2
    %s17 = sadd.s32 %s10, 1
    %s18 = ssub.s32 %s10, %s17
    %p19 = scmp.eq.s32.totalorder %s18, 0
    %s21 = sadd.s32 %s20, 1
    %s22 = scalar_select %p19, %s20, %s21
    %p25 = pneg %p19
    %p26 = scmp.eq.s32.totalorder %s10, 1
    %p27 = por %p25, %p26
    %p28 = scmp.ne.s32.totalorder %s20, %s23
    %p29 = scmp.eq.s32.totalorder %s10, 0
    %p30 = por %p28, %p29
    %p31 = scmp.ne.s32.totalorder %s20, %s23
    %p32 = scmp.eq.s32.totalorder %s15, 1
    %p33 = por %p31, %p32
    %p34 = scmp.ne.s32.totalorder %s23, %s24
    %p35 = scmp.eq.s32.totalorder %s15, 0
    %p36 = por %p34, %p35
    %p37 = scmp.ne.s32.totalorder %s23, %s24
    %p38 = scmp.eq.s32.totalorder %s16, 1
    %p39 = por %p37, %p38
    %p41 = scmp.ne.s32.totalorder %s24, %s40
    %p42 = scmp.eq.s32.totalorder %s16, 0
    %p43 = por %p41, %p42
    %s44 = ssub.s32 %s10, %s17
    %p45 = scmp.eq.s32.totalorder %s44, 0
    %s47 = sadd.s32 %s46, 1
    %s48 = scalar_select %p45, %s46, %s47
    %p51 = pneg %p45
    %p52 = scmp.eq.s32.totalorder %s10, 1
    %p53 = por %p51, %p52
    %p54 = scmp.ne.s32.totalorder %s46, %s49
    %p55 = scmp.eq.s32.totalorder %s10, 0
    %p56 = por %p54, %p55
    %p57 = scmp.ne.s32.totalorder %s46, %s49
    %p58 = scmp.eq.s32.totalorder %s15, 1
    %p59 = por %p57, %p58
    %p60 = scmp.ne.s32.totalorder %s49, %s50
    %p61 = scmp.eq.s32.totalorder %s15, 0
    %p62 = por %p60, %p61
    %p63 = scmp.ne.s32.totalorder %s49, %s50
    %p64 = scmp.eq.s32.totalorder %s16, 1
    %p65 = por %p63, %p64
    %p67 = scmp.ne.s32.totalorder %s50, %s66
    %p68 = scmp.eq.s32.totalorder %s16, 0
    %p69 = por %p67, %p68
    %s71 = sadd.s32 %s70, 1
    %p74 = scmp.eq.s32.totalorder %s10, 1
    %p75 = scmp.ne.s32.totalorder %s70, %s72
    %p76 = scmp.eq.s32.totalorder %s10, 0
    %p77 = por %p75, %p76
    %p78 = scmp.ne.s32.totalorder %s70, %s72
    %p79 = scmp.eq.s32.totalorder %s15, 1
    %p80 = por %p78, %p79
    %p81 = scmp.ne.s32.totalorder %s72, %s73
    %p82 = scmp.eq.s32.totalorder %s15, 0
    %p83 = por %p81, %p82
    %p84 = scmp.ne.s32.totalorder %s72, %s73
    %p85 = scmp.eq.s32.totalorder %s16, 1
    %p86 = por %p84, %p85
    %p88 = scmp.ne.s32.totalorder %s73, %s87
    %p89 = scmp.eq.s32.totalorder %s16, 0
    %p90 = por %p88, %p89
    %s92 = sadd.s32 %s91, 1
    %p95 = scmp.eq.s32.totalorder %s10, 1
    %p96 = scmp.ne.s32.totalorder %s91, %s93
    %p97 = scmp.eq.s32.totalorder %s10, 0
    %p98 = por %p96, %p97
    %p99 = scmp.ne.s32.totalorder %s91, %s93
    %p100 = scmp.eq.s32.totalorder %s15, 1
    %p101 = por %p99, %p100
    %p102 = scmp.ne.s32.totalorder %s93, %s94
    %p103 = scmp.eq.s32.totalorder %s15, 0
    %p104 = por %p102, %p103
    %p105 = scmp.ne.s32.totalorder %s93, %s94
    %p106 = scmp.eq.s32.totalorder %s16, 1
    %p107 = por %p105, %p106
    %p109 = scmp.ne.s32.totalorder %s94, %s108
    %p110 = scmp.eq.s32.totalorder %s16, 0
    %p111 = por %p109, %p110
    %s112 = ssub.s32 %s10, %s17
    %p113 = scmp.eq.s32.totalorder %s112, 0
    %s115 = sadd.s32 %s114, 1
    %s116 = scalar_select %p113, %s114, %s115
    %p119 = pneg %p113
    %p120 = scmp.eq.s32.totalorder %s10, 1
    %p121 = por %p119, %p120
    %p122 = scmp.ne.s32.totalorder %s114, %s117
    %p123 = scmp.eq.s32.totalorder %s10, 0
    %p124 = por %p122, %p123
    %p125 = scmp.ne.s32.totalorder %s114, %s117
    %p126 = scmp.eq.s32.totalorder %s15, 1
    %p127 = por %p125, %p126
    %p128 = scmp.ne.s32.totalorder %s117, %s118
    %p129 = scmp.eq.s32.totalorder %s15, 0
    %p130 = por %p128, %p129
    %p131 = scmp.ne.s32.totalorder %s117, %s118
    %p132 = scmp.eq.s32.totalorder %s16, 1
    %p133 = por %p131, %p132
    %p135 = scmp.ne.s32.totalorder %s118, %s134
    %p136 = scmp.eq.s32.totalorder %s16, 0
    %p137 = por %p135, %p136
    %p138 = scmp.le.s32.totalorder 1, %s10
    %p139 = scmp.lt.s32.totalorder %s10, 3
    %p140 = pnand %p138, %p139
    %p141 = pneg %p140
    // Predicated region
    $region9: #{basic_transformer_block.14} parent=5 // pred_check
      _
    $region10: #{basic_transformer_block.14} parent=5 // pred_check_branch
      %143 = sbr.rel (%p140) target = $region12
    $region11: #{basic_transformer_block.14} parent=5 // pred_region
      %s144 = ssub.s32 %s10, 1
      // Predicated region
      $region13: #{basic_transformer_block.14} parent=11 // pred_check
        %p145 = pneg %p83
      $region14: #{basic_transformer_block.14} parent=11 // pred_check_branch
        %147 = sbr.rel (%p145) target = $region16
      $region15: #{basic_transformer_block.14} parent=11 // pred_region
        _
      $region16: #{basic_transformer_block.14} parent=11 // pred_fallthru
        _
      // Predicated region
      $region17: #{basic_transformer_block.14} parent=11 // pred_check
        %p148 = pneg %p104
      $region18: #{basic_transformer_block.14} parent=11 // pred_check_branch
        %150 = sbr.rel (%p148) target = $region20
      $region19: #{basic_transformer_block.14} parent=11 // pred_region
        _
      $region20: #{basic_transformer_block.14} parent=11 // pred_fallthru
        _
    $region12: #{basic_transformer_block.14} parent=5 // pred_fallthru
      _
    %p151 = scmp.lt.s32.totalorder %s10, 2
    // Predicated region
    $region21: #{basic_transformer_block.14} parent=5 // pred_check
      %p152 = pneg %p151
    $region22: #{basic_transformer_block.14} parent=5 // pred_check_branch
      %154 = sbr.rel (%p152) target = $region24
    $region23: #{basic_transformer_block.14} parent=5 // pred_region
      // Predicated region
      $region25: #{basic_transformer_block.14} parent=23 // pred_check
        %p155 = pneg %p30
      $region26: #{basic_transformer_block.14} parent=23 // pred_check_branch
        %157 = sbr.rel (%p155) target = $region28
      $region27: #{basic_transformer_block.14} parent=23 // pred_region
        %p158 = scmp.lt.s32.totalorder %s10, 1
        %s159 = scalar_select %p158, %s10, 1
        %s160 = smul.addr %s159, 8
        %s161 = scalar_lea.vmem %s0, %s160
      $region28: #{basic_transformer_block.14} parent=23 // pred_fallthru
        _
      // Predicated region
      $region29: #{basic_transformer_block.14} parent=23 // pred_check
        %p162 = pneg %p56
      $region30: #{basic_transformer_block.14} parent=23 // pred_check_branch
        %164 = sbr.rel (%p162) target = $region32
      $region31: #{basic_transformer_block.14} parent=23 // pred_region
        %p165 = scmp.lt.s32.totalorder %s10, 1
        %s166 = scalar_select %p165, %s10, 1
        %s167 = smul.addr %s166, 8
        %s168 = scalar_lea.vmem %s1, %s167
      $region32: #{basic_transformer_block.14} parent=23 // pred_fallthru
        _
    $region24: #{basic_transformer_block.14} parent=5 // pred_fallthru
      _
    %p169 = scmp.le.s32.totalorder 1, %s10
    %p170 = scmp.lt.s32.totalorder %s10, 3
    %p171 = pnand %p169, %p170
    %p172 = pneg %p171
    // Predicated region
    $region33: #{basic_transformer_block.14} parent=5 // pred_check
      _
    $region34: #{basic_transformer_block.14} parent=5 // pred_check_branch
      %174 = sbr.rel (%p171) target = $region36
    $region35: #{basic_transformer_block.14} parent=5 // pred_region
      %s175 = ssub.s32 %s10, 1
      %p176 = scmp.lt.s32.totalorder %s15, 1
      %s177 = scalar_select %p176, %s15, 1
      %s178 = smul.addr %s177, 8
      %s179 = scalar_lea.vmem %s0, %s178
      %p180 = pneg %p36
      %p181 = pneg %p33
      %p182 = scmp.lt.s32.totalorder %s15, 1
      %s183 = scalar_select %p182, %s15, 1
      %s184 = smul.addr %s183, 8
      %s185 = scalar_lea.vmem %s1, %s184
      %p186 = pneg %p62
      %p187 = pneg %p59
      %p188 = pneg %p83
      %p189 = pneg %p80
      %p190 = pneg %p104
      %p191 = pneg %p101
      %p192 = pneg %p130
      %p193 = pneg %p127
      %p194 = scmp.lt.s32.totalorder %s15, 1
      %s195 = scalar_select %p194, %s15, 1
      %s196 = smul.addr %s195, 8
      %s197 = scalar_lea.vmem %s4, %s196
      %p198 = scmp.lt.s32.totalorder %s15, 1
      %s199 = scalar_select %p198, %s15, 1
      %s200 = smul.addr %s199, 8
      %s201 = scalar_lea.vmem %s0, %s200
      %p202 = scmp.lt.s32.totalorder %s15, 1
      %s203 = scalar_select %p202, %s15, 1
      %s204 = smul.addr %s203, 8
      %s205 = scalar_lea.vmem %s1, %s204
      %p206 = scmp.lt.s32.totalorder %s15, 1
      %s207 = scalar_select %p206, %s15, 1
      %s208 = smul.addr %s207, 8
      %s209 = scalar_lea.vmem %s4, %s208
      %v210 = vld [vmem:[%s201] sm:$0xff]
      %v211 = vld [vmem:[%s2] sm:$0xff]
      %v212 = vld [vmem:[%s2 + $0x8] sm:$0xff]
      %v213 = vld [vmem:[%s2 + $0x10] sm:$0xff]
      %v214 = vld [vmem:[%s2 + $0x18] sm:$0xff]
      %v215 = vld [vmem:[%s2 + $0x20] sm:$0xff]
      %v216 = vld [vmem:[%s2 + $0x28] sm:$0xff]
      %v217 = vld [vmem:[%s2 + $0x30] sm:$0xff]
      %v218 = vld [vmem:[%s2 + $0x38] sm:$0xff]
      %v219 = vld [vmem:[%s2 + $0x40] sm:$0xff]
      %v220 = vld [vmem:[%s2 + $0x48] sm:$0xff]
      %v221 = vld [vmem:[%s2 + $0x50] sm:$0xff]
      %v222 = vld [vmem:[%s2 + $0x58] sm:$0xff]
      %v223 = vld [vmem:[%s2 + $0x60] sm:$0xff]
      %v224 = vld [vmem:[%s2 + $0x68] sm:$0xff]
      %v225 = vld [vmem:[%s2 + $0x70] sm:$0xff]
      %v226 = vld [vmem:[%s2 + $0x78] sm:$0xff]
      %v227 = vld [vmem:[%s3] sm:$0x1]
      %v229 = vlaneseq
      %v230 = vshrl.u32 %v229, 7
      %v231 = vsub.s32 0, %v230
      %v232 = vrot.slane %v227, %v231
      %234 = vmatprep.subr.mxu0 0.0
      %235 = vmatpush1.msra.mxu0 %v211
      %236 = vmatprep.subr.mxu0 0.0
      %237 = vmatpush1.msra.mxu0 %v212
      %238 = vmatprep.subr.mxu0 0.0
      %239 = vmatpush1.msra.mxu0 %v213
      %240 = vmatprep.subr.mxu0 0.0
      %241 = vmatpush1.msra.mxu0 %v214
      %242 = vmatprep.subr.mxu0 0.0
      %243 = vmatpush1.msra.mxu0 %v215
      %244 = vmatprep.subr.mxu0 0.0
      %245 = vmatpush1.msra.mxu0 %v216
      %246 = vmatprep.subr.mxu0 0.0
      %247 = vmatpush1.msra.mxu0 %v217
      %248 = vmatprep.subr.mxu0 0.0
      %249 = vmatpush1.msra.mxu0 %v218
      %250 = vmatprep.subr.mxu0 0.0
      %251 = vmatpush1.msra.mxu0 %v219
      %252 = vmatprep.subr.mxu0 0.0
      %253 = vmatpush1.msra.mxu0 %v220
      %254 = vmatprep.subr.mxu0 0.0
      %255 = vmatpush1.msra.mxu0 %v221
      %256 = vmatprep.subr.mxu0 0.0
      %257 = vmatpush1.msra.mxu0 %v222
      %258 = vmatprep.subr.mxu0 0.0
      %259 = vmatpush1.msra.mxu0 %v223
      %260 = vmatprep.subr.mxu0 0.0
      %261 = vmatpush1.msra.mxu0 %v224
      %262 = vmatprep.subr.mxu0 0.0
      %263 = vmatpush1.msra.mxu0 %v225
      %264 = vmatprep.subr.mxu0 0.0
      %265 = vmatpush1.msra.mxu0 %v226
      %266 = vmatprep.subr.mxu0 0.0
      %267 = vmatpush1.msra.mxu0 0.0
      %268 = vmatprep.subr.mxu0 0.0
      %269 = vmatpush1.msra.mxu0 0.0
      %270 = vmatprep.subr.mxu0 0.0
      %271 = vmatpush1.msra.mxu0 0.0
      %272 = vmatprep.subr.mxu0 0.0
      %273 = vmatpush1.msra.mxu0 0.0
      %274 = vmatprep.subr.mxu0 0.0
      %275 = vmatpush1.msra.mxu0 0.0
      %276 = vmatprep.subr.mxu0 0.0
      %277 = vmatpush1.msra.mxu0 0.0
      %278 = vmatprep.subr.mxu0 0.0
      %279 = vmatpush1.msra.mxu0 0.0
      %280 = vmatprep.subr.mxu0 0.0
      %281 = vmatpush1.msra.mxu0 0.0
      %282 = vmatprep.subr.mxu0 0.0
      %283 = vmatpush1.msra.mxu0 0.0
      %284 = vmatprep.subr.mxu0 0.0
      %285 = vmatpush1.msra.mxu0 0.0
      %286 = vmatprep.subr.mxu0 0.0
      %287 = vmatpush1.msra.mxu0 0.0
      %288 = vmatprep.subr.mxu0 0.0
      %289 = vmatpush1.msra.mxu0 0.0
      %290 = vmatprep.subr.mxu0 0.0
      %291 = vmatpush1.msra.mxu0 0.0
      %292 = vmatprep.subr.mxu0 0.0
      %293 = vmatpush1.msra.mxu0 0.0
      %294 = vmatprep.subr.mxu0 0.0
      %295 = vmatpush1.msra.mxu0 0.0
      %296 = vmatprep.subr.mxu0 0.0
      %297 = vmatpush1.msra.mxu0 0.0
      %298 = vmatprep.mubr.f32.mxu0 0.0
      %299 = vmatmul.mubr.f32.gmra.mrb[0].mxu0 %v210
      %v300 = vpop.f32.mrb[0].mxu0
      %v301 = vadd.f32 %v232, %v300
      %v302 = vpop.f32.mrb[0].mxu0
      %303 = vdwg.mxu0
      %v304 = vld [vmem:[%s205] sm:$0xff]
      %v305 = vadd.f32 %v301, %v304
      %306 = vst [vmem:[%s209] sm:$0xff] %v305
      %p307 = scmp.lt.s32.totalorder %s15, 1
      %s308 = scalar_select %p307, %s15, 1
      %s309 = smul.addr %s308, 8
      %s310 = scalar_lea.vmem %s4, %s309
      // Predicated region
      $region37: #{basic_transformer_block.14} parent=35 // pred_check
        %p311 = pneg %p127
      $region38: #{basic_transformer_block.14} parent=35 // pred_check_branch
        %313 = sbr.rel (%p311) target = $region40
      $region39: #{basic_transformer_block.14} parent=35 // pred_region
        _
      $region40: #{basic_transformer_block.14} parent=35 // pred_fallthru
        _
    $region36: #{basic_transformer_block.14} parent=5 // pred_fallthru
      _
    %p314 = scmp.le.s32.totalorder 2, %s10
    // Predicated region
    $region41: #{basic_transformer_block.14} parent=5 // pred_check
      %p315 = pneg %p314
    $region42: #{basic_transformer_block.14} parent=5 // pred_check_branch
      %317 = sbr.rel (%p315) target = $region44
    $region43: #{basic_transformer_block.14} parent=5 // pred_region
      %s318 = ssub.s32 %s10, 2
      // Predicated region
      $region45: #{basic_transformer_block.14} parent=43 // pred_check
        %p319 = pneg %p133
      $region46: #{basic_transformer_block.14} parent=43 // pred_check_branch
        %321 = sbr.rel (%p319) target = $region48
      $region47: #{basic_transformer_block.14} parent=43 // pred_region
        %p322 = scmp.lt.s32.totalorder %s16, 1
        %s323 = scalar_select %p322, %s16, 1
        %s324 = smul.addr %s323, 8
        %s325 = scalar_lea.vmem %s4, %s324
      $region48: #{basic_transformer_block.14} parent=43 // pred_fallthru
        _
    $region44: #{basic_transformer_block.14} parent=5 // pred_fallthru
      _
  $region6: #{basic_transformer_block.14} parent=0 // loop_footer
    %s14 = sadd.s32 1, %s10
  $region7: #{basic_transformer_block.14} parent=0 // loop_footer_branch
    %9 = sbr.rel target = $region3
  $region8: #{basic_transformer_block.14} parent=0 // loop_exit
    _

// kernel: basic_transformer_block.12
$region0: #{basic_transformer_block.12}
  #allocation0 [shape = 'u32[]', space=smem, size = 0x4, offset = 0x4, fixed_abs, tag = 'smem constant byte address 0x4 - core index']
  #allocation1 [shape = 'u32[144,128]{1,0:T(1,128)}', space=vmem, size = 0x12000, scoped, tag = 'internal scratch']
  %s0 = inlined_call_operand.hbm [shape: f32[32,128], index: 0, kind: input, shape index: {}]
  %s1 = inlined_call_operand.hbm [shape: f32[128,128], index: 1, kind: input, shape index: {}]
  %s2 = inlined_call_operand.hbm [shape: f32[128,128], index: 2, kind: input, shape index: {}]
  %s3 = inlined_call_operand.vmem [shape: f32[32,128], index: 3, kind: output, shape index: {0}]
  %s4 = inlined_call_operand.vmem [shape: f32[32,128], index: 4, kind: output, shape index: {1}]
  %5 = xla_tuple %s3, %s4
  %s6 = sld [smem:[#allocation0]]
  $region65: #{basic_transformer_block.12} parent=0
    _
  %s8 = ssub.s32 1, %s6
  %s9 = scalar_select 0, %s8, %s6
  $region1: #{basic_transformer_block.12} parent=0
    #allocation2 [shape = 'u8[16384]{0}', space=vmem, size = 0x4000, scoped, tag = 'input window, operand 0']
    #allocation3 [shape = 's32[2]{0}', space=sflag, size = 0x8, scoped, tag = 'scoped memory for basic_transformer_block.12']
    #allocation4 [shape = 'u8[65536]{0}', space=vmem, size = 0x10000, scoped, tag = 'input window, operand 1, single buffered']
    #allocation5 [shape = 's32[1]{0}', space=sflag, size = 0x4, scoped, tag = 'scoped memory for basic_transformer_block.12']
    #allocation6 [shape = 'u8[65536]{0}', space=vmem, size = 0x10000, scoped, tag = 'input window, operand 2, single buffered']
    %10 = vsyncpa [#allocation3], 0
    %s11 = scalar_lea.sflag [#allocation3], 1
    %12 = vsyncpa %s11, 0
    %13 = vsyncpa [#allocation5], 0
    loop: start=0, step=1, limit=4
    $region2: #{basic_transformer_block.12} parent=1 // loop_pre_header
      _
    $region3: #{basic_transformer_block.12} parent=1 // loop_header
      %s15 = sphi 0, %s19
      %p16 = scmp.ge.s32.totalorder %s15, 4
      %s25 = sphi 0, %s27
      %s28 = sphi 0, %s25
      %s29 = sphi 0, %s28
      %s45 = sphi 0, %s29
      %s49 = sphi 0, %s49
      %s51 = sphi 0, %s49
      %s52 = sphi 0, %s51
      %s66 = sphi 0, %s52
      %s70 = sphi 0, %s70
      %s72 = sphi 0, %s70
      %s73 = sphi 0, %s72
      %s87 = sphi 0, %s73
      %s93 = sphi 0, %s95
      %s96 = sphi 0, %s93
      %s97 = sphi 0, %s96
      %s113 = sphi 0, %s97
      %s119 = sphi 0, %s121
      %s122 = sphi 0, %s119
      %s123 = sphi 0, %s122
      %s139 = sphi 0, %s123
    $region4: #{basic_transformer_block.12} parent=1 // loop_header_branch
      %18 = sbr.rel (%p16) target = $region8
    $region5: #{basic_transformer_block.12} parent=1 // loop_body
      %s20 = ssub.s32 %s15, 1
      %s21 = ssub.s32 %s15, 2
      %s22 = sadd.s32 %s15, 1
      %s23 = ssub.s32 %s15, %s22
      %p24 = scmp.eq.s32.totalorder %s23, 0
      %s26 = sadd.s32 %s25, 1
      %s27 = scalar_select %p24, %s25, %s26
      %p30 = pneg %p24
      %p31 = scmp.eq.s32.totalorder %s15, 1
      %p32 = por %p30, %p31
      %p33 = scmp.ne.s32.totalorder %s25, %s28
      %p34 = scmp.eq.s32.totalorder %s15, 0
      %p35 = por %p33, %p34
      %p36 = scmp.ne.s32.totalorder %s25, %s28
      %p37 = scmp.eq.s32.totalorder %s20, 1
      %p38 = por %p36, %p37
      %p39 = scmp.ne.s32.totalorder %s28, %s29
      %p40 = scmp.eq.s32.totalorder %s20, 0
      %p41 = por %p39, %p40
      %p42 = scmp.ne.s32.totalorder %s28, %s29
      %p43 = scmp.eq.s32.totalorder %s21, 1
      %p44 = por %p42, %p43
      %p46 = scmp.ne.s32.totalorder %s29, %s45
      %p47 = scmp.eq.s32.totalorder %s21, 0
      %p48 = por %p46, %p47
      %s50 = sadd.s32 %s49, 1
      %p53 = scmp.eq.s32.totalorder %s15, 1
      %p54 = scmp.ne.s32.totalorder %s49, %s51
      %p55 = scmp.eq.s32.totalorder %s15, 0
      %p56 = por %p54, %p55
      %p57 = scmp.ne.s32.totalorder %s49, %s51
      %p58 = scmp.eq.s32.totalorder %s20, 1
      %p59 = por %p57, %p58
      %p60 = scmp.ne.s32.totalorder %s51, %s52
      %p61 = scmp.eq.s32.totalorder %s20, 0
      %p62 = por %p60, %p61
      %p63 = scmp.ne.s32.totalorder %s51, %s52
      %p64 = scmp.eq.s32.totalorder %s21, 1
      %p65 = por %p63, %p64
      %p67 = scmp.ne.s32.totalorder %s52, %s66
      %p68 = scmp.eq.s32.totalorder %s21, 0
      %p69 = por %p67, %p68
      %s71 = sadd.s32 %s70, 1
      %p74 = scmp.eq.s32.totalorder %s15, 1
      %p75 = scmp.ne.s32.totalorder %s70, %s72
      %p76 = scmp.eq.s32.totalorder %s15, 0
      %p77 = por %p75, %p76
      %p78 = scmp.ne.s32.totalorder %s70, %s72
      %p79 = scmp.eq.s32.totalorder %s20, 1
      %p80 = por %p78, %p79
      %p81 = scmp.ne.s32.totalorder %s72, %s73
      %p82 = scmp.eq.s32.totalorder %s20, 0
      %p83 = por %p81, %p82
      %p84 = scmp.ne.s32.totalorder %s72, %s73
      %p85 = scmp.eq.s32.totalorder %s21, 1
      %p86 = por %p84, %p85
      %p88 = scmp.ne.s32.totalorder %s73, %s87
      %p89 = scmp.eq.s32.totalorder %s21, 0
      %p90 = por %p88, %p89
      %s91 = ssub.s32 %s15, %s22
      %p92 = scmp.eq.s32.totalorder %s91, 0
      %s94 = sadd.s32 %s93, 1
      %s95 = scalar_select %p92, %s93, %s94
      %p98 = pneg %p92
      %p99 = scmp.eq.s32.totalorder %s15, 1
      %p100 = por %p98, %p99
      %p101 = scmp.ne.s32.totalorder %s93, %s96
      %p102 = scmp.eq.s32.totalorder %s15, 0
      %p103 = por %p101, %p102
      %p104 = scmp.ne.s32.totalorder %s93, %s96
      %p105 = scmp.eq.s32.totalorder %s20, 1
      %p106 = por %p104, %p105
      %p107 = scmp.ne.s32.totalorder %s96, %s97
      %p108 = scmp.eq.s32.totalorder %s20, 0
      %p109 = por %p107, %p108
      %p110 = scmp.ne.s32.totalorder %s96, %s97
      %p111 = scmp.eq.s32.totalorder %s21, 1
      %p112 = por %p110, %p111
      %p114 = scmp.ne.s32.totalorder %s97, %s113
      %p115 = scmp.eq.s32.totalorder %s21, 0
      %p116 = por %p114, %p115
      %s117 = ssub.s32 %s15, %s22
      %p118 = scmp.eq.s32.totalorder %s117, 0
      %s120 = sadd.s32 %s119, 1
      %s121 = scalar_select %p118, %s119, %s120
      %p124 = pneg %p118
      %p125 = scmp.eq.s32.totalorder %s15, 1
      %p126 = por %p124, %p125
      %p127 = scmp.ne.s32.totalorder %s119, %s122
      %p128 = scmp.eq.s32.totalorder %s15, 0
      %p129 = por %p127, %p128
      %p130 = scmp.ne.s32.totalorder %s119, %s122
      %p131 = scmp.eq.s32.totalorder %s20, 1
      %p132 = por %p130, %p131
      %p133 = scmp.ne.s32.totalorder %s122, %s123
      %p134 = scmp.eq.s32.totalorder %s20, 0
      %p135 = por %p133, %p134
      %p136 = scmp.ne.s32.totalorder %s122, %s123
      %p137 = scmp.eq.s32.totalorder %s21, 1
      %p138 = por %p136, %p137
      %p140 = scmp.ne.s32.totalorder %s123, %s139
      %p141 = scmp.eq.s32.totalorder %s21, 0
      %p142 = por %p140, %p141
      %p143 = scmp.le.s32.totalorder 1, %s15
      %p144 = scmp.lt.s32.totalorder %s15, 3
      %p145 = pnand %p143, %p144
      %p146 = pneg %p145
      // Predicated region
      $region9: #{basic_transformer_block.12} parent=5 // pred_check
        _
      $region10: #{basic_transformer_block.12} parent=5 // pred_check_branch
        %148 = sbr.rel (%p145) target = $region12
      $region11: #{basic_transformer_block.12} parent=5 // pred_region
        %s149 = ssub.s32 %s15, 1
        // Predicated region
        $region13: #{basic_transformer_block.12} parent=11 // pred_check
          %p150 = pneg %p62
        $region14: #{basic_transformer_block.12} parent=11 // pred_check_branch
          %152 = sbr.rel (%p150) target = $region16
        $region15: #{basic_transformer_block.12} parent=11 // pred_region
          %s154 = ssub.s32 2048, 2048
          %155 = vsyncadd [#allocation5], %s154
          %s156 = sshll.u32 [#allocation4], 4
          %s157 = int_to_ptr.vmem [resolvable:$true] %s156
          %162 = dma.hbm_to_vmem [thread:$0]  %s1, 2048, %s157, [#allocation5], 128, 128, 8
        $region16: #{basic_transformer_block.12} parent=11 // pred_fallthru
          _
        // Predicated region
        $region17: #{basic_transformer_block.12} parent=11 // pred_check
          %p163 = pneg %p83
        $region18: #{basic_transformer_block.12} parent=11 // pred_check_branch
          %165 = sbr.rel (%p163) target = $region20
        $region19: #{basic_transformer_block.12} parent=11 // pred_region
          %s167 = ssub.s32 2048, 2048
          %168 = vsyncadd [#allocation5], %s167
          %s169 = sshll.u32 [#allocation6], 4
          %s170 = int_to_ptr.vmem [resolvable:$true] %s169
          %175 = dma.hbm_to_vmem [thread:$0]  %s2, 2048, %s170, [#allocation5], 128, 128, 8
        $region20: #{basic_transformer_block.12} parent=11 // pred_fallthru
          _
      $region12: #{basic_transformer_block.12} parent=5 // pred_fallthru
        _
      %p176 = scmp.lt.s32.totalorder %s15, 2
      // Predicated region
      $region21: #{basic_transformer_block.12} parent=5 // pred_check
        %p177 = pneg %p176
      $region22: #{basic_transformer_block.12} parent=5 // pred_check_branch
        %179 = sbr.rel (%p177) target = $region24
      $region23: #{basic_transformer_block.12} parent=5 // pred_region
        // Predicated region
        $region25: #{basic_transformer_block.12} parent=23 // pred_check
          %p180 = pneg %p35
        $region26: #{basic_transformer_block.12} parent=23 // pred_check_branch
          %182 = sbr.rel (%p180) target = $region28
        $region27: #{basic_transformer_block.12} parent=23 // pred_region
          %s183 = sand.u32 %s25, 1
          %s184 = scalar_lea.sflag [#allocation3], %s183
          %s185 = sand.u32 %s25, 1
          %s186 = smul.addr %s185, 16
          %s187 = scalar_lea.vmem [#allocation2], %s186
          %s188 = smul.u32 2, %s15
          %s190 = ssub.s32 256, 256
          %191 = vsyncadd %s184, %s190
          %s192 = smul.addr %s188, 128
          %s193 = scalar_lea.hbm %s0, %s192
          %s194 = sshll.u32 %s187, 4
          %s195 = int_to_ptr.vmem [resolvable:$true] %s194
          %200 = dma.hbm_to_vmem [thread:$0]  %s193, 256, %s195, %s184, 128, 128, 8
        $region28: #{basic_transformer_block.12} parent=23 // pred_fallthru
          _
      $region24: #{basic_transformer_block.12} parent=5 // pred_fallthru
        _
      %p201 = scmp.le.s32.totalorder 1, %s15
      %p202 = scmp.lt.s32.totalorder %s15, 3
      %p203 = pnand %p201, %p202
      %p204 = pneg %p203
      // Predicated region
      $region29: #{basic_transformer_block.12} parent=5 // pred_check
        _
      $region30: #{basic_transformer_block.12} parent=5 // pred_check_branch
        %206 = sbr.rel (%p203) target = $region32
      $region31: #{basic_transformer_block.12} parent=5 // pred_region
        %s207 = ssub.s32 %s15, 1
        %s208 = sand.u32 %s28, 1
        %s209 = scalar_lea.sflag [#allocation3], %s208
        %s210 = sand.u32 %s28, 1
        %s211 = smul.addr %s210, 16
        %s212 = scalar_lea.vmem [#allocation2], %s211
        // Predicated region
        $region33: #{basic_transformer_block.12} parent=31 // pred_check
          %p213 = pneg %p41
        $region34: #{basic_transformer_block.12} parent=31 // pred_check_branch
          %215 = sbr.rel (%p213) target = $region36
        $region35: #{basic_transformer_block.12} parent=31 // pred_region
          %216 = dma.done %s209, 256
        $region36: #{basic_transformer_block.12} parent=31 // pred_fallthru
          _
        // Predicated region
        $region37: #{basic_transformer_block.12} parent=31 // pred_check
          %p217 = pneg %p62
        $region38: #{basic_transformer_block.12} parent=31 // pred_check_branch
          %219 = sbr.rel (%p217) target = $region40
        $region39: #{basic_transformer_block.12} parent=31 // pred_region
          %220 = dma.done [#allocation5], 2048
        $region40: #{basic_transformer_block.12} parent=31 // pred_fallthru
          _
        // Predicated region
        $region41: #{basic_transformer_block.12} parent=31 // pred_check
          %p221 = pneg %p83
        $region42: #{basic_transformer_block.12} parent=31 // pred_check_branch
          %223 = sbr.rel (%p221) target = $region44
        $region43: #{basic_transformer_block.12} parent=31 // pred_region
          %224 = dma.done [#allocation5], 2048
        $region44: #{basic_transformer_block.12} parent=31 // pred_fallthru
          _
        %s225 = sand.u32 %s28, 1
        %s226 = scalar_lea.sflag [#allocation3], %s225
        %s227 = sand.u32 %s28, 1
        %s228 = smul.addr %s227, 16
        %s229 = scalar_lea.vmem [#allocation2], %s228
        %p230 = pneg %p41
        %p231 = pneg %p38
        %p232 = pneg %p62
        %p233 = pneg %p59
        %p234 = pneg %p83
        %p235 = pneg %p80
        %p236 = pneg %p109
        %p237 = pneg %p106
        %s238 = smul.u32 2, %s20
        %p239 = scmp.lt.s32.totalorder %s238, 3
        %s240 = scalar_select %p239, %s238, 3
        %s241 = smul.addr %s240, 8
        %s242 = scalar_lea.vmem %s3, %s241
        %p243 = pneg %p135
        %p244 = pneg %p132
        %s245 = smul.u32 2, %s20
        %p246 = scmp.lt.s32.totalorder %s245, 3
        %s247 = scalar_select %p246, %s245, 3
        %s248 = smul.addr %s247, 8
        %s249 = scalar_lea.vmem %s4, %s248
        %s250 = smul.u32 2, %s20
        %s251 = smul.u32 2, %s20
        %p252 = scmp.lt.s32.totalorder %s251, 3
        %s253 = scalar_select %p252, %s251, 3
        %s254 = smul.addr %s253, 8
        %s255 = scalar_lea.vmem %s3, %s254
        %s256 = smul.u32 2, %s20
        %s257 = smul.u32 2, %s20
        %p258 = scmp.lt.s32.totalorder %s257, 3
        %s259 = scalar_select %p258, %s257, 3
        %s260 = smul.addr %s259, 8
        %s261 = scalar_lea.vmem %s4, %s260
        %s262 = smul.u32 2, %s20
        %v263 = vld [vmem:[%s212] sm:$0xff]
        %v264 = vld [vmem:[%s212 + $0x8] sm:$0xff]
        %v265 = vld [vmem:[#allocation4] sm:$0xff]
        %v266 = vld [vmem:[#allocation4 + $0x8] sm:$0xff]
        %v267 = vld [vmem:[#allocation4 + $0x10] sm:$0xff]
        %v268 = vld [vmem:[#allocation4 + $0x18] sm:$0xff]
        %v269 = vld [vmem:[#allocation4 + $0x20] sm:$0xff]
        %v270 = vld [vmem:[#allocation4 + $0x28] sm:$0xff]
        %v271 = vld [vmem:[#allocation4 + $0x30] sm:$0xff]
        %v272 = vld [vmem:[#allocation4 + $0x38] sm:$0xff]
        %v273 = vld [vmem:[#allocation4 + $0x40] sm:$0xff]
        %v274 = vld [vmem:[#allocation4 + $0x48] sm:$0xff]
        %v275 = vld [vmem:[#allocation4 + $0x50] sm:$0xff]
        %v276 = vld [vmem:[#allocation4 + $0x58] sm:$0xff]
        %v277 = vld [vmem:[#allocation4 + $0x60] sm:$0xff]
        %v278 = vld [vmem:[#allocation4 + $0x68] sm:$0xff]
        %v279 = vld [vmem:[#allocation4 + $0x70] sm:$0xff]
        %v280 = vld [vmem:[#allocation4 + $0x78] sm:$0xff]
        %281 = vmatprep.subr.mxu0 0.0
        %282 = vmatpush1.msra.mxu0 %v265
        %283 = vmatprep.subr.mxu0 0.0
        %284 = vmatpush1.msra.mxu0 %v266
        %285 = vmatprep.subr.mxu0 0.0
        %286 = vmatpush1.msra.mxu0 %v267
        %287 = vmatprep.subr.mxu0 0.0
        %288 = vmatpush1.msra.mxu0 %v268
        %289 = vmatprep.subr.mxu0 0.0
        %290 = vmatpush1.msra.mxu0 %v269
        %291 = vmatprep.subr.mxu0 0.0
        %292 = vmatpush1.msra.mxu0 %v270
        %293 = vmatprep.subr.mxu0 0.0
        %294 = vmatpush1.msra.mxu0 %v271
        %295 = vmatprep.subr.mxu0 0.0
        %296 = vmatpush1.msra.mxu0 %v272
        %297 = vmatprep.subr.mxu0 0.0
        %298 = vmatpush1.msra.mxu0 %v273
        %299 = vmatprep.subr.mxu0 0.0
        %300 = vmatpush1.msra.mxu0 %v274
        %301 = vmatprep.subr.mxu0 0.0
        %302 = vmatpush1.msra.mxu0 %v275
        %303 = vmatprep.subr.mxu0 0.0
        %304 = vmatpush1.msra.mxu0 %v276
        %305 = vmatprep.subr.mxu0 0.0
        %306 = vmatpush1.msra.mxu0 %v277
        %307 = vmatprep.subr.mxu0 0.0
        %308 = vmatpush1.msra.mxu0 %v278
        %309 = vmatprep.subr.mxu0 0.0
        %310 = vmatpush1.msra.mxu0 %v279
        %311 = vmatprep.subr.mxu0 0.0
        %312 = vmatpush1.msra.mxu0 %v280
        %313 = vmatprep.subr.mxu0 0.0
        %314 = vmatpush1.msra.mxu0 0.0
        %315 = vmatprep.subr.mxu0 0.0
        %316 = vmatpush1.msra.mxu0 0.0
        %317 = vmatprep.subr.mxu0 0.0
        %318 = vmatpush1.msra.mxu0 0.0
        %319 = vmatprep.subr.mxu0 0.0
        %320 = vmatpush1.msra.mxu0 0.0
        %321 = vmatprep.subr.mxu0 0.0
        %322 = vmatpush1.msra.mxu0 0.0
        %323 = vmatprep.subr.mxu0 0.0
        %324 = vmatpush1.msra.mxu0 0.0
        %325 = vmatprep.subr.mxu0 0.0
        %326 = vmatpush1.msra.mxu0 0.0
        %327 = vmatprep.subr.mxu0 0.0
        %328 = vmatpush1.msra.mxu0 0.0
        %329 = vmatprep.subr.mxu0 0.0
        %330 = vmatpush1.msra.mxu0 0.0
        %331 = vmatprep.subr.mxu0 0.0
        %332 = vmatpush1.msra.mxu0 0.0
        %333 = vmatprep.subr.mxu0 0.0
        %334 = vmatpush1.msra.mxu0 0.0
        %335 = vmatprep.subr.mxu0 0.0
        %336 = vmatpush1.msra.mxu0 0.0
        %337 = vmatprep.subr.mxu0 0.0
        %338 = vmatpush1.msra.mxu0 0.0
        %339 = vmatprep.subr.mxu0 0.0
        %340 = vmatpush1.msra.mxu0 0.0
        %341 = vmatprep.subr.mxu0 0.0
        %342 = vmatpush1.msra.mxu0 0.0
        %343 = vmatprep.subr.mxu0 0.0
        %344 = vmatpush1.msra.mxu0 0.0
        %345 = vmatprep.mubr.f32.mxu0 0.0
        %346 = vmatmul.mubr.f32.gmra.mrb[0].mxu0 %v263
        %v347 = vpop.f32.mrb[0].mxu0
        %v348 = vadd.f32 0.0, %v347
        %v349 = vpop.f32.mrb[0].mxu0
        %350 = vmatprep.mubr.f32.mxu0 0.0
        %351 = vmatmul.mubr.f32.gmra.mrb[0].mxu0 %v264
        %v352 = vpop.f32.mrb[0].mxu0
        %v353 = vadd.f32 0.0, %v352
        %v354 = vpop.f32.mrb[0].mxu0
        %355 = vdwg.mxu0
        %356 = vst [vmem:[%s255] sm:$0xff] %v348
        %357 = vst [vmem:[%s255 + $0x8] sm:$0xff] %v353
        %v358 = vld [vmem:[#allocation6] sm:$0xff]
        %v359 = vld [vmem:[#allocation6 + $0x8] sm:$0xff]
        %v360 = vld [vmem:[#allocation6 + $0x10] sm:$0xff]
        %v361 = vld [vmem:[#allocation6 + $0x18] sm:$0xff]
        %v362 = vld [vmem:[#allocation6 + $0x20] sm:$0xff]
        %v363 = vld [vmem:[#allocation6 + $0x28] sm:$0xff]
        %v364 = vld [vmem:[#allocation6 + $0x30] sm:$0xff]
        %v365 = vld [vmem:[#allocation6 + $0x38] sm:$0xff]
        %v366 = vld [vmem:[#allocation6 + $0x40] sm:$0xff]
        %v367 = vld [vmem:[#allocation6 + $0x48] sm:$0xff]
        %v368 = vld [vmem:[#allocation6 + $0x50] sm:$0xff]
        %v369 = vld [vmem:[#allocation6 + $0x58] sm:$0xff]
        %v370 = vld [vmem:[#allocation6 + $0x60] sm:$0xff]
        %v371 = vld [vmem:[#allocation6 + $0x68] sm:$0xff]
        %v372 = vld [vmem:[#allocation6 + $0x70] sm:$0xff]
        %v373 = vld [vmem:[#allocation6 + $0x78] sm:$0xff]
        %374 = vmatprep.subr.mxu0 0.0
        %375 = vmatpush1.msra.mxu0 %v358
        %376 = vmatprep.subr.mxu0 0.0
        %377 = vmatpush1.msra.mxu0 %v359
        %378 = vmatprep.subr.mxu0 0.0
        %379 = vmatpush1.msra.mxu0 %v360
        %380 = vmatprep.subr.mxu0 0.0
        %381 = vmatpush1.msra.mxu0 %v361
        %382 = vmatprep.subr.mxu0 0.0
        %383 = vmatpush1.msra.mxu0 %v362
        %384 = vmatprep.subr.mxu0 0.0
        %385 = vmatpush1.msra.mxu0 %v363
        %386 = vmatprep.subr.mxu0 0.0
        %387 = vmatpush1.msra.mxu0 %v364
        %388 = vmatprep.subr.mxu0 0.0
        %389 = vmatpush1.msra.mxu0 %v365
        %390 = vmatprep.subr.mxu0 0.0
        %391 = vmatpush1.msra.mxu0 %v366
        %392 = vmatprep.subr.mxu0 0.0
        %393 = vmatpush1.msra.mxu0 %v367
        %394 = vmatprep.subr.mxu0 0.0
        %395 = vmatpush1.msra.mxu0 %v368
        %396 = vmatprep.subr.mxu0 0.0
        %397 = vmatpush1.msra.mxu0 %v369
        %398 = vmatprep.subr.mxu0 0.0
        %399 = vmatpush1.msra.mxu0 %v370
        %400 = vmatprep.subr.mxu0 0.0
        %401 = vmatpush1.msra.mxu0 %v371
        %402 = vmatprep.subr.mxu0 0.0
        %403 = vmatpush1.msra.mxu0 %v372
        %404 = vmatprep.subr.mxu0 0.0
        %405 = vmatpush1.msra.mxu0 %v373
        %406 = vmatprep.subr.mxu0 0.0
        %407 = vmatpush1.msra.mxu0 0.0
        %408 = vmatprep.subr.mxu0 0.0
        %409 = vmatpush1.msra.mxu0 0.0
        %410 = vmatprep.subr.mxu0 0.0
        %411 = vmatpush1.msra.mxu0 0.0
        %412 = vmatprep.subr.mxu0 0.0
        %413 = vmatpush1.msra.mxu0 0.0
        %414 = vmatprep.subr.mxu0 0.0
        %415 = vmatpush1.msra.mxu0 0.0
        %416 = vmatprep.subr.mxu0 0.0
        %417 = vmatpush1.msra.mxu0 0.0
        %418 = vmatprep.subr.mxu0 0.0
        %419 = vmatpush1.msra.mxu0 0.0
        %420 = vmatprep.subr.mxu0 0.0
        %421 = vmatpush1.msra.mxu0 0.0
        %422 = vmatprep.subr.mxu0 0.0
        %423 = vmatpush1.msra.mxu0 0.0
        %424 = vmatprep.subr.mxu0 0.0
        %425 = vmatpush1.msra.mxu0 0.0
        %426 = vmatprep.subr.mxu0 0.0
        %427 = vmatpush1.msra.mxu0 0.0
        %428 = vmatprep.subr.mxu0 0.0
        %429 = vmatpush1.msra.mxu0 0.0
        %430 = vmatprep.subr.mxu0 0.0
        %431 = vmatpush1.msra.mxu0 0.0
        %432 = vmatprep.subr.mxu0 0.0
        %433 = vmatpush1.msra.mxu0 0.0
        %434 = vmatprep.subr.mxu0 0.0
        %435 = vmatpush1.msra.mxu0 0.0
        %436 = vmatprep.subr.mxu0 0.0
        %437 = vmatpush1.msra.mxu0 0.0
        %438 = vmatprep.mubr.f32.mxu0 0.0
        %439 = vmatmul.mubr.f32.gmra.mrb[0].mxu0 %v263
        %v440 = vpop.f32.mrb[0].mxu0
        %v441 = vadd.f32 0.0, %v440
        %v442 = vpop.f32.mrb[0].mxu0
        %443 = vmatprep.mubr.f32.mxu0 0.0
        %444 = vmatmul.mubr.f32.gmra.mrb[0].mxu0 %v264
        %v445 = vpop.f32.mrb[0].mxu0
        %v446 = vadd.f32 0.0, %v445
        %v447 = vpop.f32.mrb[0].mxu0
        %448 = vdwg.mxu0
        %449 = vst [vmem:[%s261] sm:$0xff] %v441
        %450 = vst [vmem:[%s261 + $0x8] sm:$0xff] %v446
        %s451 = smul.u32 2, %s20
        %p452 = scmp.lt.s32.totalorder %s451, 3
        %s453 = scalar_select %p452, %s451, 3
        %s454 = smul.addr %s453, 8
        %s455 = scalar_lea.vmem %s3, %s454
        %s456 = smul.u32 2, %s20
        %p457 = scmp.lt.s32.totalorder %s456, 3
        %s458 = scalar_select %p457, %s456, 3
        %s459 = smul.addr %s458, 8
        %s460 = scalar_lea.vmem %s4, %s459
        // Predicated region
        $region45: #{basic_transformer_block.12} parent=31 // pred_check
          %p461 = pneg %p106
        $region46: #{basic_transformer_block.12} parent=31 // pred_check_branch
          %463 = sbr.rel (%p461) target = $region48
        $region47: #{basic_transformer_block.12} parent=31 // pred_region
          %s464 = smul.u32 2, %s20
        $region48: #{basic_transformer_block.12} parent=31 // pred_fallthru
          _
        // Predicated region
        $region49: #{basic_transformer_block.12} parent=31 // pred_check
          %p465 = pneg %p132
        $region50: #{basic_transformer_block.12} parent=31 // pred_check_branch
          %467 = sbr.rel (%p465) target = $region52
        $region51: #{basic_transformer_block.12} parent=31 // pred_region
          %s468 = smul.u32 2, %s20
        $region52: #{basic_transformer_block.12} parent=31 // pred_fallthru
          _
      $region32: #{basic_transformer_block.12} parent=5 // pred_fallthru
        _
      %p469 = scmp.le.s32.totalorder 2, %s15
      // Predicated region
      $region53: #{basic_transformer_block.12} parent=5 // pred_check
        %p470 = pneg %p469
      $region54: #{basic_transformer_block.12} parent=5 // pred_check_branch
        %472 = sbr.rel (%p470) target = $region56
      $region55: #{basic_transformer_block.12} parent=5 // pred_region
        %s473 = ssub.s32 %s15, 2
        // Predicated region
        $region57: #{basic_transformer_block.12} parent=55 // pred_check
          %p474 = pneg %p112
        $region58: #{basic_transformer_block.12} parent=55 // pred_check_branch
          %476 = sbr.rel (%p474) target = $region60
        $region59: #{basic_transformer_block.12} parent=55 // pred_region
          %s477 = smul.u32 2, %s21
          %p478 = scmp.lt.s32.totalorder %s477, 3
          %s479 = scalar_select %p478, %s477, 3
          %s480 = smul.addr %s479, 8
          %s481 = scalar_lea.vmem %s3, %s480
        $region60: #{basic_transformer_block.12} parent=55 // pred_fallthru
          _
        // Predicated region
        $region61: #{basic_transformer_block.12} parent=55 // pred_check
          %p482 = pneg %p138
        $region62: #{basic_transformer_block.12} parent=55 // pred_check_branch
          %484 = sbr.rel (%p482) target = $region64
        $region63: #{basic_transformer_block.12} parent=55 // pred_region
          %s485 = smul.u32 2, %s21
          %p486 = scmp.lt.s32.totalorder %s485, 3
          %s487 = scalar_select %p486, %s485, 3
          %s488 = smul.addr %s487, 8
          %s489 = scalar_lea.vmem %s4, %s488
        $region64: #{basic_transformer_block.12} parent=55 // pred_fallthru
          _
      $region56: #{basic_transformer_block.12} parent=5 // pred_fallthru
        _
    $region6: #{basic_transformer_block.12} parent=1 // loop_footer
      %s19 = sadd.s32 1, %s15
    $region7: #{basic_transformer_block.12} parent=1 // loop_footer_branch
      %14 = sbr.rel target = $region3
    $region8: #{basic_transformer_block.12} parent=1 // loop_exit
      _
    %490 = vsyncpa [#allocation3], 1
    %s491 = scalar_lea.sflag [#allocation3], 1
    %492 = vsyncpa %s491, 1
    %493 = vsyncpa [#allocation5], 1

// kernel: basic_transformer_block.13
$region0: #{basic_transformer_block.13}
  #allocation0 [shape = 'u32[]', space=smem, size = 0x4, offset = 0x4, fixed_abs, tag = 'smem constant byte address 0x4 - core index']
  #allocation1 [shape = 'u32[144,128]{1,0:T(1,128)}', space=vmem, size = 0x12000, scoped, tag = 'internal scratch']
  #allocation2 [shape = 'f32[2,8,1]{2,1,0:T(8,128)}', space=vmem, size = 0x2000, scoped, tag = 'scratch operand']
  #allocation3 [shape = 'f32[2,8,1]{2,1,0:T(8,128)}', space=vmem, size = 0x2000, scoped, tag = 'scratch operand']
  #allocation4 [shape = 'f32[2,8,64]{2,1,0:T(8,128)}', space=vmem, size = 0x2000, scoped, tag = 'scratch operand']
  %s0 = inlined_call_operand.vmem [shape: f32[2,8,128], index: 0, kind: input, shape index: {}]
  %s1 = inlined_call_operand.vmem [shape: f32[2,16,128], index: 1, kind: input, shape index: {}]
  %s2 = inlined_call_operand.vmem [shape: f32[2,16,128], index: 2, kind: input, shape index: {}]
  %s3 = inlined_call_operand.vmem [shape: f32[2,8,128], index: 3, kind: output, shape index: {}]
  %s4 = sld [smem:[#allocation0]]
  $region53: #{basic_transformer_block.13} parent=0
    _
  %s6 = ssub.s32 1, %s4
  %s7 = scalar_select 0, %s6, %s4
  loop: start=0, step=1, limit=6
  $region2: #{basic_transformer_block.13} parent=0 // loop_pre_header
    _
  $region3: #{basic_transformer_block.13} parent=0 // loop_header
    %s9 = sphi 0, %s13
    %p10 = scmp.ge.s32.totalorder %s9, 6
    %s16 = sphi 0, %s35
    %s17 = sphi 0, %s31
    %s18 = sphi 0, %s27
    %s19 = sphi 0, %s16
    %s20 = sphi 0, %s17
    %s21 = sphi 0, %s18
    %s22 = sphi 0, %s19
    %s23 = sphi 0, %s20
    %s24 = sphi 0, %s21
    %s40 = sphi 0, %s42
    %s43 = sphi 0, %s40
    %s44 = sphi 0, %s43
    %s60 = sphi 0, %s44
    %s70 = sphi 0, %s72
    %s73 = sphi 0, %s70
    %s74 = sphi 0, %s73
    %s90 = sphi 0, %s74
    %s100 = sphi 0, %s102
    %s103 = sphi 0, %s100
    %s104 = sphi 0, %s103
    %s120 = sphi 0, %s104
    %s128 = sphi 0, %s130
    %s131 = sphi 0, %s128
    %s132 = sphi 0, %s131
    %s148 = sphi 0, %s132
  $region4: #{basic_transformer_block.13} parent=0 // loop_header_branch
    %12 = sbr.rel (%p10) target = $region8
  $region5: #{basic_transformer_block.13} parent=0 // loop_body
    %s14 = ssub.s32 %s9, 1
    %s15 = ssub.s32 %s9, 2
    %s25 = sadd.s32 1, %s18
    %p26 = scmp.ge.s32.totalorder %s25, 2
    %s27 = scalar_select %p26, 0, %s25
    %s28 = sadd.s32 1, %s17
    %s29 = scalar_select %p26, %s28, %s17
    %p30 = scmp.ge.s32.totalorder %s29, 1
    %s31 = scalar_select %p30, 0, %s29
    %s32 = sadd.s32 1, %s16
    %s33 = scalar_select %p30, %s32, %s16
    %p34 = scmp.ge.s32.totalorder %s33, 2
    %s35 = scalar_select %p34, 0, %s33
    %s36 = ssub.s32 %s16, %s35
    %s37 = ssub.s32 %s17, %s31
    %s38 = sor.u32 %s36, %s37
    %p39 = scmp.eq.s32.totalorder %s38, 0
    %s41 = sadd.s32 %s40, 1
    %s42 = scalar_select %p39, %s40, %s41
    %p45 = pneg %p39
    %p46 = scmp.eq.s32.totalorder %s9, 3
    %p47 = por %p45, %p46
    %p48 = scmp.ne.s32.totalorder %s40, %s43
    %p49 = scmp.eq.s32.totalorder %s9, 0
    %p50 = por %p48, %p49
    %p51 = scmp.ne.s32.totalorder %s40, %s43
    %p52 = scmp.eq.s32.totalorder %s14, 3
    %p53 = por %p51, %p52
    %p54 = scmp.ne.s32.totalorder %s43, %s44
    %p55 = scmp.eq.s32.totalorder %s14, 0
    %p56 = por %p54, %p55
    %p57 = scmp.ne.s32.totalorder %s43, %s44
    %p58 = scmp.eq.s32.totalorder %s15, 3
    %p59 = por %p57, %p58
    %p61 = scmp.ne.s32.totalorder %s44, %s60
    %p62 = scmp.eq.s32.totalorder %s15, 0
    %p63 = por %p61, %p62
    %s64 = ssub.s32 %s16, %s35
    %s65 = ssub.s32 %s18, %s27
    %s66 = sor.u32 %s64, %s65
    %s67 = ssub.s32 %s17, %s31
    %s68 = sor.u32 %s66, %s67
    %p69 = scmp.eq.s32.totalorder %s68, 0
    %s71 = sadd.s32 %s70, 1
    %s72 = scalar_select %p69, %s70, %s71
    %p75 = pneg %p69
    %p76 = scmp.eq.s32.totalorder %s9, 3
    %p77 = por %p75, %p76
    %p78 = scmp.ne.s32.totalorder %s70, %s73
    %p79 = scmp.eq.s32.totalorder %s9, 0
    %p80 = por %p78, %p79
    %p81 = scmp.ne.s32.totalorder %s70, %s73
    %p82 = scmp.eq.s32.totalorder %s14, 3
    %p83 = por %p81, %p82
    %p84 = scmp.ne.s32.totalorder %s73, %s74
    %p85 = scmp.eq.s32.totalorder %s14, 0
    %p86 = por %p84, %p85
    %p87 = scmp.ne.s32.totalorder %s73, %s74
    %p88 = scmp.eq.s32.totalorder %s15, 3
    %p89 = por %p87, %p88
    %p91 = scmp.ne.s32.totalorder %s74, %s90
    %p92 = scmp.eq.s32.totalorder %s15, 0
    %p93 = por %p91, %p92
    %s94 = ssub.s32 %s16, %s35
    %s95 = ssub.s32 %s18, %s27
    %s96 = sor.u32 %s94, %s95
    %s97 = ssub.s32 %s17, %s31
    %s98 = sor.u32 %s96, %s97
    %p99 = scmp.eq.s32.totalorder %s98, 0
    %s101 = sadd.s32 %s100, 1
    %s102 = scalar_select %p99, %s100, %s101
    %p105 = pneg %p99
    %p106 = scmp.eq.s32.totalorder %s9, 3
    %p107 = por %p105, %p106
    %p108 = scmp.ne.s32.totalorder %s100, %s103
    %p109 = scmp.eq.s32.totalorder %s9, 0
    %p110 = por %p108, %p109
    %p111 = scmp.ne.s32.totalorder %s100, %s103
    %p112 = scmp.eq.s32.totalorder %s14, 3
    %p113 = por %p111, %p112
    %p114 = scmp.ne.s32.totalorder %s103, %s104
    %p115 = scmp.eq.s32.totalorder %s14, 0
    %p116 = por %p114, %p115
    %p117 = scmp.ne.s32.totalorder %s103, %s104
    %p118 = scmp.eq.s32.totalorder %s15, 3
    %p119 = por %p117, %p118
    %p121 = scmp.ne.s32.totalorder %s104, %s120
    %p122 = scmp.eq.s32.totalorder %s15, 0
    %p123 = por %p121, %p122
    %s124 = ssub.s32 %s16, %s35
    %s125 = ssub.s32 %s17, %s31
    %s126 = sor.u32 %s124, %s125
    %p127 = scmp.eq.s32.totalorder %s126, 0
    %s129 = sadd.s32 %s128, 1
    %s130 = scalar_select %p127, %s128, %s129
    %p133 = pneg %p127
    %p134 = scmp.eq.s32.totalorder %s9, 3
    %p135 = por %p133, %p134
    %p136 = scmp.ne.s32.totalorder %s128, %s131
    %p137 = scmp.eq.s32.totalorder %s9, 0
    %p138 = por %p136, %p137
    %p139 = scmp.ne.s32.totalorder %s128, %s131
    %p140 = scmp.eq.s32.totalorder %s14, 3
    %p141 = por %p139, %p140
    %p142 = scmp.ne.s32.totalorder %s131, %s132
    %p143 = scmp.eq.s32.totalorder %s14, 0
    %p144 = por %p142, %p143
    %p145 = scmp.ne.s32.totalorder %s131, %s132
    %p146 = scmp.eq.s32.totalorder %s15, 3
    %p147 = por %p145, %p146
    %p149 = scmp.ne.s32.totalorder %s132, %s148
    %p150 = scmp.eq.s32.totalorder %s15, 0
    %p151 = por %p149, %p150
    %p152 = scmp.le.s32.totalorder 1, %s9
    %p153 = scmp.lt.s32.totalorder %s9, 5
    %p154 = pnand %p152, %p153
    %p155 = pneg %p154
    // Predicated region
    $region9: #{basic_transformer_block.13} parent=5 // pred_check
      _
    $region10: #{basic_transformer_block.13} parent=5 // pred_check_branch
      %157 = sbr.rel (%p154) target = $region12
    $region11: #{basic_transformer_block.13} parent=5 // pred_region
      %s158 = ssub.s32 %s9, 1
    $region12: #{basic_transformer_block.13} parent=5 // pred_fallthru
      _
    %p159 = scmp.lt.s32.totalorder %s9, 4
    // Predicated region
    $region13: #{basic_transformer_block.13} parent=5 // pred_check
      %p160 = pneg %p159
    $region14: #{basic_transformer_block.13} parent=5 // pred_check_branch
      %162 = sbr.rel (%p160) target = $region16
    $region15: #{basic_transformer_block.13} parent=5 // pred_region
      // Predicated region
      $region17: #{basic_transformer_block.13} parent=15 // pred_check
        %p163 = pneg %p50
      $region18: #{basic_transformer_block.13} parent=15 // pred_check_branch
        %165 = sbr.rel (%p163) target = $region20
      $region19: #{basic_transformer_block.13} parent=15 // pred_region
        %p166 = scmp.lt.s32.totalorder %s16, 1
        %s167 = scalar_select %p166, %s16, 1
        %p168 = scmp.lt.s32.totalorder %s17, 0
        %s169 = scalar_select %p168, %s17, 0
        %s170 = sadd.s32 %s169, %s167
        %s171 = smul.addr %s170, 8
        %s172 = scalar_lea.vmem %s0, %s171
      $region20: #{basic_transformer_block.13} parent=15 // pred_fallthru
        _
      // Predicated region
      $region21: #{basic_transformer_block.13} parent=15 // pred_check
        %p173 = pneg %p80
      $region22: #{basic_transformer_block.13} parent=15 // pred_check_branch
        %175 = sbr.rel (%p173) target = $region24
      $region23: #{basic_transformer_block.13} parent=15 // pred_region
        %p176 = scmp.lt.s32.totalorder %s16, 1
        %s177 = scalar_select %p176, %s16, 1
        %p178 = scmp.lt.s32.totalorder %s18, 1
        %s179 = scalar_select %p178, %s18, 1
        %p180 = scmp.lt.s32.totalorder %s17, 0
        %s181 = scalar_select %p180, %s17, 0
        %s182 = sadd.s32 %s181, %s179
        %s183 = smul.addr %s177, 2
        %s184 = sadd.s32 %s182, %s183
        %s185 = smul.addr %s184, 8
        %s186 = scalar_lea.vmem %s1, %s185
      $region24: #{basic_transformer_block.13} parent=15 // pred_fallthru
        _
      // Predicated region
      $region25: #{basic_transformer_block.13} parent=15 // pred_check
        %p187 = pneg %p110
      $region26: #{basic_transformer_block.13} parent=15 // pred_check_branch
        %189 = sbr.rel (%p187) target = $region28
      $region27: #{basic_transformer_block.13} parent=15 // pred_region
        %p190 = scmp.lt.s32.totalorder %s16, 1
        %s191 = scalar_select %p190, %s16, 1
        %p192 = scmp.lt.s32.totalorder %s18, 1
        %s193 = scalar_select %p192, %s18, 1
        %p194 = scmp.lt.s32.totalorder %s17, 0
        %s195 = scalar_select %p194, %s17, 0
        %s196 = sadd.s32 %s195, %s193
        %s197 = smul.addr %s191, 2
        %s198 = sadd.s32 %s196, %s197
        %s199 = smul.addr %s198, 8
        %s200 = scalar_lea.vmem %s2, %s199
      $region28: #{basic_transformer_block.13} parent=15 // pred_fallthru
        _
    $region16: #{basic_transformer_block.13} parent=5 // pred_fallthru
      _
    %p201 = scmp.le.s32.totalorder 1, %s9
    %p202 = scmp.lt.s32.totalorder %s9, 5
    %p203 = pnand %p201, %p202
    %p204 = pneg %p203
    // Predicated region
    $region29: #{basic_transformer_block.13} parent=5 // pred_check
      _
    $region30: #{basic_transformer_block.13} parent=5 // pred_check_branch
      %206 = sbr.rel (%p203) target = $region32
    $region31: #{basic_transformer_block.13} parent=5 // pred_region
      %s207 = ssub.s32 %s9, 1
      %p208 = scmp.lt.s32.totalorder %s19, 1
      %s209 = scalar_select %p208, %s19, 1
      %p210 = scmp.lt.s32.totalorder %s20, 0
      %s211 = scalar_select %p210, %s20, 0
      %s212 = sadd.s32 %s211, %s209
      %s213 = smul.addr %s212, 8
      %s214 = scalar_lea.vmem %s0, %s213
      %p215 = pneg %p56
      %p216 = pneg %p53
      %p217 = scmp.lt.s32.totalorder %s19, 1
      %s218 = scalar_select %p217, %s19, 1
      %p219 = scmp.lt.s32.totalorder %s21, 1
      %s220 = scalar_select %p219, %s21, 1
      %p221 = scmp.lt.s32.totalorder %s20, 0
      %s222 = scalar_select %p221, %s20, 0
      %s223 = sadd.s32 %s222, %s220
      %s224 = smul.addr %s218, 2
      %s225 = sadd.s32 %s223, %s224
      %s226 = smul.addr %s225, 8
      %s227 = scalar_lea.vmem %s1, %s226
      %p228 = pneg %p86
      %p229 = pneg %p83
      %p230 = scmp.lt.s32.totalorder %s19, 1
      %s231 = scalar_select %p230, %s19, 1
      %p232 = scmp.lt.s32.totalorder %s21, 1
      %s233 = scalar_select %p232, %s21, 1
      %p234 = scmp.lt.s32.totalorder %s20, 0
      %s235 = scalar_select %p234, %s20, 0
      %s236 = sadd.s32 %s235, %s233
      %s237 = smul.addr %s231, 2
      %s238 = sadd.s32 %s236, %s237
      %s239 = smul.addr %s238, 8
      %s240 = scalar_lea.vmem %s2, %s239
      %p241 = pneg %p116
      %p242 = pneg %p113
      %p243 = pneg %p144
      %p244 = pneg %p141
      %p245 = scmp.lt.s32.totalorder %s19, 1
      %s246 = scalar_select %p245, %s19, 1
      %p247 = scmp.lt.s32.totalorder %s20, 0
      %s248 = scalar_select %p247, %s20, 0
      %s249 = sadd.s32 %s248, %s246
      %s250 = smul.addr %s249, 8
      %s251 = scalar_lea.vmem %s3, %s250
      %p252 = scmp.lt.s32.totalorder %s19, 1
      %s253 = scalar_select %p252, %s19, 1
      %p254 = scmp.lt.s32.totalorder %s20, 0
      %s255 = scalar_select %p254, %s20, 0
      %s256 = sadd.s32 %s255, %s253
      %s257 = smul.addr %s256, 8
      %s258 = scalar_lea.vmem %s0, %s257
      %p259 = scmp.lt.s32.totalorder %s19, 1
      %s260 = scalar_select %p259, %s19, 1
      %p261 = scmp.lt.s32.totalorder %s21, 1
      %s262 = scalar_select %p261, %s21, 1
      %p263 = scmp.lt.s32.totalorder %s20, 0
      %s264 = scalar_select %p263, %s20, 0
      %s265 = sadd.s32 %s264, %s262
      %s266 = smul.addr %s260, 2
      %s267 = sadd.s32 %s265, %s266
      %s268 = smul.addr %s267, 8
      %s269 = scalar_lea.vmem %s1, %s268
      %p270 = scmp.lt.s32.totalorder %s19, 1
      %s271 = scalar_select %p270, %s19, 1
      %p272 = scmp.lt.s32.totalorder %s21, 1
      %s273 = scalar_select %p272, %s21, 1
      %p274 = scmp.lt.s32.totalorder %s20, 0
      %s275 = scalar_select %p274, %s20, 0
      %s276 = sadd.s32 %s275, %s273
      %s277 = smul.addr %s271, 2
      %s278 = sadd.s32 %s276, %s277
      %s279 = smul.addr %s278, 8
      %s280 = scalar_lea.vmem %s2, %s279
      %p281 = scmp.lt.s32.totalorder %s19, 1
      %s282 = scalar_select %p281, %s19, 1
      %p283 = scmp.lt.s32.totalorder %s20, 0
      %s284 = scalar_select %p283, %s20, 0
      %s285 = sadd.s32 %s284, %s282
      %s286 = smul.addr %s285, 8
      %s287 = scalar_lea.vmem %s3, %s286
      %p288 = scmp.eq.s32.totalorder %s21, 0
      // Predicated region
      $region33: #{basic_transformer_block.13} parent=31 // pred_check
        %p289 = pneg %p288
      $region34: #{basic_transformer_block.13} parent=31 // pred_check_branch
        %291 = sbr.rel (%p289) target = $region36
      $region35: #{basic_transformer_block.13} parent=31 // pred_region
        %vm292 = vcmask 7168
        %293 = vst.msk [vmem:[#allocation2] sm:$0xff] %vm292, -inf
        %294 = vst.msk [vmem:[#allocation2 + $0x8] sm:$0xff] %vm292, -inf
        %295 = vst.msk [vmem:[#allocation3] sm:$0xff] %vm292, 0.0
        %296 = vst.msk [vmem:[#allocation3 + $0x8] sm:$0xff] %vm292, 0.0
        %vm297 = vcmask 523264
        %298 = vst.msk [vmem:[#allocation4] sm:$0xff] %vm297, 0.0
        %299 = vst.msk [vmem:[#allocation4 + $0x8] sm:$0xff] %vm297, 0.0
      $region36: #{basic_transformer_block.13} parent=31 // pred_fallthru
        _
      %v300 = vld [vmem:[%s258] sm:$0xff]
      %v301 = vld [vmem:[%s269] sm:$0xff]
      %v302 = vld [vmem:[%s280] sm:$0xff]
      %vm303 = vcmask 523264
      %v305 = vsel %vm303, %v300, 0
      %v308 = vsel %vm303, %v301, 0
      %310 = vmatprep.subr.mxu0 0.0
      %311 = vmatpush1.xpose.msra.mxu0 %v308
      %312 = vmatprep.subr.mxu0 0.0
      %313 = vmatpush1.xpose.msra.mxu0 0.0
      %314 = vmatprep.subr.mxu0 0.0
      %315 = vmatpush1.xpose.msra.mxu0 0.0
      %316 = vmatprep.subr.mxu0 0.0
      %317 = vmatpush1.xpose.msra.mxu0 0.0
      %318 = vmatprep.subr.mxu0 0.0
      %319 = vmatpush1.xpose.msra.mxu0 0.0
      %320 = vmatprep.subr.mxu0 0.0
      %321 = vmatpush1.xpose.msra.mxu0 0.0
      %322 = vmatprep.subr.mxu0 0.0
      %323 = vmatpush1.xpose.msra.mxu0 0.0
      %324 = vmatprep.subr.mxu0 0.0
      %325 = vmatpush1.xpose.msra.mxu0 0.0
      %326 = vmatprep.subr.mxu0 0.0
      %327 = vmatpush1.xpose.msra.mxu0 0.0
      %328 = vmatprep.subr.mxu0 0.0
      %329 = vmatpush1.xpose.msra.mxu0 0.0
      %330 = vmatprep.subr.mxu0 0.0
      %331 = vmatpush1.xpose.msra.mxu0 0.0
      %332 = vmatprep.subr.mxu0 0.0
      %333 = vmatpush1.xpose.msra.mxu0 0.0
      %334 = vmatprep.subr.mxu0 0.0
      %335 = vmatpush1.xpose.msra.mxu0 0.0
      %336 = vmatprep.subr.mxu0 0.0
      %337 = vmatpush1.xpose.msra.mxu0 0.0
      %338 = vmatprep.subr.mxu0 0.0
      %339 = vmatpush1.xpose.msra.mxu0 0.0
      %340 = vmatprep.subr.mxu0 0.0
      %341 = vmatpush1.xpose.msra.mxu0 0.0
      %342 = vmatprep.subr.mxu0 0.0
      %343 = vmatpush1.xpose.msra.mxu0 0.0
      %344 = vmatprep.subr.mxu0 0.0
      %345 = vmatpush1.xpose.msra.mxu0 0.0
      %346 = vmatprep.subr.mxu0 0.0
      %347 = vmatpush1.xpose.msra.mxu0 0.0
      %348 = vmatprep.subr.mxu0 0.0
      %349 = vmatpush1.xpose.msra.mxu0 0.0
      %350 = vmatprep.subr.mxu0 0.0
      %351 = vmatpush1.xpose.msra.mxu0 0.0
      %352 = vmatprep.subr.mxu0 0.0
      %353 = vmatpush1.xpose.msra.mxu0 0.0
      %354 = vmatprep.subr.mxu0 0.0
      %355 = vmatpush1.xpose.msra.mxu0 0.0
      %356 = vmatprep.subr.mxu0 0.0
      %357 = vmatpush1.xpose.msra.mxu0 0.0
      %358 = vmatprep.subr.mxu0 0.0
      %359 = vmatpush1.xpose.msra.mxu0 0.0
      %360 = vmatprep.subr.mxu0 0.0
      %361 = vmatpush1.xpose.msra.mxu0 0.0
      %362 = vmatprep.subr.mxu0 0.0
      %363 = vmatpush1.xpose.msra.mxu0 0.0
      %364 = vmatprep.subr.mxu0 0.0
      %365 = vmatpush1.xpose.msra.mxu0 0.0
      %366 = vmatprep.subr.mxu0 0.0
      %367 = vmatpush1.xpose.msra.mxu0 0.0
      %368 = vmatprep.subr.mxu0 0.0
      %369 = vmatpush1.xpose.msra.mxu0 0.0
      %370 = vmatprep.subr.mxu0 0.0
      %371 = vmatpush1.xpose.msra.mxu0 0.0
      %372 = vmatprep.subr.mxu0 0.0
      %373 = vmatpush1.xpose.msra.mxu0 0.0
      %374 = vmatprep.mubr.f32.mxu0 0.0
      %375 = vmatmul.mubr.f32.gmra.mrb[0].mxu0 %v305
      %v376 = vpop.f32.mrb[0].mxu0
      %v377 = vadd.f32 0.0, %v376
      %v378 = vpop.f32.mrb[0].mxu0
      %379 = vdwg.mxu0
      %v380 = vmul.f32 %v377, 0.125
      %v381 = vld [vmem:[#allocation2] sm:$0xff]
      %vm382 = vcmask 64512
      %v383 = vsel %vm382, %v380, -inf
      %384 = vmax.xlane.f32.xlu0 %v383
      %v385 = vpop.xlane.xlu0 %384
      %v386 = vmax.f32 %v381, %v385
      %v387 = vsub.f32 %v381, %v386
      %v388 = vmul.f32 %v387, 1.442695
      %v389 = vpow.pop %v388
      %391 = vset.pattern.permute.xlu0 0
      %392 = vperm.xlu0 %391, %v386
      %v393 = vpop.permute.xlu0 %392
      %v395 = vsub.f32 %v380, %v393
      %v396 = vmul.f32 %v395, 1.442695
      %v397 = vpow.pop %v396
      %v398 = vld [vmem:[#allocation3] sm:$0xff]
      %v399 = vmul.f32 %v389, %v398
      %v400 = vsel %vm382, %v397, 0.0
      %401 = vadd.xlane.f32.xlu0 %v400
      %v402 = vpop.xlane.xlu0 %401
      %v403 = vadd.f32 %v399, %v402
      %vm404 = vcmask 7168
      %405 = vst.msk [vmem:[#allocation3] sm:$0xff] %vm404, %v403
      %v406 = vld [vmem:[#allocation4] sm:$0xff]
      %408 = vset.pattern.permute.xlu0 0
      %409 = vperm.xlu0 %408, %v389
      %v410 = vpop.permute.xlu0 %409
      %v412 = vmul.f32 %v410, %v406
      %v414 = vsel %vm382, %v397, 0
      %416 = vmatprep.subr.mxu0 0.0
      %417 = vmatpush1.msra.mxu0 %v302
      %418 = vmatprep.subr.mxu0 0.0
      %419 = vmatpush1.msra.mxu0 0.0
      %420 = vmatprep.subr.mxu0 0.0
      %421 = vmatpush1.msra.mxu0 0.0
      %422 = vmatprep.subr.mxu0 0.0
      %423 = vmatpush1.msra.mxu0 0.0
      %424 = vmatprep.subr.mxu0 0.0
      %425 = vmatpush1.msra.mxu0 0.0
      %426 = vmatprep.subr.mxu0 0.0
      %427 = vmatpush1.msra.mxu0 0.0
      %428 = vmatprep.subr.mxu0 0.0
      %429 = vmatpush1.msra.mxu0 0.0
      %430 = vmatprep.subr.mxu0 0.0
      %431 = vmatpush1.msra.mxu0 0.0
      %432 = vmatprep.subr.mxu0 0.0
      %433 = vmatpush1.msra.mxu0 0.0
      %434 = vmatprep.subr.mxu0 0.0
      %435 = vmatpush1.msra.mxu0 0.0
      %436 = vmatprep.subr.mxu0 0.0
      %437 = vmatpush1.msra.mxu0 0.0
      %438 = vmatprep.subr.mxu0 0.0
      %439 = vmatpush1.msra.mxu0 0.0
      %440 = vmatprep.subr.mxu0 0.0
      %441 = vmatpush1.msra.mxu0 0.0
      %442 = vmatprep.subr.mxu0 0.0
      %443 = vmatpush1.msra.mxu0 0.0
      %444 = vmatprep.subr.mxu0 0.0
      %445 = vmatpush1.msra.mxu0 0.0
      %446 = vmatprep.subr.mxu0 0.0
      %447 = vmatpush1.msra.mxu0 0.0
      %448 = vmatprep.subr.mxu0 0.0
      %449 = vmatpush1.msra.mxu0 0.0
      %450 = vmatprep.subr.mxu0 0.0
      %451 = vmatpush1.msra.mxu0 0.0
      %452 = vmatprep.subr.mxu0 0.0
      %453 = vmatpush1.msra.mxu0 0.0
      %454 = vmatprep.subr.mxu0 0.0
      %455 = vmatpush1.msra.mxu0 0.0
      %456 = vmatprep.subr.mxu0 0.0
      %457 = vmatpush1.msra.mxu0 0.0
      %458 = vmatprep.subr.mxu0 0.0
      %459 = vmatpush1.msra.mxu0 0.0
      %460 = vmatprep.subr.mxu0 0.0
      %461 = vmatpush1.msra.mxu0 0.0
      %462 = vmatprep.subr.mxu0 0.0
      %463 = vmatpush1.msra.mxu0 0.0
      %464 = vmatprep.subr.mxu0 0.0
      %465 = vmatpush1.msra.mxu0 0.0
      %466 = vmatprep.subr.mxu0 0.0
      %467 = vmatpush1.msra.mxu0 0.0
      %468 = vmatprep.subr.mxu0 0.0
      %469 = vmatpush1.msra.mxu0 0.0
      %470 = vmatprep.subr.mxu0 0.0
      %471 = vmatpush1.msra.mxu0 0.0
      %472 = vmatprep.subr.mxu0 0.0
      %473 = vmatpush1.msra.mxu0 0.0
      %474 = vmatprep.subr.mxu0 0.0
      %475 = vmatpush1.msra.mxu0 0.0
      %476 = vmatprep.subr.mxu0 0.0
      %477 = vmatpush1.msra.mxu0 0.0
      %478 = vmatprep.subr.mxu0 0.0
      %479 = vmatpush1.msra.mxu0 0.0
      %480 = vmatprep.mubr.f32.mxu0 0.0
      %481 = vmatmul.mubr.f32.gmra.mrb[0].mxu0 %v414
      %v482 = vpop.f32.mrb[0].mxu0
      %v483 = vadd.f32 0.0, %v482
      %v484 = vpop.f32.mrb[0].mxu0
      %485 = vdwg.mxu0
      %v486 = vadd.f32 %v412, %v483
      %487 = vst.msk [vmem:[#allocation4] sm:$0xff] %vm303, %v486
      %488 = vst.msk [vmem:[#allocation2] sm:$0xff] %vm404, %v386
      %v489 = vld [vmem:[%s258] sm:$0xff]
      %v490 = vld [vmem:[%s269] sm:$0xff]
      %v491 = vld [vmem:[%s280] sm:$0xff]
      %493 = vrot.lane.b32.xlu0 %v489, 64
      %v494 = vpop.permute.xlu0 %493
      %496 = vrot.lane.b32.xlu0 %v490, 64
      %v497 = vpop.permute.xlu0 %496
      %v498 = vsel %vm303, %v494, 0
      %v500 = vsel %vm303, %v497, 0
      %502 = vmatprep.subr.mxu0 0.0
      %503 = vmatpush1.xpose.msra.mxu0 %v500
      %504 = vmatprep.subr.mxu0 0.0
      %505 = vmatpush1.xpose.msra.mxu0 0.0
      %506 = vmatprep.subr.mxu0 0.0
      %507 = vmatpush1.xpose.msra.mxu0 0.0
      %508 = vmatprep.subr.mxu0 0.0
      %509 = vmatpush1.xpose.msra.mxu0 0.0
      %510 = vmatprep.subr.mxu0 0.0
      %511 = vmatpush1.xpose.msra.mxu0 0.0
      %512 = vmatprep.subr.mxu0 0.0
      %513 = vmatpush1.xpose.msra.mxu0 0.0
      %514 = vmatprep.subr.mxu0 0.0
      %515 = vmatpush1.xpose.msra.mxu0 0.0
      %516 = vmatprep.subr.mxu0 0.0
      %517 = vmatpush1.xpose.msra.mxu0 0.0
      %518 = vmatprep.subr.mxu0 0.0
      %519 = vmatpush1.xpose.msra.mxu0 0.0
      %520 = vmatprep.subr.mxu0 0.0
      %521 = vmatpush1.xpose.msra.mxu0 0.0
      %522 = vmatprep.subr.mxu0 0.0
      %523 = vmatpush1.xpose.msra.mxu0 0.0
      %524 = vmatprep.subr.mxu0 0.0
      %525 = vmatpush1.xpose.msra.mxu0 0.0
      %526 = vmatprep.subr.mxu0 0.0
      %527 = vmatpush1.xpose.msra.mxu0 0.0
      %528 = vmatprep.subr.mxu0 0.0
      %529 = vmatpush1.xpose.msra.mxu0 0.0
      %530 = vmatprep.subr.mxu0 0.0
      %531 = vmatpush1.xpose.msra.mxu0 0.0
      %532 = vmatprep.subr.mxu0 0.0
      %533 = vmatpush1.xpose.msra.mxu0 0.0
      %534 = vmatprep.subr.mxu0 0.0
      %535 = vmatpush1.xpose.msra.mxu0 0.0
      %536 = vmatprep.subr.mxu0 0.0
      %537 = vmatpush1.xpose.msra.mxu0 0.0
      %538 = vmatprep.subr.mxu0 0.0
      %539 = vmatpush1.xpose.msra.mxu0 0.0
      %540 = vmatprep.subr.mxu0 0.0
      %541 = vmatpush1.xpose.msra.mxu0 0.0
      %542 = vmatprep.subr.mxu0 0.0
      %543 = vmatpush1.xpose.msra.mxu0 0.0
      %544 = vmatprep.subr.mxu0 0.0
      %545 = vmatpush1.xpose.msra.mxu0 0.0
      %546 = vmatprep.subr.mxu0 0.0
      %547 = vmatpush1.xpose.msra.mxu0 0.0
      %548 = vmatprep.subr.mxu0 0.0
      %549 = vmatpush1.xpose.msra.mxu0 0.0
      %550 = vmatprep.subr.mxu0 0.0
      %551 = vmatpush1.xpose.msra.mxu0 0.0
      %552 = vmatprep.subr.mxu0 0.0
      %553 = vmatpush1.xpose.msra.mxu0 0.0
      %554 = vmatprep.subr.mxu0 0.0
      %555 = vmatpush1.xpose.msra.mxu0 0.0
      %556 = vmatprep.subr.mxu0 0.0
      %557 = vmatpush1.xpose.msra.mxu0 0.0
      %558 = vmatprep.subr.mxu0 0.0
      %559 = vmatpush1.xpose.msra.mxu0 0.0
      %560 = vmatprep.subr.mxu0 0.0
      %561 = vmatpush1.xpose.msra.mxu0 0.0
      %562 = vmatprep.subr.mxu0 0.0
      %563 = vmatpush1.xpose.msra.mxu0 0.0
      %564 = vmatprep.subr.mxu0 0.0
      %565 = vmatpush1.xpose.msra.mxu0 0.0
      %566 = vmatprep.mubr.f32.mxu0 0.0
      %567 = vmatmul.mubr.f32.gmra.mrb[0].mxu0 %v498
      %v568 = vpop.f32.mrb[0].mxu0
      %v569 = vadd.f32 0.0, %v568
      %v570 = vpop.f32.mrb[0].mxu0
      %571 = vdwg.mxu0
      %v572 = vmul.f32 %v569, 0.125
      %s573 = scalar_lea.vmem [#allocation2], 8
      %v574 = vld [vmem:[%s573] sm:$0xff]
      %v575 = vsel %vm382, %v572, -inf
      %576 = vmax.xlane.f32.xlu0 %v575
      %v577 = vpop.xlane.xlu0 %576
      %v578 = vmax.f32 %v574, %v577
      %v579 = vsub.f32 %v574, %v578
      %v580 = vmul.f32 %v579, 1.442695
      %v581 = vpow.pop %v580
      %583 = vset.pattern.permute.xlu0 0
      %584 = vperm.xlu0 %583, %v578
      %v585 = vpop.permute.xlu0 %584
      %v587 = vsub.f32 %v572, %v585
      %v588 = vmul.f32 %v587, 1.442695
      %v589 = vpow.pop %v588
      %s590 = scalar_lea.vmem [#allocation3], 8
      %v591 = vld [vmem:[%s590] sm:$0xff]
      %v592 = vmul.f32 %v581, %v591
      %v593 = vsel %vm382, %v589, 0.0
      %594 = vadd.xlane.f32.xlu0 %v593
      %v595 = vpop.xlane.xlu0 %594
      %v596 = vadd.f32 %v592, %v595
      %597 = vst.msk [vmem:[%s590] sm:$0xff] %vm404, %v596
      %s598 = scalar_lea.vmem [#allocation4], 8
      %v599 = vld [vmem:[%s598] sm:$0xff]
      %601 = vset.pattern.permute.xlu0 0
      %602 = vperm.xlu0 %601, %v581
      %v603 = vpop.permute.xlu0 %602
      %v605 = vmul.f32 %v603, %v599
      %607 = vrot.lane.b32.xlu0 %v491, 64
      %v608 = vpop.permute.xlu0 %607
      %v611 = vsel %vm382, %v589, 0
      %613 = vmatprep.subr.mxu0 0.0
      %614 = vmatpush1.msra.mxu0 %v608
      %615 = vmatprep.subr.mxu0 0.0
      %616 = vmatpush1.msra.mxu0 0.0
      %617 = vmatprep.subr.mxu0 0.0
      %618 = vmatpush1.msra.mxu0 0.0
      %619 = vmatprep.subr.mxu0 0.0
      %620 = vmatpush1.msra.mxu0 0.0
      %621 = vmatprep.subr.mxu0 0.0
      %622 = vmatpush1.msra.mxu0 0.0
      %623 = vmatprep.subr.mxu0 0.0
      %624 = vmatpush1.msra.mxu0 0.0
      %625 = vmatprep.subr.mxu0 0.0
      %626 = vmatpush1.msra.mxu0 0.0
      %627 = vmatprep.subr.mxu0 0.0
      %628 = vmatpush1.msra.mxu0 0.0
      %629 = vmatprep.subr.mxu0 0.0
      %630 = vmatpush1.msra.mxu0 0.0
      %631 = vmatprep.subr.mxu0 0.0
      %632 = vmatpush1.msra.mxu0 0.0
      %633 = vmatprep.subr.mxu0 0.0
      %634 = vmatpush1.msra.mxu0 0.0
      %635 = vmatprep.subr.mxu0 0.0
      %636 = vmatpush1.msra.mxu0 0.0
      %637 = vmatprep.subr.mxu0 0.0
      %638 = vmatpush1.msra.mxu0 0.0
      %639 = vmatprep.subr.mxu0 0.0
      %640 = vmatpush1.msra.mxu0 0.0
      %641 = vmatprep.subr.mxu0 0.0
      %642 = vmatpush1.msra.mxu0 0.0
      %643 = vmatprep.subr.mxu0 0.0
      %644 = vmatpush1.msra.mxu0 0.0
      %645 = vmatprep.subr.mxu0 0.0
      %646 = vmatpush1.msra.mxu0 0.0
      %647 = vmatprep.subr.mxu0 0.0
      %648 = vmatpush1.msra.mxu0 0.0
      %649 = vmatprep.subr.mxu0 0.0
      %650 = vmatpush1.msra.mxu0 0.0
      %651 = vmatprep.subr.mxu0 0.0
      %652 = vmatpush1.msra.mxu0 0.0
      %653 = vmatprep.subr.mxu0 0.0
      %654 = vmatpush1.msra.mxu0 0.0
      %655 = vmatprep.subr.mxu0 0.0
      %656 = vmatpush1.msra.mxu0 0.0
      %657 = vmatprep.subr.mxu0 0.0
      %658 = vmatpush1.msra.mxu0 0.0
      %659 = vmatprep.subr.mxu0 0.0
      %660 = vmatpush1.msra.mxu0 0.0
      %661 = vmatprep.subr.mxu0 0.0
      %662 = vmatpush1.msra.mxu0 0.0
      %663 = vmatprep.subr.mxu0 0.0
      %664 = vmatpush1.msra.mxu0 0.0
      %665 = vmatprep.subr.mxu0 0.0
      %666 = vmatpush1.msra.mxu0 0.0
      %667 = vmatprep.subr.mxu0 0.0
      %668 = vmatpush1.msra.mxu0 0.0
      %669 = vmatprep.subr.mxu0 0.0
      %670 = vmatpush1.msra.mxu0 0.0
      %671 = vmatprep.subr.mxu0 0.0
      %672 = vmatpush1.msra.mxu0 0.0
      %673 = vmatprep.subr.mxu0 0.0
      %674 = vmatpush1.msra.mxu0 0.0
      %675 = vmatprep.subr.mxu0 0.0
      %676 = vmatpush1.msra.mxu0 0.0
      %677 = vmatprep.mubr.f32.mxu0 0.0
      %678 = vmatmul.mubr.f32.gmra.mrb[0].mxu0 %v611
      %v679 = vpop.f32.mrb[0].mxu0
      %v680 = vadd.f32 0.0, %v679
      %v681 = vpop.f32.mrb[0].mxu0
      %682 = vdwg.mxu0
      %v683 = vadd.f32 %v605, %v680
      %684 = vst.msk [vmem:[%s598] sm:$0xff] %vm303, %v683
      %685 = vst.msk [vmem:[%s573] sm:$0xff] %vm404, %v578
      %p686 = scmp.eq.s32.totalorder %s21, 1
      // Predicated region
      $region37: #{basic_transformer_block.13} parent=31 // pred_check
        %p687 = pneg %p686
      $region38: #{basic_transformer_block.13} parent=31 // pred_check_branch
        %689 = sbr.rel (%p687) target = $region40
      $region39: #{basic_transformer_block.13} parent=31 // pred_region
        %v690 = vld [vmem:[#allocation4] sm:$0xff]
        %v691 = vld [vmem:[#allocation3] sm:$0xff]
        %v692 = vrcp.pop %v691
        %694 = vset.pattern.permute.xlu0 0
        %695 = vperm.xlu0 %694, %v692
        %v696 = vpop.permute.xlu0 %695
        %v698 = vmul.f32 %v690, %v696
        %v699 = vld [vmem:[%s598] sm:$0xff]
        %v700 = vld [vmem:[%s590] sm:$0xff]
        %v701 = vrcp.pop %v700
        %703 = vset.pattern.permute.xlu0 0
        %704 = vperm.xlu0 %703, %v701
        %v705 = vpop.permute.xlu0 %704
        %v707 = vmul.f32 %v699, %v705
        %709 = vrot.lane.b32.xlu0 %v707, 64
        %v710 = vpop.permute.xlu0 %709
        %v712 = vsel %vm303, %v698, %v710
        %713 = vst [vmem:[%s287] sm:$0xff] %v712
      $region40: #{basic_transformer_block.13} parent=31 // pred_fallthru
        _
      %p714 = scmp.lt.s32.totalorder %s19, 1
      %s715 = scalar_select %p714, %s19, 1
      %p716 = scmp.lt.s32.totalorder %s20, 0
      %s717 = scalar_select %p716, %s20, 0
      %s718 = sadd.s32 %s717, %s715
      %s719 = smul.addr %s718, 8
      %s720 = scalar_lea.vmem %s3, %s719
      // Predicated region
      $region41: #{basic_transformer_block.13} parent=31 // pred_check
        %p721 = pneg %p141
      $region42: #{basic_transformer_block.13} parent=31 // pred_check_branch
        %723 = sbr.rel (%p721) target = $region44
      $region43: #{basic_transformer_block.13} parent=31 // pred_region
        _
      $region44: #{basic_transformer_block.13} parent=31 // pred_fallthru
        _
    $region32: #{basic_transformer_block.13} parent=5 // pred_fallthru
      _
    %p724 = scmp.le.s32.totalorder 2, %s9
    // Predicated region
    $region45: #{basic_transformer_block.13} parent=5 // pred_check
      %p725 = pneg %p724
    $region46: #{basic_transformer_block.13} parent=5 // pred_check_branch
      %727 = sbr.rel (%p725) target = $region48
    $region47: #{basic_transformer_block.13} parent=5 // pred_region
      %s728 = ssub.s32 %s9, 2
      // Predicated region
      $region49: #{basic_transformer_block.13} parent=47 // pred_check
        %p729 = pneg %p147
      $region50: #{basic_transformer_block.13} parent=47 // pred_check_branch
        %731 = sbr.rel (%p729) target = $region52
      $region51: #{basic_transformer_block.13} parent=47 // pred_region
        %p732 = scmp.lt.s32.totalorder %s22, 1
        %s733 = scalar_select %p732, %s22, 1
        %p734 = scmp.lt.s32.totalorder %s23, 0
        %s735 = scalar_select %p734, %s23, 0
        %s736 = sadd.s32 %s735, %s733
        %s737 = smul.addr %s736, 8
        %s738 = scalar_lea.vmem %s3, %s737
      $region52: #{basic_transformer_block.13} parent=47 // pred_fallthru
        _
    $region48: #{basic_transformer_block.13} parent=5 // pred_fallthru
      _
  $region6: #{basic_transformer_block.13} parent=0 // loop_footer
    %s13 = sadd.s32 1, %s9
  $region7: #{basic_transformer_block.13} parent=0 // loop_footer_branch
    %8 = sbr.rel target = $region3
  $region8: #{basic_transformer_block.13} parent=0 // loop_exit
    _

// kernel: basic_transformer_block.15
$region0: #{basic_transformer_block.15}
  #allocation0 [shape = 'u32[]', space=smem, size = 0x4, offset = 0x4, fixed_abs, tag = 'smem constant byte address 0x4 - core index']
  #allocation1 [shape = 'u32[144,128]{1,0:T(1,128)}', space=vmem, size = 0x12000, scoped, tag = 'internal scratch']
  %s0 = inlined_call_operand.vmem [shape: f32[16,128], index: 0, kind: input, shape index: {}]
  %s1 = inlined_call_operand.vmem [shape: f32[1,128], index: 1, kind: input, shape index: {}]
  %s2 = inlined_call_operand.vmem [shape: f32[1,128], index: 2, kind: input, shape index: {}]
  %s3 = inlined_call_operand.vmem [shape: f32[128,1024], index: 3, kind: input, shape index: {}]
  %s4 = inlined_call_operand.vmem [shape: f32[1,1024], index: 4, kind: input, shape index: {}]
  %s5 = inlined_call_operand.hbm [shape: f32[512,128], index: 5, kind: input, shape index: {}]
  %s6 = inlined_call_operand.vmem [shape: f32[1,128], index: 6, kind: input, shape index: {}]
  %s7 = inlined_call_operand.hbm [shape: f32[16,128], index: 7, kind: output, shape index: {}]
  %s8 = sld [smem:[#allocation0]]
  $region65: #{basic_transformer_block.15} parent=0
    _
  %s10 = ssub.s32 1, %s8
  %s11 = scalar_select 0, %s10, %s8
  $region1: #{basic_transformer_block.15} parent=0
    #allocation2 [shape = 'u8[262144]{0}', space=vmem, size = 0x40000, scoped, tag = 'input window, operand 5, single buffered']
    #allocation3 [shape = 's32[2]{0}', space=sflag, size = 0x8, scoped, tag = 'scoped memory for basic_transformer_block.15']
    #allocation4 [shape = 's32[2]{0}', space=sflag, size = 0x8, scoped, tag = 'scoped memory for basic_transformer_block.15']
    #allocation5 [shape = 'u8[8192]{0}', space=vmem, size = 0x2000, scoped, tag = 'output window, operand 0']
    %12 = vsyncpa [#allocation3], 0
    %13 = vsyncpa [#allocation4], 0
    %s14 = scalar_lea.sflag [#allocation4], 1
    %15 = vsyncpa %s14, 0
    loop: start=0, step=1, limit=4
    $region2: #{basic_transformer_block.15} parent=1 // loop_pre_header
      _
    $region3: #{basic_transformer_block.15} parent=1 // loop_header
      %s17 = sphi 0, %s21
      %p18 = scmp.ge.s32.totalorder %s17, 4
      %s27 = sphi 0, %s29
      %s30 = sphi 0, %s27
      %s31 = sphi 0, %s30
      %s47 = sphi 0, %s31
      %s51 = sphi 0, %s51
      %s53 = sphi 0, %s51
      %s54 = sphi 0, %s53
      %s68 = sphi 0, %s54
      %s72 = sphi 0, %s72
      %s74 = sphi 0, %s72
      %s75 = sphi 0, %s74
      %s89 = sphi 0, %s75
      %s93 = sphi 0, %s93
      %s95 = sphi 0, %s93
      %s96 = sphi 0, %s95
      %s110 = sphi 0, %s96
      %s114 = sphi 0, %s114
      %s116 = sphi 0, %s114
      %s117 = sphi 0, %s116
      %s131 = sphi 0, %s117
      %s135 = sphi 0, %s135
      %s137 = sphi 0, %s135
      %s138 = sphi 0, %s137
      %s152 = sphi 0, %s138
      %s156 = sphi 0, %s156
      %s158 = sphi 0, %s156
      %s159 = sphi 0, %s158
      %s173 = sphi 0, %s159
      %s179 = sphi 0, %s181
      %s182 = sphi 0, %s179
      %s183 = sphi 0, %s182
      %s199 = sphi 0, %s183
    $region4: #{basic_transformer_block.15} parent=1 // loop_header_branch
      %20 = sbr.rel (%p18) target = $region8
    $region5: #{basic_transformer_block.15} parent=1 // loop_body
      %s22 = ssub.s32 %s17, 1
      %s23 = ssub.s32 %s17, 2
      %s24 = sadd.s32 %s17, 1
      %s25 = ssub.s32 %s17, %s24
      %p26 = scmp.eq.s32.totalorder %s25, 0
      %s28 = sadd.s32 %s27, 1
      %s29 = scalar_select %p26, %s27, %s28
      %p32 = pneg %p26
      %p33 = scmp.eq.s32.totalorder %s17, 1
      %p34 = por %p32, %p33
      %p35 = scmp.ne.s32.totalorder %s27, %s30
      %p36 = scmp.eq.s32.totalorder %s17, 0
      %p37 = por %p35, %p36
      %p38 = scmp.ne.s32.totalorder %s27, %s30
      %p39 = scmp.eq.s32.totalorder %s22, 1
      %p40 = por %p38, %p39
      %p41 = scmp.ne.s32.totalorder %s30, %s31
      %p42 = scmp.eq.s32.totalorder %s22, 0
      %p43 = por %p41, %p42
      %p44 = scmp.ne.s32.totalorder %s30, %s31
      %p45 = scmp.eq.s32.totalorder %s23, 1
      %p46 = por %p44, %p45
      %p48 = scmp.ne.s32.totalorder %s31, %s47
      %p49 = scmp.eq.s32.totalorder %s23, 0
      %p50 = por %p48, %p49
      %s52 = sadd.s32 %s51, 1
      %p55 = scmp.eq.s32.totalorder %s17, 1
      %p56 = scmp.ne.s32.totalorder %s51, %s53
      %p57 = scmp.eq.s32.totalorder %s17, 0
      %p58 = por %p56, %p57
      %p59 = scmp.ne.s32.totalorder %s51, %s53
      %p60 = scmp.eq.s32.totalorder %s22, 1
      %p61 = por %p59, %p60
      %p62 = scmp.ne.s32.totalorder %s53, %s54
      %p63 = scmp.eq.s32.totalorder %s22, 0
      %p64 = por %p62, %p63
      %p65 = scmp.ne.s32.totalorder %s53, %s54
      %p66 = scmp.eq.s32.totalorder %s23, 1
      %p67 = por %p65, %p66
      %p69 = scmp.ne.s32.totalorder %s54, %s68
      %p70 = scmp.eq.s32.totalorder %s23, 0
      %p71 = por %p69, %p70
      %s73 = sadd.s32 %s72, 1
      %p76 = scmp.eq.s32.totalorder %s17, 1
      %p77 = scmp.ne.s32.totalorder %s72, %s74
      %p78 = scmp.eq.s32.totalorder %s17, 0
      %p79 = por %p77, %p78
      %p80 = scmp.ne.s32.totalorder %s72, %s74
      %p81 = scmp.eq.s32.totalorder %s22, 1
      %p82 = por %p80, %p81
      %p83 = scmp.ne.s32.totalorder %s74, %s75
      %p84 = scmp.eq.s32.totalorder %s22, 0
      %p85 = por %p83, %p84
      %p86 = scmp.ne.s32.totalorder %s74, %s75
      %p87 = scmp.eq.s32.totalorder %s23, 1
      %p88 = por %p86, %p87
      %p90 = scmp.ne.s32.totalorder %s75, %s89
      %p91 = scmp.eq.s32.totalorder %s23, 0
      %p92 = por %p90, %p91
      %s94 = sadd.s32 %s93, 1
      %p97 = scmp.eq.s32.totalorder %s17, 1
      %p98 = scmp.ne.s32.totalorder %s93, %s95
      %p99 = scmp.eq.s32.totalorder %s17, 0
      %p100 = por %p98, %p99
      %p101 = scmp.ne.s32.totalorder %s93, %s95
      %p102 = scmp.eq.s32.totalorder %s22, 1
      %p103 = por %p101, %p102
      %p104 = scmp.ne.s32.totalorder %s95, %s96
      %p105 = scmp.eq.s32.totalorder %s22, 0
      %p106 = por %p104, %p105
      %p107 = scmp.ne.s32.totalorder %s95, %s96
      %p108 = scmp.eq.s32.totalorder %s23, 1
      %p109 = por %p107, %p108
      %p111 = scmp.ne.s32.totalorder %s96, %s110
      %p112 = scmp.eq.s32.totalorder %s23, 0
      %p113 = por %p111, %p112
      %s115 = sadd.s32 %s114, 1
      %p118 = scmp.eq.s32.totalorder %s17, 1
      %p119 = scmp.ne.s32.totalorder %s114, %s116
      %p120 = scmp.eq.s32.totalorder %s17, 0
      %p121 = por %p119, %p120
      %p122 = scmp.ne.s32.totalorder %s114, %s116
      %p123 = scmp.eq.s32.totalorder %s22, 1
      %p124 = por %p122, %p123
      %p125 = scmp.ne.s32.totalorder %s116, %s117
      %p126 = scmp.eq.s32.totalorder %s22, 0
      %p127 = por %p125, %p126
      %p128 = scmp.ne.s32.totalorder %s116, %s117
      %p129 = scmp.eq.s32.totalorder %s23, 1
      %p130 = por %p128, %p129
      %p132 = scmp.ne.s32.totalorder %s117, %s131
      %p133 = scmp.eq.s32.totalorder %s23, 0
      %p134 = por %p132, %p133
      %s136 = sadd.s32 %s135, 1
      %p139 = scmp.eq.s32.totalorder %s17, 1
      %p140 = scmp.ne.s32.totalorder %s135, %s137
      %p141 = scmp.eq.s32.totalorder %s17, 0
      %p142 = por %p140, %p141
      %p143 = scmp.ne.s32.totalorder %s135, %s137
      %p144 = scmp.eq.s32.totalorder %s22, 1
      %p145 = por %p143, %p144
      %p146 = scmp.ne.s32.totalorder %s137, %s138
      %p147 = scmp.eq.s32.totalorder %s22, 0
      %p148 = por %p146, %p147
      %p149 = scmp.ne.s32.totalorder %s137, %s138
      %p150 = scmp.eq.s32.totalorder %s23, 1
      %p151 = por %p149, %p150
      %p153 = scmp.ne.s32.totalorder %s138, %s152
      %p154 = scmp.eq.s32.totalorder %s23, 0
      %p155 = por %p153, %p154
      %s157 = sadd.s32 %s156, 1
      %p160 = scmp.eq.s32.totalorder %s17, 1
      %p161 = scmp.ne.s32.totalorder %s156, %s158
      %p162 = scmp.eq.s32.totalorder %s17, 0
      %p163 = por %p161, %p162
      %p164 = scmp.ne.s32.totalorder %s156, %s158
      %p165 = scmp.eq.s32.totalorder %s22, 1
      %p166 = por %p164, %p165
      %p167 = scmp.ne.s32.totalorder %s158, %s159
      %p168 = scmp.eq.s32.totalorder %s22, 0
      %p169 = por %p167, %p168
      %p170 = scmp.ne.s32.totalorder %s158, %s159
      %p171 = scmp.eq.s32.totalorder %s23, 1
      %p172 = por %p170, %p171
      %p174 = scmp.ne.s32.totalorder %s159, %s173
      %p175 = scmp.eq.s32.totalorder %s23, 0
      %p176 = por %p174, %p175
      %s177 = ssub.s32 %s17, %s24
      %p178 = scmp.eq.s32.totalorder %s177, 0
      %s180 = sadd.s32 %s179, 1
      %s181 = scalar_select %p178, %s179, %s180
      %p184 = pneg %p178
      %p185 = scmp.eq.s32.totalorder %s17, 1
      %p186 = por %p184, %p185
      %p187 = scmp.ne.s32.totalorder %s179, %s182
      %p188 = scmp.eq.s32.totalorder %s17, 0
      %p189 = por %p187, %p188
      %p190 = scmp.ne.s32.totalorder %s179, %s182
      %p191 = scmp.eq.s32.totalorder %s22, 1
      %p192 = por %p190, %p191
      %p193 = scmp.ne.s32.totalorder %s182, %s183
      %p194 = scmp.eq.s32.totalorder %s22, 0
      %p195 = por %p193, %p194
      %p196 = scmp.ne.s32.totalorder %s182, %s183
      %p197 = scmp.eq.s32.totalorder %s23, 1
      %p198 = por %p196, %p197
      %p200 = scmp.ne.s32.totalorder %s183, %s199
      %p201 = scmp.eq.s32.totalorder %s23, 0
      %p202 = por %p200, %p201
      %p203 = scmp.le.s32.totalorder 1, %s17
      %p204 = scmp.lt.s32.totalorder %s17, 3
      %p205 = pnand %p203, %p204
      %p206 = pneg %p205
      // Predicated region
      $region9: #{basic_transformer_block.15} parent=5 // pred_check
        _
      $region10: #{basic_transformer_block.15} parent=5 // pred_check_branch
        %208 = sbr.rel (%p205) target = $region12
      $region11: #{basic_transformer_block.15} parent=5 // pred_region
        %s209 = ssub.s32 %s17, 1
        // Predicated region
        $region13: #{basic_transformer_block.15} parent=11 // pred_check
          %p210 = pneg %p64
        $region14: #{basic_transformer_block.15} parent=11 // pred_check_branch
          %212 = sbr.rel (%p210) target = $region16
        $region15: #{basic_transformer_block.15} parent=11 // pred_region
          _
        $region16: #{basic_transformer_block.15} parent=11 // pred_fallthru
          _
        // Predicated region
        $region17: #{basic_transformer_block.15} parent=11 // pred_check
          %p213 = pneg %p85
        $region18: #{basic_transformer_block.15} parent=11 // pred_check_branch
          %215 = sbr.rel (%p213) target = $region20
        $region19: #{basic_transformer_block.15} parent=11 // pred_region
          _
        $region20: #{basic_transformer_block.15} parent=11 // pred_fallthru
          _
        // Predicated region
        $region21: #{basic_transformer_block.15} parent=11 // pred_check
          %p216 = pneg %p106
        $region22: #{basic_transformer_block.15} parent=11 // pred_check_branch
          %218 = sbr.rel (%p216) target = $region24
        $region23: #{basic_transformer_block.15} parent=11 // pred_region
          _
        $region24: #{basic_transformer_block.15} parent=11 // pred_fallthru
          _
        // Predicated region
        $region25: #{basic_transformer_block.15} parent=11 // pred_check
          %p219 = pneg %p127
        $region26: #{basic_transformer_block.15} parent=11 // pred_check_branch
          %221 = sbr.rel (%p219) target = $region28
        $region27: #{basic_transformer_block.15} parent=11 // pred_region
          _
        $region28: #{basic_transformer_block.15} parent=11 // pred_fallthru
          _
        // Predicated region
        $region29: #{basic_transformer_block.15} parent=11 // pred_check
          %p222 = pneg %p148
        $region30: #{basic_transformer_block.15} parent=11 // pred_check_branch
          %224 = sbr.rel (%p222) target = $region32
        $region31: #{basic_transformer_block.15} parent=11 // pred_region
          %s226 = ssub.s32 8192, 8192
          %227 = vsyncadd [#allocation3], %s226
          %s228 = sshll.u32 [#allocation2], 4
          %s229 = int_to_ptr.vmem [resolvable:$true] %s228
          %234 = dma.hbm_to_vmem [thread:$0]  %s5, 8192, %s229, [#allocation3], 128, 128, 8
        $region32: #{basic_transformer_block.15} parent=11 // pred_fallthru
          _
        // Predicated region
        $region33: #{basic_transformer_block.15} parent=11 // pred_check
          %p235 = pneg %p169
        $region34: #{basic_transformer_block.15} parent=11 // pred_check_branch
          %237 = sbr.rel (%p235) target = $region36
        $region35: #{basic_transformer_block.15} parent=11 // pred_region
          _
        $region36: #{basic_transformer_block.15} parent=11 // pred_fallthru
          _
      $region12: #{basic_transformer_block.15} parent=5 // pred_fallthru
        _
      %p238 = scmp.lt.s32.totalorder %s17, 2
      // Predicated region
      $region37: #{basic_transformer_block.15} parent=5 // pred_check
        %p239 = pneg %p238
      $region38: #{basic_transformer_block.15} parent=5 // pred_check_branch
        %241 = sbr.rel (%p239) target = $region40
      $region39: #{basic_transformer_block.15} parent=5 // pred_region
        // Predicated region
        $region41: #{basic_transformer_block.15} parent=39 // pred_check
          %p242 = pneg %p37
        $region42: #{basic_transformer_block.15} parent=39 // pred_check_branch
          %244 = sbr.rel (%p242) target = $region44
        $region43: #{basic_transformer_block.15} parent=39 // pred_region
          %p245 = scmp.lt.s32.totalorder %s17, 1
          %s246 = scalar_select %p245, %s17, 1
          %s247 = smul.addr %s246, 8
          %s248 = scalar_lea.vmem %s0, %s247
        $region44: #{basic_transformer_block.15} parent=39 // pred_fallthru
          _
      $region40: #{basic_transformer_block.15} parent=5 // pred_fallthru
        _
      %p249 = scmp.le.s32.totalorder 1, %s17
      %p250 = scmp.lt.s32.totalorder %s17, 3
      %p251 = pnand %p249, %p250
      %p252 = pneg %p251
      // Predicated region
      $region45: #{basic_transformer_block.15} parent=5 // pred_check
        _
      $region46: #{basic_transformer_block.15} parent=5 // pred_check_branch
        %254 = sbr.rel (%p251) target = $region48
      $region47: #{basic_transformer_block.15} parent=5 // pred_region
        %s255 = ssub.s32 %s17, 1
        // Predicated region
        $region49: #{basic_transformer_block.15} parent=47 // pred_check
          %p256 = pneg %p148
        $region50: #{basic_transformer_block.15} parent=47 // pred_check_branch
          %258 = sbr.rel (%p256) target = $region52
        $region51: #{basic_transformer_block.15} parent=47 // pred_region
          %259 = dma.done [#allocation3], 8192
        $region52: #{basic_transformer_block.15} parent=47 // pred_fallthru
          _
        %p260 = scmp.lt.s32.totalorder %s22, 1
        %s261 = scalar_select %p260, %s22, 1
        %s262 = smul.addr %s261, 8
        %s263 = scalar_lea.vmem %s0, %s262
        %p264 = pneg %p43
        %p265 = pneg %p40
        %p266 = pneg %p64
        %p267 = pneg %p61
        %p268 = pneg %p85
        %p269 = pneg %p82
        %p270 = pneg %p106
        %p271 = pneg %p103
        %p272 = pneg %p127
        %p273 = pneg %p124
        %p274 = pneg %p148
        %p275 = pneg %p145
        %p276 = pneg %p169
        %p277 = pneg %p166
        %p278 = pneg %p195
        %p279 = pneg %p192
        %s280 = sand.u32 %s182, 1
        %s281 = scalar_lea.sflag [#allocation4], %s280
        %s282 = sand.u32 %s182, 1
        %s283 = smul.addr %s282, 8
        %s284 = scalar_lea.vmem [#allocation5], %s283
        %p285 = scmp.lt.s32.totalorder %s22, 1
        %s286 = scalar_select %p285, %s22, 1
        %s287 = smul.addr %s286, 8
        %s288 = scalar_lea.vmem %s0, %s287
        %v289 = vld [vmem:[%s288] sm:$0xff]
        %290 = vadd.xlane.f32.xlu0 %v289
        %v291 = vpop.xlane.xlu0 %290
        %v292 = vrcp.pop 128.0
        %v293 = vmul.f32 %v291, %v292
        %v294 = vsub.f32 %v289, %v293
        %v295 = vmul.f32 %v294, %v294
        %296 = vadd.xlane.f32.xlu0 %v295
        %v297 = vpop.xlane.xlu0 %296
        %v298 = vmul.f32 %v297, %v292
        %v299 = vadd.f32 %v298, 1e-05
        %v300 = vrsqrt.pop %v299
        %v301 = vmul.f32 %v294, %v300
        %v302 = vld [vmem:[%s1] sm:$0x1]
        %v304 = vlaneseq
        %v305 = vshrl.u32 %v304, 7
        %v306 = vsub.s32 0, %v305
        %v307 = vrot.slane %v302, %v306
        %v309 = vmul.f32 %v301, %v307
        %v310 = vld [vmem:[%s2] sm:$0x1]
        %v312 = vlaneseq
        %v313 = vshrl.u32 %v312, 7
        %v314 = vsub.s32 0, %v313
        %v315 = vrot.slane %v310, %v314
        %v317 = vadd.f32 %v309, %v315
        %v318 = vld [vmem:[%s3] sm:$0xff]
        %v319 = vld [vmem:[%s3 + $0x8] sm:$0xff]
        %v320 = vld [vmem:[%s3 + $0x10] sm:$0xff]
        %v321 = vld [vmem:[%s3 + $0x18] sm:$0xff]
        %v322 = vld [vmem:[%s3 + $0x20] sm:$0xff]
        %v323 = vld [vmem:[%s3 + $0x28] sm:$0xff]
        %v324 = vld [vmem:[%s3 + $0x30] sm:$0xff]
        %v325 = vld [vmem:[%s3 + $0x38] sm:$0xff]
        %v326 = vld [vmem:[%s3 + $0x40] sm:$0xff]
        %v327 = vld [vmem:[%s3 + $0x48] sm:$0xff]
        %v328 = vld [vmem:[%s3 + $0x50] sm:$0xff]
        %v329 = vld [vmem:[%s3 + $0x58] sm:$0xff]
        %v330 = vld [vmem:[%s3 + $0x60] sm:$0xff]
        %v331 = vld [vmem:[%s3 + $0x68] sm:$0xff]
        %v332 = vld [vmem:[%s3 + $0x70] sm:$0xff]
        %v333 = vld [vmem:[%s3 + $0x78] sm:$0xff]
        %v334 = vld [vmem:[%s3 + $0x80] sm:$0xff]
        %v335 = vld [vmem:[%s3 + $0x88] sm:$0xff]
        %v336 = vld [vmem:[%s3 + $0x90] sm:$0xff]
        %v337 = vld [vmem:[%s3 + $0x98] sm:$0xff]
        %v338 = vld [vmem:[%s3 + $0xa0] sm:$0xff]
        %v339 = vld [vmem:[%s3 + $0xa8] sm:$0xff]
        %v340 = vld [vmem:[%s3 + $0xb0] sm:$0xff]
        %v341 = vld [vmem:[%s3 + $0xb8] sm:$0xff]
        %v342 = vld [vmem:[%s3 + $0xc0] sm:$0xff]
        %v343 = vld [vmem:[%s3 + $0xc8] sm:$0xff]
        %v344 = vld [vmem:[%s3 + $0xd0] sm:$0xff]
        %v345 = vld [vmem:[%s3 + $0xd8] sm:$0xff]
        %v346 = vld [vmem:[%s3 + $0xe0] sm:$0xff]
        %v347 = vld [vmem:[%s3 + $0xe8] sm:$0xff]
        %v348 = vld [vmem:[%s3 + $0xf0] sm:$0xff]
        %v349 = vld [vmem:[%s3 + $0xf8] sm:$0xff]
        %v350 = vld [vmem:[%s3 + $0x100] sm:$0xff]
        %v351 = vld [vmem:[%s3 + $0x108] sm:$0xff]
        %v352 = vld [vmem:[%s3 + $0x110] sm:$0xff]
        %v353 = vld [vmem:[%s3 + $0x118] sm:$0xff]
        %v354 = vld [vmem:[%s3 + $0x120] sm:$0xff]
        %v355 = vld [vmem:[%s3 + $0x128] sm:$0xff]
        %v356 = vld [vmem:[%s3 + $0x130] sm:$0xff]
        %v357 = vld [vmem:[%s3 + $0x138] sm:$0xff]
        %v358 = vld [vmem:[%s3 + $0x140] sm:$0xff]
        %v359 = vld [vmem:[%s3 + $0x148] sm:$0xff]
        %v360 = vld [vmem:[%s3 + $0x150] sm:$0xff]
        %v361 = vld [vmem:[%s3 + $0x158] sm:$0xff]
        %v362 = vld [vmem:[%s3 + $0x160] sm:$0xff]
        %v363 = vld [vmem:[%s3 + $0x168] sm:$0xff]
        %v364 = vld [vmem:[%s3 + $0x170] sm:$0xff]
        %v365 = vld [vmem:[%s3 + $0x178] sm:$0xff]
        %v366 = vld [vmem:[%s3 + $0x180] sm:$0xff]
        %v367 = vld [vmem:[%s3 + $0x188] sm:$0xff]
        %v368 = vld [vmem:[%s3 + $0x190] sm:$0xff]
        %v369 = vld [vmem:[%s3 + $0x198] sm:$0xff]
        %v370 = vld [vmem:[%s3 + $0x1a0] sm:$0xff]
        %v371 = vld [vmem:[%s3 + $0x1a8] sm:$0xff]
        %v372 = vld [vmem:[%s3 + $0x1b0] sm:$0xff]
        %v373 = vld [vmem:[%s3 + $0x1b8] sm:$0xff]
        %v374 = vld [vmem:[%s3 + $0x1c0] sm:$0xff]
        %v375 = vld [vmem:[%s3 + $0x1c8] sm:$0xff]
        %v376 = vld [vmem:[%s3 + $0x1d0] sm:$0xff]
        %v377 = vld [vmem:[%s3 + $0x1d8] sm:$0xff]
        %v378 = vld [vmem:[%s3 + $0x1e0] sm:$0xff]
        %v379 = vld [vmem:[%s3 + $0x1e8] sm:$0xff]
        %v380 = vld [vmem:[%s3 + $0x1f0] sm:$0xff]
        %v381 = vld [vmem:[%s3 + $0x1f8] sm:$0xff]
        %v382 = vld [vmem:[%s3 + $0x200] sm:$0xff]
        %v383 = vld [vmem:[%s3 + $0x208] sm:$0xff]
        %v384 = vld [vmem:[%s3 + $0x210] sm:$0xff]
        %v385 = vld [vmem:[%s3 + $0x218] sm:$0xff]
        %v386 = vld [vmem:[%s3 + $0x220] sm:$0xff]
        %v387 = vld [vmem:[%s3 + $0x228] sm:$0xff]
        %v388 = vld [vmem:[%s3 + $0x230] sm:$0xff]
        %v389 = vld [vmem:[%s3 + $0x238] sm:$0xff]
        %v390 = vld [vmem:[%s3 + $0x240] sm:$0xff]
        %v391 = vld [vmem:[%s3 + $0x248] sm:$0xff]
        %v392 = vld [vmem:[%s3 + $0x250] sm:$0xff]
        %v393 = vld [vmem:[%s3 + $0x258] sm:$0xff]
        %v394 = vld [vmem:[%s3 + $0x260] sm:$0xff]
        %v395 = vld [vmem:[%s3 + $0x268] sm:$0xff]
        %v396 = vld [vmem:[%s3 + $0x270] sm:$0xff]
        %v397 = vld [vmem:[%s3 + $0x278] sm:$0xff]
        %v398 = vld [vmem:[%s3 + $0x280] sm:$0xff]
        %v399 = vld [vmem:[%s3 + $0x288] sm:$0xff]
        %v400 = vld [vmem:[%s3 + $0x290] sm:$0xff]
        %v401 = vld [vmem:[%s3 + $0x298] sm:$0xff]
        %v402 = vld [vmem:[%s3 + $0x2a0] sm:$0xff]
        %v403 = vld [vmem:[%s3 + $0x2a8] sm:$0xff]
        %v404 = vld [vmem:[%s3 + $0x2b0] sm:$0xff]
        %v405 = vld [vmem:[%s3 + $0x2b8] sm:$0xff]
        %v406 = vld [vmem:[%s3 + $0x2c0] sm:$0xff]
        %v407 = vld [vmem:[%s3 + $0x2c8] sm:$0xff]
        %v408 = vld [vmem:[%s3 + $0x2d0] sm:$0xff]
        %v409 = vld [vmem:[%s3 + $0x2d8] sm:$0xff]
        %v410 = vld [vmem:[%s3 + $0x2e0] sm:$0xff]
        %v411 = vld [vmem:[%s3 + $0x2e8] sm:$0xff]
        %v412 = vld [vmem:[%s3 + $0x2f0] sm:$0xff]
        %v413 = vld [vmem:[%s3 + $0x2f8] sm:$0xff]
        %v414 = vld [vmem:[%s3 + $0x300] sm:$0xff]
        %v415 = vld [vmem:[%s3 + $0x308] sm:$0xff]
        %v416 = vld [vmem:[%s3 + $0x310] sm:$0xff]
        %v417 = vld [vmem:[%s3 + $0x318] sm:$0xff]
        %v418 = vld [vmem:[%s3 + $0x320] sm:$0xff]
        %v419 = vld [vmem:[%s3 + $0x328] sm:$0xff]
        %v420 = vld [vmem:[%s3 + $0x330] sm:$0xff]
        %v421 = vld [vmem:[%s3 + $0x338] sm:$0xff]
        %v422 = vld [vmem:[%s3 + $0x340] sm:$0xff]
        %v423 = vld [vmem:[%s3 + $0x348] sm:$0xff]
        %v424 = vld [vmem:[%s3 + $0x350] sm:$0xff]
        %v425 = vld [vmem:[%s3 + $0x358] sm:$0xff]
        %v426 = vld [vmem:[%s3 + $0x360] sm:$0xff]
        %v427 = vld [vmem:[%s3 + $0x368] sm:$0xff]
        %v428 = vld [vmem:[%s3 + $0x370] sm:$0xff]
        %v429 = vld [vmem:[%s3 + $0x378] sm:$0xff]
        %v430 = vld [vmem:[%s3 + $0x380] sm:$0xff]
        %v431 = vld [vmem:[%s3 + $0x388] sm:$0xff]
        %v432 = vld [vmem:[%s3 + $0x390] sm:$0xff]
        %v433 = vld [vmem:[%s3 + $0x398] sm:$0xff]
        %v434 = vld [vmem:[%s3 + $0x3a0] sm:$0xff]
        %v435 = vld [vmem:[%s3 + $0x3a8] sm:$0xff]
        %v436 = vld [vmem:[%s3 + $0x3b0] sm:$0xff]
        %v437 = vld [vmem:[%s3 + $0x3b8] sm:$0xff]
        %v438 = vld [vmem:[%s3 + $0x3c0] sm:$0xff]
        %v439 = vld [vmem:[%s3 + $0x3c8] sm:$0xff]
        %v440 = vld [vmem:[%s3 + $0x3d0] sm:$0xff]
        %v441 = vld [vmem:[%s3 + $0x3d8] sm:$0xff]
        %v442 = vld [vmem:[%s3 + $0x3e0] sm:$0xff]
        %v443 = vld [vmem:[%s3 + $0x3e8] sm:$0xff]
        %v444 = vld [vmem:[%s3 + $0x3f0] sm:$0xff]
        %v445 = vld [vmem:[%s3 + $0x3f8] sm:$0xff]
        %v446 = vld [vmem:[%s4] sm:$0xff]
        %v448 = vlaneseq
        %v449 = vshrl.u32 %v448, 7
        %v450 = vsub.s32 0, %v449
        %v451 = vrot.slane %v446, %v450
        %v452 = vlaneseq
        %v453 = vshrl.u32 %v452, 7
        %v454 = vsub.s32 1, %v453
        %v455 = vrot.slane %v446, %v454
        %v456 = vlaneseq
        %v457 = vshrl.u32 %v456, 7
        %v458 = vsub.s32 2, %v457
        %v459 = vrot.slane %v446, %v458
        %v460 = vlaneseq
        %v461 = vshrl.u32 %v460, 7
        %v462 = vsub.s32 3, %v461
        %v463 = vrot.slane %v446, %v462
        %v464 = vlaneseq
        %v465 = vshrl.u32 %v464, 7
        %v466 = vsub.s32 4, %v465
        %v467 = vrot.slane %v446, %v466
        %v468 = vlaneseq
        %v469 = vshrl.u32 %v468, 7
        %v470 = vsub.s32 5, %v469
        %v471 = vrot.slane %v446, %v470
        %v472 = vlaneseq
        %v473 = vshrl.u32 %v472, 7
        %v474 = vsub.s32 6, %v473
        %v475 = vrot.slane %v446, %v474
        %v476 = vlaneseq
        %v477 = vshrl.u32 %v476, 7
        %v478 = vsub.s32 7, %v477
        %v479 = vrot.slane %v446, %v478
        %488 = vmatprep.subr.mxu0 %v319
        %489 = vmatpush1.msra.mxu0 %v318
        %490 = vmatprep.subr.mxu0 %v327
        %491 = vmatpush1.msra.mxu0 %v326
        %492 = vmatprep.subr.mxu0 %v335
        %493 = vmatpush1.msra.mxu0 %v334
        %494 = vmatprep.subr.mxu0 %v343
        %495 = vmatpush1.msra.mxu0 %v342
        %496 = vmatprep.subr.mxu0 %v351
        %497 = vmatpush1.msra.mxu0 %v350
        %498 = vmatprep.subr.mxu0 %v359
        %499 = vmatpush1.msra.mxu0 %v358
        %500 = vmatprep.subr.mxu0 %v367
        %501 = vmatpush1.msra.mxu0 %v366
        %502 = vmatprep.subr.mxu0 %v375
        %503 = vmatpush1.msra.mxu0 %v374
        %504 = vmatprep.subr.mxu0 %v383
        %505 = vmatpush1.msra.mxu0 %v382
        %506 = vmatprep.subr.mxu0 %v391
        %507 = vmatpush1.msra.mxu0 %v390
        %508 = vmatprep.subr.mxu0 %v399
        %509 = vmatpush1.msra.mxu0 %v398
        %510 = vmatprep.subr.mxu0 %v407
        %511 = vmatpush1.msra.mxu0 %v406
        %512 = vmatprep.subr.mxu0 %v415
        %513 = vmatpush1.msra.mxu0 %v414
        %514 = vmatprep.subr.mxu0 %v423
        %515 = vmatpush1.msra.mxu0 %v422
        %516 = vmatprep.subr.mxu0 %v431
        %517 = vmatpush1.msra.mxu0 %v430
        %518 = vmatprep.subr.mxu0 %v439
        %519 = vmatpush1.msra.mxu0 %v438
        %520 = vmatprep.subr.mxu0 0.0
        %521 = vmatpush1.msra.mxu0 0.0
        %522 = vmatprep.subr.mxu0 0.0
        %523 = vmatpush1.msra.mxu0 0.0
        %524 = vmatprep.subr.mxu0 0.0
        %525 = vmatpush1.msra.mxu0 0.0
        %526 = vmatprep.subr.mxu0 0.0
        %527 = vmatpush1.msra.mxu0 0.0
        %528 = vmatprep.subr.mxu0 0.0
        %529 = vmatpush1.msra.mxu0 0.0
        %530 = vmatprep.subr.mxu0 0.0
        %531 = vmatpush1.msra.mxu0 0.0
        %532 = vmatprep.subr.mxu0 0.0
        %533 = vmatpush1.msra.mxu0 0.0
        %534 = vmatprep.subr.mxu0 0.0
        %535 = vmatpush1.msra.mxu0 0.0
        %536 = vmatprep.subr.mxu0 0.0
        %537 = vmatpush1.msra.mxu0 0.0
        %538 = vmatprep.subr.mxu0 0.0
        %539 = vmatpush1.msra.mxu0 0.0
        %540 = vmatprep.subr.mxu0 0.0
        %541 = vmatpush1.msra.mxu0 0.0
        %542 = vmatprep.subr.mxu0 0.0
        %543 = vmatpush1.msra.mxu0 0.0
        %544 = vmatprep.subr.mxu0 0.0
        %545 = vmatpush1.msra.mxu0 0.0
        %546 = vmatprep.subr.mxu0 0.0
        %547 = vmatpush1.msra.mxu0 0.0
        %548 = vmatprep.subr.mxu0 0.0
        %549 = vmatpush1.msra.mxu0 0.0
        %550 = vmatprep.subr.mxu0 0.0
        %551 = vmatpush1.msra.mxu0 0.0
        %552 = vmatprep.mubr.f32.mxu0 0.0
        %553 = vmatmul.mubr.f32.gmra.mrb[0].mxu0 %v317
        %v554 = vpop.f32.mrb[0].mxu0
        %v555 = vadd.f32 %v451, %v554
        %v556 = vpop.f32.mrb[0].mxu0
        %v557 = vadd.f32 %v455, %v556
        %558 = vdwg.mxu0
        %559 = vmatprep.subr.mxu0 %v321
        %560 = vmatpush1.msra.mxu0 %v320
        %561 = vmatprep.subr.mxu0 %v329
        %562 = vmatpush1.msra.mxu0 %v328
        %563 = vmatprep.subr.mxu0 %v337
        %564 = vmatpush1.msra.mxu0 %v336
        %565 = vmatprep.subr.mxu0 %v345
        %566 = vmatpush1.msra.mxu0 %v344
        %567 = vmatprep.subr.mxu0 %v353
        %568 = vmatpush1.msra.mxu0 %v352
        %569 = vmatprep.subr.mxu0 %v361
        %570 = vmatpush1.msra.mxu0 %v360
        %571 = vmatprep.subr.mxu0 %v369
        %572 = vmatpush1.msra.mxu0 %v368
        %573 = vmatprep.subr.mxu0 %v377
        %574 = vmatpush1.msra.mxu0 %v376
        %575 = vmatprep.subr.mxu0 %v385
        %576 = vmatpush1.msra.mxu0 %v384
        %577 = vmatprep.subr.mxu0 %v393
        %578 = vmatpush1.msra.mxu0 %v392
        %579 = vmatprep.subr.mxu0 %v401
        %580 = vmatpush1.msra.mxu0 %v400
        %581 = vmatprep.subr.mxu0 %v409
        %582 = vmatpush1.msra.mxu0 %v408
        %583 = vmatprep.subr.mxu0 %v417
        %584 = vmatpush1.msra.mxu0 %v416
        %585 = vmatprep.subr.mxu0 %v425
        %586 = vmatpush1.msra.mxu0 %v424
        %587 = vmatprep.subr.mxu0 %v433
        %588 = vmatpush1.msra.mxu0 %v432
        %589 = vmatprep.subr.mxu0 %v441
        %590 = vmatpush1.msra.mxu0 %v440
        %591 = vmatprep.subr.mxu0 0.0
        %592 = vmatpush1.msra.mxu0 0.0
        %593 = vmatprep.subr.mxu0 0.0
        %594 = vmatpush1.msra.mxu0 0.0
        %595 = vmatprep.subr.mxu0 0.0
        %596 = vmatpush1.msra.mxu0 0.0
        %597 = vmatprep.subr.mxu0 0.0
        %598 = vmatpush1.msra.mxu0 0.0
        %599 = vmatprep.subr.mxu0 0.0
        %600 = vmatpush1.msra.mxu0 0.0
        %601 = vmatprep.subr.mxu0 0.0
        %602 = vmatpush1.msra.mxu0 0.0
        %603 = vmatprep.subr.mxu0 0.0
        %604 = vmatpush1.msra.mxu0 0.0
        %605 = vmatprep.subr.mxu0 0.0
        %606 = vmatpush1.msra.mxu0 0.0
        %607 = vmatprep.subr.mxu0 0.0
        %608 = vmatpush1.msra.mxu0 0.0
        %609 = vmatprep.subr.mxu0 0.0
        %610 = vmatpush1.msra.mxu0 0.0
        %611 = vmatprep.subr.mxu0 0.0
        %612 = vmatpush1.msra.mxu0 0.0
        %613 = vmatprep.subr.mxu0 0.0
        %614 = vmatpush1.msra.mxu0 0.0
        %615 = vmatprep.subr.mxu0 0.0
        %616 = vmatpush1.msra.mxu0 0.0
        %617 = vmatprep.subr.mxu0 0.0
        %618 = vmatpush1.msra.mxu0 0.0
        %619 = vmatprep.subr.mxu0 0.0
        %620 = vmatpush1.msra.mxu0 0.0
        %621 = vmatprep.subr.mxu0 0.0
        %622 = vmatpush1.msra.mxu0 0.0
        %623 = vmatprep.mubr.f32.mxu0 0.0
        %624 = vmatmul.mubr.f32.gmra.mrb[0].mxu0 %v317
        %v625 = vpop.f32.mrb[0].mxu0
        %v626 = vadd.f32 %v459, %v625
        %v627 = vpop.f32.mrb[0].mxu0
        %v628 = vadd.f32 %v463, %v627
        %629 = vdwg.mxu0
        %630 = vmatprep.subr.mxu0 %v323
        %631 = vmatpush1.msra.mxu0 %v322
        %632 = vmatprep.subr.mxu0 %v331
        %633 = vmatpush1.msra.mxu0 %v330
        %634 = vmatprep.subr.mxu0 %v339
        %635 = vmatpush1.msra.mxu0 %v338
        %636 = vmatprep.subr.mxu0 %v347
        %637 = vmatpush1.msra.mxu0 %v346
        %638 = vmatprep.subr.mxu0 %v355
        %639 = vmatpush1.msra.mxu0 %v354
        %640 = vmatprep.subr.mxu0 %v363
        %641 = vmatpush1.msra.mxu0 %v362
        %642 = vmatprep.subr.mxu0 %v371
        %643 = vmatpush1.msra.mxu0 %v370
        %644 = vmatprep.subr.mxu0 %v379
        %645 = vmatpush1.msra.mxu0 %v378
        %646 = vmatprep.subr.mxu0 %v387
        %647 = vmatpush1.msra.mxu0 %v386
        %648 = vmatprep.subr.mxu0 %v395
        %649 = vmatpush1.msra.mxu0 %v394
        %650 = vmatprep.subr.mxu0 %v403
        %651 = vmatpush1.msra.mxu0 %v402
        %652 = vmatprep.subr.mxu0 %v411
        %653 = vmatpush1.msra.mxu0 %v410
        %654 = vmatprep.subr.mxu0 %v419
        %655 = vmatpush1.msra.mxu0 %v418
        %656 = vmatprep.subr.mxu0 %v427
        %657 = vmatpush1.msra.mxu0 %v426
        %658 = vmatprep.subr.mxu0 %v435
        %659 = vmatpush1.msra.mxu0 %v434
        %660 = vmatprep.subr.mxu0 %v443
        %661 = vmatpush1.msra.mxu0 %v442
        %662 = vmatprep.subr.mxu0 0.0
        %663 = vmatpush1.msra.mxu0 0.0
        %664 = vmatprep.subr.mxu0 0.0
        %665 = vmatpush1.msra.mxu0 0.0
        %666 = vmatprep.subr.mxu0 0.0
        %667 = vmatpush1.msra.mxu0 0.0
        %668 = vmatprep.subr.mxu0 0.0
        %669 = vmatpush1.msra.mxu0 0.0
        %670 = vmatprep.subr.mxu0 0.0
        %671 = vmatpush1.msra.mxu0 0.0
        %672 = vmatprep.subr.mxu0 0.0
        %673 = vmatpush1.msra.mxu0 0.0
        %674 = vmatprep.subr.mxu0 0.0
        %675 = vmatpush1.msra.mxu0 0.0
        %676 = vmatprep.subr.mxu0 0.0
        %677 = vmatpush1.msra.mxu0 0.0
        %678 = vmatprep.subr.mxu0 0.0
        %679 = vmatpush1.msra.mxu0 0.0
        %680 = vmatprep.subr.mxu0 0.0
        %681 = vmatpush1.msra.mxu0 0.0
        %682 = vmatprep.subr.mxu0 0.0
        %683 = vmatpush1.msra.mxu0 0.0
        %684 = vmatprep.subr.mxu0 0.0
        %685 = vmatpush1.msra.mxu0 0.0
        %686 = vmatprep.subr.mxu0 0.0
        %687 = vmatpush1.msra.mxu0 0.0
        %688 = vmatprep.subr.mxu0 0.0
        %689 = vmatpush1.msra.mxu0 0.0
        %690 = vmatprep.subr.mxu0 0.0
        %691 = vmatpush1.msra.mxu0 0.0
        %692 = vmatprep.subr.mxu0 0.0
        %693 = vmatpush1.msra.mxu0 0.0
        %694 = vmatprep.mubr.f32.mxu0 0.0
        %695 = vmatmul.mubr.f32.gmra.mrb[0].mxu0 %v317
        %v696 = vpop.f32.mrb[0].mxu0
        %v697 = vadd.f32 %v467, %v696
        %v698 = vpop.f32.mrb[0].mxu0
        %v699 = vadd.f32 %v471, %v698
        %700 = vdwg.mxu0
        %701 = vmatprep.subr.mxu0 %v325
        %702 = vmatpush1.msra.mxu0 %v324
        %703 = vmatprep.subr.mxu0 %v333
        %704 = vmatpush1.msra.mxu0 %v332
        %705 = vmatprep.subr.mxu0 %v341
        %706 = vmatpush1.msra.mxu0 %v340
        %707 = vmatprep.subr.mxu0 %v349
        %708 = vmatpush1.msra.mxu0 %v348
        %709 = vmatprep.subr.mxu0 %v357
        %710 = vmatpush1.msra.mxu0 %v356
        %711 = vmatprep.subr.mxu0 %v365
        %712 = vmatpush1.msra.mxu0 %v364
        %713 = vmatprep.subr.mxu0 %v373
        %714 = vmatpush1.msra.mxu0 %v372
        %715 = vmatprep.subr.mxu0 %v381
        %716 = vmatpush1.msra.mxu0 %v380
        %717 = vmatprep.subr.mxu0 %v389
        %718 = vmatpush1.msra.mxu0 %v388
        %719 = vmatprep.subr.mxu0 %v397
        %720 = vmatpush1.msra.mxu0 %v396
        %721 = vmatprep.subr.mxu0 %v405
        %722 = vmatpush1.msra.mxu0 %v404
        %723 = vmatprep.subr.mxu0 %v413
        %724 = vmatpush1.msra.mxu0 %v412
        %725 = vmatprep.subr.mxu0 %v421
        %726 = vmatpush1.msra.mxu0 %v420
        %727 = vmatprep.subr.mxu0 %v429
        %728 = vmatpush1.msra.mxu0 %v428
        %729 = vmatprep.subr.mxu0 %v437
        %730 = vmatpush1.msra.mxu0 %v436
        %731 = vmatprep.subr.mxu0 %v445
        %732 = vmatpush1.msra.mxu0 %v444
        %733 = vmatprep.subr.mxu0 0.0
        %734 = vmatpush1.msra.mxu0 0.0
        %735 = vmatprep.subr.mxu0 0.0
        %736 = vmatpush1.msra.mxu0 0.0
        %737 = vmatprep.subr.mxu0 0.0
        %738 = vmatpush1.msra.mxu0 0.0
        %739 = vmatprep.subr.mxu0 0.0
        %740 = vmatpush1.msra.mxu0 0.0
        %741 = vmatprep.subr.mxu0 0.0
        %742 = vmatpush1.msra.mxu0 0.0
        %743 = vmatprep.subr.mxu0 0.0
        %744 = vmatpush1.msra.mxu0 0.0
        %745 = vmatprep.subr.mxu0 0.0
        %746 = vmatpush1.msra.mxu0 0.0
        %747 = vmatprep.subr.mxu0 0.0
        %748 = vmatpush1.msra.mxu0 0.0
        %749 = vmatprep.subr.mxu0 0.0
        %750 = vmatpush1.msra.mxu0 0.0
        %751 = vmatprep.subr.mxu0 0.0
        %752 = vmatpush1.msra.mxu0 0.0
        %753 = vmatprep.subr.mxu0 0.0
        %754 = vmatpush1.msra.mxu0 0.0
        %755 = vmatprep.subr.mxu0 0.0
        %756 = vmatpush1.msra.mxu0 0.0
        %757 = vmatprep.subr.mxu0 0.0
        %758 = vmatpush1.msra.mxu0 0.0
        %759 = vmatprep.subr.mxu0 0.0
        %760 = vmatpush1.msra.mxu0 0.0
        %761 = vmatprep.subr.mxu0 0.0
        %762 = vmatpush1.msra.mxu0 0.0
        %763 = vmatprep.subr.mxu0 0.0
        %764 = vmatpush1.msra.mxu0 0.0
        %765 = vmatprep.mubr.f32.mxu0 0.0
        %766 = vmatmul.mubr.f32.gmra.mrb[0].mxu0 %v317
        %v767 = vpop.f32.mrb[0].mxu0
        %v768 = vadd.f32 %v475, %v767
        %v769 = vpop.f32.mrb[0].mxu0
        %v770 = vadd.f32 %v479, %v769
        %771 = vdwg.mxu0
        %v772 = vmul.f32 %v697, 0.5
        %v773 = vmul.f32 %v699, 0.5
        %v774 = vmul.f32 %v768, 0.5
        %v775 = vmul.f32 %v770, 0.5
        %v776 = vmul.f32 %v697, 0.70710677
        %v777 = vmul.f32 %v699, 0.70710677
        %v778 = vmul.f32 %v768, 0.70710677
        %v779 = vmul.f32 %v770, 0.70710677
        %v780 = verf.f32.pop %v776
        %v781 = verf.f32.pop %v777
        %v782 = verf.f32.pop %v778
        %v783 = verf.f32.pop %v779
        %v784 = vadd.f32 %v780, 1.0
        %v785 = vadd.f32 %v781, 1.0
        %v786 = vadd.f32 %v782, 1.0
        %v787 = vadd.f32 %v783, 1.0
        %v788 = vmul.f32 %v772, %v784
        %v789 = vmul.f32 %v773, %v785
        %v790 = vmul.f32 %v774, %v786
        %v791 = vmul.f32 %v775, %v787
        %v792 = vmul.f32 %v555, %v788
        %v793 = vmul.f32 %v557, %v789
        %v794 = vmul.f32 %v626, %v790
        %v795 = vmul.f32 %v628, %v791
        %v796 = vld [vmem:[#allocation2] sm:$0xff]
        %v797 = vld [vmem:[#allocation2 + $0x8] sm:$0xff]
        %v798 = vld [vmem:[#allocation2 + $0x10] sm:$0xff]
        %v799 = vld [vmem:[#allocation2 + $0x18] sm:$0xff]
        %v800 = vld [vmem:[#allocation2 + $0x20] sm:$0xff]
        %v801 = vld [vmem:[#allocation2 + $0x28] sm:$0xff]
        %v802 = vld [vmem:[#allocation2 + $0x30] sm:$0xff]
        %v803 = vld [vmem:[#allocation2 + $0x38] sm:$0xff]
        %v804 = vld [vmem:[#allocation2 + $0x40] sm:$0xff]
        %v805 = vld [vmem:[#allocation2 + $0x48] sm:$0xff]
        %v806 = vld [vmem:[#allocation2 + $0x50] sm:$0xff]
        %v807 = vld [vmem:[#allocation2 + $0x58] sm:$0xff]
        %v808 = vld [vmem:[#allocation2 + $0x60] sm:$0xff]
        %v809 = vld [vmem:[#allocation2 + $0x68] sm:$0xff]
        %v810 = vld [vmem:[#allocation2 + $0x70] sm:$0xff]
        %v811 = vld [vmem:[#allocation2 + $0x78] sm:$0xff]
        %v812 = vld [vmem:[#allocation2 + $0x80] sm:$0xff]
        %v813 = vld [vmem:[#allocation2 + $0x88] sm:$0xff]
        %v814 = vld [vmem:[#allocation2 + $0x90] sm:$0xff]
        %v815 = vld [vmem:[#allocation2 + $0x98] sm:$0xff]
        %v816 = vld [vmem:[#allocation2 + $0xa0] sm:$0xff]
        %v817 = vld [vmem:[#allocation2 + $0xa8] sm:$0xff]
        %v818 = vld [vmem:[#allocation2 + $0xb0] sm:$0xff]
        %v819 = vld [vmem:[#allocation2 + $0xb8] sm:$0xff]
        %v820 = vld [vmem:[#allocation2 + $0xc0] sm:$0xff]
        %v821 = vld [vmem:[#allocation2 + $0xc8] sm:$0xff]
        %v822 = vld [vmem:[#allocation2 + $0xd0] sm:$0xff]
        %v823 = vld [vmem:[#allocation2 + $0xd8] sm:$0xff]
        %v824 = vld [vmem:[#allocation2 + $0xe0] sm:$0xff]
        %v825 = vld [vmem:[#allocation2 + $0xe8] sm:$0xff]
        %v826 = vld [vmem:[#allocation2 + $0xf0] sm:$0xff]
        %v827 = vld [vmem:[#allocation2 + $0xf8] sm:$0xff]
        %v828 = vld [vmem:[#allocation2 + $0x100] sm:$0xff]
        %v829 = vld [vmem:[#allocation2 + $0x108] sm:$0xff]
        %v830 = vld [vmem:[#allocation2 + $0x110] sm:$0xff]
        %v831 = vld [vmem:[#allocation2 + $0x118] sm:$0xff]
        %v832 = vld [vmem:[#allocation2 + $0x120] sm:$0xff]
        %v833 = vld [vmem:[#allocation2 + $0x128] sm:$0xff]
        %v834 = vld [vmem:[#allocation2 + $0x130] sm:$0xff]
        %v835 = vld [vmem:[#allocation2 + $0x138] sm:$0xff]
        %v836 = vld [vmem:[#allocation2 + $0x140] sm:$0xff]
        %v837 = vld [vmem:[#allocation2 + $0x148] sm:$0xff]
        %v838 = vld [vmem:[#allocation2 + $0x150] sm:$0xff]
        %v839 = vld [vmem:[#allocation2 + $0x158] sm:$0xff]
        %v840 = vld [vmem:[#allocation2 + $0x160] sm:$0xff]
        %v841 = vld [vmem:[#allocation2 + $0x168] sm:$0xff]
        %v842 = vld [vmem:[#allocation2 + $0x170] sm:$0xff]
        %v843 = vld [vmem:[#allocation2 + $0x178] sm:$0xff]
        %v844 = vld [vmem:[#allocation2 + $0x180] sm:$0xff]
        %v845 = vld [vmem:[#allocation2 + $0x188] sm:$0xff]
        %v846 = vld [vmem:[#allocation2 + $0x190] sm:$0xff]
        %v847 = vld [vmem:[#allocation2 + $0x198] sm:$0xff]
        %v848 = vld [vmem:[#allocation2 + $0x1a0] sm:$0xff]
        %v849 = vld [vmem:[#allocation2 + $0x1a8] sm:$0xff]
        %v850 = vld [vmem:[#allocation2 + $0x1b0] sm:$0xff]
        %v851 = vld [vmem:[#allocation2 + $0x1b8] sm:$0xff]
        %v852 = vld [vmem:[#allocation2 + $0x1c0] sm:$0xff]
        %v853 = vld [vmem:[#allocation2 + $0x1c8] sm:$0xff]
        %v854 = vld [vmem:[#allocation2 + $0x1d0] sm:$0xff]
        %v855 = vld [vmem:[#allocation2 + $0x1d8] sm:$0xff]
        %v856 = vld [vmem:[#allocation2 + $0x1e0] sm:$0xff]
        %v857 = vld [vmem:[#allocation2 + $0x1e8] sm:$0xff]
        %v858 = vld [vmem:[#allocation2 + $0x1f0] sm:$0xff]
        %v859 = vld [vmem:[#allocation2 + $0x1f8] sm:$0xff]
        %v860 = vld [vmem:[%s6] sm:$0x1]
        %v862 = vlaneseq
        %v863 = vshrl.u32 %v862, 7
        %v864 = vsub.s32 0, %v863
        %v865 = vrot.slane %v860, %v864
        %867 = vmatprep.subr.mxu0 0.0
        %868 = vmatpush1.msra.mxu0 %v796
        %869 = vmatprep.subr.mxu0 0.0
        %870 = vmatpush1.msra.mxu0 %v797
        %871 = vmatprep.subr.mxu0 0.0
        %872 = vmatpush1.msra.mxu0 %v798
        %873 = vmatprep.subr.mxu0 0.0
        %874 = vmatpush1.msra.mxu0 %v799
        %875 = vmatprep.subr.mxu0 0.0
        %876 = vmatpush1.msra.mxu0 %v800
        %877 = vmatprep.subr.mxu0 0.0
        %878 = vmatpush1.msra.mxu0 %v801
        %879 = vmatprep.subr.mxu0 0.0
        %880 = vmatpush1.msra.mxu0 %v802
        %881 = vmatprep.subr.mxu0 0.0
        %882 = vmatpush1.msra.mxu0 %v803
        %883 = vmatprep.subr.mxu0 0.0
        %884 = vmatpush1.msra.mxu0 %v804
        %885 = vmatprep.subr.mxu0 0.0
        %886 = vmatpush1.msra.mxu0 %v805
        %887 = vmatprep.subr.mxu0 0.0
        %888 = vmatpush1.msra.mxu0 %v806
        %889 = vmatprep.subr.mxu0 0.0
        %890 = vmatpush1.msra.mxu0 %v807
        %891 = vmatprep.subr.mxu0 0.0
        %892 = vmatpush1.msra.mxu0 %v808
        %893 = vmatprep.subr.mxu0 0.0
        %894 = vmatpush1.msra.mxu0 %v809
        %895 = vmatprep.subr.mxu0 0.0
        %896 = vmatpush1.msra.mxu0 %v810
        %897 = vmatprep.subr.mxu0 0.0
        %898 = vmatpush1.msra.mxu0 %v811
        %899 = vmatprep.subr.mxu0 0.0
        %900 = vmatpush1.msra.mxu0 %v812
        %901 = vmatprep.subr.mxu0 0.0
        %902 = vmatpush1.msra.mxu0 %v813
        %903 = vmatprep.subr.mxu0 0.0
        %904 = vmatpush1.msra.mxu0 %v814
        %905 = vmatprep.subr.mxu0 0.0
        %906 = vmatpush1.msra.mxu0 %v815
        %907 = vmatprep.subr.mxu0 0.0
        %908 = vmatpush1.msra.mxu0 %v816
        %909 = vmatprep.subr.mxu0 0.0
        %910 = vmatpush1.msra.mxu0 %v817
        %911 = vmatprep.subr.mxu0 0.0
        %912 = vmatpush1.msra.mxu0 %v818
        %913 = vmatprep.subr.mxu0 0.0
        %914 = vmatpush1.msra.mxu0 %v819
        %915 = vmatprep.subr.mxu0 0.0
        %916 = vmatpush1.msra.mxu0 %v820
        %917 = vmatprep.subr.mxu0 0.0
        %918 = vmatpush1.msra.mxu0 %v821
        %919 = vmatprep.subr.mxu0 0.0
        %920 = vmatpush1.msra.mxu0 %v822
        %921 = vmatprep.subr.mxu0 0.0
        %922 = vmatpush1.msra.mxu0 %v823
        %923 = vmatprep.subr.mxu0 0.0
        %924 = vmatpush1.msra.mxu0 %v824
        %925 = vmatprep.subr.mxu0 0.0
        %926 = vmatpush1.msra.mxu0 %v825
        %927 = vmatprep.subr.mxu0 0.0
        %928 = vmatpush1.msra.mxu0 %v826
        %929 = vmatprep.subr.mxu0 0.0
        %930 = vmatpush1.msra.mxu0 %v827
        %931 = vmatprep.mubr.f32.mxu0 %v793
        %932 = vmatmul.mubr.f32.gmra.mrb[0].mxu0 %v792
        %v933 = vpop.f32.mrb[0].mxu0
        %v934 = vadd.f32 %v865, %v933
        %v935 = vpop.f32.mrb[0].mxu0
        %936 = vdwg.mxu0
        %937 = vmatprep.subr.mxu0 0.0
        %938 = vmatpush1.msra.mxu0 %v828
        %939 = vmatprep.subr.mxu0 0.0
        %940 = vmatpush1.msra.mxu0 %v829
        %941 = vmatprep.subr.mxu0 0.0
        %942 = vmatpush1.msra.mxu0 %v830
        %943 = vmatprep.subr.mxu0 0.0
        %944 = vmatpush1.msra.mxu0 %v831
        %945 = vmatprep.subr.mxu0 0.0
        %946 = vmatpush1.msra.mxu0 %v832
        %947 = vmatprep.subr.mxu0 0.0
        %948 = vmatpush1.msra.mxu0 %v833
        %949 = vmatprep.subr.mxu0 0.0
        %950 = vmatpush1.msra.mxu0 %v834
        %951 = vmatprep.subr.mxu0 0.0
        %952 = vmatpush1.msra.mxu0 %v835
        %953 = vmatprep.subr.mxu0 0.0
        %954 = vmatpush1.msra.mxu0 %v836
        %955 = vmatprep.subr.mxu0 0.0
        %956 = vmatpush1.msra.mxu0 %v837
        %957 = vmatprep.subr.mxu0 0.0
        %958 = vmatpush1.msra.mxu0 %v838
        %959 = vmatprep.subr.mxu0 0.0
        %960 = vmatpush1.msra.mxu0 %v839
        %961 = vmatprep.subr.mxu0 0.0
        %962 = vmatpush1.msra.mxu0 %v840
        %963 = vmatprep.subr.mxu0 0.0
        %964 = vmatpush1.msra.mxu0 %v841
        %965 = vmatprep.subr.mxu0 0.0
        %966 = vmatpush1.msra.mxu0 %v842
        %967 = vmatprep.subr.mxu0 0.0
        %968 = vmatpush1.msra.mxu0 %v843
        %969 = vmatprep.subr.mxu0 0.0
        %970 = vmatpush1.msra.mxu0 %v844
        %971 = vmatprep.subr.mxu0 0.0
        %972 = vmatpush1.msra.mxu0 %v845
        %973 = vmatprep.subr.mxu0 0.0
        %974 = vmatpush1.msra.mxu0 %v846
        %975 = vmatprep.subr.mxu0 0.0
        %976 = vmatpush1.msra.mxu0 %v847
        %977 = vmatprep.subr.mxu0 0.0
        %978 = vmatpush1.msra.mxu0 %v848
        %979 = vmatprep.subr.mxu0 0.0
        %980 = vmatpush1.msra.mxu0 %v849
        %981 = vmatprep.subr.mxu0 0.0
        %982 = vmatpush1.msra.mxu0 %v850
        %983 = vmatprep.subr.mxu0 0.0
        %984 = vmatpush1.msra.mxu0 %v851
        %985 = vmatprep.subr.mxu0 0.0
        %986 = vmatpush1.msra.mxu0 %v852
        %987 = vmatprep.subr.mxu0 0.0
        %988 = vmatpush1.msra.mxu0 %v853
        %989 = vmatprep.subr.mxu0 0.0
        %990 = vmatpush1.msra.mxu0 %v854
        %991 = vmatprep.subr.mxu0 0.0
        %992 = vmatpush1.msra.mxu0 %v855
        %993 = vmatprep.subr.mxu0 0.0
        %994 = vmatpush1.msra.mxu0 %v856
        %995 = vmatprep.subr.mxu0 0.0
        %996 = vmatpush1.msra.mxu0 %v857
        %997 = vmatprep.subr.mxu0 0.0
        %998 = vmatpush1.msra.mxu0 %v858
        %999 = vmatprep.subr.mxu0 0.0
        %1000 = vmatpush1.msra.mxu0 %v859
        %1001 = vmatprep.mubr.f32.mxu0 %v795
        %1002 = vmatmul.mubr.f32.gmra.mrb[0].mxu0 %v794
        %v1003 = vpop.f32.mrb[0].mxu0
        %v1004 = vadd.f32 %v934, %v1003
        %v1005 = vpop.f32.mrb[0].mxu0
        %1006 = vdwg.mxu0
        %v1007 = vadd.f32 %v1004, %v289
        %1008 = vst [vmem:[%s284] sm:$0xff] %v1007
        %s1009 = sand.u32 %s182, 1
        %s1010 = scalar_lea.sflag [#allocation4], %s1009
        %s1011 = sand.u32 %s182, 1
        %s1012 = smul.addr %s1011, 8
        %s1013 = scalar_lea.vmem [#allocation5], %s1012
        // Predicated region
        $region53: #{basic_transformer_block.15} parent=47 // pred_check
          %p1014 = pneg %p192
        $region54: #{basic_transformer_block.15} parent=47 // pred_check_branch
          %1016 = sbr.rel (%p1014) target = $region56
        $region55: #{basic_transformer_block.15} parent=47 // pred_region
          %s1018 = ssub.s32 128, 128
          %1019 = vsyncadd %s1010, %s1018
          %s1020 = smul.addr %s22, 128
          %s1021 = scalar_lea.hbm %s7, %s1020
          %s1023 = sshll.u32 %s1013, 4
          %s1024 = int_to_ptr.vmem [resolvable:$true] %s1023
          %1026 = dma.vmem_to_hbm [thread:$0]  %s1024, 128, %s1021, %s1010
        $region56: #{basic_transformer_block.15} parent=47 // pred_fallthru
          _
      $region48: #{basic_transformer_block.15} parent=5 // pred_fallthru
        _
      %p1027 = scmp.le.s32.totalorder 2, %s17
      // Predicated region
      $region57: #{basic_transformer_block.15} parent=5 // pred_check
        %p1028 = pneg %p1027
      $region58: #{basic_transformer_block.15} parent=5 // pred_check_branch
        %1030 = sbr.rel (%p1028) target = $region60
      $region59: #{basic_transformer_block.15} parent=5 // pred_region
        %s1031 = ssub.s32 %s17, 2
        // Predicated region
        $region61: #{basic_transformer_block.15} parent=59 // pred_check
          %p1032 = pneg %p198
        $region62: #{basic_transformer_block.15} parent=59 // pred_check_branch
          %1034 = sbr.rel (%p1032) target = $region64
        $region63: #{basic_transformer_block.15} parent=59 // pred_region
          %s1035 = sand.u32 %s183, 1
          %s1036 = scalar_lea.sflag [#allocation4], %s1035
          %s1037 = sand.u32 %s183, 1
          %s1038 = smul.addr %s1037, 8
          %s1039 = scalar_lea.vmem [#allocation5], %s1038
          %1040 = dma.done %s1036, 128
        $region64: #{basic_transformer_block.15} parent=59 // pred_fallthru
          _
      $region60: #{basic_transformer_block.15} parent=5 // pred_fallthru
        _
    $region6: #{basic_transformer_block.15} parent=1 // loop_footer
      %s21 = sadd.s32 1, %s17
    $region7: #{basic_transformer_block.15} parent=1 // loop_footer_branch
      %16 = sbr.rel target = $region3
    $region8: #{basic_transformer_block.15} parent=1 // loop_exit
      _
    %1041 = vsyncpa [#allocation3], 1
    %s1042 = scalar_lea.sflag [#allocation3], 1
    %1043 = vsyncpa %s1042, 1
    %1044 = vsyncpa [#allocation4], 1
    %s1045 = scalar_lea.sflag [#allocation4], 1
    %1046 = vsyncpa %s1045, 1

</llo_original>
